<compile_context>
chip_gen: v7x
topology: tpu7x:2x2x1
jax: 0.10.0
libtpu: 0.0.40
codegen_flags: <defaults>
</compile_context>

<pallas_src>
import functools
import math

import jax
import jax.numpy as jnp
from jax.experimental import pallas as pl
from jax.experimental.pallas import tpu as pltpu

# ---------------- configuration (small, self-consistent ViT) ----------------
IMAGE_RES  = 32      # image_resolution
NUM_CH     = 3       # num_image_channels
PATCH      = 8       # patch_size
LATENT     = 128     # latent_vector_size
N_LAYERS   = 2       # num_transformer_layers
N_HEADS    = 4       # num_MSA_heads
MLP_HIDDEN = 256     # MLP_hidden_layer_size
NUM_LABELS = 37      # num_labels
EPS        = 1e-5    # LayerNorm eps (PyTorch default)

N_PATCHES  = (IMAGE_RES // PATCH) ** 2          # 16
SEQ        = N_PATCHES + 1                      # 17 (cls token + patches)
SEQ_PAD    = 24                                 # padded to a multiple of 8 sublanes
PATCH_DIM  = NUM_CH * PATCH * PATCH             # 192
HEAD_DIM   = LATENT // N_HEADS                  # 32
LABELS_PAD = 128                                # lane-dense head output width
MAX_BT     = 32                                 # cap on batch-block size


# ---------------- in-kernel math helpers ----------------
def _erf(x):
    # Abramowitz & Stegun 7.1.26 (max abs err ~1.5e-7): only exp/div, always
    # lowers on Mosaic; effectively exact at f32 precision.
    a1, a2, a3, a4, a5 = 0.254829592, -0.284496736, 1.421413741, -1.453152027, 1.061405429
    p = 0.3275911
    ax = jnp.abs(x)
    t = 1.0 / (1.0 + p * ax)
    poly = ((((a5 * t + a4) * t + a3) * t + a2) * t + a1) * t
    y = 1.0 - poly * jnp.exp(-ax * ax)
    return jnp.where(x >= 0, y, -y)


def _gelu(x):
    # exact (erf-based) GELU, matching torch.nn.GELU() default
    return 0.5 * x * (1.0 + _erf(x * 0.7071067811865476))


def _layernorm(x, g, b):
    mu = jnp.mean(x, axis=-1, keepdims=True)
    var = jnp.mean((x - mu) * (x - mu), axis=-1, keepdims=True)
    return (x - mu) * jax.lax.rsqrt(var + EPS) * g + b


# ---------------- fused ViT kernel ----------------
def _vit_kernel(patches_ref, pw_ref, pb_ref, cls_ref, pos_ref,
                ln1g_ref, ln1b_ref, wqkv_ref, bqkv_ref, wo_ref, bo_ref,
                ln2g_ref, ln2b_ref, w1_ref, b1_ref, w2_ref, b2_ref,
                lnfg_ref, lnfb_ref, hw_ref, hb_ref,
                out_ref, xbuf,
                *, bt, n_layers, n_heads, head_dim, seq, seq_pad):
    f32 = jnp.float32
    bf16 = jnp.bfloat16
    d = n_heads * head_dim
    n_patches = seq - 1
    m = bt * seq_pad

    # ---- patch embedding + cls token + position embeddings ----
    patches = patches_ref[...].reshape(bt * n_patches, -1).astype(bf16)     # [bt*16, 192]
    proj = jnp.dot(patches, pw_ref[...],
                   preferred_element_type=f32) + pb_ref[...]                # [bt*16, D]
    proj = proj.reshape(bt, n_patches, d)

    # Assemble padded token slab via stores (no concatenate).  Only the 7 pad
    # rows are zeroed (they must stay finite: they feed V; masked as keys).
    xbuf[:, seq:, :] = jnp.zeros((bt, seq_pad - seq, d), f32)
    cls_row = (cls_ref[...] + pos_ref[0:1, :])[None, :, :]                  # [1, 1, D]
    xbuf[:, 0:1, :] = jnp.broadcast_to(cls_row, (bt, 1, d))
    xbuf[:, 1:seq, :] = proj + pos_ref[1:seq, :][None, :, :]
    x = xbuf[...].reshape(m, d)                                             # [bt*24, D] f32

    # key-padding mask bias for the padded token columns
    key_ids = jax.lax.broadcasted_iota(jnp.int32, (1, 1, seq_pad), 2)
    mask_bias = jnp.where(key_ids < seq, 0.0, -1e30).astype(f32)

    scale = 1.0 / math.sqrt(head_dim)
    for l in range(n_layers):                     # static unroll over layers
        # --- Multi-head self-attention block (pre-LN) ---
        h1 = _layernorm(x, ln1g_ref[l], ln1b_ref[l]).astype(bf16)
        qkv = jnp.dot(h1, wqkv_ref[l],
                      preferred_element_type=f32) + bqkv_ref[l]             # [m, 3D] f32

        ctx_heads = []
        for hh in range(n_heads):                 # static unroll over heads
            lo = hh * head_dim
            qh = qkv[:, lo:lo + head_dim].reshape(bt, seq_pad, head_dim).astype(bf16)
            kh = qkv[:, d + lo:d + lo + head_dim].reshape(bt, seq_pad, head_dim).astype(bf16)
            vh = qkv[:, 2 * d + lo:2 * d + lo + head_dim].reshape(bt, seq_pad, head_dim).astype(bf16)
            s = jnp.einsum('bqd,bkd->bqk', qh, kh,
                           preferred_element_type=f32) * scale + mask_bias
            s = s - jnp.max(s, axis=-1, keepdims=True)
            e = jnp.exp(s)
            p = (e * pl.reciprocal(jnp.sum(e, axis=-1, keepdims=True),
                                   approx=True)).astype(bf16)
            ctx_heads.append(jnp.einsum('bqk,bkd->bqd', p, vh,
                                        preferred_element_type=f32))
        ctx = jnp.concatenate(ctx_heads, axis=-1).reshape(m, d).astype(bf16)

        msa = jnp.dot(ctx, wo_ref[l],
                      preferred_element_type=f32) + bo_ref[l]
        z = msa + x                                                         # residual 1 (f32)

        # --- MLP block (Linear -> Dropout(id) -> GELU -> Linear -> Dropout(id)) ---
        h2 = _layernorm(z, ln2g_ref[l], ln2b_ref[l]).astype(bf16)
        mm = _gelu(jnp.dot(h2, w1_ref[l],
                           preferred_element_type=f32) + b1_ref[l])
        mm = jnp.dot(mm.astype(bf16), w2_ref[l],
                     preferred_element_type=f32) + b2_ref[l]
        x = mm + z                                                          # residual 2 (f32)

    # ---- final LayerNorm + linear classification head on the cls token ----
    cls_tok = x.reshape(bt, seq_pad, d)[:, 0, :]                            # [bt, D]
    hf = _layernorm(cls_tok, lnfg_ref[...], lnfb_ref[...]).astype(bf16)
    logits = jnp.dot(hf, hw_ref[...],
                     preferred_element_type=f32) + hb_ref[...]              # [bt, 128]
    out_ref[...] = logits[None, :, :]                                       # dense (1, bt, 128) tile


# ---------------- pallas_call wrapper ----------------
def _full_spec(shape):
    n = len(shape)
    return pl.BlockSpec(shape, lambda i, _n=n: (0,) * _n)


def _cores_per_chip():
    # 2 TensorCores per chip on v4 / v5p / v7x; 1 on v5e / v6e.
    try:
        kind = jax.devices()[0].device_kind.lower()
        if ("v4" in kind) or ("v5p" in kind) or ("7" in kind):
            return 2
    except Exception:
        pass
    return 1


def _pick_block_batch(B):
    # Maximize bt (M = bt*24 per step).  On 2-core chips keep >= 2 grid steps
    # so both cores get work; on 1-core chips a single fat step is best.
    cores = _cores_per_chip()
    min_steps = min(cores, B)
    best = 1
    for bt in range(1, min(B, MAX_BT) + 1):
        if B % bt == 0 and (B // bt) >= min_steps:
            best = bt
    return best


def _cost_estimate(B):
    per_layer_dense = SEQ_PAD * 2 * LATENT * (3 * LATENT + LATENT + 2 * MLP_HIDDEN)
    per_layer_attn = 2 * 2 * N_HEADS * SEQ_PAD * SEQ_PAD * HEAD_DIM
    flops_per_sample = (2 * N_PATCHES * PATCH_DIM * LATENT
                        + N_LAYERS * (per_layer_dense + per_layer_attn)
                        + 2 * LATENT * LABELS_PAD)
    transc_per_sample = N_LAYERS * (N_HEADS * SEQ_PAD * SEQ_PAD + SEQ_PAD * MLP_HIDDEN)
    weight_bytes = 2 * (PATCH_DIM * LATENT + LATENT * LABELS_PAD
                        + N_LAYERS * (LATENT * 3 * LATENT + LATENT * LATENT
                                      + 2 * LATENT * MLP_HIDDEN))
    bytes_accessed = B * (N_PATCHES * PATCH_DIM * 4 + LABELS_PAD * 4) + weight_bytes
    return pl.CostEstimate(flops=int(B * flops_per_sample),
                           transcendentals=int(B * transc_per_sample),
                           bytes_accessed=int(bytes_accessed))


def extract_patches(images):
    # torch.nn.Unfold(kernel=p, stride=p) followed by .transpose(1, 2):
    # output [B, N, C*p*p]; per-patch element ordering is (c, kh, kw),
    # patches enumerated row-major over the image grid.
    B, C, H, W = images.shape
    p = PATCH
    x = images.reshape(B, C, H // p, p, W // p, p)
    x = x.transpose(0, 2, 4, 1, 3, 5)                 # [B, H/p, W/p, C, p, p]
    return x.reshape(B, N_PATCHES, C * p * p)


@jax.jit
def vit_forward(images, params):
    B = images.shape[0]
    patches = extract_patches(images)
    bt = _pick_block_batch(B)
    grid_n = B // bt
    wdt = jnp.bfloat16          # MXU weight operand dtype (f32 accumulation)

    kern = functools.partial(_vit_kernel, bt=bt, n_layers=N_LAYERS,
                             n_heads=N_HEADS, head_dim=HEAD_DIM,
                             seq=SEQ, seq_pad=SEQ_PAD)
    out = pl.pallas_call(
        kern,
        out_shape=jax.ShapeDtypeStruct((grid_n, bt, LABELS_PAD), jnp.float32),
        grid=(grid_n,),
        in_specs=[
            pl.BlockSpec((bt, N_PATCHES, PATCH_DIM), lambda i: (i, 0, 0)),
            _full_spec((PATCH_DIM, LATENT)),                 # proj_w (bf16)
            _full_spec((1, LATENT)),                         # proj_b
            _full_spec((1, LATENT)),                         # cls
            _full_spec((SEQ, LATENT)),                       # pos
            _full_spec((N_LAYERS, 1, LATENT)),               # ln1_g
            _full_spec((N_LAYERS, 1, LATENT)),               # ln1_b
            _full_spec((N_LAYERS, LATENT, 3 * LATENT)),      # w_qkv (bf16)
            _full_spec((N_LAYERS, 1, 3 * LATENT)),           # b_qkv
            _full_spec((N_LAYERS, LATENT, LATENT)),          # w_o (bf16)
            _full_spec((N_LAYERS, 1, LATENT)),               # b_o
            _full_spec((N_LAYERS, 1, LATENT)),               # ln2_g
            _full_spec((N_LAYERS, 1, LATENT)),               # ln2_b
            _full_spec((N_LAYERS, LATENT, MLP_HIDDEN)),      # w1 (bf16)
            _full_spec((N_LAYERS, 1, MLP_HIDDEN)),           # b1
            _full_spec((N_LAYERS, MLP_HIDDEN, LATENT)),      # w2 (bf16)
            _full_spec((N_LAYERS, 1, LATENT)),               # b2
            _full_spec((1, LATENT)),                         # ln_f_g
            _full_spec((1, LATENT)),                         # ln_f_b
            _full_spec((LATENT, LABELS_PAD)),                # cls head W (bf16, padded)
            _full_spec((1, LABELS_PAD)),                     # cls head b (padded)
        ],
        out_specs=pl.BlockSpec((1, bt, LABELS_PAD), lambda i: (i, 0, 0)),
        scratch_shapes=[pltpu.VMEM((bt, SEQ_PAD, LATENT), jnp.float32)],
        compiler_params=pltpu.CompilerParams(
            dimension_semantics=("parallel",)),
        cost_estimate=_cost_estimate(B),
    )(patches, params['proj_w'].astype(wdt), params['proj_b'],
      params['cls'], params['pos'],
      params['ln1_g'], params['ln1_b'],
      params['w_qkv'].astype(wdt), params['b_qkv'],
      params['w_o'].astype(wdt), params['b_o'],
      params['ln2_g'], params['ln2_b'],
      params['w1'].astype(wdt), params['b1'],
      params['w2'].astype(wdt), params['b2'],
      params['ln_f_g'], params['ln_f_b'],
      params['cls_w'].astype(wdt), params['cls_b'])

    # final Dropout: identity in eval mode; slice lane-padded logits to 37 labels
    return out.reshape(B, LABELS_PAD)[:, :NUM_LABELS]


# ---------------- parameters ----------------
def init_params(key):
    kit = iter(jax.random.split(key, 16))

    def nrm(shape, scale=0.02):
        return (scale * jax.random.normal(next(kit), shape)).astype(jnp.float32)

    L = N_LAYERS
    return dict(
        proj_w=nrm((PATCH_DIM, LATENT)),                  # linear_projection weight (transposed)
        proj_b=nrm((1, LATENT)),
        cls=nrm((1, LATENT), scale=1.0),                  # class_embedding ~ randn
        pos=nrm((SEQ, LATENT), scale=1.0),                # position_embeddings ~ randn
        # per-layer params stacked along a leading layer axis (VMEM-resident)
        ln1_g=jnp.ones((L, 1, LATENT), jnp.float32),
        ln1_b=jnp.zeros((L, 1, LATENT), jnp.float32),
        w_qkv=nrm((L, LATENT, 3 * LATENT)),               # packed in_proj (transposed)
        b_qkv=nrm((L, 1, 3 * LATENT)),
        w_o=nrm((L, LATENT, LATENT)),                     # out_proj (transposed)
        b_o=nrm((L, 1, LATENT)),
        ln2_g=jnp.ones((L, 1, LATENT), jnp.float32),
        ln2_b=jnp.zeros((L, 1, LATENT), jnp.float32),
        w1=nrm((L, LATENT, MLP_HIDDEN)),
        b1=nrm((L, 1, MLP_HIDDEN)),
        w2=nrm((L, MLP_HIDDEN, LATENT)),
        b2=nrm((L, 1, LATENT)),
        ln_f_g=jnp.ones((1, LATENT), jnp.float32),
        ln_f_b=jnp.zeros((1, LATENT), jnp.float32),
        # classification head zero-initialized (as in the PyTorch module),
        # stored lane-dense (padded to 128 columns; extra columns are zero and
        # sliced off in the wrapper).
        cls_w=jnp.zeros((LATENT, LABELS_PAD), jnp.float32),
        cls_b=jnp.zeros((1, LABELS_PAD), jnp.float32),
    )


if __name__ == "__main__":
    key = jax.random.PRNGKey(0)
    k_img, k_par = jax.random.split(key)
    images = jax.random.normal(k_img, (2, NUM_CH, IMAGE_RES, IMAGE_RES), jnp.float32)
    params = init_params(k_par)

    out = vit_forward(images, params)
    jax.block_until_ready(out)
    assert out.shape == (2, NUM_LABELS)
    print("KERNEL_OK")
</pallas_src>

<mosaic_0001>
module attributes {stable_mosaic.version = 11 : i64} {
  func.func @_vit_kernel(%arg0: i32, %arg1: memref<2x16x192xf32, #tpu.memory_space<vmem>>, %arg2: memref<192x128xbf16, #tpu.memory_space<vmem>>, %arg3: memref<1x128xf32, #tpu.memory_space<vmem>>, %arg4: memref<1x128xf32, #tpu.memory_space<vmem>>, %arg5: memref<17x128xf32, #tpu.memory_space<vmem>>, %arg6: memref<2x1x128xf32, #tpu.memory_space<vmem>>, %arg7: memref<2x1x128xf32, #tpu.memory_space<vmem>>, %arg8: memref<2x128x384xbf16, #tpu.memory_space<vmem>>, %arg9: memref<2x1x384xf32, #tpu.memory_space<vmem>>, %arg10: memref<2x128x128xbf16, #tpu.memory_space<vmem>>, %arg11: memref<2x1x128xf32, #tpu.memory_space<vmem>>, %arg12: memref<2x1x128xf32, #tpu.memory_space<vmem>>, %arg13: memref<2x1x128xf32, #tpu.memory_space<vmem>>, %arg14: memref<2x128x256xbf16, #tpu.memory_space<vmem>>, %arg15: memref<2x1x256xf32, #tpu.memory_space<vmem>>, %arg16: memref<2x256x128xbf16, #tpu.memory_space<vmem>>, %arg17: memref<2x1x128xf32, #tpu.memory_space<vmem>>, %arg18: memref<1x128xf32, #tpu.memory_space<vmem>>, %arg19: memref<1x128xf32, #tpu.memory_space<vmem>>, %arg20: memref<128x128xbf16, #tpu.memory_space<vmem>>, %arg21: memref<1x128xf32, #tpu.memory_space<vmem>>, %arg22: memref<1x2x128xf32, #tpu.memory_space<vmem>>, %arg23: memref<2x24x128xf32, #tpu.memory_space<vmem>>) attributes {dimension_semantics = [#tpu.dimension_semantics<parallel>], iteration_bounds = array<i64: 1>, scalar_prefetch = 0 : i64, scratch_operands = 1 : i64, tpu.core_type = #tpu.core_type<tc>, window_params = [{transform_indices = @transform_0, window_bounds = array<i64: 2, 16, 192>}, {pipeline_mode = #tpu.pipeline_mode<synchronous>, transform_indices = @transform_1, window_bounds = array<i64: 192, 128>}, {pipeline_mode = #tpu.pipeline_mode<synchronous>, transform_indices = @transform_2, window_bounds = array<i64: 1, 128>}, {pipeline_mode = #tpu.pipeline_mode<synchronous>, transform_indices = @transform_3, window_bounds = array<i64: 1, 128>}, {pipeline_mode = #tpu.pipeline_mode<synchronous>, transform_indices = @transform_4, window_bounds = array<i64: 17, 128>}, {pipeline_mode = #tpu.pipeline_mode<synchronous>, transform_indices = @transform_5, window_bounds = array<i64: 2, 1, 128>}, {pipeline_mode = #tpu.pipeline_mode<synchronous>, transform_indices = @transform_6, window_bounds = array<i64: 2, 1, 128>}, {pipeline_mode = #tpu.pipeline_mode<synchronous>, transform_indices = @transform_7, window_bounds = array<i64: 2, 128, 384>}, {pipeline_mode = #tpu.pipeline_mode<synchronous>, transform_indices = @transform_8, window_bounds = array<i64: 2, 1, 384>}, {pipeline_mode = #tpu.pipeline_mode<synchronous>, transform_indices = @transform_9, window_bounds = array<i64: 2, 128, 128>}, {pipeline_mode = #tpu.pipeline_mode<synchronous>, transform_indices = @transform_10, window_bounds = array<i64: 2, 1, 128>}, {pipeline_mode = #tpu.pipeline_mode<synchronous>, transform_indices = @transform_11, window_bounds = array<i64: 2, 1, 128>}, {pipeline_mode = #tpu.pipeline_mode<synchronous>, transform_indices = @transform_12, window_bounds = array<i64: 2, 1, 128>}, {pipeline_mode = #tpu.pipeline_mode<synchronous>, transform_indices = @transform_13, window_bounds = array<i64: 2, 128, 256>}, {pipeline_mode = #tpu.pipeline_mode<synchronous>, transform_indices = @transform_14, window_bounds = array<i64: 2, 1, 256>}, {pipeline_mode = #tpu.pipeline_mode<synchronous>, transform_indices = @transform_15, window_bounds = array<i64: 2, 256, 128>}, {pipeline_mode = #tpu.pipeline_mode<synchronous>, transform_indices = @transform_16, window_bounds = array<i64: 2, 1, 128>}, {pipeline_mode = #tpu.pipeline_mode<synchronous>, transform_indices = @transform_17, window_bounds = array<i64: 1, 128>}, {pipeline_mode = #tpu.pipeline_mode<synchronous>, transform_indices = @transform_18, window_bounds = array<i64: 1, 128>}, {pipeline_mode = #tpu.pipeline_mode<synchronous>, transform_indices = @transform_19, window_bounds = array<i64: 128, 128>}, {pipeline_mode = #tpu.pipeline_mode<synchronous>, transform_indices = @transform_20, window_bounds = array<i64: 1, 128>}, {transform_indices = @transform_21, window_bounds = array<i64: 1, 2, 128>}]} {
    %c0 = arith.constant 0 : index
    %c0_0 = arith.constant 0 : index
    %c0_1 = arith.constant 0 : index
    %0 = vector.load %arg1[%c0, %c0_0, %c0_1] : memref<2x16x192xf32, #tpu.memory_space<vmem>>, vector<2x16x192xf32>
    %1 = vector.shape_cast %0 : vector<2x16x192xf32> to vector<32x192xf32>
    %2 = arith.truncf %1 : vector<32x192xf32> to vector<32x192xbf16>
    %c0_2 = arith.constant 0 : index
    %c0_3 = arith.constant 0 : index
    %3 = vector.load %arg2[%c0_2, %c0_3] : memref<192x128xbf16, #tpu.memory_space<vmem>>, vector<192x128xbf16>
    %cst = arith.constant dense<0.000000e+00> : vector<32x128xf32>
    %4 = tpu.matmul %2, %3, %cst {dimension_numbers = #tpu.dot_dimension_numbers<[1], [0], [0], [1], [0, 0, 1, 1], [], []>} : vector<32x192xbf16>, vector<192x128xbf16>, vector<32x128xf32> -> vector<32x128xf32>
    %c0_4 = arith.constant 0 : index
    %c0_5 = arith.constant 0 : index
    %5 = vector.load %arg3[%c0_4, %c0_5] : memref<1x128xf32, #tpu.memory_space<vmem>>, vector<1x128xf32>
    %6 = vector.broadcast %5 : vector<1x128xf32> to vector<32x128xf32>
    %7 = arith.addf %4, %6 : vector<32x128xf32>
    %8 = vector.shape_cast %7 : vector<32x128xf32> to vector<2x16x128xf32>
    %cst_6 = arith.constant 0.000000e+00 : f32
    %9 = vector.broadcast %cst_6 : f32 to vector<2x7x128xf32>
    %c0_7 = arith.constant 0 : index
    %c17 = arith.constant 17 : index
    %c0_8 = arith.constant 0 : index
    %10 = vector.load %arg23[%c0_7, %c17, %c0_8] : memref<2x24x128xf32, #tpu.memory_space<vmem>>, vector<2x7x128xf32>
    tpu.vector_store %arg23[%c0_7, %c17, %c0_8], %9 {strides = array<i32>} : memref<2x24x128xf32, #tpu.memory_space<vmem>>, vector<2x7x128xf32>,
    %c0_9 = arith.constant 0 : index
    %c0_10 = arith.constant 0 : index
    %11 = vector.load %arg4[%c0_9, %c0_10] : memref<1x128xf32, #tpu.memory_space<vmem>>, vector<1x128xf32>
    %c0_11 = arith.constant 0 : index
    %c0_12 = arith.constant 0 : index
    %12 = vector.load %arg5[%c0_11, %c0_12] : memref<17x128xf32, #tpu.memory_space<vmem>>, vector<1x128xf32>
    %13 = arith.addf %11, %12 : vector<1x128xf32>
    %14 = vector.shape_cast %13 : vector<1x128xf32> to vector<1x1x128xf32>
    %15 = vector.shape_cast %14 : vector<1x1x128xf32> to vector<1x1x128xf32>
    %16 = vector.broadcast %15 : vector<1x1x128xf32> to vector<2x1x128xf32>
    %c0_13 = arith.constant 0 : index
    %c0_14 = arith.constant 0 : index
    %c0_15 = arith.constant 0 : index
    %17 = vector.load %arg23[%c0_13, %c0_14, %c0_15] : memref<2x24x128xf32, #tpu.memory_space<vmem>>, vector<2x1x128xf32>
    tpu.vector_store %arg23[%c0_13, %c0_14, %c0_15], %16 {strides = array<i32>} : memref<2x24x128xf32, #tpu.memory_space<vmem>>, vector<2x1x128xf32>,
    %c1 = arith.constant 1 : index
    %c0_16 = arith.constant 0 : index
    %18 = vector.load %arg5[%c1, %c0_16] : memref<17x128xf32, #tpu.memory_space<vmem>>, vector<16x128xf32>
    %19 = vector.shape_cast %18 : vector<16x128xf32> to vector<1x16x128xf32>
    %20 = vector.broadcast %19 : vector<1x16x128xf32> to vector<2x16x128xf32>
    %21 = arith.addf %8, %20 : vector<2x16x128xf32>
    %c0_17 = arith.constant 0 : index
    %c1_18 = arith.constant 1 : index
    %c0_19 = arith.constant 0 : index
    %22 = vector.load %arg23[%c0_17, %c1_18, %c0_19] : memref<2x24x128xf32, #tpu.memory_space<vmem>>, vector<2x16x128xf32>
    tpu.vector_store %arg23[%c0_17, %c1_18, %c0_19], %21 {strides = array<i32>} : memref<2x24x128xf32, #tpu.memory_space<vmem>>, vector<2x16x128xf32>,
    %c0_20 = arith.constant 0 : index
    %c0_21 = arith.constant 0 : index
    %c0_22 = arith.constant 0 : index
    %23 = vector.load %arg23[%c0_20, %c0_21, %c0_22] : memref<2x24x128xf32, #tpu.memory_space<vmem>>, vector<2x24x128xf32>
    %24 = vector.shape_cast %23 : vector<2x24x128xf32> to vector<48x128xf32>
    %25 = tpu.iota {dimensions = array<i32: 2>} : vector<1x1x24xi32>
    %c17_i32 = arith.constant 17 : i32
    %26 = vector.broadcast %c17_i32 : i32 to vector<1x1x24xi32>
    %27 = arith.cmpi slt, %25, %26 : vector<1x1x24xi32>
    %cst_23 = arith.constant 0.000000e+00 : f32
    %cst_24 = arith.constant -1.000000e+30 : f32
    %28 = vector.broadcast %cst_23 : f32 to vector<1x1x24xf32>
    %29 = vector.broadcast %cst_24 : f32 to vector<1x1x24xf32>
    %30 = arith.select %27, %28, %29 : vector<1x1x24xi1>, vector<1x1x24xf32>
    %c0_25 = arith.constant 0 : index
    %c0_26 = arith.constant 0 : index
    %c0_27 = arith.constant 0 : index
    %31 = vector.load %arg6[%c0_25, %c0_26, %c0_27] : memref<2x1x128xf32, #tpu.memory_space<vmem>>, vector<1x1x128xf32>
    %32 = vector.shape_cast %31 : vector<1x1x128xf32> to vector<1x128xf32>
    %c0_28 = arith.constant 0 : index
    %c0_29 = arith.constant 0 : index
    %c0_30 = arith.constant 0 : index
    %33 = vector.load %arg7[%c0_28, %c0_29, %c0_30] : memref<2x1x128xf32, #tpu.memory_space<vmem>>, vector<1x1x128xf32>
    %34 = vector.shape_cast %33 : vector<1x1x128xf32> to vector<1x128xf32>
    %cst_31 = arith.constant dense<0.000000e+00> : vector<48xf32>
    %35 = vector.multi_reduction <add>, %24, %cst_31 [1] : vector<48x128xf32> to vector<48xf32>
    %36 = vector.shape_cast %35 : vector<48xf32> to vector<48x1xf32>
    %cst_32 = arith.constant 1.280000e+02 : f32
    %37 = vector.broadcast %cst_32 : f32 to vector<48x1xf32>
    %38 = arith.divf %36, %37 : vector<48x1xf32>
    %39 = vector.broadcast %38 : vector<48x1xf32> to vector<48x128xf32>
    %40 = arith.subf %24, %39 : vector<48x128xf32>
    %41 = vector.broadcast %38 : vector<48x1xf32> to vector<48x128xf32>
    %42 = arith.subf %24, %41 : vector<48x128xf32>
    %43 = arith.mulf %40, %42 : vector<48x128xf32>
    %cst_33 = arith.constant dense<0.000000e+00> : vector<48xf32>
    %44 = vector.multi_reduction <add>, %43, %cst_33 [1] : vector<48x128xf32> to vector<48xf32>
    %45 = vector.shape_cast %44 : vector<48xf32> to vector<48x1xf32>
    %cst_34 = arith.constant 1.280000e+02 : f32
    %46 = vector.broadcast %cst_34 : f32 to vector<48x1xf32>
    %47 = arith.divf %45, %46 : vector<48x1xf32>
    %48 = vector.broadcast %38 : vector<48x1xf32> to vector<48x128xf32>
    %49 = arith.subf %24, %48 : vector<48x128xf32>
    %cst_35 = arith.constant 9.99999974E-6 : f32
    %50 = vector.broadcast %cst_35 : f32 to vector<48x1xf32>
    %51 = arith.addf %47, %50 : vector<48x1xf32>
    %52 = math.rsqrt %51 : vector<48x1xf32>
    %53 = vector.broadcast %52 : vector<48x1xf32> to vector<48x128xf32>
    %54 = arith.mulf %49, %53 : vector<48x128xf32>
    %55 = vector.broadcast %32 : vector<1x128xf32> to vector<48x128xf32>
    %56 = arith.mulf %54, %55 : vector<48x128xf32>
    %57 = vector.broadcast %34 : vector<1x128xf32> to vector<48x128xf32>
    %58 = arith.addf %56, %57 : vector<48x128xf32>
    %59 = arith.truncf %58 : vector<48x128xf32> to vector<48x128xbf16>
    %c0_36 = arith.constant 0 : index
    %c0_37 = arith.constant 0 : index
    %c0_38 = arith.constant 0 : index
    %60 = vector.load %arg8[%c0_36, %c0_37, %c0_38] : memref<2x128x384xbf16, #tpu.memory_space<vmem>>, vector<1x128x384xbf16>
    %61 = vector.shape_cast %60 : vector<1x128x384xbf16> to vector<128x384xbf16>
    %cst_39 = arith.constant dense<0.000000e+00> : vector<48x384xf32>
    %62 = tpu.matmul %59, %61, %cst_39 {dimension_numbers = #tpu.dot_dimension_numbers<[1], [0], [0], [1], [0, 0, 1, 1], [], []>} : vector<48x128xbf16>, vector<128x384xbf16>, vector<48x384xf32> -> vector<48x384xf32>
    %c0_40 = arith.constant 0 : index
    %c0_41 = arith.constant 0 : index
    %c0_42 = arith.constant 0 : index
    %63 = vector.load %arg9[%c0_40, %c0_41, %c0_42] : memref<2x1x384xf32, #tpu.memory_space<vmem>>, vector<1x1x384xf32>
    %64 = vector.shape_cast %63 : vector<1x1x384xf32> to vector<1x384xf32>
    %65 = vector.broadcast %64 : vector<1x384xf32> to vector<48x384xf32>
    %66 = arith.addf %62, %65 : vector<48x384xf32>
    %67 = vector.extract_strided_slice %66 {offsets = [0, 0], sizes = [48, 32], strides = [1, 1]} : vector<48x384xf32> to vector<48x32xf32>
    %68 = vector.shape_cast %67 : vector<48x32xf32> to vector<2x24x32xf32>
    %69 = arith.truncf %68 : vector<2x24x32xf32> to vector<2x24x32xbf16>
    %70 = vector.extract_strided_slice %66 {offsets = [0, 128], sizes = [48, 32], strides = [1, 1]} : vector<48x384xf32> to vector<48x32xf32>
    %71 = vector.shape_cast %70 : vector<48x32xf32> to vector<2x24x32xf32>
    %72 = arith.truncf %71 : vector<2x24x32xf32> to vector<2x24x32xbf16>
    %73 = vector.extract_strided_slice %66 {offsets = [0, 256], sizes = [48, 32], strides = [1, 1]} : vector<48x384xf32> to vector<48x32xf32>
    %74 = vector.shape_cast %73 : vector<48x32xf32> to vector<2x24x32xf32>
    %75 = arith.truncf %74 : vector<2x24x32xf32> to vector<2x24x32xbf16>
    "tpu.trace_start"() <{level = 10 : i32, message = "bqd,bkd->bqk"}> : () -> ()
    %cst_43 = arith.constant dense<0.000000e+00> : vector<2x24x24xf32>
    %76 = tpu.matmul %69, %72, %cst_43 {dimension_numbers = #tpu.dot_dimension_numbers<[2], [2], [1], [1], [0, 0, 0, 1, 1, 1], [0], [0]>} : vector<2x24x32xbf16>, vector<2x24x32xbf16>, vector<2x24x24xf32> -> vector<2x24x24xf32>
    "tpu.trace_stop"() : () -> ()
    %cst_44 = arith.constant 0.176776692 : f32
    %77 = vector.broadcast %cst_44 : f32 to vector<2x24x24xf32>
    %78 = arith.mulf %76, %77 : vector<2x24x24xf32>
    %79 = vector.broadcast %30 : vector<1x1x24xf32> to vector<2x24x24xf32>
    %80 = arith.addf %78, %79 : vector<2x24x24xf32>
    %cst_45 = arith.constant dense<0xFF800000> : vector<2x24xf32>
    %81 = vector.multi_reduction <maximumf>, %80, %cst_45 [2] : vector<2x24x24xf32> to vector<2x24xf32>
    %82 = vector.shape_cast %81 : vector<2x24xf32> to vector<2x24x1xf32>
    %83 = vector.broadcast %82 : vector<2x24x1xf32> to vector<2x24x24xf32>
    %84 = arith.subf %80, %83 : vector<2x24x24xf32>
    %85 = math.exp %84 : vector<2x24x24xf32>
    %cst_46 = arith.constant dense<0.000000e+00> : vector<2x24xf32>
    %86 = vector.multi_reduction <add>, %85, %cst_46 [2] : vector<2x24x24xf32> to vector<2x24xf32>
    %87 = vector.shape_cast %86 : vector<2x24xf32> to vector<2x24x1xf32>
    %88 = tpu.reciprocal %87 {approx = true} : vector<2x24x1xf32> -> vector<2x24x1xf32>
    %89 = vector.broadcast %88 : vector<2x24x1xf32> to vector<2x24x24xf32>
    %90 = arith.mulf %85, %89 : vector<2x24x24xf32>
    %91 = arith.truncf %90 : vector<2x24x24xf32> to vector<2x24x24xbf16>
    "tpu.trace_start"() <{level = 10 : i32, message = "bqk,bkd->bqd"}> : () -> ()
    %cst_47 = arith.constant dense<0.000000e+00> : vector<2x24x32xf32>
    %92 = tpu.matmul %91, %75, %cst_47 {dimension_numbers = #tpu.dot_dimension_numbers<[2], [1], [1], [2], [0, 0, 0, 1, 1, 2], [0], [0]>} : vector<2x24x24xbf16>, vector<2x24x32xbf16>, vector<2x24x32xf32> -> vector<2x24x32xf32>
    "tpu.trace_stop"() : () -> ()
    %93 = vector.extract_strided_slice %66 {offsets = [0, 32], sizes = [48, 32], strides = [1, 1]} : vector<48x384xf32> to vector<48x32xf32>
    %94 = vector.shape_cast %93 : vector<48x32xf32> to vector<2x24x32xf32>
    %95 = arith.truncf %94 : vector<2x24x32xf32> to vector<2x24x32xbf16>
    %96 = vector.extract_strided_slice %66 {offsets = [0, 160], sizes = [48, 32], strides = [1, 1]} : vector<48x384xf32> to vector<48x32xf32>
    %97 = vector.shape_cast %96 : vector<48x32xf32> to vector<2x24x32xf32>
    %98 = arith.truncf %97 : vector<2x24x32xf32> to vector<2x24x32xbf16>
    %99 = vector.extract_strided_slice %66 {offsets = [0, 288], sizes = [48, 32], strides = [1, 1]} : vector<48x384xf32> to vector<48x32xf32>
    %100 = vector.shape_cast %99 : vector<48x32xf32> to vector<2x24x32xf32>
    %101 = arith.truncf %100 : vector<2x24x32xf32> to vector<2x24x32xbf16>
    "tpu.trace_start"() <{level = 10 : i32, message = "bqd,bkd->bqk"}> : () -> ()
    %cst_48 = arith.constant dense<0.000000e+00> : vector<2x24x24xf32>
    %102 = tpu.matmul %95, %98, %cst_48 {dimension_numbers = #tpu.dot_dimension_numbers<[2], [2], [1], [1], [0, 0, 0, 1, 1, 1], [0], [0]>} : vector<2x24x32xbf16>, vector<2x24x32xbf16>, vector<2x24x24xf32> -> vector<2x24x24xf32>
    "tpu.trace_stop"() : () -> ()
    %cst_49 = arith.constant 0.176776692 : f32
    %103 = vector.broadcast %cst_49 : f32 to vector<2x24x24xf32>
    %104 = arith.mulf %102, %103 : vector<2x24x24xf32>
    %105 = vector.broadcast %30 : vector<1x1x24xf32> to vector<2x24x24xf32>
    %106 = arith.addf %104, %105 : vector<2x24x24xf32>
    %cst_50 = arith.constant dense<0xFF800000> : vector<2x24xf32>
    %107 = vector.multi_reduction <maximumf>, %106, %cst_50 [2] : vector<2x24x24xf32> to vector<2x24xf32>
    %108 = vector.shape_cast %107 : vector<2x24xf32> to vector<2x24x1xf32>
    %109 = vector.broadcast %108 : vector<2x24x1xf32> to vector<2x24x24xf32>
    %110 = arith.subf %106, %109 : vector<2x24x24xf32>
    %111 = math.exp %110 : vector<2x24x24xf32>
    %cst_51 = arith.constant dense<0.000000e+00> : vector<2x24xf32>
    %112 = vector.multi_reduction <add>, %111, %cst_51 [2] : vector<2x24x24xf32> to vector<2x24xf32>
    %113 = vector.shape_cast %112 : vector<2x24xf32> to vector<2x24x1xf32>
    %114 = tpu.reciprocal %113 {approx = true} : vector<2x24x1xf32> -> vector<2x24x1xf32>
    %115 = vector.broadcast %114 : vector<2x24x1xf32> to vector<2x24x24xf32>
    %116 = arith.mulf %111, %115 : vector<2x24x24xf32>
    %117 = arith.truncf %116 : vector<2x24x24xf32> to vector<2x24x24xbf16>
    "tpu.trace_start"() <{level = 10 : i32, message = "bqk,bkd->bqd"}> : () -> ()
    %cst_52 = arith.constant dense<0.000000e+00> : vector<2x24x32xf32>
    %118 = tpu.matmul %117, %101, %cst_52 {dimension_numbers = #tpu.dot_dimension_numbers<[2], [1], [1], [2], [0, 0, 0, 1, 1, 2], [0], [0]>} : vector<2x24x24xbf16>, vector<2x24x32xbf16>, vector<2x24x32xf32> -> vector<2x24x32xf32>
    "tpu.trace_stop"() : () -> ()
    %119 = vector.extract_strided_slice %66 {offsets = [0, 64], sizes = [48, 32], strides = [1, 1]} : vector<48x384xf32> to vector<48x32xf32>
    %120 = vector.shape_cast %119 : vector<48x32xf32> to vector<2x24x32xf32>
    %121 = arith.truncf %120 : vector<2x24x32xf32> to vector<2x24x32xbf16>
    %122 = vector.extract_strided_slice %66 {offsets = [0, 192], sizes = [48, 32], strides = [1, 1]} : vector<48x384xf32> to vector<48x32xf32>
    %123 = vector.shape_cast %122 : vector<48x32xf32> to vector<2x24x32xf32>
    %124 = arith.truncf %123 : vector<2x24x32xf32> to vector<2x24x32xbf16>
    %125 = vector.extract_strided_slice %66 {offsets = [0, 320], sizes = [48, 32], strides = [1, 1]} : vector<48x384xf32> to vector<48x32xf32>
    %126 = vector.shape_cast %125 : vector<48x32xf32> to vector<2x24x32xf32>
    %127 = arith.truncf %126 : vector<2x24x32xf32> to vector<2x24x32xbf16>
    "tpu.trace_start"() <{level = 10 : i32, message = "bqd,bkd->bqk"}> : () -> ()
    %cst_53 = arith.constant dense<0.000000e+00> : vector<2x24x24xf32>
    %128 = tpu.matmul %121, %124, %cst_53 {dimension_numbers = #tpu.dot_dimension_numbers<[2], [2], [1], [1], [0, 0, 0, 1, 1, 1], [0], [0]>} : vector<2x24x32xbf16>, vector<2x24x32xbf16>, vector<2x24x24xf32> -> vector<2x24x24xf32>
    "tpu.trace_stop"() : () -> ()
    %cst_54 = arith.constant 0.176776692 : f32
    %129 = vector.broadcast %cst_54 : f32 to vector<2x24x24xf32>
    %130 = arith.mulf %128, %129 : vector<2x24x24xf32>
    %131 = vector.broadcast %30 : vector<1x1x24xf32> to vector<2x24x24xf32>
    %132 = arith.addf %130, %131 : vector<2x24x24xf32>
    %cst_55 = arith.constant dense<0xFF800000> : vector<2x24xf32>
    %133 = vector.multi_reduction <maximumf>, %132, %cst_55 [2] : vector<2x24x24xf32> to vector<2x24xf32>
    %134 = vector.shape_cast %133 : vector<2x24xf32> to vector<2x24x1xf32>
    %135 = vector.broadcast %134 : vector<2x24x1xf32> to vector<2x24x24xf32>
    %136 = arith.subf %132, %135 : vector<2x24x24xf32>
    %137 = math.exp %136 : vector<2x24x24xf32>
    %cst_56 = arith.constant dense<0.000000e+00> : vector<2x24xf32>
    %138 = vector.multi_reduction <add>, %137, %cst_56 [2] : vector<2x24x24xf32> to vector<2x24xf32>
    %139 = vector.shape_cast %138 : vector<2x24xf32> to vector<2x24x1xf32>
    %140 = tpu.reciprocal %139 {approx = true} : vector<2x24x1xf32> -> vector<2x24x1xf32>
    %141 = vector.broadcast %140 : vector<2x24x1xf32> to vector<2x24x24xf32>
    %142 = arith.mulf %137, %141 : vector<2x24x24xf32>
    %143 = arith.truncf %142 : vector<2x24x24xf32> to vector<2x24x24xbf16>
    "tpu.trace_start"() <{level = 10 : i32, message = "bqk,bkd->bqd"}> : () -> ()
    %cst_57 = arith.constant dense<0.000000e+00> : vector<2x24x32xf32>
    %144 = tpu.matmul %143, %127, %cst_57 {dimension_numbers = #tpu.dot_dimension_numbers<[2], [1], [1], [2], [0, 0, 0, 1, 1, 2], [0], [0]>} : vector<2x24x24xbf16>, vector<2x24x32xbf16>, vector<2x24x32xf32> -> vector<2x24x32xf32>
    "tpu.trace_stop"() : () -> ()
    %145 = vector.extract_strided_slice %66 {offsets = [0, 96], sizes = [48, 32], strides = [1, 1]} : vector<48x384xf32> to vector<48x32xf32>
    %146 = vector.shape_cast %145 : vector<48x32xf32> to vector<2x24x32xf32>
    %147 = arith.truncf %146 : vector<2x24x32xf32> to vector<2x24x32xbf16>
    %148 = vector.extract_strided_slice %66 {offsets = [0, 224], sizes = [48, 32], strides = [1, 1]} : vector<48x384xf32> to vector<48x32xf32>
    %149 = vector.shape_cast %148 : vector<48x32xf32> to vector<2x24x32xf32>
    %150 = arith.truncf %149 : vector<2x24x32xf32> to vector<2x24x32xbf16>
    %151 = vector.extract_strided_slice %66 {offsets = [0, 352], sizes = [48, 32], strides = [1, 1]} : vector<48x384xf32> to vector<48x32xf32>
    %152 = vector.shape_cast %151 : vector<48x32xf32> to vector<2x24x32xf32>
    %153 = arith.truncf %152 : vector<2x24x32xf32> to vector<2x24x32xbf16>
    "tpu.trace_start"() <{level = 10 : i32, message = "bqd,bkd->bqk"}> : () -> ()
    %cst_58 = arith.constant dense<0.000000e+00> : vector<2x24x24xf32>
    %154 = tpu.matmul %147, %150, %cst_58 {dimension_numbers = #tpu.dot_dimension_numbers<[2], [2], [1], [1], [0, 0, 0, 1, 1, 1], [0], [0]>} : vector<2x24x32xbf16>, vector<2x24x32xbf16>, vector<2x24x24xf32> -> vector<2x24x24xf32>
    "tpu.trace_stop"() : () -> ()
    %cst_59 = arith.constant 0.176776692 : f32
    %155 = vector.broadcast %cst_59 : f32 to vector<2x24x24xf32>
    %156 = arith.mulf %154, %155 : vector<2x24x24xf32>
    %157 = vector.broadcast %30 : vector<1x1x24xf32> to vector<2x24x24xf32>
    %158 = arith.addf %156, %157 : vector<2x24x24xf32>
    %cst_60 = arith.constant dense<0xFF800000> : vector<2x24xf32>
    %159 = vector.multi_reduction <maximumf>, %158, %cst_60 [2] : vector<2x24x24xf32> to vector<2x24xf32>
    %160 = vector.shape_cast %159 : vector<2x24xf32> to vector<2x24x1xf32>
    %161 = vector.broadcast %160 : vector<2x24x1xf32> to vector<2x24x24xf32>
    %162 = arith.subf %158, %161 : vector<2x24x24xf32>
    %163 = math.exp %162 : vector<2x24x24xf32>
    %cst_61 = arith.constant dense<0.000000e+00> : vector<2x24xf32>
    %164 = vector.multi_reduction <add>, %163, %cst_61 [2] : vector<2x24x24xf32> to vector<2x24xf32>
    %165 = vector.shape_cast %164 : vector<2x24xf32> to vector<2x24x1xf32>
    %166 = tpu.reciprocal %165 {approx = true} : vector<2x24x1xf32> -> vector<2x24x1xf32>
    %167 = vector.broadcast %166 : vector<2x24x1xf32> to vector<2x24x24xf32>
    %168 = arith.mulf %163, %167 : vector<2x24x24xf32>
    %169 = arith.truncf %168 : vector<2x24x24xf32> to vector<2x24x24xbf16>
    "tpu.trace_start"() <{level = 10 : i32, message = "bqk,bkd->bqd"}> : () -> ()
    %cst_62 = arith.constant dense<0.000000e+00> : vector<2x24x32xf32>
    %170 = tpu.matmul %169, %153, %cst_62 {dimension_numbers = #tpu.dot_dimension_numbers<[2], [1], [1], [2], [0, 0, 0, 1, 1, 2], [0], [0]>} : vector<2x24x24xbf16>, vector<2x24x32xbf16>, vector<2x24x32xf32> -> vector<2x24x32xf32>
    "tpu.trace_stop"() : () -> ()
    %171 = tpu.concatenate %92, %118, %144, %170 in 2 : vector<2x24x32xf32>, vector<2x24x32xf32>, vector<2x24x32xf32>, vector<2x24x32xf32> -> vector<2x24x128xf32>
    %172 = vector.shape_cast %171 : vector<2x24x128xf32> to vector<48x128xf32>
    %173 = arith.truncf %172 : vector<48x128xf32> to vector<48x128xbf16>
    %c0_63 = arith.constant 0 : index
    %c0_64 = arith.constant 0 : index
    %c0_65 = arith.constant 0 : index
    %174 = vector.load %arg10[%c0_63, %c0_64, %c0_65] : memref<2x128x128xbf16, #tpu.memory_space<vmem>>, vector<1x128x128xbf16>
    %175 = vector.shape_cast %174 : vector<1x128x128xbf16> to vector<128x128xbf16>
    %cst_66 = arith.constant dense<0.000000e+00> : vector<48x128xf32>
    %176 = tpu.matmul %173, %175, %cst_66 {dimension_numbers = #tpu.dot_dimension_numbers<[1], [0], [0], [1], [0, 0, 1, 1], [], []>} : vector<48x128xbf16>, vector<128x128xbf16>, vector<48x128xf32> -> vector<48x128xf32>
    %c0_67 = arith.constant 0 : index
    %c0_68 = arith.constant 0 : index
    %c0_69 = arith.constant 0 : index
    %177 = vector.load %arg11[%c0_67, %c0_68, %c0_69] : memref<2x1x128xf32, #tpu.memory_space<vmem>>, vector<1x1x128xf32>
    %178 = vector.shape_cast %177 : vector<1x1x128xf32> to vector<1x128xf32>
    %179 = vector.broadcast %178 : vector<1x128xf32> to vector<48x128xf32>
    %180 = arith.addf %176, %179 : vector<48x128xf32>
    %181 = arith.addf %180, %24 : vector<48x128xf32>
    %c0_70 = arith.constant 0 : index
    %c0_71 = arith.constant 0 : index
    %c0_72 = arith.constant 0 : index
    %182 = vector.load %arg12[%c0_70, %c0_71, %c0_72] : memref<2x1x128xf32, #tpu.memory_space<vmem>>, vector<1x1x128xf32>
    %183 = vector.shape_cast %182 : vector<1x1x128xf32> to vector<1x128xf32>
    %c0_73 = arith.constant 0 : index
    %c0_74 = arith.constant 0 : index
    %c0_75 = arith.constant 0 : index
    %184 = vector.load %arg13[%c0_73, %c0_74, %c0_75] : memref<2x1x128xf32, #tpu.memory_space<vmem>>, vector<1x1x128xf32>
    %185 = vector.shape_cast %184 : vector<1x1x128xf32> to vector<1x128xf32>
    %cst_76 = arith.constant dense<0.000000e+00> : vector<48xf32>
    %186 = vector.multi_reduction <add>, %181, %cst_76 [1] : vector<48x128xf32> to vector<48xf32>
    %187 = vector.shape_cast %186 : vector<48xf32> to vector<48x1xf32>
    %cst_77 = arith.constant 1.280000e+02 : f32
    %188 = vector.broadcast %cst_77 : f32 to vector<48x1xf32>
    %189 = arith.divf %187, %188 : vector<48x1xf32>
    %190 = vector.broadcast %189 : vector<48x1xf32> to vector<48x128xf32>
    %191 = arith.subf %181, %190 : vector<48x128xf32>
    %192 = vector.broadcast %189 : vector<48x1xf32> to vector<48x128xf32>
    %193 = arith.subf %181, %192 : vector<48x128xf32>
    %194 = arith.mulf %191, %193 : vector<48x128xf32>
    %cst_78 = arith.constant dense<0.000000e+00> : vector<48xf32>
    %195 = vector.multi_reduction <add>, %194, %cst_78 [1] : vector<48x128xf32> to vector<48xf32>
    %196 = vector.shape_cast %195 : vector<48xf32> to vector<48x1xf32>
    %cst_79 = arith.constant 1.280000e+02 : f32
    %197 = vector.broadcast %cst_79 : f32 to vector<48x1xf32>
    %198 = arith.divf %196, %197 : vector<48x1xf32>
    %199 = vector.broadcast %189 : vector<48x1xf32> to vector<48x128xf32>
    %200 = arith.subf %181, %199 : vector<48x128xf32>
    %cst_80 = arith.constant 9.99999974E-6 : f32
    %201 = vector.broadcast %cst_80 : f32 to vector<48x1xf32>
    %202 = arith.addf %198, %201 : vector<48x1xf32>
    %203 = math.rsqrt %202 : vector<48x1xf32>
    %204 = vector.broadcast %203 : vector<48x1xf32> to vector<48x128xf32>
    %205 = arith.mulf %200, %204 : vector<48x128xf32>
    %206 = vector.broadcast %183 : vector<1x128xf32> to vector<48x128xf32>
    %207 = arith.mulf %205, %206 : vector<48x128xf32>
    %208 = vector.broadcast %185 : vector<1x128xf32> to vector<48x128xf32>
    %209 = arith.addf %207, %208 : vector<48x128xf32>
    %210 = arith.truncf %209 : vector<48x128xf32> to vector<48x128xbf16>
    %c0_81 = arith.constant 0 : index
    %c0_82 = arith.constant 0 : index
    %c0_83 = arith.constant 0 : index
    %211 = vector.load %arg14[%c0_81, %c0_82, %c0_83] : memref<2x128x256xbf16, #tpu.memory_space<vmem>>, vector<1x128x256xbf16>
    %212 = vector.shape_cast %211 : vector<1x128x256xbf16> to vector<128x256xbf16>
    %cst_84 = arith.constant dense<0.000000e+00> : vector<48x256xf32>
    %213 = tpu.matmul %210, %212, %cst_84 {dimension_numbers = #tpu.dot_dimension_numbers<[1], [0], [0], [1], [0, 0, 1, 1], [], []>} : vector<48x128xbf16>, vector<128x256xbf16>, vector<48x256xf32> -> vector<48x256xf32>
    %c0_85 = arith.constant 0 : index
    %c0_86 = arith.constant 0 : index
    %c0_87 = arith.constant 0 : index
    %214 = vector.load %arg15[%c0_85, %c0_86, %c0_87] : memref<2x1x256xf32, #tpu.memory_space<vmem>>, vector<1x1x256xf32>
    %215 = vector.shape_cast %214 : vector<1x1x256xf32> to vector<1x256xf32>
    %216 = vector.broadcast %215 : vector<1x256xf32> to vector<48x256xf32>
    %217 = arith.addf %213, %216 : vector<48x256xf32>
    %cst_88 = arith.constant 5.000000e-01 : f32
    %218 = vector.broadcast %cst_88 : f32 to vector<48x256xf32>
    %219 = arith.mulf %218, %217 : vector<48x256xf32>
    %cst_89 = arith.constant 0.707106769 : f32
    %220 = vector.broadcast %cst_89 : f32 to vector<48x256xf32>
    %221 = arith.mulf %217, %220 : vector<48x256xf32>
    %222 = math.absf %221 : vector<48x256xf32>
    %cst_90 = arith.constant 0.327591091 : f32
    %223 = vector.broadcast %cst_90 : f32 to vector<48x256xf32>
    %224 = arith.mulf %223, %222 : vector<48x256xf32>
    %cst_91 = arith.constant 1.000000e+00 : f32
    %225 = vector.broadcast %cst_91 : f32 to vector<48x256xf32>
    %226 = arith.addf %225, %224 : vector<48x256xf32>
    %cst_92 = arith.constant 1.000000e+00 : f32
    %227 = vector.broadcast %cst_92 : f32 to vector<48x256xf32>
    %228 = arith.divf %227, %226 : vector<48x256xf32>
    %cst_93 = arith.constant 1.06140542 : f32
    %229 = vector.broadcast %cst_93 : f32 to vector<48x256xf32>
    %230 = arith.mulf %229, %228 : vector<48x256xf32>
    %cst_94 = arith.constant -1.45315206 : f32
    %231 = vector.broadcast %cst_94 : f32 to vector<48x256xf32>
    %232 = arith.addf %230, %231 : vector<48x256xf32>
    %233 = arith.mulf %232, %228 : vector<48x256xf32>
    %cst_95 = arith.constant 1.42141378 : f32
    %234 = vector.broadcast %cst_95 : f32 to vector<48x256xf32>
    %235 = arith.addf %233, %234 : vector<48x256xf32>
    %236 = arith.mulf %235, %228 : vector<48x256xf32>
    %cst_96 = arith.constant -0.284496725 : f32
    %237 = vector.broadcast %cst_96 : f32 to vector<48x256xf32>
    %238 = arith.addf %236, %237 : vector<48x256xf32>
    %239 = arith.mulf %238, %228 : vector<48x256xf32>
    %cst_97 = arith.constant 0.254829586 : f32
    %240 = vector.broadcast %cst_97 : f32 to vector<48x256xf32>
    %241 = arith.addf %239, %240 : vector<48x256xf32>
    %242 = arith.mulf %241, %228 : vector<48x256xf32>
    %cst_98 = arith.constant 0.000000e+00 : f32
    %243 = vector.broadcast %cst_98 : f32 to vector<48x256xf32>
    %244 = arith.subf %243, %222 : vector<48x256xf32>
    %245 = arith.mulf %244, %222 : vector<48x256xf32>
    %246 = math.exp %245 : vector<48x256xf32>
    %247 = arith.mulf %242, %246 : vector<48x256xf32>
    %cst_99 = arith.constant 1.000000e+00 : f32
    %248 = vector.broadcast %cst_99 : f32 to vector<48x256xf32>
    %249 = arith.subf %248, %247 : vector<48x256xf32>
    %cst_100 = arith.constant 0.000000e+00 : f32
    %250 = vector.broadcast %cst_100 : f32 to vector<48x256xf32>
    %251 = arith.cmpf oge, %221, %250 : vector<48x256xf32>
    %cst_101 = arith.constant 0.000000e+00 : f32
    %252 = vector.broadcast %cst_101 : f32 to vector<48x256xf32>
    %253 = arith.subf %252, %249 : vector<48x256xf32>
    %254 = arith.select %251, %249, %253 : vector<48x256xi1>, vector<48x256xf32>
    %cst_102 = arith.constant 1.000000e+00 : f32
    %255 = vector.broadcast %cst_102 : f32 to vector<48x256xf32>
    %256 = arith.addf %255, %254 : vector<48x256xf32>
    %257 = arith.mulf %219, %256 : vector<48x256xf32>
    %258 = arith.truncf %257 : vector<48x256xf32> to vector<48x256xbf16>
    %c0_103 = arith.constant 0 : index
    %c0_104 = arith.constant 0 : index
    %c0_105 = arith.constant 0 : index
    %259 = vector.load %arg16[%c0_103, %c0_104, %c0_105] : memref<2x256x128xbf16, #tpu.memory_space<vmem>>, vector<1x256x128xbf16>
    %260 = vector.shape_cast %259 : vector<1x256x128xbf16> to vector<256x128xbf16>
    %cst_106 = arith.constant dense<0.000000e+00> : vector<48x128xf32>
    %261 = tpu.matmul %258, %260, %cst_106 {dimension_numbers = #tpu.dot_dimension_numbers<[1], [0], [0], [1], [0, 0, 1, 1], [], []>} : vector<48x256xbf16>, vector<256x128xbf16>, vector<48x128xf32> -> vector<48x128xf32>
    %c0_107 = arith.constant 0 : index
    %c0_108 = arith.constant 0 : index
    %c0_109 = arith.constant 0 : index
    %262 = vector.load %arg17[%c0_107, %c0_108, %c0_109] : memref<2x1x128xf32, #tpu.memory_space<vmem>>, vector<1x1x128xf32>
    %263 = vector.shape_cast %262 : vector<1x1x128xf32> to vector<1x128xf32>
    %264 = vector.broadcast %263 : vector<1x128xf32> to vector<48x128xf32>
    %265 = arith.addf %261, %264 : vector<48x128xf32>
    %266 = arith.addf %265, %181 : vector<48x128xf32>
    %c1_110 = arith.constant 1 : index
    %c0_111 = arith.constant 0 : index
    %c0_112 = arith.constant 0 : index
    %267 = vector.load %arg6[%c1_110, %c0_111, %c0_112] : memref<2x1x128xf32, #tpu.memory_space<vmem>>, vector<1x1x128xf32>
    %268 = vector.shape_cast %267 : vector<1x1x128xf32> to vector<1x128xf32>
    %c1_113 = arith.constant 1 : index
    %c0_114 = arith.constant 0 : index
    %c0_115 = arith.constant 0 : index
    %269 = vector.load %arg7[%c1_113, %c0_114, %c0_115] : memref<2x1x128xf32, #tpu.memory_space<vmem>>, vector<1x1x128xf32>
    %270 = vector.shape_cast %269 : vector<1x1x128xf32> to vector<1x128xf32>
    %cst_116 = arith.constant dense<0.000000e+00> : vector<48xf32>
    %271 = vector.multi_reduction <add>, %266, %cst_116 [1] : vector<48x128xf32> to vector<48xf32>
    %272 = vector.shape_cast %271 : vector<48xf32> to vector<48x1xf32>
    %cst_117 = arith.constant 1.280000e+02 : f32
    %273 = vector.broadcast %cst_117 : f32 to vector<48x1xf32>
    %274 = arith.divf %272, %273 : vector<48x1xf32>
    %275 = vector.broadcast %274 : vector<48x1xf32> to vector<48x128xf32>
    %276 = arith.subf %266, %275 : vector<48x128xf32>
    %277 = vector.broadcast %274 : vector<48x1xf32> to vector<48x128xf32>
    %278 = arith.subf %266, %277 : vector<48x128xf32>
    %279 = arith.mulf %276, %278 : vector<48x128xf32>
    %cst_118 = arith.constant dense<0.000000e+00> : vector<48xf32>
    %280 = vector.multi_reduction <add>, %279, %cst_118 [1] : vector<48x128xf32> to vector<48xf32>
    %281 = vector.shape_cast %280 : vector<48xf32> to vector<48x1xf32>
    %cst_119 = arith.constant 1.280000e+02 : f32
    %282 = vector.broadcast %cst_119 : f32 to vector<48x1xf32>
    %283 = arith.divf %281, %282 : vector<48x1xf32>
    %284 = vector.broadcast %274 : vector<48x1xf32> to vector<48x128xf32>
    %285 = arith.subf %266, %284 : vector<48x128xf32>
    %cst_120 = arith.constant 9.99999974E-6 : f32
    %286 = vector.broadcast %cst_120 : f32 to vector<48x1xf32>
    %287 = arith.addf %283, %286 : vector<48x1xf32>
    %288 = math.rsqrt %287 : vector<48x1xf32>
    %289 = vector.broadcast %288 : vector<48x1xf32> to vector<48x128xf32>
    %290 = arith.mulf %285, %289 : vector<48x128xf32>
    %291 = vector.broadcast %268 : vector<1x128xf32> to vector<48x128xf32>
    %292 = arith.mulf %290, %291 : vector<48x128xf32>
    %293 = vector.broadcast %270 : vector<1x128xf32> to vector<48x128xf32>
    %294 = arith.addf %292, %293 : vector<48x128xf32>
    %295 = arith.truncf %294 : vector<48x128xf32> to vector<48x128xbf16>
    %c1_121 = arith.constant 1 : index
    %c0_122 = arith.constant 0 : index
    %c0_123 = arith.constant 0 : index
    %296 = vector.load %arg8[%c1_121, %c0_122, %c0_123] : memref<2x128x384xbf16, #tpu.memory_space<vmem>>, vector<1x128x384xbf16>
    %297 = vector.shape_cast %296 : vector<1x128x384xbf16> to vector<128x384xbf16>
    %cst_124 = arith.constant dense<0.000000e+00> : vector<48x384xf32>
    %298 = tpu.matmul %295, %297, %cst_124 {dimension_numbers = #tpu.dot_dimension_numbers<[1], [0], [0], [1], [0, 0, 1, 1], [], []>} : vector<48x128xbf16>, vector<128x384xbf16>, vector<48x384xf32> -> vector<48x384xf32>
    %c1_125 = arith.constant 1 : index
    %c0_126 = arith.constant 0 : index
    %c0_127 = arith.constant 0 : index
    %299 = vector.load %arg9[%c1_125, %c0_126, %c0_127] : memref<2x1x384xf32, #tpu.memory_space<vmem>>, vector<1x1x384xf32>
    %300 = vector.shape_cast %299 : vector<1x1x384xf32> to vector<1x384xf32>
    %301 = vector.broadcast %300 : vector<1x384xf32> to vector<48x384xf32>
    %302 = arith.addf %298, %301 : vector<48x384xf32>
    %303 = vector.extract_strided_slice %302 {offsets = [0, 0], sizes = [48, 32], strides = [1, 1]} : vector<48x384xf32> to vector<48x32xf32>
    %304 = vector.shape_cast %303 : vector<48x32xf32> to vector<2x24x32xf32>
    %305 = arith.truncf %304 : vector<2x24x32xf32> to vector<2x24x32xbf16>
    %306 = vector.extract_strided_slice %302 {offsets = [0, 128], sizes = [48, 32], strides = [1, 1]} : vector<48x384xf32> to vector<48x32xf32>
    %307 = vector.shape_cast %306 : vector<48x32xf32> to vector<2x24x32xf32>
    %308 = arith.truncf %307 : vector<2x24x32xf32> to vector<2x24x32xbf16>
    %309 = vector.extract_strided_slice %302 {offsets = [0, 256], sizes = [48, 32], strides = [1, 1]} : vector<48x384xf32> to vector<48x32xf32>
    %310 = vector.shape_cast %309 : vector<48x32xf32> to vector<2x24x32xf32>
    %311 = arith.truncf %310 : vector<2x24x32xf32> to vector<2x24x32xbf16>
    "tpu.trace_start"() <{level = 10 : i32, message = "bqd,bkd->bqk"}> : () -> ()
    %cst_128 = arith.constant dense<0.000000e+00> : vector<2x24x24xf32>
    %312 = tpu.matmul %305, %308, %cst_128 {dimension_numbers = #tpu.dot_dimension_numbers<[2], [2], [1], [1], [0, 0, 0, 1, 1, 1], [0], [0]>} : vector<2x24x32xbf16>, vector<2x24x32xbf16>, vector<2x24x24xf32> -> vector<2x24x24xf32>
    "tpu.trace_stop"() : () -> ()
    %cst_129 = arith.constant 0.176776692 : f32
    %313 = vector.broadcast %cst_129 : f32 to vector<2x24x24xf32>
    %314 = arith.mulf %312, %313 : vector<2x24x24xf32>
    %315 = vector.broadcast %30 : vector<1x1x24xf32> to vector<2x24x24xf32>
    %316 = arith.addf %314, %315 : vector<2x24x24xf32>
    %cst_130 = arith.constant dense<0xFF800000> : vector<2x24xf32>
    %317 = vector.multi_reduction <maximumf>, %316, %cst_130 [2] : vector<2x24x24xf32> to vector<2x24xf32>
    %318 = vector.shape_cast %317 : vector<2x24xf32> to vector<2x24x1xf32>
    %319 = vector.broadcast %318 : vector<2x24x1xf32> to vector<2x24x24xf32>
    %320 = arith.subf %316, %319 : vector<2x24x24xf32>
    %321 = math.exp %320 : vector<2x24x24xf32>
    %cst_131 = arith.constant dense<0.000000e+00> : vector<2x24xf32>
    %322 = vector.multi_reduction <add>, %321, %cst_131 [2] : vector<2x24x24xf32> to vector<2x24xf32>
    %323 = vector.shape_cast %322 : vector<2x24xf32> to vector<2x24x1xf32>
    %324 = tpu.reciprocal %323 {approx = true} : vector<2x24x1xf32> -> vector<2x24x1xf32>
    %325 = vector.broadcast %324 : vector<2x24x1xf32> to vector<2x24x24xf32>
    %326 = arith.mulf %321, %325 : vector<2x24x24xf32>
    %327 = arith.truncf %326 : vector<2x24x24xf32> to vector<2x24x24xbf16>
    "tpu.trace_start"() <{level = 10 : i32, message = "bqk,bkd->bqd"}> : () -> ()
    %cst_132 = arith.constant dense<0.000000e+00> : vector<2x24x32xf32>
    %328 = tpu.matmul %327, %311, %cst_132 {dimension_numbers = #tpu.dot_dimension_numbers<[2], [1], [1], [2], [0, 0, 0, 1, 1, 2], [0], [0]>} : vector<2x24x24xbf16>, vector<2x24x32xbf16>, vector<2x24x32xf32> -> vector<2x24x32xf32>
    "tpu.trace_stop"() : () -> ()
    %329 = vector.extract_strided_slice %302 {offsets = [0, 32], sizes = [48, 32], strides = [1, 1]} : vector<48x384xf32> to vector<48x32xf32>
    %330 = vector.shape_cast %329 : vector<48x32xf32> to vector<2x24x32xf32>
    %331 = arith.truncf %330 : vector<2x24x32xf32> to vector<2x24x32xbf16>
    %332 = vector.extract_strided_slice %302 {offsets = [0, 160], sizes = [48, 32], strides = [1, 1]} : vector<48x384xf32> to vector<48x32xf32>
    %333 = vector.shape_cast %332 : vector<48x32xf32> to vector<2x24x32xf32>
    %334 = arith.truncf %333 : vector<2x24x32xf32> to vector<2x24x32xbf16>
    %335 = vector.extract_strided_slice %302 {offsets = [0, 288], sizes = [48, 32], strides = [1, 1]} : vector<48x384xf32> to vector<48x32xf32>
    %336 = vector.shape_cast %335 : vector<48x32xf32> to vector<2x24x32xf32>
    %337 = arith.truncf %336 : vector<2x24x32xf32> to vector<2x24x32xbf16>
    "tpu.trace_start"() <{level = 10 : i32, message = "bqd,bkd->bqk"}> : () -> ()
    %cst_133 = arith.constant dense<0.000000e+00> : vector<2x24x24xf32>
    %338 = tpu.matmul %331, %334, %cst_133 {dimension_numbers = #tpu.dot_dimension_numbers<[2], [2], [1], [1], [0, 0, 0, 1, 1, 1], [0], [0]>} : vector<2x24x32xbf16>, vector<2x24x32xbf16>, vector<2x24x24xf32> -> vector<2x24x24xf32>
    "tpu.trace_stop"() : () -> ()
    %cst_134 = arith.constant 0.176776692 : f32
    %339 = vector.broadcast %cst_134 : f32 to vector<2x24x24xf32>
    %340 = arith.mulf %338, %339 : vector<2x24x24xf32>
    %341 = vector.broadcast %30 : vector<1x1x24xf32> to vector<2x24x24xf32>
    %342 = arith.addf %340, %341 : vector<2x24x24xf32>
    %cst_135 = arith.constant dense<0xFF800000> : vector<2x24xf32>
    %343 = vector.multi_reduction <maximumf>, %342, %cst_135 [2] : vector<2x24x24xf32> to vector<2x24xf32>
    %344 = vector.shape_cast %343 : vector<2x24xf32> to vector<2x24x1xf32>
    %345 = vector.broadcast %344 : vector<2x24x1xf32> to vector<2x24x24xf32>
    %346 = arith.subf %342, %345 : vector<2x24x24xf32>
    %347 = math.exp %346 : vector<2x24x24xf32>
    %cst_136 = arith.constant dense<0.000000e+00> : vector<2x24xf32>
    %348 = vector.multi_reduction <add>, %347, %cst_136 [2] : vector<2x24x24xf32> to vector<2x24xf32>
    %349 = vector.shape_cast %348 : vector<2x24xf32> to vector<2x24x1xf32>
    %350 = tpu.reciprocal %349 {approx = true} : vector<2x24x1xf32> -> vector<2x24x1xf32>
    %351 = vector.broadcast %350 : vector<2x24x1xf32> to vector<2x24x24xf32>
    %352 = arith.mulf %347, %351 : vector<2x24x24xf32>
    %353 = arith.truncf %352 : vector<2x24x24xf32> to vector<2x24x24xbf16>
    "tpu.trace_start"() <{level = 10 : i32, message = "bqk,bkd->bqd"}> : () -> ()
    %cst_137 = arith.constant dense<0.000000e+00> : vector<2x24x32xf32>
    %354 = tpu.matmul %353, %337, %cst_137 {dimension_numbers = #tpu.dot_dimension_numbers<[2], [1], [1], [2], [0, 0, 0, 1, 1, 2], [0], [0]>} : vector<2x24x24xbf16>, vector<2x24x32xbf16>, vector<2x24x32xf32> -> vector<2x24x32xf32>
    "tpu.trace_stop"() : () -> ()
    %355 = vector.extract_strided_slice %302 {offsets = [0, 64], sizes = [48, 32], strides = [1, 1]} : vector<48x384xf32> to vector<48x32xf32>
    %356 = vector.shape_cast %355 : vector<48x32xf32> to vector<2x24x32xf32>
    %357 = arith.truncf %356 : vector<2x24x32xf32> to vector<2x24x32xbf16>
    %358 = vector.extract_strided_slice %302 {offsets = [0, 192], sizes = [48, 32], strides = [1, 1]} : vector<48x384xf32> to vector<48x32xf32>
    %359 = vector.shape_cast %358 : vector<48x32xf32> to vector<2x24x32xf32>
    %360 = arith.truncf %359 : vector<2x24x32xf32> to vector<2x24x32xbf16>
    %361 = vector.extract_strided_slice %302 {offsets = [0, 320], sizes = [48, 32], strides = [1, 1]} : vector<48x384xf32> to vector<48x32xf32>
    %362 = vector.shape_cast %361 : vector<48x32xf32> to vector<2x24x32xf32>
    %363 = arith.truncf %362 : vector<2x24x32xf32> to vector<2x24x32xbf16>
    "tpu.trace_start"() <{level = 10 : i32, message = "bqd,bkd->bqk"}> : () -> ()
    %cst_138 = arith.constant dense<0.000000e+00> : vector<2x24x24xf32>
    %364 = tpu.matmul %357, %360, %cst_138 {dimension_numbers = #tpu.dot_dimension_numbers<[2], [2], [1], [1], [0, 0, 0, 1, 1, 1], [0], [0]>} : vector<2x24x32xbf16>, vector<2x24x32xbf16>, vector<2x24x24xf32> -> vector<2x24x24xf32>
    "tpu.trace_stop"() : () -> ()
    %cst_139 = arith.constant 0.176776692 : f32
    %365 = vector.broadcast %cst_139 : f32 to vector<2x24x24xf32>
    %366 = arith.mulf %364, %365 : vector<2x24x24xf32>
    %367 = vector.broadcast %30 : vector<1x1x24xf32> to vector<2x24x24xf32>
    %368 = arith.addf %366, %367 : vector<2x24x24xf32>
    %cst_140 = arith.constant dense<0xFF800000> : vector<2x24xf32>
    %369 = vector.multi_reduction <maximumf>, %368, %cst_140 [2] : vector<2x24x24xf32> to vector<2x24xf32>
    %370 = vector.shape_cast %369 : vector<2x24xf32> to vector<2x24x1xf32>
    %371 = vector.broadcast %370 : vector<2x24x1xf32> to vector<2x24x24xf32>
    %372 = arith.subf %368, %371 : vector<2x24x24xf32>
    %373 = math.exp %372 : vector<2x24x24xf32>
    %cst_141 = arith.constant dense<0.000000e+00> : vector<2x24xf32>
    %374 = vector.multi_reduction <add>, %373, %cst_141 [2] : vector<2x24x24xf32> to vector<2x24xf32>
    %375 = vector.shape_cast %374 : vector<2x24xf32> to vector<2x24x1xf32>
    %376 = tpu.reciprocal %375 {approx = true} : vector<2x24x1xf32> -> vector<2x24x1xf32>
    %377 = vector.broadcast %376 : vector<2x24x1xf32> to vector<2x24x24xf32>
    %378 = arith.mulf %373, %377 : vector<2x24x24xf32>
    %379 = arith.truncf %378 : vector<2x24x24xf32> to vector<2x24x24xbf16>
    "tpu.trace_start"() <{level = 10 : i32, message = "bqk,bkd->bqd"}> : () -> ()
    %cst_142 = arith.constant dense<0.000000e+00> : vector<2x24x32xf32>
    %380 = tpu.matmul %379, %363, %cst_142 {dimension_numbers = #tpu.dot_dimension_numbers<[2], [1], [1], [2], [0, 0, 0, 1, 1, 2], [0], [0]>} : vector<2x24x24xbf16>, vector<2x24x32xbf16>, vector<2x24x32xf32> -> vector<2x24x32xf32>
    "tpu.trace_stop"() : () -> ()
    %381 = vector.extract_strided_slice %302 {offsets = [0, 96], sizes = [48, 32], strides = [1, 1]} : vector<48x384xf32> to vector<48x32xf32>
    %382 = vector.shape_cast %381 : vector<48x32xf32> to vector<2x24x32xf32>
    %383 = arith.truncf %382 : vector<2x24x32xf32> to vector<2x24x32xbf16>
    %384 = vector.extract_strided_slice %302 {offsets = [0, 224], sizes = [48, 32], strides = [1, 1]} : vector<48x384xf32> to vector<48x32xf32>
    %385 = vector.shape_cast %384 : vector<48x32xf32> to vector<2x24x32xf32>
    %386 = arith.truncf %385 : vector<2x24x32xf32> to vector<2x24x32xbf16>
    %387 = vector.extract_strided_slice %302 {offsets = [0, 352], sizes = [48, 32], strides = [1, 1]} : vector<48x384xf32> to vector<48x32xf32>
    %388 = vector.shape_cast %387 : vector<48x32xf32> to vector<2x24x32xf32>
    %389 = arith.truncf %388 : vector<2x24x32xf32> to vector<2x24x32xbf16>
    "tpu.trace_start"() <{level = 10 : i32, message = "bqd,bkd->bqk"}> : () -> ()
    %cst_143 = arith.constant dense<0.000000e+00> : vector<2x24x24xf32>
    %390 = tpu.matmul %383, %386, %cst_143 {dimension_numbers = #tpu.dot_dimension_numbers<[2], [2], [1], [1], [0, 0, 0, 1, 1, 1], [0], [0]>} : vector<2x24x32xbf16>, vector<2x24x32xbf16>, vector<2x24x24xf32> -> vector<2x24x24xf32>
    "tpu.trace_stop"() : () -> ()
    %cst_144 = arith.constant 0.176776692 : f32
    %391 = vector.broadcast %cst_144 : f32 to vector<2x24x24xf32>
    %392 = arith.mulf %390, %391 : vector<2x24x24xf32>
    %393 = vector.broadcast %30 : vector<1x1x24xf32> to vector<2x24x24xf32>
    %394 = arith.addf %392, %393 : vector<2x24x24xf32>
    %cst_145 = arith.constant dense<0xFF800000> : vector<2x24xf32>
    %395 = vector.multi_reduction <maximumf>, %394, %cst_145 [2] : vector<2x24x24xf32> to vector<2x24xf32>
    %396 = vector.shape_cast %395 : vector<2x24xf32> to vector<2x24x1xf32>
    %397 = vector.broadcast %396 : vector<2x24x1xf32> to vector<2x24x24xf32>
    %398 = arith.subf %394, %397 : vector<2x24x24xf32>
    %399 = math.exp %398 : vector<2x24x24xf32>
    %cst_146 = arith.constant dense<0.000000e+00> : vector<2x24xf32>
    %400 = vector.multi_reduction <add>, %399, %cst_146 [2] : vector<2x24x24xf32> to vector<2x24xf32>
    %401 = vector.shape_cast %400 : vector<2x24xf32> to vector<2x24x1xf32>
    %402 = tpu.reciprocal %401 {approx = true} : vector<2x24x1xf32> -> vector<2x24x1xf32>
    %403 = vector.broadcast %402 : vector<2x24x1xf32> to vector<2x24x24xf32>
    %404 = arith.mulf %399, %403 : vector<2x24x24xf32>
    %405 = arith.truncf %404 : vector<2x24x24xf32> to vector<2x24x24xbf16>
    "tpu.trace_start"() <{level = 10 : i32, message = "bqk,bkd->bqd"}> : () -> ()
    %cst_147 = arith.constant dense<0.000000e+00> : vector<2x24x32xf32>
    %406 = tpu.matmul %405, %389, %cst_147 {dimension_numbers = #tpu.dot_dimension_numbers<[2], [1], [1], [2], [0, 0, 0, 1, 1, 2], [0], [0]>} : vector<2x24x24xbf16>, vector<2x24x32xbf16>, vector<2x24x32xf32> -> vector<2x24x32xf32>
    "tpu.trace_stop"() : () -> ()
    %407 = tpu.concatenate %328, %354, %380, %406 in 2 : vector<2x24x32xf32>, vector<2x24x32xf32>, vector<2x24x32xf32>, vector<2x24x32xf32> -> vector<2x24x128xf32>
    %408 = vector.shape_cast %407 : vector<2x24x128xf32> to vector<48x128xf32>
    %409 = arith.truncf %408 : vector<48x128xf32> to vector<48x128xbf16>
    %c1_148 = arith.constant 1 : index
    %c0_149 = arith.constant 0 : index
    %c0_150 = arith.constant 0 : index
    %410 = vector.load %arg10[%c1_148, %c0_149, %c0_150] : memref<2x128x128xbf16, #tpu.memory_space<vmem>>, vector<1x128x128xbf16>
    %411 = vector.shape_cast %410 : vector<1x128x128xbf16> to vector<128x128xbf16>
    %cst_151 = arith.constant dense<0.000000e+00> : vector<48x128xf32>
    %412 = tpu.matmul %409, %411, %cst_151 {dimension_numbers = #tpu.dot_dimension_numbers<[1], [0], [0], [1], [0, 0, 1, 1], [], []>} : vector<48x128xbf16>, vector<128x128xbf16>, vector<48x128xf32> -> vector<48x128xf32>
    %c1_152 = arith.constant 1 : index
    %c0_153 = arith.constant 0 : index
    %c0_154 = arith.constant 0 : index
    %413 = vector.load %arg11[%c1_152, %c0_153, %c0_154] : memref<2x1x128xf32, #tpu.memory_space<vmem>>, vector<1x1x128xf32>
    %414 = vector.shape_cast %413 : vector<1x1x128xf32> to vector<1x128xf32>
    %415 = vector.broadcast %414 : vector<1x128xf32> to vector<48x128xf32>
    %416 = arith.addf %412, %415 : vector<48x128xf32>
    %417 = arith.addf %416, %266 : vector<48x128xf32>
    %c1_155 = arith.constant 1 : index
    %c0_156 = arith.constant 0 : index
    %c0_157 = arith.constant 0 : index
    %418 = vector.load %arg12[%c1_155, %c0_156, %c0_157] : memref<2x1x128xf32, #tpu.memory_space<vmem>>, vector<1x1x128xf32>
    %419 = vector.shape_cast %418 : vector<1x1x128xf32> to vector<1x128xf32>
    %c1_158 = arith.constant 1 : index
    %c0_159 = arith.constant 0 : index
    %c0_160 = arith.constant 0 : index
    %420 = vector.load %arg13[%c1_158, %c0_159, %c0_160] : memref<2x1x128xf32, #tpu.memory_space<vmem>>, vector<1x1x128xf32>
    %421 = vector.shape_cast %420 : vector<1x1x128xf32> to vector<1x128xf32>
    %cst_161 = arith.constant dense<0.000000e+00> : vector<48xf32>
    %422 = vector.multi_reduction <add>, %417, %cst_161 [1] : vector<48x128xf32> to vector<48xf32>
    %423 = vector.shape_cast %422 : vector<48xf32> to vector<48x1xf32>
    %cst_162 = arith.constant 1.280000e+02 : f32
    %424 = vector.broadcast %cst_162 : f32 to vector<48x1xf32>
    %425 = arith.divf %423, %424 : vector<48x1xf32>
    %426 = vector.broadcast %425 : vector<48x1xf32> to vector<48x128xf32>
    %427 = arith.subf %417, %426 : vector<48x128xf32>
    %428 = vector.broadcast %425 : vector<48x1xf32> to vector<48x128xf32>
    %429 = arith.subf %417, %428 : vector<48x128xf32>
    %430 = arith.mulf %427, %429 : vector<48x128xf32>
    %cst_163 = arith.constant dense<0.000000e+00> : vector<48xf32>
    %431 = vector.multi_reduction <add>, %430, %cst_163 [1] : vector<48x128xf32> to vector<48xf32>
    %432 = vector.shape_cast %431 : vector<48xf32> to vector<48x1xf32>
    %cst_164 = arith.constant 1.280000e+02 : f32
    %433 = vector.broadcast %cst_164 : f32 to vector<48x1xf32>
    %434 = arith.divf %432, %433 : vector<48x1xf32>
    %435 = vector.broadcast %425 : vector<48x1xf32> to vector<48x128xf32>
    %436 = arith.subf %417, %435 : vector<48x128xf32>
    %cst_165 = arith.constant 9.99999974E-6 : f32
    %437 = vector.broadcast %cst_165 : f32 to vector<48x1xf32>
    %438 = arith.addf %434, %437 : vector<48x1xf32>
    %439 = math.rsqrt %438 : vector<48x1xf32>
    %440 = vector.broadcast %439 : vector<48x1xf32> to vector<48x128xf32>
    %441 = arith.mulf %436, %440 : vector<48x128xf32>
    %442 = vector.broadcast %419 : vector<1x128xf32> to vector<48x128xf32>
    %443 = arith.mulf %441, %442 : vector<48x128xf32>
    %444 = vector.broadcast %421 : vector<1x128xf32> to vector<48x128xf32>
    %445 = arith.addf %443, %444 : vector<48x128xf32>
    %446 = arith.truncf %445 : vector<48x128xf32> to vector<48x128xbf16>
    %c1_166 = arith.constant 1 : index
    %c0_167 = arith.constant 0 : index
    %c0_168 = arith.constant 0 : index
    %447 = vector.load %arg14[%c1_166, %c0_167, %c0_168] : memref<2x128x256xbf16, #tpu.memory_space<vmem>>, vector<1x128x256xbf16>
    %448 = vector.shape_cast %447 : vector<1x128x256xbf16> to vector<128x256xbf16>
    %cst_169 = arith.constant dense<0.000000e+00> : vector<48x256xf32>
    %449 = tpu.matmul %446, %448, %cst_169 {dimension_numbers = #tpu.dot_dimension_numbers<[1], [0], [0], [1], [0, 0, 1, 1], [], []>} : vector<48x128xbf16>, vector<128x256xbf16>, vector<48x256xf32> -> vector<48x256xf32>
    %c1_170 = arith.constant 1 : index
    %c0_171 = arith.constant 0 : index
    %c0_172 = arith.constant 0 : index
    %450 = vector.load %arg15[%c1_170, %c0_171, %c0_172] : memref<2x1x256xf32, #tpu.memory_space<vmem>>, vector<1x1x256xf32>
    %451 = vector.shape_cast %450 : vector<1x1x256xf32> to vector<1x256xf32>
    %452 = vector.broadcast %451 : vector<1x256xf32> to vector<48x256xf32>
    %453 = arith.addf %449, %452 : vector<48x256xf32>
    %cst_173 = arith.constant 5.000000e-01 : f32
    %454 = vector.broadcast %cst_173 : f32 to vector<48x256xf32>
    %455 = arith.mulf %454, %453 : vector<48x256xf32>
    %cst_174 = arith.constant 0.707106769 : f32
    %456 = vector.broadcast %cst_174 : f32 to vector<48x256xf32>
    %457 = arith.mulf %453, %456 : vector<48x256xf32>
    %458 = math.absf %457 : vector<48x256xf32>
    %cst_175 = arith.constant 0.327591091 : f32
    %459 = vector.broadcast %cst_175 : f32 to vector<48x256xf32>
    %460 = arith.mulf %459, %458 : vector<48x256xf32>
    %cst_176 = arith.constant 1.000000e+00 : f32
    %461 = vector.broadcast %cst_176 : f32 to vector<48x256xf32>
    %462 = arith.addf %461, %460 : vector<48x256xf32>
    %cst_177 = arith.constant 1.000000e+00 : f32
    %463 = vector.broadcast %cst_177 : f32 to vector<48x256xf32>
    %464 = arith.divf %463, %462 : vector<48x256xf32>
    %cst_178 = arith.constant 1.06140542 : f32
    %465 = vector.broadcast %cst_178 : f32 to vector<48x256xf32>
    %466 = arith.mulf %465, %464 : vector<48x256xf32>
    %cst_179 = arith.constant -1.45315206 : f32
    %467 = vector.broadcast %cst_179 : f32 to vector<48x256xf32>
    %468 = arith.addf %466, %467 : vector<48x256xf32>
    %469 = arith.mulf %468, %464 : vector<48x256xf32>
    %cst_180 = arith.constant 1.42141378 : f32
    %470 = vector.broadcast %cst_180 : f32 to vector<48x256xf32>
    %471 = arith.addf %469, %470 : vector<48x256xf32>
    %472 = arith.mulf %471, %464 : vector<48x256xf32>
    %cst_181 = arith.constant -0.284496725 : f32
    %473 = vector.broadcast %cst_181 : f32 to vector<48x256xf32>
    %474 = arith.addf %472, %473 : vector<48x256xf32>
    %475 = arith.mulf %474, %464 : vector<48x256xf32>
    %cst_182 = arith.constant 0.254829586 : f32
    %476 = vector.broadcast %cst_182 : f32 to vector<48x256xf32>
    %477 = arith.addf %475, %476 : vector<48x256xf32>
    %478 = arith.mulf %477, %464 : vector<48x256xf32>
    %cst_183 = arith.constant 0.000000e+00 : f32
    %479 = vector.broadcast %cst_183 : f32 to vector<48x256xf32>
    %480 = arith.subf %479, %458 : vector<48x256xf32>
    %481 = arith.mulf %480, %458 : vector<48x256xf32>
    %482 = math.exp %481 : vector<48x256xf32>
    %483 = arith.mulf %478, %482 : vector<48x256xf32>
    %cst_184 = arith.constant 1.000000e+00 : f32
    %484 = vector.broadcast %cst_184 : f32 to vector<48x256xf32>
    %485 = arith.subf %484, %483 : vector<48x256xf32>
    %cst_185 = arith.constant 0.000000e+00 : f32
    %486 = vector.broadcast %cst_185 : f32 to vector<48x256xf32>
    %487 = arith.cmpf oge, %457, %486 : vector<48x256xf32>
    %cst_186 = arith.constant 0.000000e+00 : f32
    %488 = vector.broadcast %cst_186 : f32 to vector<48x256xf32>
    %489 = arith.subf %488, %485 : vector<48x256xf32>
    %490 = arith.select %487, %485, %489 : vector<48x256xi1>, vector<48x256xf32>
    %cst_187 = arith.constant 1.000000e+00 : f32
    %491 = vector.broadcast %cst_187 : f32 to vector<48x256xf32>
    %492 = arith.addf %491, %490 : vector<48x256xf32>
    %493 = arith.mulf %455, %492 : vector<48x256xf32>
    %494 = arith.truncf %493 : vector<48x256xf32> to vector<48x256xbf16>
    %c1_188 = arith.constant 1 : index
    %c0_189 = arith.constant 0 : index
    %c0_190 = arith.constant 0 : index
    %495 = vector.load %arg16[%c1_188, %c0_189, %c0_190] : memref<2x256x128xbf16, #tpu.memory_space<vmem>>, vector<1x256x128xbf16>
    %496 = vector.shape_cast %495 : vector<1x256x128xbf16> to vector<256x128xbf16>
    %cst_191 = arith.constant dense<0.000000e+00> : vector<48x128xf32>
    %497 = tpu.matmul %494, %496, %cst_191 {dimension_numbers = #tpu.dot_dimension_numbers<[1], [0], [0], [1], [0, 0, 1, 1], [], []>} : vector<48x256xbf16>, vector<256x128xbf16>, vector<48x128xf32> -> vector<48x128xf32>
    %c1_192 = arith.constant 1 : index
    %c0_193 = arith.constant 0 : index
    %c0_194 = arith.constant 0 : index
    %498 = vector.load %arg17[%c1_192, %c0_193, %c0_194] : memref<2x1x128xf32, #tpu.memory_space<vmem>>, vector<1x1x128xf32>
    %499 = vector.shape_cast %498 : vector<1x1x128xf32> to vector<1x128xf32>
    %500 = vector.broadcast %499 : vector<1x128xf32> to vector<48x128xf32>
    %501 = arith.addf %497, %500 : vector<48x128xf32>
    %502 = arith.addf %501, %417 : vector<48x128xf32>
    %503 = vector.shape_cast %502 : vector<48x128xf32> to vector<2x24x128xf32>
    %504 = vector.extract_strided_slice %503 {offsets = [0, 0, 0], sizes = [2, 1, 128], strides = [1, 1, 1]} : vector<2x24x128xf32> to vector<2x1x128xf32>
    %505 = vector.shape_cast %504 : vector<2x1x128xf32> to vector<2x128xf32>
    %c0_195 = arith.constant 0 : index
    %c0_196 = arith.constant 0 : index
    %506 = vector.load %arg18[%c0_195, %c0_196] : memref<1x128xf32, #tpu.memory_space<vmem>>, vector<1x128xf32>
    %c0_197 = arith.constant 0 : index
    %c0_198 = arith.constant 0 : index
    %507 = vector.load %arg19[%c0_197, %c0_198] : memref<1x128xf32, #tpu.memory_space<vmem>>, vector<1x128xf32>
    %cst_199 = arith.constant dense<0.000000e+00> : vector<2xf32>
    %508 = vector.multi_reduction <add>, %505, %cst_199 [1] : vector<2x128xf32> to vector<2xf32>
    %509 = vector.shape_cast %508 : vector<2xf32> to vector<2x1xf32>
    %cst_200 = arith.constant 1.280000e+02 : f32
    %510 = vector.broadcast %cst_200 : f32 to vector<2x1xf32>
    %511 = arith.divf %509, %510 : vector<2x1xf32>
    %512 = vector.broadcast %511 : vector<2x1xf32> to vector<2x128xf32>
    %513 = arith.subf %505, %512 : vector<2x128xf32>
    %514 = vector.broadcast %511 : vector<2x1xf32> to vector<2x128xf32>
    %515 = arith.subf %505, %514 : vector<2x128xf32>
    %516 = arith.mulf %513, %515 : vector<2x128xf32>
    %cst_201 = arith.constant dense<0.000000e+00> : vector<2xf32>
    %517 = vector.multi_reduction <add>, %516, %cst_201 [1] : vector<2x128xf32> to vector<2xf32>
    %518 = vector.shape_cast %517 : vector<2xf32> to vector<2x1xf32>
    %cst_202 = arith.constant 1.280000e+02 : f32
    %519 = vector.broadcast %cst_202 : f32 to vector<2x1xf32>
    %520 = arith.divf %518, %519 : vector<2x1xf32>
    %521 = vector.broadcast %511 : vector<2x1xf32> to vector<2x128xf32>
    %522 = arith.subf %505, %521 : vector<2x128xf32>
    %cst_203 = arith.constant 9.99999974E-6 : f32
    %523 = vector.broadcast %cst_203 : f32 to vector<2x1xf32>
    %524 = arith.addf %520, %523 : vector<2x1xf32>
    %525 = math.rsqrt %524 : vector<2x1xf32>
    %526 = vector.broadcast %525 : vector<2x1xf32> to vector<2x128xf32>
    %527 = arith.mulf %522, %526 : vector<2x128xf32>
    %528 = vector.broadcast %506 : vector<1x128xf32> to vector<2x128xf32>
    %529 = arith.mulf %527, %528 : vector<2x128xf32>
    %530 = vector.broadcast %507 : vector<1x128xf32> to vector<2x128xf32>
    %531 = arith.addf %529, %530 : vector<2x128xf32>
    %532 = arith.truncf %531 : vector<2x128xf32> to vector<2x128xbf16>
    %c0_204 = arith.constant 0 : index
    %c0_205 = arith.constant 0 : index
    %533 = vector.load %arg20[%c0_204, %c0_205] : memref<128x128xbf16, #tpu.memory_space<vmem>>, vector<128x128xbf16>
    %cst_206 = arith.constant dense<0.000000e+00> : vector<2x128xf32>
    %534 = tpu.matmul %532, %533, %cst_206 {dimension_numbers = #tpu.dot_dimension_numbers<[1], [0], [0], [1], [0, 0, 1, 1], [], []>} : vector<2x128xbf16>, vector<128x128xbf16>, vector<2x128xf32> -> vector<2x128xf32>
    %c0_207 = arith.constant 0 : index
    %c0_208 = arith.constant 0 : index
    %535 = vector.load %arg21[%c0_207, %c0_208] : memref<1x128xf32, #tpu.memory_space<vmem>>, vector<1x128xf32>
    %536 = vector.broadcast %535 : vector<1x128xf32> to vector<2x128xf32>
    %537 = arith.addf %534, %536 : vector<2x128xf32>
    %538 = vector.shape_cast %537 : vector<2x128xf32> to vector<1x2x128xf32>
    %c0_209 = arith.constant 0 : index
    %c0_210 = arith.constant 0 : index
    %c0_211 = arith.constant 0 : index
    %539 = vector.load %arg22[%c0_209, %c0_210, %c0_211] : memref<1x2x128xf32, #tpu.memory_space<vmem>>, vector<1x2x128xf32>
    tpu.vector_store %arg22[%c0_209, %c0_210, %c0_211], %538 {strides = array<i32>} : memref<1x2x128xf32, #tpu.memory_space<vmem>>, vector<1x2x128xf32>,
    return
  }
  func.func @transform_0(%arg0: i32) -> (i32, i32, i32) {
    %c0_i32 = arith.constant 0 : i32
    %c0_i32_0 = arith.constant 0 : i32
    %c0_i32_1 = arith.constant 0 : i32
    return %arg0, %c0_i32, %c0_i32_0 : i32, i32, i32
  }
  func.func @transform_1(%arg0: i32) -> (i32, i32) {
    %c0_i32 = arith.constant 0 : i32
    %c0_i32_0 = arith.constant 0 : i32
    %c0_i32_1 = arith.constant 0 : i32
    return %c0_i32, %c0_i32_0 : i32, i32
  }
  func.func @transform_2(%arg0: i32) -> (i32, i32) {
    %c0_i32 = arith.constant 0 : i32
    %c0_i32_0 = arith.constant 0 : i32
    %c0_i32_1 = arith.constant 0 : i32
    return %c0_i32, %c0_i32_0 : i32, i32
  }
  func.func @transform_3(%arg0: i32) -> (i32, i32) {
    %c0_i32 = arith.constant 0 : i32
    %c0_i32_0 = arith.constant 0 : i32
    %c0_i32_1 = arith.constant 0 : i32
    return %c0_i32, %c0_i32_0 : i32, i32
  }
  func.func @transform_4(%arg0: i32) -> (i32, i32) {
    %c0_i32 = arith.constant 0 : i32
    %c0_i32_0 = arith.constant 0 : i32
    %c0_i32_1 = arith.constant 0 : i32
    return %c0_i32, %c0_i32_0 : i32, i32
  }
  func.func @transform_5(%arg0: i32) -> (i32, i32, i32) {
    %c0_i32 = arith.constant 0 : i32
    %c0_i32_0 = arith.constant 0 : i32
    %c0_i32_1 = arith.constant 0 : i32
    %c0_i32_2 = arith.constant 0 : i32
    return %c0_i32, %c0_i32_0, %c0_i32_1 : i32, i32, i32
  }
  func.func @transform_6(%arg0: i32) -> (i32, i32, i32) {
    %c0_i32 = arith.constant 0 : i32
    %c0_i32_0 = arith.constant 0 : i32
    %c0_i32_1 = arith.constant 0 : i32
    %c0_i32_2 = arith.constant 0 : i32
    return %c0_i32, %c0_i32_0, %c0_i32_1 : i32, i32, i32
  }
  func.func @transform_7(%arg0: i32) -> (i32, i32, i32) {
    %c0_i32 = arith.constant 0 : i32
    %c0_i32_0 = arith.constant 0 : i32
    %c0_i32_1 = arith.constant 0 : i32
    %c0_i32_2 = arith.constant 0 : i32
    return %c0_i32, %c0_i32_0, %c0_i32_1 : i32, i32, i32
  }
  func.func @transform_8(%arg0: i32) -> (i32, i32, i32) {
    %c0_i32 = arith.constant 0 : i32
    %c0_i32_0 = arith.constant 0 : i32
    %c0_i32_1 = arith.constant 0 : i32
    %c0_i32_2 = arith.constant 0 : i32
    return %c0_i32, %c0_i32_0, %c0_i32_1 : i32, i32, i32
  }
  func.func @transform_9(%arg0: i32) -> (i32, i32, i32) {
    %c0_i32 = arith.constant 0 : i32
    %c0_i32_0 = arith.constant 0 : i32
    %c0_i32_1 = arith.constant 0 : i32
    %c0_i32_2 = arith.constant 0 : i32
    return %c0_i32, %c0_i32_0, %c0_i32_1 : i32, i32, i32
  }
  func.func @transform_10(%arg0: i32) -> (i32, i32, i32) {
    %c0_i32 = arith.constant 0 : i32
    %c0_i32_0 = arith.constant 0 : i32
    %c0_i32_1 = arith.constant 0 : i32
    %c0_i32_2 = arith.constant 0 : i32
    return %c0_i32, %c0_i32_0, %c0_i32_1 : i32, i32, i32
  }
  func.func @transform_11(%arg0: i32) -> (i32, i32, i32) {
    %c0_i32 = arith.constant 0 : i32
    %c0_i32_0 = arith.constant 0 : i32
    %c0_i32_1 = arith.constant 0 : i32
    %c0_i32_2 = arith.constant 0 : i32
    return %c0_i32, %c0_i32_0, %c0_i32_1 : i32, i32, i32
  }
  func.func @transform_12(%arg0: i32) -> (i32, i32, i32) {
    %c0_i32 = arith.constant 0 : i32
    %c0_i32_0 = arith.constant 0 : i32
    %c0_i32_1 = arith.constant 0 : i32
    %c0_i32_2 = arith.constant 0 : i32
    return %c0_i32, %c0_i32_0, %c0_i32_1 : i32, i32, i32
  }
  func.func @transform_13(%arg0: i32) -> (i32, i32, i32) {
    %c0_i32 = arith.constant 0 : i32
    %c0_i32_0 = arith.constant 0 : i32
    %c0_i32_1 = arith.constant 0 : i32
    %c0_i32_2 = arith.constant 0 : i32
    return %c0_i32, %c0_i32_0, %c0_i32_1 : i32, i32, i32
  }
  func.func @transform_14(%arg0: i32) -> (i32, i32, i32) {
    %c0_i32 = arith.constant 0 : i32
    %c0_i32_0 = arith.constant 0 : i32
    %c0_i32_1 = arith.constant 0 : i32
    %c0_i32_2 = arith.constant 0 : i32
    return %c0_i32, %c0_i32_0, %c0_i32_1 : i32, i32, i32
  }
  func.func @transform_15(%arg0: i32) -> (i32, i32, i32) {
    %c0_i32 = arith.constant 0 : i32
    %c0_i32_0 = arith.constant 0 : i32
    %c0_i32_1 = arith.constant 0 : i32
    %c0_i32_2 = arith.constant 0 : i32
    return %c0_i32, %c0_i32_0, %c0_i32_1 : i32, i32, i32
  }
  func.func @transform_16(%arg0: i32) -> (i32, i32, i32) {
    %c0_i32 = arith.constant 0 : i32
    %c0_i32_0 = arith.constant 0 : i32
    %c0_i32_1 = arith.constant 0 : i32
    %c0_i32_2 = arith.constant 0 : i32
    return %c0_i32, %c0_i32_0, %c0_i32_1 : i32, i32, i32
  }
  func.func @transform_17(%arg0: i32) -> (i32, i32) {
    %c0_i32 = arith.constant 0 : i32
    %c0_i32_0 = arith.constant 0 : i32
    %c0_i32_1 = arith.constant 0 : i32
    return %c0_i32, %c0_i32_0 : i32, i32
  }
  func.func @transform_18(%arg0: i32) -> (i32, i32) {
    %c0_i32 = arith.constant 0 : i32
    %c0_i32_0 = arith.constant 0 : i32
    %c0_i32_1 = arith.constant 0 : i32
    return %c0_i32, %c0_i32_0 : i32, i32
  }
  func.func @transform_19(%arg0: i32) -> (i32, i32) {
    %c0_i32 = arith.constant 0 : i32
    %c0_i32_0 = arith.constant 0 : i32
    %c0_i32_1 = arith.constant 0 : i32
    return %c0_i32, %c0_i32_0 : i32, i32
  }
  func.func @transform_20(%arg0: i32) -> (i32, i32) {
    %c0_i32 = arith.constant 0 : i32
    %c0_i32_0 = arith.constant 0 : i32
    %c0_i32_1 = arith.constant 0 : i32
    return %c0_i32, %c0_i32_0 : i32, i32
  }
  func.func @transform_21(%arg0: i32) -> (i32, i32, i32) {
    %c0_i32 = arith.constant 0 : i32
    %c0_i32_0 = arith.constant 0 : i32
    %c0_i32_1 = arith.constant 0 : i32
    return %arg0, %c0_i32, %c0_i32_0 : i32, i32, i32
  }
}

</mosaic_0001>

<llo_original>
// kernel: vit_forward.1
$region0: #{vit_forward.1}
  #allocation0 [shape = 'u32[]', space=smem, size = 0x4, offset = 0x4, fixed_abs, tag = 'smem constant byte address 0x4 - core index']
  #allocation1 [shape = 'u32[144,128]{1,0:T(1,128)}', space=vmem, size = 0x12000, scoped, tag = 'internal scratch']
  #allocation2 [shape = 'f32[2,24,128]{2,1,0:T(8,128)}', space=vmem, size = 0x6000, scoped, tag = 'scratch operand']
  %s0 = inlined_call_operand.vmem [shape: f32[2,16,192], index: 0, kind: input, shape index: {}]
  %s1 = inlined_call_operand.vmem [shape: bf16[192,128], index: 1, kind: input, shape index: {}]
  %s2 = inlined_call_operand.vmem [shape: f32[1,128], index: 2, kind: input, shape index: {}]
  %s3 = inlined_call_operand.vmem [shape: f32[1,128], index: 3, kind: input, shape index: {}]
  %s4 = inlined_call_operand.vmem [shape: f32[17,128], index: 4, kind: input, shape index: {}]
  %s5 = inlined_call_operand.vmem [shape: f32[2,1,128], index: 5, kind: input, shape index: {}]
  %s6 = inlined_call_operand.vmem [shape: f32[2,1,128], index: 6, kind: input, shape index: {}]
  %s7 = inlined_call_operand.vmem [shape: bf16[2,128,384], index: 7, kind: input, shape index: {}]
  %s8 = inlined_call_operand.vmem [shape: f32[2,1,384], index: 8, kind: input, shape index: {}]
  %s9 = inlined_call_operand.vmem [shape: bf16[2,128,128], index: 9, kind: input, shape index: {}]
  %s10 = inlined_call_operand.vmem [shape: f32[2,1,128], index: 10, kind: input, shape index: {}]
  %s11 = inlined_call_operand.vmem [shape: f32[2,1,128], index: 11, kind: input, shape index: {}]
  %s12 = inlined_call_operand.vmem [shape: f32[2,1,128], index: 12, kind: input, shape index: {}]
  %s13 = inlined_call_operand.vmem [shape: bf16[2,128,256], index: 13, kind: input, shape index: {}]
  %s14 = inlined_call_operand.vmem [shape: f32[2,1,256], index: 14, kind: input, shape index: {}]
  %s15 = inlined_call_operand.vmem [shape: bf16[2,256,128], index: 15, kind: input, shape index: {}]
  %s16 = inlined_call_operand.vmem [shape: f32[2,1,128], index: 16, kind: input, shape index: {}]
  %s17 = inlined_call_operand.vmem [shape: f32[1,128], index: 17, kind: input, shape index: {}]
  %s18 = inlined_call_operand.vmem [shape: f32[1,128], index: 18, kind: input, shape index: {}]
  %s19 = inlined_call_operand.vmem [shape: bf16[128,128], index: 19, kind: input, shape index: {}]
  %s20 = inlined_call_operand.vmem [shape: f32[1,128], index: 20, kind: input, shape index: {}]
  %s21 = inlined_call_operand.hbm [shape: f32[1,2,128], index: 21, kind: output, shape index: {}]
  %s22 = sld [smem:[#allocation0]]
  $region94: #{vit_forward.1} parent=0
    _
  %s24 = ssub.s32 1, %s22
  %s25 = scalar_select 0, %s24, %s22
  $region1: #{vit_forward.1} parent=0
    #allocation3 [shape = 'u8[1024]{0}', space=vmem, size = 0x400, scoped, tag = 'output window, operand 0, single buffered']
    #allocation4 [shape = 's32[1]{0}', space=sflag, size = 0x4, scoped, tag = 'scoped memory for vit_forward.1']
    %26 = vsyncpa [#allocation4], 0
    // Predicated region
    $region2: #{vit_forward.1} parent=1 // pred_check
      _
    $region3: #{vit_forward.1} parent=1 // pred_check_branch
      %28 = sbr.rel (0) target = $region5
    $region4: #{vit_forward.1} parent=1 // pred_region
      _
    $region5: #{vit_forward.1} parent=1 // pred_fallthru
      _
    // Predicated region
    $region6: #{vit_forward.1} parent=1 // pred_check
      _
    $region7: #{vit_forward.1} parent=1 // pred_check_branch
      %30 = sbr.rel (0) target = $region9
    $region8: #{vit_forward.1} parent=1 // pred_region
      _
    $region9: #{vit_forward.1} parent=1 // pred_fallthru
      _
    // Predicated region
    $region10: #{vit_forward.1} parent=1 // pred_check
      _
    $region11: #{vit_forward.1} parent=1 // pred_check_branch
      %32 = sbr.rel (0) target = $region13
    $region12: #{vit_forward.1} parent=1 // pred_region
      _
    $region13: #{vit_forward.1} parent=1 // pred_fallthru
      _
    // Predicated region
    $region14: #{vit_forward.1} parent=1 // pred_check
      _
    $region15: #{vit_forward.1} parent=1 // pred_check_branch
      %34 = sbr.rel (0) target = $region17
    $region16: #{vit_forward.1} parent=1 // pred_region
      _
    $region17: #{vit_forward.1} parent=1 // pred_fallthru
      _
    // Predicated region
    $region18: #{vit_forward.1} parent=1 // pred_check
      _
    $region19: #{vit_forward.1} parent=1 // pred_check_branch
      %36 = sbr.rel (0) target = $region21
    $region20: #{vit_forward.1} parent=1 // pred_region
      _
    $region21: #{vit_forward.1} parent=1 // pred_fallthru
      _
    // Predicated region
    $region22: #{vit_forward.1} parent=1 // pred_check
      _
    $region23: #{vit_forward.1} parent=1 // pred_check_branch
      %38 = sbr.rel (0) target = $region25
    $region24: #{vit_forward.1} parent=1 // pred_region
      _
    $region25: #{vit_forward.1} parent=1 // pred_fallthru
      _
    // Predicated region
    $region26: #{vit_forward.1} parent=1 // pred_check
      _
    $region27: #{vit_forward.1} parent=1 // pred_check_branch
      %40 = sbr.rel (0) target = $region29
    $region28: #{vit_forward.1} parent=1 // pred_region
      _
    $region29: #{vit_forward.1} parent=1 // pred_fallthru
      _
    // Predicated region
    $region30: #{vit_forward.1} parent=1 // pred_check
      _
    $region31: #{vit_forward.1} parent=1 // pred_check_branch
      %42 = sbr.rel (0) target = $region33
    $region32: #{vit_forward.1} parent=1 // pred_region
      _
    $region33: #{vit_forward.1} parent=1 // pred_fallthru
      _
    // Predicated region
    $region34: #{vit_forward.1} parent=1 // pred_check
      _
    $region35: #{vit_forward.1} parent=1 // pred_check_branch
      %44 = sbr.rel (0) target = $region37
    $region36: #{vit_forward.1} parent=1 // pred_region
      _
    $region37: #{vit_forward.1} parent=1 // pred_fallthru
      _
    // Predicated region
    $region38: #{vit_forward.1} parent=1 // pred_check
      _
    $region39: #{vit_forward.1} parent=1 // pred_check_branch
      %46 = sbr.rel (0) target = $region41
    $region40: #{vit_forward.1} parent=1 // pred_region
      _
    $region41: #{vit_forward.1} parent=1 // pred_fallthru
      _
    // Predicated region
    $region42: #{vit_forward.1} parent=1 // pred_check
      _
    $region43: #{vit_forward.1} parent=1 // pred_check_branch
      %48 = sbr.rel (0) target = $region45
    $region44: #{vit_forward.1} parent=1 // pred_region
      _
    $region45: #{vit_forward.1} parent=1 // pred_fallthru
      _
    // Predicated region
    $region46: #{vit_forward.1} parent=1 // pred_check
      _
    $region47: #{vit_forward.1} parent=1 // pred_check_branch
      %50 = sbr.rel (0) target = $region49
    $region48: #{vit_forward.1} parent=1 // pred_region
      _
    $region49: #{vit_forward.1} parent=1 // pred_fallthru
      _
    // Predicated region
    $region50: #{vit_forward.1} parent=1 // pred_check
      _
    $region51: #{vit_forward.1} parent=1 // pred_check_branch
      %52 = sbr.rel (0) target = $region53
    $region52: #{vit_forward.1} parent=1 // pred_region
      _
    $region53: #{vit_forward.1} parent=1 // pred_fallthru
      _
    // Predicated region
    $region54: #{vit_forward.1} parent=1 // pred_check
      _
    $region55: #{vit_forward.1} parent=1 // pred_check_branch
      %54 = sbr.rel (0) target = $region57
    $region56: #{vit_forward.1} parent=1 // pred_region
      _
    $region57: #{vit_forward.1} parent=1 // pred_fallthru
      _
    // Predicated region
    $region58: #{vit_forward.1} parent=1 // pred_check
      _
    $region59: #{vit_forward.1} parent=1 // pred_check_branch
      %56 = sbr.rel (0) target = $region61
    $region60: #{vit_forward.1} parent=1 // pred_region
      _
    $region61: #{vit_forward.1} parent=1 // pred_fallthru
      _
    // Predicated region
    $region62: #{vit_forward.1} parent=1 // pred_check
      _
    $region63: #{vit_forward.1} parent=1 // pred_check_branch
      %58 = sbr.rel (0) target = $region65
    $region64: #{vit_forward.1} parent=1 // pred_region
      _
    $region65: #{vit_forward.1} parent=1 // pred_fallthru
      _
    // Predicated region
    $region66: #{vit_forward.1} parent=1 // pred_check
      _
    $region67: #{vit_forward.1} parent=1 // pred_check_branch
      %60 = sbr.rel (0) target = $region69
    $region68: #{vit_forward.1} parent=1 // pred_region
      _
    $region69: #{vit_forward.1} parent=1 // pred_fallthru
      _
    // Predicated region
    $region70: #{vit_forward.1} parent=1 // pred_check
      _
    $region71: #{vit_forward.1} parent=1 // pred_check_branch
      %62 = sbr.rel (0) target = $region73
    $region72: #{vit_forward.1} parent=1 // pred_region
      _
    $region73: #{vit_forward.1} parent=1 // pred_fallthru
      _
    // Predicated region
    $region74: #{vit_forward.1} parent=1 // pred_check
      _
    $region75: #{vit_forward.1} parent=1 // pred_check_branch
      %64 = sbr.rel (0) target = $region77
    $region76: #{vit_forward.1} parent=1 // pred_region
      _
    $region77: #{vit_forward.1} parent=1 // pred_fallthru
      _
    // Predicated region
    $region78: #{vit_forward.1} parent=1 // pred_check
      _
    $region79: #{vit_forward.1} parent=1 // pred_check_branch
      %66 = sbr.rel (0) target = $region81
    $region80: #{vit_forward.1} parent=1 // pred_region
      _
    $region81: #{vit_forward.1} parent=1 // pred_fallthru
      _
    // Predicated region
    $region82: #{vit_forward.1} parent=1 // pred_check
      _
    $region83: #{vit_forward.1} parent=1 // pred_check_branch
      %68 = sbr.rel (0) target = $region85
    $region84: #{vit_forward.1} parent=1 // pred_region
      _
    $region85: #{vit_forward.1} parent=1 // pred_fallthru
      _
    %v70 = vld [vmem:[%s0] sm:$0xff]
    %v71 = vld [vmem:[%s0 + $0x8] sm:$0xff]
    %v72 = vld [vmem:[%s0 + $0x10] sm:$0xff]
    %v73 = vld [vmem:[%s0 + $0x18] sm:$0xff]
    %v74 = vld [vmem:[%s0 + $0x20] sm:$0xff]
    %v75 = vld [vmem:[%s0 + $0x28] sm:$0xff]
    %v76 = vld [vmem:[%s0 + $0x30] sm:$0xff]
    %v77 = vld [vmem:[%s0 + $0x38] sm:$0xff]
    %v78 = vpack.c.bf16 %v72, %v70
    %v79 = vpack.c.bf16 %v73, %v71
    %v80 = vpack.c.bf16 %v76, %v74
    %v81 = vpack.c.bf16 %v77, %v75
    %v82 = vld [vmem:[%s1] sm:$0xf]
    %v83 = vld [vmem:[%s1 + $0x4] sm:$0xf]
    %v84 = vld [vmem:[%s1 + $0x8] sm:$0xf]
    %v85 = vld [vmem:[%s1 + $0xc] sm:$0xf]
    %v86 = vld [vmem:[%s1 + $0x10] sm:$0xf]
    %v87 = vld [vmem:[%s1 + $0x14] sm:$0xf]
    %v88 = vld [vmem:[%s1 + $0x18] sm:$0xf]
    %v89 = vld [vmem:[%s1 + $0x1c] sm:$0xf]
    %v90 = vld [vmem:[%s1 + $0x20] sm:$0xf]
    %v91 = vld [vmem:[%s1 + $0x24] sm:$0xf]
    %v92 = vld [vmem:[%s1 + $0x28] sm:$0xf]
    %v93 = vld [vmem:[%s1 + $0x2c] sm:$0xf]
    %v94 = vld [vmem:[%s1 + $0x30] sm:$0xf]
    %v95 = vld [vmem:[%s1 + $0x34] sm:$0xf]
    %v96 = vld [vmem:[%s1 + $0x38] sm:$0xf]
    %v97 = vld [vmem:[%s1 + $0x3c] sm:$0xf]
    %v98 = vld [vmem:[%s1 + $0x40] sm:$0xf]
    %v99 = vld [vmem:[%s1 + $0x44] sm:$0xf]
    %v100 = vld [vmem:[%s1 + $0x48] sm:$0xf]
    %v101 = vld [vmem:[%s1 + $0x4c] sm:$0xf]
    %v102 = vld [vmem:[%s1 + $0x50] sm:$0xf]
    %v103 = vld [vmem:[%s1 + $0x54] sm:$0xf]
    %v104 = vld [vmem:[%s1 + $0x58] sm:$0xf]
    %v105 = vld [vmem:[%s1 + $0x5c] sm:$0xf]
    %v106 = vld [vmem:[%s2] sm:$0x1]
    %v108 = vlaneseq
    %v109 = vshrl.u32 %v108, 7
    %v110 = vsub.s32 0, %v109
    %v111 = vrot.slane %v106, %v110
    %v137 = vunpack.c.l.b16 %v82
    %v138 = vunpack.c.l.b16 %v83
    %v139 = vunpack.c.l.b16 %v84
    %v140 = vunpack.c.l.b16 %v85
    %v141 = vunpack.c.l.b16 %v86
    %v142 = vunpack.c.l.b16 %v87
    %v143 = vunpack.c.l.b16 %v88
    %v144 = vunpack.c.l.b16 %v89
    %v145 = vunpack.c.l.b16 %v90
    %v146 = vunpack.c.l.b16 %v91
    %v147 = vunpack.c.l.b16 %v92
    %v148 = vunpack.c.l.b16 %v93
    %v149 = vunpack.c.l.b16 %v94
    %v150 = vunpack.c.l.b16 %v95
    %v151 = vunpack.c.l.b16 %v96
    %v152 = vunpack.c.l.b16 %v97
    %v153 = vunpack.c.l.b16 %v98
    %v154 = vunpack.c.l.b16 %v99
    %v155 = vunpack.c.l.b16 %v100
    %v156 = vunpack.c.l.b16 %v101
    %v157 = vunpack.c.l.b16 %v102
    %v158 = vunpack.c.l.b16 %v103
    %v159 = vunpack.c.l.b16 %v104
    %v160 = vunpack.c.l.b16 %v105
    %v161 = vpack.c.b16 %v138, %v137
    %v162 = vpack.c.b16 %v140, %v139
    %v163 = vpack.c.b16 %v142, %v141
    %v164 = vpack.c.b16 %v144, %v143
    %v165 = vpack.c.b16 %v146, %v145
    %v166 = vpack.c.b16 %v148, %v147
    %v167 = vpack.c.b16 %v150, %v149
    %v168 = vpack.c.b16 %v152, %v151
    %v169 = vpack.c.b16 %v154, %v153
    %v170 = vpack.c.b16 %v156, %v155
    %v171 = vpack.c.b16 %v158, %v157
    %v172 = vpack.c.b16 %v160, %v159
    %vm185 = vcmask 523264
    %v187 = vsel %vm185, %v79, 0
    %v190 = vsel %vm185, %v81, 0
    %192 = vmatprep.subr.bf16.mxu0 0
    %193 = vmatpush1.bf16.msra.mxu0 %v161
    %194 = vmatprep.subr.bf16.mxu0 0
    %195 = vmatpush1.bf16.msra.mxu0 %v162
    %196 = vmatprep.subr.bf16.mxu0 0
    %197 = vmatpush1.bf16.msra.mxu0 %v163
    %198 = vmatprep.subr.bf16.mxu0 0
    %199 = vmatpush1.bf16.msra.mxu0 %v164
    %200 = vmatprep.subr.bf16.mxu0 0
    %201 = vmatpush1.bf16.msra.mxu0 %v165
    %202 = vmatprep.subr.bf16.mxu0 0
    %203 = vmatpush1.bf16.msra.mxu0 %v166
    %204 = vmatprep.subr.bf16.mxu0 0
    %205 = vmatpush1.bf16.msra.mxu0 %v167
    %206 = vmatprep.subr.bf16.mxu0 0
    %207 = vmatpush1.bf16.msra.mxu0 %v168
    %208 = vmatprep.subr.bf16.mxu0 0
    %209 = vmatpush1.bf16.msra.mxu0 %v169
    %210 = vmatprep.subr.bf16.mxu0 0
    %211 = vmatpush1.bf16.msra.mxu0 %v170
    %212 = vmatprep.subr.bf16.mxu0 0
    %213 = vmatpush1.bf16.msra.mxu0 %v171
    %214 = vmatprep.subr.bf16.mxu0 0
    %215 = vmatpush1.bf16.msra.mxu0 %v172
    %216 = vmatprep.subr.bf16.mxu0 0
    %217 = vmatpush1.bf16.msra.mxu0 0
    %218 = vmatprep.subr.bf16.mxu0 0
    %219 = vmatpush1.bf16.msra.mxu0 0
    %220 = vmatprep.subr.bf16.mxu0 0
    %221 = vmatpush1.bf16.msra.mxu0 0
    %222 = vmatprep.subr.bf16.mxu0 0
    %223 = vmatpush1.bf16.msra.mxu0 0
    %224 = vmatprep.mubr.bf16.mxu0 %v187
    %225 = vmatmul.mubr.bf16.gmra.mrb[0].mxu0 %v78
    %v226 = vpop.f32.mrb[0].mxu0
    %v227 = vadd.f32 %v111, %v226
    %v228 = vpop.f32.mrb[0].mxu0
    %v229 = vpop.f32.mrb[0].mxu0
    %v230 = vadd.f32 %v111, %v229
    %v231 = vpop.f32.mrb[0].mxu0
    %232 = vmatprep.mubr.bf16.mxu0 %v190
    %233 = vmatmul.mubr.bf16.gmra.mrb[0].mxu0 %v80
    %v234 = vpop.f32.mrb[0].mxu0
    %v235 = vadd.f32 %v111, %v234
    %v236 = vpop.f32.mrb[0].mxu0
    %v237 = vpop.f32.mrb[0].mxu0
    %v238 = vadd.f32 %v111, %v237
    %v239 = vpop.f32.mrb[0].mxu0
    %240 = vdwg.mxu0
    %241 = vst [vmem:[#allocation2 + $0x11] sm:$0x7f] 0.0
    %242 = vst [vmem:[#allocation2 + $0x29] sm:$0x7f] 0.0
    %v243 = vld [vmem:[%s3] sm:$0x1]
    %v244 = vld [vmem:[%s4] sm:$0x1]
    %v245 = vadd.f32 %v243, %v244
    %246 = vst [vmem:[#allocation2] sm:$0x1] %v245
    %247 = vst [vmem:[#allocation2 + $0x18] sm:$0x1] %v245
    %v248 = vld [vmem:[%s4 + $0x1] sm:$0xff]
    %v249 = vld [vmem:[%s4 + $0x9] sm:$0xff]
    %v250 = vadd.f32 %v227, %v248
    %v251 = vadd.f32 %v230, %v249
    %v252 = vadd.f32 %v235, %v248
    %v253 = vadd.f32 %v238, %v249
    %254 = vst [vmem:[#allocation2 + $0x1] sm:$0xff] %v250
    %255 = vst [vmem:[#allocation2 + $0x9] sm:$0xff] %v251
    %256 = vst [vmem:[#allocation2 + $0x19] sm:$0xff] %v252
    %257 = vst [vmem:[#allocation2 + $0x21] sm:$0xff] %v253
    %v258 = vld [vmem:[#allocation2] sm:$0xff]
    %v259 = vld [vmem:[#allocation2 + $0x8] sm:$0xff]
    %v260 = vld [vmem:[#allocation2 + $0x10] sm:$0xff]
    %v261 = vld [vmem:[#allocation2 + $0x18] sm:$0xff]
    %v262 = vld [vmem:[#allocation2 + $0x20] sm:$0xff]
    %v263 = vld [vmem:[#allocation2 + $0x28] sm:$0xff]
    %v264 = vlaneseq
    %v265 = vand.u32 %v264, 127
    %vm266 = vcmp.lt.s32.totalorder %v265, 17
    %v267 = vsel %vm266, 0.0, -1e+30
    %v268 = vld [vmem:[%s5] sm:$0x1]
    %v269 = vld [vmem:[%s6] sm:$0x1]
    %270 = vadd.xlane.f32.xlu0 %v258
    %v271 = vpop.xlane.xlu0 %270
    %272 = vadd.xlane.f32.xlu0 %v259
    %v273 = vpop.xlane.xlu0 %272
    %274 = vadd.xlane.f32.xlu0 %v260
    %v275 = vpop.xlane.xlu0 %274
    %276 = vadd.xlane.f32.xlu0 %v261
    %v277 = vpop.xlane.xlu0 %276
    %278 = vadd.xlane.f32.xlu0 %v262
    %v279 = vpop.xlane.xlu0 %278
    %280 = vadd.xlane.f32.xlu0 %v263
    %v281 = vpop.xlane.xlu0 %280
    %v282 = vrcp.pop 128.0
    %v283 = vmul.f32 %v271, %v282
    %v284 = vmul.f32 %v273, %v282
    %v285 = vmul.f32 %v275, %v282
    %v286 = vmul.f32 %v277, %v282
    %v287 = vmul.f32 %v279, %v282
    %v288 = vmul.f32 %v281, %v282
    %v289 = vsub.f32 %v258, %v283
    %v290 = vsub.f32 %v259, %v284
    %v291 = vsub.f32 %v260, %v285
    %v292 = vsub.f32 %v261, %v286
    %v293 = vsub.f32 %v262, %v287
    %v294 = vsub.f32 %v263, %v288
    %v295 = vmul.f32 %v289, %v289
    %v296 = vmul.f32 %v290, %v290
    %v297 = vmul.f32 %v291, %v291
    %v298 = vmul.f32 %v292, %v292
    %v299 = vmul.f32 %v293, %v293
    %v300 = vmul.f32 %v294, %v294
    %301 = vadd.xlane.f32.xlu0 %v295
    %v302 = vpop.xlane.xlu0 %301
    %303 = vadd.xlane.f32.xlu0 %v296
    %v304 = vpop.xlane.xlu0 %303
    %305 = vadd.xlane.f32.xlu0 %v297
    %v306 = vpop.xlane.xlu0 %305
    %307 = vadd.xlane.f32.xlu0 %v298
    %v308 = vpop.xlane.xlu0 %307
    %309 = vadd.xlane.f32.xlu0 %v299
    %v310 = vpop.xlane.xlu0 %309
    %311 = vadd.xlane.f32.xlu0 %v300
    %v312 = vpop.xlane.xlu0 %311
    %v313 = vmul.f32 %v302, %v282
    %v314 = vmul.f32 %v304, %v282
    %v315 = vmul.f32 %v306, %v282
    %v316 = vmul.f32 %v308, %v282
    %v317 = vmul.f32 %v310, %v282
    %v318 = vmul.f32 %v312, %v282
    %v319 = vadd.f32 %v313, 1e-05
    %v320 = vadd.f32 %v314, 1e-05
    %v321 = vadd.f32 %v315, 1e-05
    %v322 = vadd.f32 %v316, 1e-05
    %v323 = vadd.f32 %v317, 1e-05
    %v324 = vadd.f32 %v318, 1e-05
    %v325 = vrsqrt.pop %v319
    %v326 = vrsqrt.pop %v320
    %v327 = vrsqrt.pop %v321
    %v328 = vrsqrt.pop %v322
    %v329 = vrsqrt.pop %v323
    %v330 = vrsqrt.pop %v324
    %v331 = vmul.f32 %v289, %v325
    %v332 = vmul.f32 %v290, %v326
    %v333 = vmul.f32 %v291, %v327
    %v334 = vmul.f32 %v292, %v328
    %v335 = vmul.f32 %v293, %v329
    %v336 = vmul.f32 %v294, %v330
    %v338 = vlaneseq
    %v339 = vshrl.u32 %v338, 7
    %v340 = vsub.s32 0, %v339
    %v341 = vrot.slane %v268, %v340
    %v343 = vmul.f32 %v331, %v341
    %v344 = vmul.f32 %v332, %v341
    %v345 = vmul.f32 %v333, %v341
    %v346 = vmul.f32 %v334, %v341
    %v347 = vmul.f32 %v335, %v341
    %v348 = vmul.f32 %v336, %v341
    %v350 = vlaneseq
    %v351 = vshrl.u32 %v350, 7
    %v352 = vsub.s32 0, %v351
    %v353 = vrot.slane %v269, %v352
    %v355 = vadd.f32 %v343, %v353
    %v356 = vadd.f32 %v344, %v353
    %v357 = vadd.f32 %v345, %v353
    %v358 = vadd.f32 %v346, %v353
    %v359 = vadd.f32 %v347, %v353
    %v360 = vadd.f32 %v348, %v353
    %v361 = vpack.c.bf16 %v356, %v355
    %v362 = vpack.c.bf16 %v358, %v357
    %v363 = vpack.c.bf16 %v360, %v359
    %v364 = vld [vmem:[%s7] sm:$0xff]
    %v365 = vld [vmem:[%s7 + $0x8] sm:$0xf]
    %v366 = vld [vmem:[%s7 + $0xc] sm:$0xff]
    %v367 = vld [vmem:[%s7 + $0x14] sm:$0xf]
    %v368 = vld [vmem:[%s7 + $0x18] sm:$0xff]
    %v369 = vld [vmem:[%s7 + $0x20] sm:$0xf]
    %v370 = vld [vmem:[%s7 + $0x24] sm:$0xff]
    %v371 = vld [vmem:[%s7 + $0x2c] sm:$0xf]
    %v372 = vld [vmem:[%s7 + $0x30] sm:$0xff]
    %v373 = vld [vmem:[%s7 + $0x38] sm:$0xf]
    %v374 = vld [vmem:[%s7 + $0x3c] sm:$0xff]
    %v375 = vld [vmem:[%s7 + $0x44] sm:$0xf]
    %v376 = vld [vmem:[%s7 + $0x48] sm:$0xff]
    %v377 = vld [vmem:[%s7 + $0x50] sm:$0xf]
    %v378 = vld [vmem:[%s7 + $0x54] sm:$0xff]
    %v379 = vld [vmem:[%s7 + $0x5c] sm:$0xf]
    %v380 = vld [vmem:[%s7 + $0x60] sm:$0xff]
    %v381 = vld [vmem:[%s7 + $0x68] sm:$0xf]
    %v382 = vld [vmem:[%s7 + $0x6c] sm:$0xff]
    %v383 = vld [vmem:[%s7 + $0x74] sm:$0xf]
    %v384 = vld [vmem:[%s7 + $0x78] sm:$0xff]
    %v385 = vld [vmem:[%s7 + $0x80] sm:$0xf]
    %v386 = vld [vmem:[%s7 + $0x84] sm:$0xff]
    %v387 = vld [vmem:[%s7 + $0x8c] sm:$0xf]
    %v388 = vld [vmem:[%s7 + $0x90] sm:$0xff]
    %v389 = vld [vmem:[%s7 + $0x98] sm:$0xf]
    %v390 = vld [vmem:[%s7 + $0x9c] sm:$0xff]
    %v391 = vld [vmem:[%s7 + $0xa4] sm:$0xf]
    %v392 = vld [vmem:[%s7 + $0xa8] sm:$0xff]
    %v393 = vld [vmem:[%s7 + $0xb0] sm:$0xf]
    %v394 = vld [vmem:[%s7 + $0xb4] sm:$0xff]
    %v395 = vld [vmem:[%s7 + $0xbc] sm:$0xf]
    %v396 = vld [vmem:[%s8] sm:$0x7]
    %v398 = vlaneseq
    %v399 = vshrl.u32 %v398, 7
    %v400 = vsub.s32 0, %v399
    %v401 = vrot.slane %v396, %v400
    %v402 = vlaneseq
    %v403 = vshrl.u32 %v402, 7
    %v404 = vsub.s32 1, %v403
    %v405 = vrot.slane %v396, %v404
    %v406 = vlaneseq
    %v407 = vshrl.u32 %v406, 7
    %v408 = vsub.s32 2, %v407
    %v409 = vrot.slane %v396, %v408
    %v445 = vunpack.c.l.b16 %v364
    %v446 = vunpack.c.h.b16 %v364
    %v447 = vunpack.c.l.b16 %v365
    %v448 = vunpack.c.l.b16 %v366
    %v449 = vunpack.c.h.b16 %v366
    %v450 = vunpack.c.l.b16 %v367
    %v451 = vunpack.c.l.b16 %v368
    %v452 = vunpack.c.h.b16 %v368
    %v453 = vunpack.c.l.b16 %v369
    %v454 = vunpack.c.l.b16 %v370
    %v455 = vunpack.c.h.b16 %v370
    %v456 = vunpack.c.l.b16 %v371
    %v457 = vunpack.c.l.b16 %v372
    %v458 = vunpack.c.h.b16 %v372
    %v459 = vunpack.c.l.b16 %v373
    %v460 = vunpack.c.l.b16 %v374
    %v461 = vunpack.c.h.b16 %v374
    %v462 = vunpack.c.l.b16 %v375
    %v463 = vunpack.c.l.b16 %v376
    %v464 = vunpack.c.h.b16 %v376
    %v465 = vunpack.c.l.b16 %v377
    %v466 = vunpack.c.l.b16 %v378
    %v467 = vunpack.c.h.b16 %v378
    %v468 = vunpack.c.l.b16 %v379
    %v469 = vunpack.c.l.b16 %v380
    %v470 = vunpack.c.h.b16 %v380
    %v471 = vunpack.c.l.b16 %v381
    %v472 = vunpack.c.l.b16 %v382
    %v473 = vunpack.c.h.b16 %v382
    %v474 = vunpack.c.l.b16 %v383
    %v475 = vunpack.c.l.b16 %v384
    %v476 = vunpack.c.h.b16 %v384
    %v477 = vunpack.c.l.b16 %v385
    %v478 = vunpack.c.l.b16 %v386
    %v479 = vunpack.c.h.b16 %v386
    %v480 = vunpack.c.l.b16 %v387
    %v481 = vunpack.c.l.b16 %v388
    %v482 = vunpack.c.h.b16 %v388
    %v483 = vunpack.c.l.b16 %v389
    %v484 = vunpack.c.l.b16 %v390
    %v485 = vunpack.c.h.b16 %v390
    %v486 = vunpack.c.l.b16 %v391
    %v487 = vunpack.c.l.b16 %v392
    %v488 = vunpack.c.h.b16 %v392
    %v489 = vunpack.c.l.b16 %v393
    %v490 = vunpack.c.l.b16 %v394
    %v491 = vunpack.c.h.b16 %v394
    %v492 = vunpack.c.l.b16 %v395
    %v493 = vpack.c.b16 %v448, %v445
    %v494 = vpack.c.b16 %v449, %v446
    %v495 = vpack.c.b16 %v450, %v447
    %v496 = vpack.c.b16 %v454, %v451
    %v497 = vpack.c.b16 %v455, %v452
    %v498 = vpack.c.b16 %v456, %v453
    %v499 = vpack.c.b16 %v460, %v457
    %v500 = vpack.c.b16 %v461, %v458
    %v501 = vpack.c.b16 %v462, %v459
    %v502 = vpack.c.b16 %v466, %v463
    %v503 = vpack.c.b16 %v467, %v464
    %v504 = vpack.c.b16 %v468, %v465
    %v505 = vpack.c.b16 %v472, %v469
    %v506 = vpack.c.b16 %v473, %v470
    %v507 = vpack.c.b16 %v474, %v471
    %v508 = vpack.c.b16 %v478, %v475
    %v509 = vpack.c.b16 %v479, %v476
    %v510 = vpack.c.b16 %v480, %v477
    %v511 = vpack.c.b16 %v484, %v481
    %v512 = vpack.c.b16 %v485, %v482
    %v513 = vpack.c.b16 %v486, %v483
    %v514 = vpack.c.b16 %v490, %v487
    %v515 = vpack.c.b16 %v491, %v488
    %v516 = vpack.c.b16 %v492, %v489
    %541 = vmatprep.subr.bf16.mxu0 %v494
    %542 = vmatpush1.bf16.msra.mxu0 %v493
    %543 = vmatprep.subr.bf16.mxu0 %v497
    %544 = vmatpush1.bf16.msra.mxu0 %v496
    %545 = vmatprep.subr.bf16.mxu0 %v500
    %546 = vmatpush1.bf16.msra.mxu0 %v499
    %547 = vmatprep.subr.bf16.mxu0 %v503
    %548 = vmatpush1.bf16.msra.mxu0 %v502
    %549 = vmatprep.subr.bf16.mxu0 %v506
    %550 = vmatpush1.bf16.msra.mxu0 %v505
    %551 = vmatprep.subr.bf16.mxu0 %v509
    %552 = vmatpush1.bf16.msra.mxu0 %v508
    %553 = vmatprep.subr.bf16.mxu0 %v512
    %554 = vmatpush1.bf16.msra.mxu0 %v511
    %555 = vmatprep.subr.bf16.mxu0 %v515
    %556 = vmatpush1.bf16.msra.mxu0 %v514
    %557 = vmatprep.subr.bf16.mxu0 0
    %558 = vmatpush1.bf16.msra.mxu0 0
    %559 = vmatprep.subr.bf16.mxu0 0
    %560 = vmatpush1.bf16.msra.mxu0 0
    %561 = vmatprep.subr.bf16.mxu0 0
    %562 = vmatpush1.bf16.msra.mxu0 0
    %563 = vmatprep.subr.bf16.mxu0 0
    %564 = vmatpush1.bf16.msra.mxu0 0
    %565 = vmatprep.subr.bf16.mxu0 0
    %566 = vmatpush1.bf16.msra.mxu0 0
    %567 = vmatprep.subr.bf16.mxu0 0
    %568 = vmatpush1.bf16.msra.mxu0 0
    %569 = vmatprep.subr.bf16.mxu0 0
    %570 = vmatpush1.bf16.msra.mxu0 0
    %571 = vmatprep.subr.bf16.mxu0 0
    %572 = vmatpush1.bf16.msra.mxu0 0
    %573 = vmatprep.mubr.bf16.mxu0 0
    %574 = vmatmul.mubr.bf16.gmra.mrb[0].mxu0 %v361
    %v575 = vpop.f32.mrb[0].mxu0
    %v576 = vadd.f32 %v401, %v575
    %v577 = vpop.f32.mrb[0].mxu0
    %v578 = vadd.f32 %v405, %v577
    %v579 = vpop.f32.mrb[0].mxu0
    %v580 = vadd.f32 %v401, %v579
    %v581 = vpop.f32.mrb[0].mxu0
    %v582 = vadd.f32 %v405, %v581
    %583 = vmatprep.mubr.bf16.mxu0 0
    %584 = vmatmul.mubr.bf16.gmra.mrb[0].mxu0 %v362
    %v585 = vpop.f32.mrb[0].mxu0
    %v586 = vadd.f32 %v401, %v585
    %v587 = vpop.f32.mrb[0].mxu0
    %v588 = vadd.f32 %v405, %v587
    %v589 = vpop.f32.mrb[0].mxu0
    %v590 = vadd.f32 %v401, %v589
    %v591 = vpop.f32.mrb[0].mxu0
    %v592 = vadd.f32 %v405, %v591
    %593 = vmatprep.mubr.bf16.mxu0 0
    %594 = vmatmul.mubr.bf16.gmra.mrb[0].mxu0 %v363
    %v595 = vpop.f32.mrb[0].mxu0
    %v596 = vadd.f32 %v401, %v595
    %v597 = vpop.f32.mrb[0].mxu0
    %v598 = vadd.f32 %v405, %v597
    %v599 = vpop.f32.mrb[0].mxu0
    %v600 = vadd.f32 %v401, %v599
    %v601 = vpop.f32.mrb[0].mxu0
    %v602 = vadd.f32 %v405, %v601
    %603 = vdwg.mxu0
    %604 = vmatprep.subr.bf16.mxu0 0
    %605 = vmatpush1.bf16.msra.mxu0 %v495
    %606 = vmatprep.subr.bf16.mxu0 0
    %607 = vmatpush1.bf16.msra.mxu0 %v498
    %608 = vmatprep.subr.bf16.mxu0 0
    %609 = vmatpush1.bf16.msra.mxu0 %v501
    %610 = vmatprep.subr.bf16.mxu0 0
    %611 = vmatpush1.bf16.msra.mxu0 %v504
    %612 = vmatprep.subr.bf16.mxu0 0
    %613 = vmatpush1.bf16.msra.mxu0 %v507
    %614 = vmatprep.subr.bf16.mxu0 0
    %615 = vmatpush1.bf16.msra.mxu0 %v510
    %616 = vmatprep.subr.bf16.mxu0 0
    %617 = vmatpush1.bf16.msra.mxu0 %v513
    %618 = vmatprep.subr.bf16.mxu0 0
    %619 = vmatpush1.bf16.msra.mxu0 %v516
    %620 = vmatprep.subr.bf16.mxu0 0
    %621 = vmatpush1.bf16.msra.mxu0 0
    %622 = vmatprep.subr.bf16.mxu0 0
    %623 = vmatpush1.bf16.msra.mxu0 0
    %624 = vmatprep.subr.bf16.mxu0 0
    %625 = vmatpush1.bf16.msra.mxu0 0
    %626 = vmatprep.subr.bf16.mxu0 0
    %627 = vmatpush1.bf16.msra.mxu0 0
    %628 = vmatprep.subr.bf16.mxu0 0
    %629 = vmatpush1.bf16.msra.mxu0 0
    %630 = vmatprep.subr.bf16.mxu0 0
    %631 = vmatpush1.bf16.msra.mxu0 0
    %632 = vmatprep.subr.bf16.mxu0 0
    %633 = vmatpush1.bf16.msra.mxu0 0
    %634 = vmatprep.subr.bf16.mxu0 0
    %635 = vmatpush1.bf16.msra.mxu0 0
    %636 = vmatprep.mubr.bf16.mxu0 0
    %637 = vmatmul.mubr.bf16.gmra.mrb[0].mxu0 %v361
    %v638 = vpop.f32.mrb[0].mxu0
    %v639 = vadd.f32 %v409, %v638
    %v640 = vpop.f32.mrb[0].mxu0
    %v641 = vpop.f32.mrb[0].mxu0
    %v642 = vadd.f32 %v409, %v641
    %v643 = vpop.f32.mrb[0].mxu0
    %644 = vmatprep.mubr.bf16.mxu0 0
    %645 = vmatmul.mubr.bf16.gmra.mrb[0].mxu0 %v362
    %v646 = vpop.f32.mrb[0].mxu0
    %v647 = vadd.f32 %v409, %v646
    %v648 = vpop.f32.mrb[0].mxu0
    %v649 = vpop.f32.mrb[0].mxu0
    %v650 = vadd.f32 %v409, %v649
    %v651 = vpop.f32.mrb[0].mxu0
    %652 = vmatprep.mubr.bf16.mxu0 0
    %653 = vmatmul.mubr.bf16.gmra.mrb[0].mxu0 %v363
    %v654 = vpop.f32.mrb[0].mxu0
    %v655 = vadd.f32 %v409, %v654
    %v656 = vpop.f32.mrb[0].mxu0
    %v657 = vpop.f32.mrb[0].mxu0
    %v658 = vadd.f32 %v409, %v657
    %v659 = vpop.f32.mrb[0].mxu0
    %660 = vdwg.mxu0
    %v661 = vpack.c.bf16 %v580, %v576
    %v662 = vpack.c.bf16 %v586, %v586
    %v663 = vpack.c.bf16 %v596, %v590
    %v664 = vpack.c.bf16 %v600, %v600
    %v665 = vpack.c.bf16 %v582, %v578
    %v666 = vpack.c.bf16 %v588, %v588
    %v667 = vpack.c.bf16 %v598, %v592
    %v668 = vpack.c.bf16 %v602, %v602
    %v669 = vpack.c.bf16 %v642, %v639
    %v670 = vpack.c.bf16 %v647, %v647
    %v671 = vpack.c.bf16 %v655, %v650
    %v672 = vpack.c.bf16 %v658, %v658
    %vm673 = vcmask 261120
    %v675 = vsel %vm673, %v661, 0
    %v678 = vsel %vm673, %v662, 0
    %v681 = vsel %vm673, %v665, 0
    %v684 = vsel %vm673, %v666, 0
    %686 = vmatprep.subr.bf16.mxu0 0
    %687 = vmatpush1.bf16.xpose.msra.mxu0 %v681
    %688 = vmatprep.subr.bf16.mxu0 0
    %689 = vmatpush1.bf16.xpose.msra.mxu0 %v684
    %690 = vmatprep.subr.bf16.mxu0 0
    %691 = vmatpush1.bf16.xpose.msra.mxu0 0
    %692 = vmatprep.subr.bf16.mxu0 0
    %693 = vmatpush1.bf16.xpose.msra.mxu0 0
    %694 = vmatprep.subr.bf16.mxu0 0
    %695 = vmatpush1.bf16.xpose.msra.mxu0 0
    %696 = vmatprep.subr.bf16.mxu0 0
    %697 = vmatpush1.bf16.xpose.msra.mxu0 0
    %698 = vmatprep.subr.bf16.mxu0 0
    %699 = vmatpush1.bf16.xpose.msra.mxu0 0
    %700 = vmatprep.subr.bf16.mxu0 0
    %701 = vmatpush1.bf16.xpose.msra.mxu0 0
    %702 = vmatprep.subr.bf16.mxu0 0
    %703 = vmatpush1.bf16.xpose.msra.mxu0 0
    %704 = vmatprep.subr.bf16.mxu0 0
    %705 = vmatpush1.bf16.xpose.msra.mxu0 0
    %706 = vmatprep.subr.bf16.mxu0 0
    %707 = vmatpush1.bf16.xpose.msra.mxu0 0
    %708 = vmatprep.subr.bf16.mxu0 0
    %709 = vmatpush1.bf16.xpose.msra.mxu0 0
    %710 = vmatprep.subr.bf16.mxu0 0
    %711 = vmatpush1.bf16.xpose.msra.mxu0 0
    %712 = vmatprep.subr.bf16.mxu0 0
    %713 = vmatpush1.bf16.xpose.msra.mxu0 0
    %714 = vmatprep.subr.bf16.mxu0 0
    %715 = vmatpush1.bf16.xpose.msra.mxu0 0
    %716 = vmatprep.subr.bf16.mxu0 0
    %717 = vmatpush1.bf16.xpose.msra.mxu0 0
    %718 = vmatprep.mubr.bf16.mxu0 0
    %719 = vmatmul.mubr.bf16.gmra.mrb[0].mxu0 %v675
    %v720 = vpop.f32.mrb[0].mxu0
    %v721 = vadd.f32 0.0, %v720
    %v722 = vpop.f32.mrb[0].mxu0
    %v723 = vpop.f32.mrb[0].mxu0
    %v724 = vadd.f32 0.0, %v723
    %v725 = vpop.f32.mrb[0].mxu0
    %726 = vmatprep.mubr.bf16.mxu0 0
    %727 = vmatmul.mubr.bf16.gmra.mrb[0].mxu0 %v678
    %v728 = vpop.f32.mrb[0].mxu0
    %v729 = vadd.f32 0.0, %v728
    %v730 = vpop.f32.mrb[0].mxu0
    %v731 = vpop.f32.mrb[0].mxu0
    %v732 = vpop.f32.mrb[0].mxu0
    %733 = vdwg.mxu0
    %v735 = vsel %vm673, %v663, 0
    %v738 = vsel %vm673, %v664, 0
    %v741 = vsel %vm673, %v667, 0
    %v744 = vsel %vm673, %v668, 0
    %746 = vmatprep.subr.bf16.mxu0 0
    %747 = vmatpush1.bf16.xpose.msra.mxu0 %v741
    %748 = vmatprep.subr.bf16.mxu0 0
    %749 = vmatpush1.bf16.xpose.msra.mxu0 %v744
    %750 = vmatprep.subr.bf16.mxu0 0
    %751 = vmatpush1.bf16.xpose.msra.mxu0 0
    %752 = vmatprep.subr.bf16.mxu0 0
    %753 = vmatpush1.bf16.xpose.msra.mxu0 0
    %754 = vmatprep.subr.bf16.mxu0 0
    %755 = vmatpush1.bf16.xpose.msra.mxu0 0
    %756 = vmatprep.subr.bf16.mxu0 0
    %757 = vmatpush1.bf16.xpose.msra.mxu0 0
    %758 = vmatprep.subr.bf16.mxu0 0
    %759 = vmatpush1.bf16.xpose.msra.mxu0 0
    %760 = vmatprep.subr.bf16.mxu0 0
    %761 = vmatpush1.bf16.xpose.msra.mxu0 0
    %762 = vmatprep.subr.bf16.mxu0 0
    %763 = vmatpush1.bf16.xpose.msra.mxu0 0
    %764 = vmatprep.subr.bf16.mxu0 0
    %765 = vmatpush1.bf16.xpose.msra.mxu0 0
    %766 = vmatprep.subr.bf16.mxu0 0
    %767 = vmatpush1.bf16.xpose.msra.mxu0 0
    %768 = vmatprep.subr.bf16.mxu0 0
    %769 = vmatpush1.bf16.xpose.msra.mxu0 0
    %770 = vmatprep.subr.bf16.mxu0 0
    %771 = vmatpush1.bf16.xpose.msra.mxu0 0
    %772 = vmatprep.subr.bf16.mxu0 0
    %773 = vmatpush1.bf16.xpose.msra.mxu0 0
    %774 = vmatprep.subr.bf16.mxu0 0
    %775 = vmatpush1.bf16.xpose.msra.mxu0 0
    %776 = vmatprep.subr.bf16.mxu0 0
    %777 = vmatpush1.bf16.xpose.msra.mxu0 0
    %778 = vmatprep.mubr.bf16.mxu0 0
    %779 = vmatmul.mubr.bf16.gmra.mrb[0].mxu0 %v735
    %v780 = vpop.f32.mrb[0].mxu0
    %v781 = vadd.f32 0.0, %v780
    %v782 = vpop.f32.mrb[0].mxu0
    %v783 = vpop.f32.mrb[0].mxu0
    %v784 = vadd.f32 0.0, %v783
    %v785 = vpop.f32.mrb[0].mxu0
    %786 = vmatprep.mubr.bf16.mxu0 0
    %787 = vmatmul.mubr.bf16.gmra.mrb[0].mxu0 %v738
    %v788 = vpop.f32.mrb[0].mxu0
    %v789 = vadd.f32 0.0, %v788
    %v790 = vpop.f32.mrb[0].mxu0
    %v791 = vpop.f32.mrb[0].mxu0
    %v792 = vpop.f32.mrb[0].mxu0
    %793 = vdwg.mxu0
    %v794 = vmul.f32 %v721, 0.17677669
    %v795 = vmul.f32 %v724, 0.17677669
    %v796 = vmul.f32 %v729, 0.17677669
    %v797 = vmul.f32 %v781, 0.17677669
    %v798 = vmul.f32 %v784, 0.17677669
    %v799 = vmul.f32 %v789, 0.17677669
    %v800 = vadd.f32 %v794, %v267
    %v801 = vadd.f32 %v795, %v267
    %v802 = vadd.f32 %v796, %v267
    %v803 = vadd.f32 %v797, %v267
    %v804 = vadd.f32 %v798, %v267
    %v805 = vadd.f32 %v799, %v267
    %vm806 = vcmask 195584
    %v807 = vsel %vm806, %v800, -inf
    %808 = vmax.xlane.f32.xlu0 %v807
    %v809 = vpop.xlane.xlu0 %808
    %v810 = vsel %vm806, %v801, -inf
    %811 = vmax.xlane.f32.xlu0 %v810
    %v812 = vpop.xlane.xlu0 %811
    %v813 = vsel %vm806, %v802, -inf
    %814 = vmax.xlane.f32.xlu0 %v813
    %v815 = vpop.xlane.xlu0 %814
    %v816 = vsel %vm806, %v803, -inf
    %817 = vmax.xlane.f32.xlu0 %v816
    %v818 = vpop.xlane.xlu0 %817
    %v819 = vsel %vm806, %v804, -inf
    %820 = vmax.xlane.f32.xlu0 %v819
    %v821 = vpop.xlane.xlu0 %820
    %v822 = vsel %vm806, %v805, -inf
    %823 = vmax.xlane.f32.xlu0 %v822
    %v824 = vpop.xlane.xlu0 %823
    %v825 = vsub.f32 %v800, %v809
    %v826 = vsub.f32 %v801, %v812
    %v827 = vsub.f32 %v802, %v815
    %v828 = vsub.f32 %v803, %v818
    %v829 = vsub.f32 %v804, %v821
    %v830 = vsub.f32 %v805, %v824
    %v831 = vmul.f32 %v825, 1.442695
    %v832 = vpow.pop %v831
    %v833 = vmul.f32 %v826, 1.442695
    %v834 = vpow.pop %v833
    %v835 = vmul.f32 %v827, 1.442695
    %v836 = vpow.pop %v835
    %v837 = vmul.f32 %v828, 1.442695
    %v838 = vpow.pop %v837
    %v839 = vmul.f32 %v829, 1.442695
    %v840 = vpow.pop %v839
    %v841 = vmul.f32 %v830, 1.442695
    %v842 = vpow.pop %v841
    %v843 = vsel %vm806, %v832, 0.0
    %844 = vadd.xlane.f32.xlu0 %v843
    %v845 = vpop.xlane.xlu0 %844
    %v846 = vsel %vm806, %v834, 0.0
    %847 = vadd.xlane.f32.xlu0 %v846
    %v848 = vpop.xlane.xlu0 %847
    %v849 = vsel %vm806, %v836, 0.0
    %850 = vadd.xlane.f32.xlu0 %v849
    %v851 = vpop.xlane.xlu0 %850
    %v852 = vsel %vm806, %v838, 0.0
    %853 = vadd.xlane.f32.xlu0 %v852
    %v854 = vpop.xlane.xlu0 %853
    %v855 = vsel %vm806, %v840, 0.0
    %856 = vadd.xlane.f32.xlu0 %v855
    %v857 = vpop.xlane.xlu0 %856
    %v858 = vsel %vm806, %v842, 0.0
    %859 = vadd.xlane.f32.xlu0 %v858
    %v860 = vpop.xlane.xlu0 %859
    %v861 = vrcp.pop %v845
    %v862 = vrcp.pop %v848
    %v863 = vrcp.pop %v851
    %v864 = vrcp.pop %v854
    %v865 = vrcp.pop %v857
    %v866 = vrcp.pop %v860
    %v867 = vmul.f32 %v832, %v861
    %v868 = vmul.f32 %v834, %v862
    %v869 = vmul.f32 %v836, %v863
    %v870 = vmul.f32 %v838, %v864
    %v871 = vmul.f32 %v840, %v865
    %v872 = vmul.f32 %v842, %v866
    %v873 = vpack.c.bf16 %v868, %v867
    %v874 = vpack.c.bf16 %v869, %v869
    %v875 = vpack.c.bf16 %v871, %v870
    %v876 = vpack.c.bf16 %v872, %v872
    %v878 = vsel %vm806, %v873, 0
    %v881 = vsel %vm806, %v874, 0
    %vm883 = vcmask 1043456
    %v885 = vsel %vm883, %v670, 0
    %887 = vmatprep.subr.bf16.mxu0 0
    %888 = vmatpush1.bf16.msra.mxu0 %v669
    %889 = vmatprep.subr.bf16.mxu0 0
    %890 = vmatpush1.bf16.msra.mxu0 %v885
    %891 = vmatprep.subr.bf16.mxu0 0
    %892 = vmatpush1.bf16.msra.mxu0 0
    %893 = vmatprep.subr.bf16.mxu0 0
    %894 = vmatpush1.bf16.msra.mxu0 0
    %895 = vmatprep.subr.bf16.mxu0 0
    %896 = vmatpush1.bf16.msra.mxu0 0
    %897 = vmatprep.subr.bf16.mxu0 0
    %898 = vmatpush1.bf16.msra.mxu0 0
    %899 = vmatprep.subr.bf16.mxu0 0
    %900 = vmatpush1.bf16.msra.mxu0 0
    %901 = vmatprep.subr.bf16.mxu0 0
    %902 = vmatpush1.bf16.msra.mxu0 0
    %903 = vmatprep.subr.bf16.mxu0 0
    %904 = vmatpush1.bf16.msra.mxu0 0
    %905 = vmatprep.subr.bf16.mxu0 0
    %906 = vmatpush1.bf16.msra.mxu0 0
    %907 = vmatprep.subr.bf16.mxu0 0
    %908 = vmatpush1.bf16.msra.mxu0 0
    %909 = vmatprep.subr.bf16.mxu0 0
    %910 = vmatpush1.bf16.msra.mxu0 0
    %911 = vmatprep.subr.bf16.mxu0 0
    %912 = vmatpush1.bf16.msra.mxu0 0
    %913 = vmatprep.subr.bf16.mxu0 0
    %914 = vmatpush1.bf16.msra.mxu0 0
    %915 = vmatprep.subr.bf16.mxu0 0
    %916 = vmatpush1.bf16.msra.mxu0 0
    %917 = vmatprep.subr.bf16.mxu0 0
    %918 = vmatpush1.bf16.msra.mxu0 0
    %919 = vmatprep.mubr.bf16.mxu0 0
    %920 = vmatmul.mubr.bf16.gmra.mrb[0].mxu0 %v878
    %v921 = vpop.f32.mrb[0].mxu0
    %v922 = vadd.f32 0.0, %v921
    %v923 = vpop.f32.mrb[0].mxu0
    %v924 = vpop.f32.mrb[0].mxu0
    %v925 = vadd.f32 0.0, %v924
    %v926 = vpop.f32.mrb[0].mxu0
    %927 = vmatprep.mubr.bf16.mxu0 0
    %928 = vmatmul.mubr.bf16.gmra.mrb[0].mxu0 %v881
    %v929 = vpop.f32.mrb[0].mxu0
    %v930 = vadd.f32 0.0, %v929
    %v931 = vpop.f32.mrb[0].mxu0
    %v932 = vpop.f32.mrb[0].mxu0
    %v933 = vpop.f32.mrb[0].mxu0
    %934 = vdwg.mxu0
    %v936 = vsel %vm806, %v875, 0
    %v939 = vsel %vm806, %v876, 0
    %v942 = vsel %vm883, %v672, 0
    %944 = vmatprep.subr.bf16.mxu0 0
    %945 = vmatpush1.bf16.msra.mxu0 %v671
    %946 = vmatprep.subr.bf16.mxu0 0
    %947 = vmatpush1.bf16.msra.mxu0 %v942
    %948 = vmatprep.subr.bf16.mxu0 0
    %949 = vmatpush1.bf16.msra.mxu0 0
    %950 = vmatprep.subr.bf16.mxu0 0
    %951 = vmatpush1.bf16.msra.mxu0 0
    %952 = vmatprep.subr.bf16.mxu0 0
    %953 = vmatpush1.bf16.msra.mxu0 0
    %954 = vmatprep.subr.bf16.mxu0 0
    %955 = vmatpush1.bf16.msra.mxu0 0
    %956 = vmatprep.subr.bf16.mxu0 0
    %957 = vmatpush1.bf16.msra.mxu0 0
    %958 = vmatprep.subr.bf16.mxu0 0
    %959 = vmatpush1.bf16.msra.mxu0 0
    %960 = vmatprep.subr.bf16.mxu0 0
    %961 = vmatpush1.bf16.msra.mxu0 0
    %962 = vmatprep.subr.bf16.mxu0 0
    %963 = vmatpush1.bf16.msra.mxu0 0
    %964 = vmatprep.subr.bf16.mxu0 0
    %965 = vmatpush1.bf16.msra.mxu0 0
    %966 = vmatprep.subr.bf16.mxu0 0
    %967 = vmatpush1.bf16.msra.mxu0 0
    %968 = vmatprep.subr.bf16.mxu0 0
    %969 = vmatpush1.bf16.msra.mxu0 0
    %970 = vmatprep.subr.bf16.mxu0 0
    %971 = vmatpush1.bf16.msra.mxu0 0
    %972 = vmatprep.subr.bf16.mxu0 0
    %973 = vmatpush1.bf16.msra.mxu0 0
    %974 = vmatprep.subr.bf16.mxu0 0
    %975 = vmatpush1.bf16.msra.mxu0 0
    %976 = vmatprep.mubr.bf16.mxu0 0
    %977 = vmatmul.mubr.bf16.gmra.mrb[0].mxu0 %v936
    %v978 = vpop.f32.mrb[0].mxu0
    %v979 = vadd.f32 0.0, %v978
    %v980 = vpop.f32.mrb[0].mxu0
    %v981 = vpop.f32.mrb[0].mxu0
    %v982 = vadd.f32 0.0, %v981
    %v983 = vpop.f32.mrb[0].mxu0
    %984 = vmatprep.mubr.bf16.mxu0 0
    %985 = vmatmul.mubr.bf16.gmra.mrb[0].mxu0 %v939
    %v986 = vpop.f32.mrb[0].mxu0
    %v987 = vadd.f32 0.0, %v986
    %v988 = vpop.f32.mrb[0].mxu0
    %v989 = vpop.f32.mrb[0].mxu0
    %v990 = vpop.f32.mrb[0].mxu0
    %991 = vdwg.mxu0
    %994 = vrot.lane.b32.xlu0 %v661, 96
    %v995 = vpop.permute.xlu0 %994
    %996 = vrot.lane.b32.xlu0 %v662, 96
    %v997 = vpop.permute.xlu0 %996
    %1000 = vrot.lane.b32.xlu0 %v665, 96
    %v1001 = vpop.permute.xlu0 %1000
    %1002 = vrot.lane.b32.xlu0 %v666, 96
    %v1003 = vpop.permute.xlu0 %1002
    %v1005 = vsel %vm673, %v995, 0
    %v1008 = vsel %vm673, %v997, 0
    %v1011 = vsel %vm673, %v1001, 0
    %v1014 = vsel %vm673, %v1003, 0
    %1016 = vmatprep.subr.bf16.mxu0 0
    %1017 = vmatpush1.bf16.xpose.msra.mxu0 %v1011
    %1018 = vmatprep.subr.bf16.mxu0 0
    %1019 = vmatpush1.bf16.xpose.msra.mxu0 %v1014
    %1020 = vmatprep.subr.bf16.mxu0 0
    %1021 = vmatpush1.bf16.xpose.msra.mxu0 0
    %1022 = vmatprep.subr.bf16.mxu0 0
    %1023 = vmatpush1.bf16.xpose.msra.mxu0 0
    %1024 = vmatprep.subr.bf16.mxu0 0
    %1025 = vmatpush1.bf16.xpose.msra.mxu0 0
    %1026 = vmatprep.subr.bf16.mxu0 0
    %1027 = vmatpush1.bf16.xpose.msra.mxu0 0
    %1028 = vmatprep.subr.bf16.mxu0 0
    %1029 = vmatpush1.bf16.xpose.msra.mxu0 0
    %1030 = vmatprep.subr.bf16.mxu0 0
    %1031 = vmatpush1.bf16.xpose.msra.mxu0 0
    %1032 = vmatprep.subr.bf16.mxu0 0
    %1033 = vmatpush1.bf16.xpose.msra.mxu0 0
    %1034 = vmatprep.subr.bf16.mxu0 0
    %1035 = vmatpush1.bf16.xpose.msra.mxu0 0
    %1036 = vmatprep.subr.bf16.mxu0 0
    %1037 = vmatpush1.bf16.xpose.msra.mxu0 0
    %1038 = vmatprep.subr.bf16.mxu0 0
    %1039 = vmatpush1.bf16.xpose.msra.mxu0 0
    %1040 = vmatprep.subr.bf16.mxu0 0
    %1041 = vmatpush1.bf16.xpose.msra.mxu0 0
    %1042 = vmatprep.subr.bf16.mxu0 0
    %1043 = vmatpush1.bf16.xpose.msra.mxu0 0
    %1044 = vmatprep.subr.bf16.mxu0 0
    %1045 = vmatpush1.bf16.xpose.msra.mxu0 0
    %1046 = vmatprep.subr.bf16.mxu0 0
    %1047 = vmatpush1.bf16.xpose.msra.mxu0 0
    %1048 = vmatprep.mubr.bf16.mxu0 0
    %1049 = vmatmul.mubr.bf16.gmra.mrb[0].mxu0 %v1005
    %v1050 = vpop.f32.mrb[0].mxu0
    %v1051 = vadd.f32 0.0, %v1050
    %v1052 = vpop.f32.mrb[0].mxu0
    %v1053 = vpop.f32.mrb[0].mxu0
    %v1054 = vadd.f32 0.0, %v1053
    %v1055 = vpop.f32.mrb[0].mxu0
    %1056 = vmatprep.mubr.bf16.mxu0 0
    %1057 = vmatmul.mubr.bf16.gmra.mrb[0].mxu0 %v1008
    %v1058 = vpop.f32.mrb[0].mxu0
    %v1059 = vadd.f32 0.0, %v1058
    %v1060 = vpop.f32.mrb[0].mxu0
    %v1061 = vpop.f32.mrb[0].mxu0
    %v1062 = vpop.f32.mrb[0].mxu0
    %1063 = vdwg.mxu0
    %1066 = vrot.lane.b32.xlu0 %v663, 96
    %v1067 = vpop.permute.xlu0 %1066
    %1068 = vrot.lane.b32.xlu0 %v664, 96
    %v1069 = vpop.permute.xlu0 %1068
    %1072 = vrot.lane.b32.xlu0 %v667, 96
    %v1073 = vpop.permute.xlu0 %1072
    %1074 = vrot.lane.b32.xlu0 %v668, 96
    %v1075 = vpop.permute.xlu0 %1074
    %v1077 = vsel %vm673, %v1067, 0
    %v1080 = vsel %vm673, %v1069, 0
    %v1083 = vsel %vm673, %v1073, 0
    %v1086 = vsel %vm673, %v1075, 0
    %1088 = vmatprep.subr.bf16.mxu0 0
    %1089 = vmatpush1.bf16.xpose.msra.mxu0 %v1083
    %1090 = vmatprep.subr.bf16.mxu0 0
    %1091 = vmatpush1.bf16.xpose.msra.mxu0 %v1086
    %1092 = vmatprep.subr.bf16.mxu0 0
    %1093 = vmatpush1.bf16.xpose.msra.mxu0 0
    %1094 = vmatprep.subr.bf16.mxu0 0
    %1095 = vmatpush1.bf16.xpose.msra.mxu0 0
    %1096 = vmatprep.subr.bf16.mxu0 0
    %1097 = vmatpush1.bf16.xpose.msra.mxu0 0
    %1098 = vmatprep.subr.bf16.mxu0 0
    %1099 = vmatpush1.bf16.xpose.msra.mxu0 0
    %1100 = vmatprep.subr.bf16.mxu0 0
    %1101 = vmatpush1.bf16.xpose.msra.mxu0 0
    %1102 = vmatprep.subr.bf16.mxu0 0
    %1103 = vmatpush1.bf16.xpose.msra.mxu0 0
    %1104 = vmatprep.subr.bf16.mxu0 0
    %1105 = vmatpush1.bf16.xpose.msra.mxu0 0
    %1106 = vmatprep.subr.bf16.mxu0 0
    %1107 = vmatpush1.bf16.xpose.msra.mxu0 0
    %1108 = vmatprep.subr.bf16.mxu0 0
    %1109 = vmatpush1.bf16.xpose.msra.mxu0 0
    %1110 = vmatprep.subr.bf16.mxu0 0
    %1111 = vmatpush1.bf16.xpose.msra.mxu0 0
    %1112 = vmatprep.subr.bf16.mxu0 0
    %1113 = vmatpush1.bf16.xpose.msra.mxu0 0
    %1114 = vmatprep.subr.bf16.mxu0 0
    %1115 = vmatpush1.bf16.xpose.msra.mxu0 0
    %1116 = vmatprep.subr.bf16.mxu0 0
    %1117 = vmatpush1.bf16.xpose.msra.mxu0 0
    %1118 = vmatprep.subr.bf16.mxu0 0
    %1119 = vmatpush1.bf16.xpose.msra.mxu0 0
    %1120 = vmatprep.mubr.bf16.mxu0 0
    %1121 = vmatmul.mubr.bf16.gmra.mrb[0].mxu0 %v1077
    %v1122 = vpop.f32.mrb[0].mxu0
    %v1123 = vadd.f32 0.0, %v1122
    %v1124 = vpop.f32.mrb[0].mxu0
    %v1125 = vpop.f32.mrb[0].mxu0
    %v1126 = vadd.f32 0.0, %v1125
    %v1127 = vpop.f32.mrb[0].mxu0
    %1128 = vmatprep.mubr.bf16.mxu0 0
    %1129 = vmatmul.mubr.bf16.gmra.mrb[0].mxu0 %v1080
    %v1130 = vpop.f32.mrb[0].mxu0
    %v1131 = vadd.f32 0.0, %v1130
    %v1132 = vpop.f32.mrb[0].mxu0
    %v1133 = vpop.f32.mrb[0].mxu0
    %v1134 = vpop.f32.mrb[0].mxu0
    %1135 = vdwg.mxu0
    %v1136 = vmul.f32 %v1051, 0.17677669
    %v1137 = vmul.f32 %v1054, 0.17677669
    %v1138 = vmul.f32 %v1059, 0.17677669
    %v1139 = vmul.f32 %v1123, 0.17677669
    %v1140 = vmul.f32 %v1126, 0.17677669
    %v1141 = vmul.f32 %v1131, 0.17677669
    %v1142 = vadd.f32 %v1136, %v267
    %v1143 = vadd.f32 %v1137, %v267
    %v1144 = vadd.f32 %v1138, %v267
    %v1145 = vadd.f32 %v1139, %v267
    %v1146 = vadd.f32 %v1140, %v267
    %v1147 = vadd.f32 %v1141, %v267
    %v1148 = vsel %vm806, %v1142, -inf
    %1149 = vmax.xlane.f32.xlu0 %v1148
    %v1150 = vpop.xlane.xlu0 %1149
    %v1151 = vsel %vm806, %v1143, -inf
    %1152 = vmax.xlane.f32.xlu0 %v1151
    %v1153 = vpop.xlane.xlu0 %1152
    %v1154 = vsel %vm806, %v1144, -inf
    %1155 = vmax.xlane.f32.xlu0 %v1154
    %v1156 = vpop.xlane.xlu0 %1155
    %v1157 = vsel %vm806, %v1145, -inf
    %1158 = vmax.xlane.f32.xlu0 %v1157
    %v1159 = vpop.xlane.xlu0 %1158
    %v1160 = vsel %vm806, %v1146, -inf
    %1161 = vmax.xlane.f32.xlu0 %v1160
    %v1162 = vpop.xlane.xlu0 %1161
    %v1163 = vsel %vm806, %v1147, -inf
    %1164 = vmax.xlane.f32.xlu0 %v1163
    %v1165 = vpop.xlane.xlu0 %1164
    %v1166 = vsub.f32 %v1142, %v1150
    %v1167 = vsub.f32 %v1143, %v1153
    %v1168 = vsub.f32 %v1144, %v1156
    %v1169 = vsub.f32 %v1145, %v1159
    %v1170 = vsub.f32 %v1146, %v1162
    %v1171 = vsub.f32 %v1147, %v1165
    %v1172 = vmul.f32 %v1166, 1.442695
    %v1173 = vpow.pop %v1172
    %v1174 = vmul.f32 %v1167, 1.442695
    %v1175 = vpow.pop %v1174
    %v1176 = vmul.f32 %v1168, 1.442695
    %v1177 = vpow.pop %v1176
    %v1178 = vmul.f32 %v1169, 1.442695
    %v1179 = vpow.pop %v1178
    %v1180 = vmul.f32 %v1170, 1.442695
    %v1181 = vpow.pop %v1180
    %v1182 = vmul.f32 %v1171, 1.442695
    %v1183 = vpow.pop %v1182
    %v1184 = vsel %vm806, %v1173, 0.0
    %1185 = vadd.xlane.f32.xlu0 %v1184
    %v1186 = vpop.xlane.xlu0 %1185
    %v1187 = vsel %vm806, %v1175, 0.0
    %1188 = vadd.xlane.f32.xlu0 %v1187
    %v1189 = vpop.xlane.xlu0 %1188
    %v1190 = vsel %vm806, %v1177, 0.0
    %1191 = vadd.xlane.f32.xlu0 %v1190
    %v1192 = vpop.xlane.xlu0 %1191
    %v1193 = vsel %vm806, %v1179, 0.0
    %1194 = vadd.xlane.f32.xlu0 %v1193
    %v1195 = vpop.xlane.xlu0 %1194
    %v1196 = vsel %vm806, %v1181, 0.0
    %1197 = vadd.xlane.f32.xlu0 %v1196
    %v1198 = vpop.xlane.xlu0 %1197
    %v1199 = vsel %vm806, %v1183, 0.0
    %1200 = vadd.xlane.f32.xlu0 %v1199
    %v1201 = vpop.xlane.xlu0 %1200
    %v1202 = vrcp.pop %v1186
    %v1203 = vrcp.pop %v1189
    %v1204 = vrcp.pop %v1192
    %v1205 = vrcp.pop %v1195
    %v1206 = vrcp.pop %v1198
    %v1207 = vrcp.pop %v1201
    %v1208 = vmul.f32 %v1173, %v1202
    %v1209 = vmul.f32 %v1175, %v1203
    %v1210 = vmul.f32 %v1177, %v1204
    %v1211 = vmul.f32 %v1179, %v1205
    %v1212 = vmul.f32 %v1181, %v1206
    %v1213 = vmul.f32 %v1183, %v1207
    %v1214 = vpack.c.bf16 %v1209, %v1208
    %v1215 = vpack.c.bf16 %v1210, %v1210
    %v1216 = vpack.c.bf16 %v1212, %v1211
    %v1217 = vpack.c.bf16 %v1213, %v1213
    %1220 = vrot.lane.b32.xlu0 %v669, 96
    %v1221 = vpop.permute.xlu0 %1220
    %1222 = vrot.lane.b32.xlu0 %v670, 96
    %v1223 = vpop.permute.xlu0 %1222
    %v1226 = vsel %vm806, %v1214, 0
    %v1229 = vsel %vm806, %v1215, 0
    %v1232 = vsel %vm883, %v1223, 0
    %1234 = vmatprep.subr.bf16.mxu0 0
    %1235 = vmatpush1.bf16.msra.mxu0 %v1221
    %1236 = vmatprep.subr.bf16.mxu0 0
    %1237 = vmatpush1.bf16.msra.mxu0 %v1232
    %1238 = vmatprep.subr.bf16.mxu0 0
    %1239 = vmatpush1.bf16.msra.mxu0 0
    %1240 = vmatprep.subr.bf16.mxu0 0
    %1241 = vmatpush1.bf16.msra.mxu0 0
    %1242 = vmatprep.subr.bf16.mxu0 0
    %1243 = vmatpush1.bf16.msra.mxu0 0
    %1244 = vmatprep.subr.bf16.mxu0 0
    %1245 = vmatpush1.bf16.msra.mxu0 0
    %1246 = vmatprep.subr.bf16.mxu0 0
    %1247 = vmatpush1.bf16.msra.mxu0 0
    %1248 = vmatprep.subr.bf16.mxu0 0
    %1249 = vmatpush1.bf16.msra.mxu0 0
    %1250 = vmatprep.subr.bf16.mxu0 0
    %1251 = vmatpush1.bf16.msra.mxu0 0
    %1252 = vmatprep.subr.bf16.mxu0 0
    %1253 = vmatpush1.bf16.msra.mxu0 0
    %1254 = vmatprep.subr.bf16.mxu0 0
    %1255 = vmatpush1.bf16.msra.mxu0 0
    %1256 = vmatprep.subr.bf16.mxu0 0
    %1257 = vmatpush1.bf16.msra.mxu0 0
    %1258 = vmatprep.subr.bf16.mxu0 0
    %1259 = vmatpush1.bf16.msra.mxu0 0
    %1260 = vmatprep.subr.bf16.mxu0 0
    %1261 = vmatpush1.bf16.msra.mxu0 0
    %1262 = vmatprep.subr.bf16.mxu0 0
    %1263 = vmatpush1.bf16.msra.mxu0 0
    %1264 = vmatprep.subr.bf16.mxu0 0
    %1265 = vmatpush1.bf16.msra.mxu0 0
    %1266 = vmatprep.mubr.bf16.mxu0 0
    %1267 = vmatmul.mubr.bf16.gmra.mrb[0].mxu0 %v1226
    %v1268 = vpop.f32.mrb[0].mxu0
    %v1269 = vadd.f32 0.0, %v1268
    %v1270 = vpop.f32.mrb[0].mxu0
    %v1271 = vpop.f32.mrb[0].mxu0
    %v1272 = vadd.f32 0.0, %v1271
    %v1273 = vpop.f32.mrb[0].mxu0
    %1274 = vmatprep.mubr.bf16.mxu0 0
    %1275 = vmatmul.mubr.bf16.gmra.mrb[0].mxu0 %v1229
    %v1276 = vpop.f32.mrb[0].mxu0
    %v1277 = vadd.f32 0.0, %v1276
    %v1278 = vpop.f32.mrb[0].mxu0
    %v1279 = vpop.f32.mrb[0].mxu0
    %v1280 = vpop.f32.mrb[0].mxu0
    %1281 = vdwg.mxu0
    %1284 = vrot.lane.b32.xlu0 %v671, 96
    %v1285 = vpop.permute.xlu0 %1284
    %1286 = vrot.lane.b32.xlu0 %v672, 96
    %v1287 = vpop.permute.xlu0 %1286
    %v1290 = vsel %vm806, %v1216, 0
    %v1293 = vsel %vm806, %v1217, 0
    %v1296 = vsel %vm883, %v1287, 0
    %1298 = vmatprep.subr.bf16.mxu0 0
    %1299 = vmatpush1.bf16.msra.mxu0 %v1285
    %1300 = vmatprep.subr.bf16.mxu0 0
    %1301 = vmatpush1.bf16.msra.mxu0 %v1296
    %1302 = vmatprep.subr.bf16.mxu0 0
    %1303 = vmatpush1.bf16.msra.mxu0 0
    %1304 = vmatprep.subr.bf16.mxu0 0
    %1305 = vmatpush1.bf16.msra.mxu0 0
    %1306 = vmatprep.subr.bf16.mxu0 0
    %1307 = vmatpush1.bf16.msra.mxu0 0
    %1308 = vmatprep.subr.bf16.mxu0 0
    %1309 = vmatpush1.bf16.msra.mxu0 0
    %1310 = vmatprep.subr.bf16.mxu0 0
    %1311 = vmatpush1.bf16.msra.mxu0 0
    %1312 = vmatprep.subr.bf16.mxu0 0
    %1313 = vmatpush1.bf16.msra.mxu0 0
    %1314 = vmatprep.subr.bf16.mxu0 0
    %1315 = vmatpush1.bf16.msra.mxu0 0
    %1316 = vmatprep.subr.bf16.mxu0 0
    %1317 = vmatpush1.bf16.msra.mxu0 0
    %1318 = vmatprep.subr.bf16.mxu0 0
    %1319 = vmatpush1.bf16.msra.mxu0 0
    %1320 = vmatprep.subr.bf16.mxu0 0
    %1321 = vmatpush1.bf16.msra.mxu0 0
    %1322 = vmatprep.subr.bf16.mxu0 0
    %1323 = vmatpush1.bf16.msra.mxu0 0
    %1324 = vmatprep.subr.bf16.mxu0 0
    %1325 = vmatpush1.bf16.msra.mxu0 0
    %1326 = vmatprep.subr.bf16.mxu0 0
    %1327 = vmatpush1.bf16.msra.mxu0 0
    %1328 = vmatprep.subr.bf16.mxu0 0
    %1329 = vmatpush1.bf16.msra.mxu0 0
    %1330 = vmatprep.mubr.bf16.mxu0 0
    %1331 = vmatmul.mubr.bf16.gmra.mrb[0].mxu0 %v1290
    %v1332 = vpop.f32.mrb[0].mxu0
    %v1333 = vadd.f32 0.0, %v1332
    %v1334 = vpop.f32.mrb[0].mxu0
    %v1335 = vpop.f32.mrb[0].mxu0
    %v1336 = vadd.f32 0.0, %v1335
    %v1337 = vpop.f32.mrb[0].mxu0
    %1338 = vmatprep.mubr.bf16.mxu0 0
    %1339 = vmatmul.mubr.bf16.gmra.mrb[0].mxu0 %v1293
    %v1340 = vpop.f32.mrb[0].mxu0
    %v1341 = vadd.f32 0.0, %v1340
    %v1342 = vpop.f32.mrb[0].mxu0
    %v1343 = vpop.f32.mrb[0].mxu0
    %v1344 = vpop.f32.mrb[0].mxu0
    %1345 = vdwg.mxu0
    %1346 = vrot.lane.b32.xlu0 %v661, 64
    %v1347 = vpop.permute.xlu0 %1346
    %1348 = vrot.lane.b32.xlu0 %v662, 64
    %v1349 = vpop.permute.xlu0 %1348
    %1350 = vrot.lane.b32.xlu0 %v665, 64
    %v1351 = vpop.permute.xlu0 %1350
    %1352 = vrot.lane.b32.xlu0 %v666, 64
    %v1353 = vpop.permute.xlu0 %1352
    %v1355 = vsel %vm673, %v1347, 0
    %v1358 = vsel %vm673, %v1349, 0
    %v1361 = vsel %vm673, %v1351, 0
    %v1364 = vsel %vm673, %v1353, 0
    %1366 = vmatprep.subr.bf16.mxu0 0
    %1367 = vmatpush1.bf16.xpose.msra.mxu0 %v1361
    %1368 = vmatprep.subr.bf16.mxu0 0
    %1369 = vmatpush1.bf16.xpose.msra.mxu0 %v1364
    %1370 = vmatprep.subr.bf16.mxu0 0
    %1371 = vmatpush1.bf16.xpose.msra.mxu0 0
    %1372 = vmatprep.subr.bf16.mxu0 0
    %1373 = vmatpush1.bf16.xpose.msra.mxu0 0
    %1374 = vmatprep.subr.bf16.mxu0 0
    %1375 = vmatpush1.bf16.xpose.msra.mxu0 0
    %1376 = vmatprep.subr.bf16.mxu0 0
    %1377 = vmatpush1.bf16.xpose.msra.mxu0 0
    %1378 = vmatprep.subr.bf16.mxu0 0
    %1379 = vmatpush1.bf16.xpose.msra.mxu0 0
    %1380 = vmatprep.subr.bf16.mxu0 0
    %1381 = vmatpush1.bf16.xpose.msra.mxu0 0
    %1382 = vmatprep.subr.bf16.mxu0 0
    %1383 = vmatpush1.bf16.xpose.msra.mxu0 0
    %1384 = vmatprep.subr.bf16.mxu0 0
    %1385 = vmatpush1.bf16.xpose.msra.mxu0 0
    %1386 = vmatprep.subr.bf16.mxu0 0
    %1387 = vmatpush1.bf16.xpose.msra.mxu0 0
    %1388 = vmatprep.subr.bf16.mxu0 0
    %1389 = vmatpush1.bf16.xpose.msra.mxu0 0
    %1390 = vmatprep.subr.bf16.mxu0 0
    %1391 = vmatpush1.bf16.xpose.msra.mxu0 0
    %1392 = vmatprep.subr.bf16.mxu0 0
    %1393 = vmatpush1.bf16.xpose.msra.mxu0 0
    %1394 = vmatprep.subr.bf16.mxu0 0
    %1395 = vmatpush1.bf16.xpose.msra.mxu0 0
    %1396 = vmatprep.subr.bf16.mxu0 0
    %1397 = vmatpush1.bf16.xpose.msra.mxu0 0
    %1398 = vmatprep.mubr.bf16.mxu0 0
    %1399 = vmatmul.mubr.bf16.gmra.mrb[0].mxu0 %v1355
    %v1400 = vpop.f32.mrb[0].mxu0
    %v1401 = vadd.f32 0.0, %v1400
    %v1402 = vpop.f32.mrb[0].mxu0
    %v1403 = vpop.f32.mrb[0].mxu0
    %v1404 = vadd.f32 0.0, %v1403
    %v1405 = vpop.f32.mrb[0].mxu0
    %1406 = vmatprep.mubr.bf16.mxu0 0
    %1407 = vmatmul.mubr.bf16.gmra.mrb[0].mxu0 %v1358
    %v1408 = vpop.f32.mrb[0].mxu0
    %v1409 = vadd.f32 0.0, %v1408
    %v1410 = vpop.f32.mrb[0].mxu0
    %v1411 = vpop.f32.mrb[0].mxu0
    %v1412 = vpop.f32.mrb[0].mxu0
    %1413 = vdwg.mxu0
    %1414 = vrot.lane.b32.xlu0 %v663, 64
    %v1415 = vpop.permute.xlu0 %1414
    %1416 = vrot.lane.b32.xlu0 %v664, 64
    %v1417 = vpop.permute.xlu0 %1416
    %1418 = vrot.lane.b32.xlu0 %v667, 64
    %v1419 = vpop.permute.xlu0 %1418
    %1420 = vrot.lane.b32.xlu0 %v668, 64
    %v1421 = vpop.permute.xlu0 %1420
    %v1423 = vsel %vm673, %v1415, 0
    %v1426 = vsel %vm673, %v1417, 0
    %v1429 = vsel %vm673, %v1419, 0
    %v1432 = vsel %vm673, %v1421, 0
    %1434 = vmatprep.subr.bf16.mxu0 0
    %1435 = vmatpush1.bf16.xpose.msra.mxu0 %v1429
    %1436 = vmatprep.subr.bf16.mxu0 0
    %1437 = vmatpush1.bf16.xpose.msra.mxu0 %v1432
    %1438 = vmatprep.subr.bf16.mxu0 0
    %1439 = vmatpush1.bf16.xpose.msra.mxu0 0
    %1440 = vmatprep.subr.bf16.mxu0 0
    %1441 = vmatpush1.bf16.xpose.msra.mxu0 0
    %1442 = vmatprep.subr.bf16.mxu0 0
    %1443 = vmatpush1.bf16.xpose.msra.mxu0 0
    %1444 = vmatprep.subr.bf16.mxu0 0
    %1445 = vmatpush1.bf16.xpose.msra.mxu0 0
    %1446 = vmatprep.subr.bf16.mxu0 0
    %1447 = vmatpush1.bf16.xpose.msra.mxu0 0
    %1448 = vmatprep.subr.bf16.mxu0 0
    %1449 = vmatpush1.bf16.xpose.msra.mxu0 0
    %1450 = vmatprep.subr.bf16.mxu0 0
    %1451 = vmatpush1.bf16.xpose.msra.mxu0 0
    %1452 = vmatprep.subr.bf16.mxu0 0
    %1453 = vmatpush1.bf16.xpose.msra.mxu0 0
    %1454 = vmatprep.subr.bf16.mxu0 0
    %1455 = vmatpush1.bf16.xpose.msra.mxu0 0
    %1456 = vmatprep.subr.bf16.mxu0 0
    %1457 = vmatpush1.bf16.xpose.msra.mxu0 0
    %1458 = vmatprep.subr.bf16.mxu0 0
    %1459 = vmatpush1.bf16.xpose.msra.mxu0 0
    %1460 = vmatprep.subr.bf16.mxu0 0
    %1461 = vmatpush1.bf16.xpose.msra.mxu0 0
    %1462 = vmatprep.subr.bf16.mxu0 0
    %1463 = vmatpush1.bf16.xpose.msra.mxu0 0
    %1464 = vmatprep.subr.bf16.mxu0 0
    %1465 = vmatpush1.bf16.xpose.msra.mxu0 0
    %1466 = vmatprep.mubr.bf16.mxu0 0
    %1467 = vmatmul.mubr.bf16.gmra.mrb[0].mxu0 %v1423
    %v1468 = vpop.f32.mrb[0].mxu0
    %v1469 = vadd.f32 0.0, %v1468
    %v1470 = vpop.f32.mrb[0].mxu0
    %v1471 = vpop.f32.mrb[0].mxu0
    %v1472 = vadd.f32 0.0, %v1471
    %v1473 = vpop.f32.mrb[0].mxu0
    %1474 = vmatprep.mubr.bf16.mxu0 0
    %1475 = vmatmul.mubr.bf16.gmra.mrb[0].mxu0 %v1426
    %v1476 = vpop.f32.mrb[0].mxu0
    %v1477 = vadd.f32 0.0, %v1476
    %v1478 = vpop.f32.mrb[0].mxu0
    %v1479 = vpop.f32.mrb[0].mxu0
    %v1480 = vpop.f32.mrb[0].mxu0
    %1481 = vdwg.mxu0
    %v1482 = vmul.f32 %v1401, 0.17677669
    %v1483 = vmul.f32 %v1404, 0.17677669
    %v1484 = vmul.f32 %v1409, 0.17677669
    %v1485 = vmul.f32 %v1469, 0.17677669
    %v1486 = vmul.f32 %v1472, 0.17677669
    %v1487 = vmul.f32 %v1477, 0.17677669
    %v1488 = vadd.f32 %v1482, %v267
    %v1489 = vadd.f32 %v1483, %v267
    %v1490 = vadd.f32 %v1484, %v267
    %v1491 = vadd.f32 %v1485, %v267
    %v1492 = vadd.f32 %v1486, %v267
    %v1493 = vadd.f32 %v1487, %v267
    %v1494 = vsel %vm806, %v1488, -inf
    %1495 = vmax.xlane.f32.xlu0 %v1494
    %v1496 = vpop.xlane.xlu0 %1495
    %v1497 = vsel %vm806, %v1489, -inf
    %1498 = vmax.xlane.f32.xlu0 %v1497
    %v1499 = vpop.xlane.xlu0 %1498
    %v1500 = vsel %vm806, %v1490, -inf
    %1501 = vmax.xlane.f32.xlu0 %v1500
    %v1502 = vpop.xlane.xlu0 %1501
    %v1503 = vsel %vm806, %v1491, -inf
    %1504 = vmax.xlane.f32.xlu0 %v1503
    %v1505 = vpop.xlane.xlu0 %1504
    %v1506 = vsel %vm806, %v1492, -inf
    %1507 = vmax.xlane.f32.xlu0 %v1506
    %v1508 = vpop.xlane.xlu0 %1507
    %v1509 = vsel %vm806, %v1493, -inf
    %1510 = vmax.xlane.f32.xlu0 %v1509
    %v1511 = vpop.xlane.xlu0 %1510
    %v1512 = vsub.f32 %v1488, %v1496
    %v1513 = vsub.f32 %v1489, %v1499
    %v1514 = vsub.f32 %v1490, %v1502
    %v1515 = vsub.f32 %v1491, %v1505
    %v1516 = vsub.f32 %v1492, %v1508
    %v1517 = vsub.f32 %v1493, %v1511
    %v1518 = vmul.f32 %v1512, 1.442695
    %v1519 = vpow.pop %v1518
    %v1520 = vmul.f32 %v1513, 1.442695
    %v1521 = vpow.pop %v1520
    %v1522 = vmul.f32 %v1514, 1.442695
    %v1523 = vpow.pop %v1522
    %v1524 = vmul.f32 %v1515, 1.442695
    %v1525 = vpow.pop %v1524
    %v1526 = vmul.f32 %v1516, 1.442695
    %v1527 = vpow.pop %v1526
    %v1528 = vmul.f32 %v1517, 1.442695
    %v1529 = vpow.pop %v1528
    %v1530 = vsel %vm806, %v1519, 0.0
    %1531 = vadd.xlane.f32.xlu0 %v1530
    %v1532 = vpop.xlane.xlu0 %1531
    %v1533 = vsel %vm806, %v1521, 0.0
    %1534 = vadd.xlane.f32.xlu0 %v1533
    %v1535 = vpop.xlane.xlu0 %1534
    %v1536 = vsel %vm806, %v1523, 0.0
    %1537 = vadd.xlane.f32.xlu0 %v1536
    %v1538 = vpop.xlane.xlu0 %1537
    %v1539 = vsel %vm806, %v1525, 0.0
    %1540 = vadd.xlane.f32.xlu0 %v1539
    %v1541 = vpop.xlane.xlu0 %1540
    %v1542 = vsel %vm806, %v1527, 0.0
    %1543 = vadd.xlane.f32.xlu0 %v1542
    %v1544 = vpop.xlane.xlu0 %1543
    %v1545 = vsel %vm806, %v1529, 0.0
    %1546 = vadd.xlane.f32.xlu0 %v1545
    %v1547 = vpop.xlane.xlu0 %1546
    %v1548 = vrcp.pop %v1532
    %v1549 = vrcp.pop %v1535
    %v1550 = vrcp.pop %v1538
    %v1551 = vrcp.pop %v1541
    %v1552 = vrcp.pop %v1544
    %v1553 = vrcp.pop %v1547
    %v1554 = vmul.f32 %v1519, %v1548
    %v1555 = vmul.f32 %v1521, %v1549
    %v1556 = vmul.f32 %v1523, %v1550
    %v1557 = vmul.f32 %v1525, %v1551
    %v1558 = vmul.f32 %v1527, %v1552
    %v1559 = vmul.f32 %v1529, %v1553
    %v1560 = vpack.c.bf16 %v1555, %v1554
    %v1561 = vpack.c.bf16 %v1556, %v1556
    %v1562 = vpack.c.bf16 %v1558, %v1557
    %v1563 = vpack.c.bf16 %v1559, %v1559
    %1564 = vrot.lane.b32.xlu0 %v669, 64
    %v1565 = vpop.permute.xlu0 %1564
    %1566 = vrot.lane.b32.xlu0 %v670, 64
    %v1567 = vpop.permute.xlu0 %1566
    %v1570 = vsel %vm806, %v1560, 0
    %v1573 = vsel %vm806, %v1561, 0
    %v1576 = vsel %vm883, %v1567, 0
    %1578 = vmatprep.subr.bf16.mxu0 0
    %1579 = vmatpush1.bf16.msra.mxu0 %v1565
    %1580 = vmatprep.subr.bf16.mxu0 0
    %1581 = vmatpush1.bf16.msra.mxu0 %v1576
    %1582 = vmatprep.subr.bf16.mxu0 0
    %1583 = vmatpush1.bf16.msra.mxu0 0
    %1584 = vmatprep.subr.bf16.mxu0 0
    %1585 = vmatpush1.bf16.msra.mxu0 0
    %1586 = vmatprep.subr.bf16.mxu0 0
    %1587 = vmatpush1.bf16.msra.mxu0 0
    %1588 = vmatprep.subr.bf16.mxu0 0
    %1589 = vmatpush1.bf16.msra.mxu0 0
    %1590 = vmatprep.subr.bf16.mxu0 0
    %1591 = vmatpush1.bf16.msra.mxu0 0
    %1592 = vmatprep.subr.bf16.mxu0 0
    %1593 = vmatpush1.bf16.msra.mxu0 0
    %1594 = vmatprep.subr.bf16.mxu0 0
    %1595 = vmatpush1.bf16.msra.mxu0 0
    %1596 = vmatprep.subr.bf16.mxu0 0
    %1597 = vmatpush1.bf16.msra.mxu0 0
    %1598 = vmatprep.subr.bf16.mxu0 0
    %1599 = vmatpush1.bf16.msra.mxu0 0
    %1600 = vmatprep.subr.bf16.mxu0 0
    %1601 = vmatpush1.bf16.msra.mxu0 0
    %1602 = vmatprep.subr.bf16.mxu0 0
    %1603 = vmatpush1.bf16.msra.mxu0 0
    %1604 = vmatprep.subr.bf16.mxu0 0
    %1605 = vmatpush1.bf16.msra.mxu0 0
    %1606 = vmatprep.subr.bf16.mxu0 0
    %1607 = vmatpush1.bf16.msra.mxu0 0
    %1608 = vmatprep.subr.bf16.mxu0 0
    %1609 = vmatpush1.bf16.msra.mxu0 0
    %1610 = vmatprep.mubr.bf16.mxu0 0
    %1611 = vmatmul.mubr.bf16.gmra.mrb[0].mxu0 %v1570
    %v1612 = vpop.f32.mrb[0].mxu0
    %v1613 = vadd.f32 0.0, %v1612
    %v1614 = vpop.f32.mrb[0].mxu0
    %v1615 = vpop.f32.mrb[0].mxu0
    %v1616 = vadd.f32 0.0, %v1615
    %v1617 = vpop.f32.mrb[0].mxu0
    %1618 = vmatprep.mubr.bf16.mxu0 0
    %1619 = vmatmul.mubr.bf16.gmra.mrb[0].mxu0 %v1573
    %v1620 = vpop.f32.mrb[0].mxu0
    %v1621 = vadd.f32 0.0, %v1620
    %v1622 = vpop.f32.mrb[0].mxu0
    %v1623 = vpop.f32.mrb[0].mxu0
    %v1624 = vpop.f32.mrb[0].mxu0
    %1625 = vdwg.mxu0
    %1626 = vrot.lane.b32.xlu0 %v671, 64
    %v1627 = vpop.permute.xlu0 %1626
    %1628 = vrot.lane.b32.xlu0 %v672, 64
    %v1629 = vpop.permute.xlu0 %1628
    %v1632 = vsel %vm806, %v1562, 0
    %v1635 = vsel %vm806, %v1563, 0
    %v1638 = vsel %vm883, %v1629, 0
    %1640 = vmatprep.subr.bf16.mxu0 0
    %1641 = vmatpush1.bf16.msra.mxu0 %v1627
    %1642 = vmatprep.subr.bf16.mxu0 0
    %1643 = vmatpush1.bf16.msra.mxu0 %v1638
    %1644 = vmatprep.subr.bf16.mxu0 0
    %1645 = vmatpush1.bf16.msra.mxu0 0
    %1646 = vmatprep.subr.bf16.mxu0 0
    %1647 = vmatpush1.bf16.msra.mxu0 0
    %1648 = vmatprep.subr.bf16.mxu0 0
    %1649 = vmatpush1.bf16.msra.mxu0 0
    %1650 = vmatprep.subr.bf16.mxu0 0
    %1651 = vmatpush1.bf16.msra.mxu0 0
    %1652 = vmatprep.subr.bf16.mxu0 0
    %1653 = vmatpush1.bf16.msra.mxu0 0
    %1654 = vmatprep.subr.bf16.mxu0 0
    %1655 = vmatpush1.bf16.msra.mxu0 0
    %1656 = vmatprep.subr.bf16.mxu0 0
    %1657 = vmatpush1.bf16.msra.mxu0 0
    %1658 = vmatprep.subr.bf16.mxu0 0
    %1659 = vmatpush1.bf16.msra.mxu0 0
    %1660 = vmatprep.subr.bf16.mxu0 0
    %1661 = vmatpush1.bf16.msra.mxu0 0
    %1662 = vmatprep.subr.bf16.mxu0 0
    %1663 = vmatpush1.bf16.msra.mxu0 0
    %1664 = vmatprep.subr.bf16.mxu0 0
    %1665 = vmatpush1.bf16.msra.mxu0 0
    %1666 = vmatprep.subr.bf16.mxu0 0
    %1667 = vmatpush1.bf16.msra.mxu0 0
    %1668 = vmatprep.subr.bf16.mxu0 0
    %1669 = vmatpush1.bf16.msra.mxu0 0
    %1670 = vmatprep.subr.bf16.mxu0 0
    %1671 = vmatpush1.bf16.msra.mxu0 0
    %1672 = vmatprep.mubr.bf16.mxu0 0
    %1673 = vmatmul.mubr.bf16.gmra.mrb[0].mxu0 %v1632
    %v1674 = vpop.f32.mrb[0].mxu0
    %v1675 = vadd.f32 0.0, %v1674
    %v1676 = vpop.f32.mrb[0].mxu0
    %v1677 = vpop.f32.mrb[0].mxu0
    %v1678 = vadd.f32 0.0, %v1677
    %v1679 = vpop.f32.mrb[0].mxu0
    %1680 = vmatprep.mubr.bf16.mxu0 0
    %1681 = vmatmul.mubr.bf16.gmra.mrb[0].mxu0 %v1635
    %v1682 = vpop.f32.mrb[0].mxu0
    %v1683 = vadd.f32 0.0, %v1682
    %v1684 = vpop.f32.mrb[0].mxu0
    %v1685 = vpop.f32.mrb[0].mxu0
    %v1686 = vpop.f32.mrb[0].mxu0
    %1687 = vdwg.mxu0
    %1688 = vrot.lane.b32.xlu0 %v661, 32
    %v1689 = vpop.permute.xlu0 %1688
    %1690 = vrot.lane.b32.xlu0 %v662, 32
    %v1691 = vpop.permute.xlu0 %1690
    %1692 = vrot.lane.b32.xlu0 %v665, 32
    %v1693 = vpop.permute.xlu0 %1692
    %1694 = vrot.lane.b32.xlu0 %v666, 32
    %v1695 = vpop.permute.xlu0 %1694
    %v1697 = vsel %vm673, %v1689, 0
    %v1700 = vsel %vm673, %v1691, 0
    %v1703 = vsel %vm673, %v1693, 0
    %v1706 = vsel %vm673, %v1695, 0
    %1708 = vmatprep.subr.bf16.mxu0 0
    %1709 = vmatpush1.bf16.xpose.msra.mxu0 %v1703
    %1710 = vmatprep.subr.bf16.mxu0 0
    %1711 = vmatpush1.bf16.xpose.msra.mxu0 %v1706
    %1712 = vmatprep.subr.bf16.mxu0 0
    %1713 = vmatpush1.bf16.xpose.msra.mxu0 0
    %1714 = vmatprep.subr.bf16.mxu0 0
    %1715 = vmatpush1.bf16.xpose.msra.mxu0 0
    %1716 = vmatprep.subr.bf16.mxu0 0
    %1717 = vmatpush1.bf16.xpose.msra.mxu0 0
    %1718 = vmatprep.subr.bf16.mxu0 0
    %1719 = vmatpush1.bf16.xpose.msra.mxu0 0
    %1720 = vmatprep.subr.bf16.mxu0 0
    %1721 = vmatpush1.bf16.xpose.msra.mxu0 0
    %1722 = vmatprep.subr.bf16.mxu0 0
    %1723 = vmatpush1.bf16.xpose.msra.mxu0 0
    %1724 = vmatprep.subr.bf16.mxu0 0
    %1725 = vmatpush1.bf16.xpose.msra.mxu0 0
    %1726 = vmatprep.subr.bf16.mxu0 0
    %1727 = vmatpush1.bf16.xpose.msra.mxu0 0
    %1728 = vmatprep.subr.bf16.mxu0 0
    %1729 = vmatpush1.bf16.xpose.msra.mxu0 0
    %1730 = vmatprep.subr.bf16.mxu0 0
    %1731 = vmatpush1.bf16.xpose.msra.mxu0 0
    %1732 = vmatprep.subr.bf16.mxu0 0
    %1733 = vmatpush1.bf16.xpose.msra.mxu0 0
    %1734 = vmatprep.subr.bf16.mxu0 0
    %1735 = vmatpush1.bf16.xpose.msra.mxu0 0
    %1736 = vmatprep.subr.bf16.mxu0 0
    %1737 = vmatpush1.bf16.xpose.msra.mxu0 0
    %1738 = vmatprep.subr.bf16.mxu0 0
    %1739 = vmatpush1.bf16.xpose.msra.mxu0 0
    %1740 = vmatprep.mubr.bf16.mxu0 0
    %1741 = vmatmul.mubr.bf16.gmra.mrb[0].mxu0 %v1697
    %v1742 = vpop.f32.mrb[0].mxu0
    %v1743 = vadd.f32 0.0, %v1742
    %v1744 = vpop.f32.mrb[0].mxu0
    %v1745 = vpop.f32.mrb[0].mxu0
    %v1746 = vadd.f32 0.0, %v1745
    %v1747 = vpop.f32.mrb[0].mxu0
    %1748 = vmatprep.mubr.bf16.mxu0 0
    %1749 = vmatmul.mubr.bf16.gmra.mrb[0].mxu0 %v1700
    %v1750 = vpop.f32.mrb[0].mxu0
    %v1751 = vadd.f32 0.0, %v1750
    %v1752 = vpop.f32.mrb[0].mxu0
    %v1753 = vpop.f32.mrb[0].mxu0
    %v1754 = vpop.f32.mrb[0].mxu0
    %1755 = vdwg.mxu0
    %1756 = vrot.lane.b32.xlu0 %v663, 32
    %v1757 = vpop.permute.xlu0 %1756
    %1758 = vrot.lane.b32.xlu0 %v664, 32
    %v1759 = vpop.permute.xlu0 %1758
    %1760 = vrot.lane.b32.xlu0 %v667, 32
    %v1761 = vpop.permute.xlu0 %1760
    %1762 = vrot.lane.b32.xlu0 %v668, 32
    %v1763 = vpop.permute.xlu0 %1762
    %v1765 = vsel %vm673, %v1757, 0
    %v1768 = vsel %vm673, %v1759, 0
    %v1771 = vsel %vm673, %v1761, 0
    %v1774 = vsel %vm673, %v1763, 0
    %1776 = vmatprep.subr.bf16.mxu0 0
    %1777 = vmatpush1.bf16.xpose.msra.mxu0 %v1771
    %1778 = vmatprep.subr.bf16.mxu0 0
    %1779 = vmatpush1.bf16.xpose.msra.mxu0 %v1774
    %1780 = vmatprep.subr.bf16.mxu0 0
    %1781 = vmatpush1.bf16.xpose.msra.mxu0 0
    %1782 = vmatprep.subr.bf16.mxu0 0
    %1783 = vmatpush1.bf16.xpose.msra.mxu0 0
    %1784 = vmatprep.subr.bf16.mxu0 0
    %1785 = vmatpush1.bf16.xpose.msra.mxu0 0
    %1786 = vmatprep.subr.bf16.mxu0 0
    %1787 = vmatpush1.bf16.xpose.msra.mxu0 0
    %1788 = vmatprep.subr.bf16.mxu0 0
    %1789 = vmatpush1.bf16.xpose.msra.mxu0 0
    %1790 = vmatprep.subr.bf16.mxu0 0
    %1791 = vmatpush1.bf16.xpose.msra.mxu0 0
    %1792 = vmatprep.subr.bf16.mxu0 0
    %1793 = vmatpush1.bf16.xpose.msra.mxu0 0
    %1794 = vmatprep.subr.bf16.mxu0 0
    %1795 = vmatpush1.bf16.xpose.msra.mxu0 0
    %1796 = vmatprep.subr.bf16.mxu0 0
    %1797 = vmatpush1.bf16.xpose.msra.mxu0 0
    %1798 = vmatprep.subr.bf16.mxu0 0
    %1799 = vmatpush1.bf16.xpose.msra.mxu0 0
    %1800 = vmatprep.subr.bf16.mxu0 0
    %1801 = vmatpush1.bf16.xpose.msra.mxu0 0
    %1802 = vmatprep.subr.bf16.mxu0 0
    %1803 = vmatpush1.bf16.xpose.msra.mxu0 0
    %1804 = vmatprep.subr.bf16.mxu0 0
    %1805 = vmatpush1.bf16.xpose.msra.mxu0 0
    %1806 = vmatprep.subr.bf16.mxu0 0
    %1807 = vmatpush1.bf16.xpose.msra.mxu0 0
    %1808 = vmatprep.mubr.bf16.mxu0 0
    %1809 = vmatmul.mubr.bf16.gmra.mrb[0].mxu0 %v1765
    %v1810 = vpop.f32.mrb[0].mxu0
    %v1811 = vadd.f32 0.0, %v1810
    %v1812 = vpop.f32.mrb[0].mxu0
    %v1813 = vpop.f32.mrb[0].mxu0
    %v1814 = vadd.f32 0.0, %v1813
    %v1815 = vpop.f32.mrb[0].mxu0
    %1816 = vmatprep.mubr.bf16.mxu0 0
    %1817 = vmatmul.mubr.bf16.gmra.mrb[0].mxu0 %v1768
    %v1818 = vpop.f32.mrb[0].mxu0
    %v1819 = vadd.f32 0.0, %v1818
    %v1820 = vpop.f32.mrb[0].mxu0
    %v1821 = vpop.f32.mrb[0].mxu0
    %v1822 = vpop.f32.mrb[0].mxu0
    %1823 = vdwg.mxu0
    %v1824 = vmul.f32 %v1743, 0.17677669
    %v1825 = vmul.f32 %v1746, 0.17677669
    %v1826 = vmul.f32 %v1751, 0.17677669
    %v1827 = vmul.f32 %v1811, 0.17677669
    %v1828 = vmul.f32 %v1814, 0.17677669
    %v1829 = vmul.f32 %v1819, 0.17677669
    %v1830 = vadd.f32 %v1824, %v267
    %v1831 = vadd.f32 %v1825, %v267
    %v1832 = vadd.f32 %v1826, %v267
    %v1833 = vadd.f32 %v1827, %v267
    %v1834 = vadd.f32 %v1828, %v267
    %v1835 = vadd.f32 %v1829, %v267
    %v1836 = vsel %vm806, %v1830, -inf
    %1837 = vmax.xlane.f32.xlu0 %v1836
    %v1838 = vpop.xlane.xlu0 %1837
    %v1839 = vsel %vm806, %v1831, -inf
    %1840 = vmax.xlane.f32.xlu0 %v1839
    %v1841 = vpop.xlane.xlu0 %1840
    %v1842 = vsel %vm806, %v1832, -inf
    %1843 = vmax.xlane.f32.xlu0 %v1842
    %v1844 = vpop.xlane.xlu0 %1843
    %v1845 = vsel %vm806, %v1833, -inf
    %1846 = vmax.xlane.f32.xlu0 %v1845
    %v1847 = vpop.xlane.xlu0 %1846
    %v1848 = vsel %vm806, %v1834, -inf
    %1849 = vmax.xlane.f32.xlu0 %v1848
    %v1850 = vpop.xlane.xlu0 %1849
    %v1851 = vsel %vm806, %v1835, -inf
    %1852 = vmax.xlane.f32.xlu0 %v1851
    %v1853 = vpop.xlane.xlu0 %1852
    %v1854 = vsub.f32 %v1830, %v1838
    %v1855 = vsub.f32 %v1831, %v1841
    %v1856 = vsub.f32 %v1832, %v1844
    %v1857 = vsub.f32 %v1833, %v1847
    %v1858 = vsub.f32 %v1834, %v1850
    %v1859 = vsub.f32 %v1835, %v1853
    %v1860 = vmul.f32 %v1854, 1.442695
    %v1861 = vpow.pop %v1860
    %v1862 = vmul.f32 %v1855, 1.442695
    %v1863 = vpow.pop %v1862
    %v1864 = vmul.f32 %v1856, 1.442695
    %v1865 = vpow.pop %v1864
    %v1866 = vmul.f32 %v1857, 1.442695
    %v1867 = vpow.pop %v1866
    %v1868 = vmul.f32 %v1858, 1.442695
    %v1869 = vpow.pop %v1868
    %v1870 = vmul.f32 %v1859, 1.442695
    %v1871 = vpow.pop %v1870
    %v1872 = vsel %vm806, %v1861, 0.0
    %1873 = vadd.xlane.f32.xlu0 %v1872
    %v1874 = vpop.xlane.xlu0 %1873
    %v1875 = vsel %vm806, %v1863, 0.0
    %1876 = vadd.xlane.f32.xlu0 %v1875
    %v1877 = vpop.xlane.xlu0 %1876
    %v1878 = vsel %vm806, %v1865, 0.0
    %1879 = vadd.xlane.f32.xlu0 %v1878
    %v1880 = vpop.xlane.xlu0 %1879
    %v1881 = vsel %vm806, %v1867, 0.0
    %1882 = vadd.xlane.f32.xlu0 %v1881
    %v1883 = vpop.xlane.xlu0 %1882
    %v1884 = vsel %vm806, %v1869, 0.0
    %1885 = vadd.xlane.f32.xlu0 %v1884
    %v1886 = vpop.xlane.xlu0 %1885
    %v1887 = vsel %vm806, %v1871, 0.0
    %1888 = vadd.xlane.f32.xlu0 %v1887
    %v1889 = vpop.xlane.xlu0 %1888
    %v1890 = vrcp.pop %v1874
    %v1891 = vrcp.pop %v1877
    %v1892 = vrcp.pop %v1880
    %v1893 = vrcp.pop %v1883
    %v1894 = vrcp.pop %v1886
    %v1895 = vrcp.pop %v1889
    %v1896 = vmul.f32 %v1861, %v1890
    %v1897 = vmul.f32 %v1863, %v1891
    %v1898 = vmul.f32 %v1865, %v1892
    %v1899 = vmul.f32 %v1867, %v1893
    %v1900 = vmul.f32 %v1869, %v1894
    %v1901 = vmul.f32 %v1871, %v1895
    %v1902 = vpack.c.bf16 %v1897, %v1896
    %v1903 = vpack.c.bf16 %v1898, %v1898
    %v1904 = vpack.c.bf16 %v1900, %v1899
    %v1905 = vpack.c.bf16 %v1901, %v1901
    %1906 = vrot.lane.b32.xlu0 %v669, 32
    %v1907 = vpop.permute.xlu0 %1906
    %1908 = vrot.lane.b32.xlu0 %v670, 32
    %v1909 = vpop.permute.xlu0 %1908
    %v1912 = vsel %vm806, %v1902, 0
    %v1915 = vsel %vm806, %v1903, 0
    %v1918 = vsel %vm883, %v1909, 0
    %1920 = vmatprep.subr.bf16.mxu0 0
    %1921 = vmatpush1.bf16.msra.mxu0 %v1907
    %1922 = vmatprep.subr.bf16.mxu0 0
    %1923 = vmatpush1.bf16.msra.mxu0 %v1918
    %1924 = vmatprep.subr.bf16.mxu0 0
    %1925 = vmatpush1.bf16.msra.mxu0 0
    %1926 = vmatprep.subr.bf16.mxu0 0
    %1927 = vmatpush1.bf16.msra.mxu0 0
    %1928 = vmatprep.subr.bf16.mxu0 0
    %1929 = vmatpush1.bf16.msra.mxu0 0
    %1930 = vmatprep.subr.bf16.mxu0 0
    %1931 = vmatpush1.bf16.msra.mxu0 0
    %1932 = vmatprep.subr.bf16.mxu0 0
    %1933 = vmatpush1.bf16.msra.mxu0 0
    %1934 = vmatprep.subr.bf16.mxu0 0
    %1935 = vmatpush1.bf16.msra.mxu0 0
    %1936 = vmatprep.subr.bf16.mxu0 0
    %1937 = vmatpush1.bf16.msra.mxu0 0
    %1938 = vmatprep.subr.bf16.mxu0 0
    %1939 = vmatpush1.bf16.msra.mxu0 0
    %1940 = vmatprep.subr.bf16.mxu0 0
    %1941 = vmatpush1.bf16.msra.mxu0 0
    %1942 = vmatprep.subr.bf16.mxu0 0
    %1943 = vmatpush1.bf16.msra.mxu0 0
    %1944 = vmatprep.subr.bf16.mxu0 0
    %1945 = vmatpush1.bf16.msra.mxu0 0
    %1946 = vmatprep.subr.bf16.mxu0 0
    %1947 = vmatpush1.bf16.msra.mxu0 0
    %1948 = vmatprep.subr.bf16.mxu0 0
    %1949 = vmatpush1.bf16.msra.mxu0 0
    %1950 = vmatprep.subr.bf16.mxu0 0
    %1951 = vmatpush1.bf16.msra.mxu0 0
    %1952 = vmatprep.mubr.bf16.mxu0 0
    %1953 = vmatmul.mubr.bf16.gmra.mrb[0].mxu0 %v1912
    %v1954 = vpop.f32.mrb[0].mxu0
    %v1955 = vadd.f32 0.0, %v1954
    %v1956 = vpop.f32.mrb[0].mxu0
    %v1957 = vpop.f32.mrb[0].mxu0
    %v1958 = vadd.f32 0.0, %v1957
    %v1959 = vpop.f32.mrb[0].mxu0
    %1960 = vmatprep.mubr.bf16.mxu0 0
    %1961 = vmatmul.mubr.bf16.gmra.mrb[0].mxu0 %v1915
    %v1962 = vpop.f32.mrb[0].mxu0
    %v1963 = vadd.f32 0.0, %v1962
    %v1964 = vpop.f32.mrb[0].mxu0
    %v1965 = vpop.f32.mrb[0].mxu0
    %v1966 = vpop.f32.mrb[0].mxu0
    %1967 = vdwg.mxu0
    %1968 = vrot.lane.b32.xlu0 %v671, 32
    %v1969 = vpop.permute.xlu0 %1968
    %1970 = vrot.lane.b32.xlu0 %v672, 32
    %v1971 = vpop.permute.xlu0 %1970
    %v1974 = vsel %vm806, %v1904, 0
    %v1977 = vsel %vm806, %v1905, 0
    %v1980 = vsel %vm883, %v1971, 0
    %1982 = vmatprep.subr.bf16.mxu0 0
    %1983 = vmatpush1.bf16.msra.mxu0 %v1969
    %1984 = vmatprep.subr.bf16.mxu0 0
    %1985 = vmatpush1.bf16.msra.mxu0 %v1980
    %1986 = vmatprep.subr.bf16.mxu0 0
    %1987 = vmatpush1.bf16.msra.mxu0 0
    %1988 = vmatprep.subr.bf16.mxu0 0
    %1989 = vmatpush1.bf16.msra.mxu0 0
    %1990 = vmatprep.subr.bf16.mxu0 0
    %1991 = vmatpush1.bf16.msra.mxu0 0
    %1992 = vmatprep.subr.bf16.mxu0 0
    %1993 = vmatpush1.bf16.msra.mxu0 0
    %1994 = vmatprep.subr.bf16.mxu0 0
    %1995 = vmatpush1.bf16.msra.mxu0 0
    %1996 = vmatprep.subr.bf16.mxu0 0
    %1997 = vmatpush1.bf16.msra.mxu0 0
    %1998 = vmatprep.subr.bf16.mxu0 0
    %1999 = vmatpush1.bf16.msra.mxu0 0
    %2000 = vmatprep.subr.bf16.mxu0 0
    %2001 = vmatpush1.bf16.msra.mxu0 0
    %2002 = vmatprep.subr.bf16.mxu0 0
    %2003 = vmatpush1.bf16.msra.mxu0 0
    %2004 = vmatprep.subr.bf16.mxu0 0
    %2005 = vmatpush1.bf16.msra.mxu0 0
    %2006 = vmatprep.subr.bf16.mxu0 0
    %2007 = vmatpush1.bf16.msra.mxu0 0
    %2008 = vmatprep.subr.bf16.mxu0 0
    %2009 = vmatpush1.bf16.msra.mxu0 0
    %2010 = vmatprep.subr.bf16.mxu0 0
    %2011 = vmatpush1.bf16.msra.mxu0 0
    %2012 = vmatprep.subr.bf16.mxu0 0
    %2013 = vmatpush1.bf16.msra.mxu0 0
    %2014 = vmatprep.mubr.bf16.mxu0 0
    %2015 = vmatmul.mubr.bf16.gmra.mrb[0].mxu0 %v1974
    %v2016 = vpop.f32.mrb[0].mxu0
    %v2017 = vadd.f32 0.0, %v2016
    %v2018 = vpop.f32.mrb[0].mxu0
    %v2019 = vpop.f32.mrb[0].mxu0
    %v2020 = vadd.f32 0.0, %v2019
    %v2021 = vpop.f32.mrb[0].mxu0
    %2022 = vmatprep.mubr.bf16.mxu0 0
    %2023 = vmatmul.mubr.bf16.gmra.mrb[0].mxu0 %v1977
    %v2024 = vpop.f32.mrb[0].mxu0
    %v2025 = vadd.f32 0.0, %v2024
    %v2026 = vpop.f32.mrb[0].mxu0
    %v2027 = vpop.f32.mrb[0].mxu0
    %v2028 = vpop.f32.mrb[0].mxu0
    %2029 = vdwg.mxu0
    %2036 = vrot.lane.b32.xlu0 %v1269, 32
    %v2037 = vpop.permute.xlu0 %2036
    %2038 = vrot.lane.b32.xlu0 %v1272, 32
    %v2039 = vpop.permute.xlu0 %2038
    %2040 = vrot.lane.b32.xlu0 %v1277, 32
    %v2041 = vpop.permute.xlu0 %2040
    %2042 = vrot.lane.b32.xlu0 %v1333, 32
    %v2043 = vpop.permute.xlu0 %2042
    %2044 = vrot.lane.b32.xlu0 %v1336, 32
    %v2045 = vpop.permute.xlu0 %2044
    %2046 = vrot.lane.b32.xlu0 %v1341, 32
    %v2047 = vpop.permute.xlu0 %2046
    %2060 = vrot.lane.b32.xlu0 %v1613, 64
    %v2061 = vpop.permute.xlu0 %2060
    %2062 = vrot.lane.b32.xlu0 %v1616, 64
    %v2063 = vpop.permute.xlu0 %2062
    %2064 = vrot.lane.b32.xlu0 %v1621, 64
    %v2065 = vpop.permute.xlu0 %2064
    %2066 = vrot.lane.b32.xlu0 %v1675, 64
    %v2067 = vpop.permute.xlu0 %2066
    %2068 = vrot.lane.b32.xlu0 %v1678, 64
    %v2069 = vpop.permute.xlu0 %2068
    %2070 = vrot.lane.b32.xlu0 %v1683, 64
    %v2071 = vpop.permute.xlu0 %2070
    %2084 = vrot.lane.b32.xlu0 %v1955, 96
    %v2085 = vpop.permute.xlu0 %2084
    %2086 = vrot.lane.b32.xlu0 %v1958, 96
    %v2087 = vpop.permute.xlu0 %2086
    %2088 = vrot.lane.b32.xlu0 %v1963, 96
    %v2089 = vpop.permute.xlu0 %2088
    %2090 = vrot.lane.b32.xlu0 %v2017, 96
    %v2091 = vpop.permute.xlu0 %2090
    %2092 = vrot.lane.b32.xlu0 %v2020, 96
    %v2093 = vpop.permute.xlu0 %2092
    %2094 = vrot.lane.b32.xlu0 %v2025, 96
    %v2095 = vpop.permute.xlu0 %2094
    %v2102 = vsel %vm673, %v922, %v2037
    %v2103 = vsel %vm673, %v925, %v2039
    %v2104 = vsel %vm673, %v930, %v2041
    %v2105 = vsel %vm673, %v979, %v2043
    %v2106 = vsel %vm673, %v982, %v2045
    %v2107 = vsel %vm673, %v987, %v2047
    %v2108 = vsel %vm185, %v2102, %v2061
    %v2109 = vsel %vm185, %v2103, %v2063
    %v2110 = vsel %vm185, %v2104, %v2065
    %v2111 = vsel %vm185, %v2105, %v2067
    %v2112 = vsel %vm185, %v2106, %v2069
    %v2113 = vsel %vm185, %v2107, %v2071
    %vm2114 = vcmask 785408
    %v2115 = vsel %vm2114, %v2108, %v2085
    %v2116 = vsel %vm2114, %v2109, %v2087
    %v2117 = vsel %vm2114, %v2110, %v2089
    %v2118 = vsel %vm2114, %v2111, %v2091
    %v2119 = vsel %vm2114, %v2112, %v2093
    %v2120 = vsel %vm2114, %v2113, %v2095
    %v2121 = vpack.c.bf16 %v2116, %v2115
    %v2122 = vpack.c.bf16 %v2118, %v2117
    %v2123 = vpack.c.bf16 %v2120, %v2119
    %v2124 = vld [vmem:[%s9] sm:$0xf]
    %v2125 = vld [vmem:[%s9 + $0x4] sm:$0xf]
    %v2126 = vld [vmem:[%s9 + $0x8] sm:$0xf]
    %v2127 = vld [vmem:[%s9 + $0xc] sm:$0xf]
    %v2128 = vld [vmem:[%s9 + $0x10] sm:$0xf]
    %v2129 = vld [vmem:[%s9 + $0x14] sm:$0xf]
    %v2130 = vld [vmem:[%s9 + $0x18] sm:$0xf]
    %v2131 = vld [vmem:[%s9 + $0x1c] sm:$0xf]
    %v2132 = vld [vmem:[%s9 + $0x20] sm:$0xf]
    %v2133 = vld [vmem:[%s9 + $0x24] sm:$0xf]
    %v2134 = vld [vmem:[%s9 + $0x28] sm:$0xf]
    %v2135 = vld [vmem:[%s9 + $0x2c] sm:$0xf]
    %v2136 = vld [vmem:[%s9 + $0x30] sm:$0xf]
    %v2137 = vld [vmem:[%s9 + $0x34] sm:$0xf]
    %v2138 = vld [vmem:[%s9 + $0x38] sm:$0xf]
    %v2139 = vld [vmem:[%s9 + $0x3c] sm:$0xf]
    %v2140 = vld [vmem:[%s10] sm:$0x1]
    %v2142 = vlaneseq
    %v2143 = vshrl.u32 %v2142, 7
    %v2144 = vsub.s32 0, %v2143
    %v2145 = vrot.slane %v2140, %v2144
    %v2163 = vunpack.c.l.b16 %v2124
    %v2164 = vunpack.c.l.b16 %v2125
    %v2165 = vunpack.c.l.b16 %v2126
    %v2166 = vunpack.c.l.b16 %v2127
    %v2167 = vunpack.c.l.b16 %v2128
    %v2168 = vunpack.c.l.b16 %v2129
    %v2169 = vunpack.c.l.b16 %v2130
    %v2170 = vunpack.c.l.b16 %v2131
    %v2171 = vunpack.c.l.b16 %v2132
    %v2172 = vunpack.c.l.b16 %v2133
    %v2173 = vunpack.c.l.b16 %v2134
    %v2174 = vunpack.c.l.b16 %v2135
    %v2175 = vunpack.c.l.b16 %v2136
    %v2176 = vunpack.c.l.b16 %v2137
    %v2177 = vunpack.c.l.b16 %v2138
    %v2178 = vunpack.c.l.b16 %v2139
    %v2179 = vpack.c.b16 %v2164, %v2163
    %v2180 = vpack.c.b16 %v2166, %v2165
    %v2181 = vpack.c.b16 %v2168, %v2167
    %v2182 = vpack.c.b16 %v2170, %v2169
    %v2183 = vpack.c.b16 %v2172, %v2171
    %v2184 = vpack.c.b16 %v2174, %v2173
    %v2185 = vpack.c.b16 %v2176, %v2175
    %v2186 = vpack.c.b16 %v2178, %v2177
    %2195 = vmatprep.subr.bf16.mxu0 0
    %2196 = vmatpush1.bf16.msra.mxu0 %v2179
    %2197 = vmatprep.subr.bf16.mxu0 0
    %2198 = vmatpush1.bf16.msra.mxu0 %v2180
    %2199 = vmatprep.subr.bf16.mxu0 0
    %2200 = vmatpush1.bf16.msra.mxu0 %v2181
    %2201 = vmatprep.subr.bf16.mxu0 0
    %2202 = vmatpush1.bf16.msra.mxu0 %v2182
    %2203 = vmatprep.subr.bf16.mxu0 0
    %2204 = vmatpush1.bf16.msra.mxu0 %v2183
    %2205 = vmatprep.subr.bf16.mxu0 0
    %2206 = vmatpush1.bf16.msra.mxu0 %v2184
    %2207 = vmatprep.subr.bf16.mxu0 0
    %2208 = vmatpush1.bf16.msra.mxu0 %v2185
    %2209 = vmatprep.subr.bf16.mxu0 0
    %2210 = vmatpush1.bf16.msra.mxu0 %v2186
    %2211 = vmatprep.subr.bf16.mxu0 0
    %2212 = vmatpush1.bf16.msra.mxu0 0
    %2213 = vmatprep.subr.bf16.mxu0 0
    %2214 = vmatpush1.bf16.msra.mxu0 0
    %2215 = vmatprep.subr.bf16.mxu0 0
    %2216 = vmatpush1.bf16.msra.mxu0 0
    %2217 = vmatprep.subr.bf16.mxu0 0
    %2218 = vmatpush1.bf16.msra.mxu0 0
    %2219 = vmatprep.subr.bf16.mxu0 0
    %2220 = vmatpush1.bf16.msra.mxu0 0
    %2221 = vmatprep.subr.bf16.mxu0 0
    %2222 = vmatpush1.bf16.msra.mxu0 0
    %2223 = vmatprep.subr.bf16.mxu0 0
    %2224 = vmatpush1.bf16.msra.mxu0 0
    %2225 = vmatprep.subr.bf16.mxu0 0
    %2226 = vmatpush1.bf16.msra.mxu0 0
    %2227 = vmatprep.mubr.bf16.mxu0 0
    %2228 = vmatmul.mubr.bf16.gmra.mrb[0].mxu0 %v2121
    %v2229 = vpop.f32.mrb[0].mxu0
    %v2230 = vadd.f32 %v2145, %v2229
    %v2231 = vpop.f32.mrb[0].mxu0
    %v2232 = vpop.f32.mrb[0].mxu0
    %v2233 = vadd.f32 %v2145, %v2232
    %v2234 = vpop.f32.mrb[0].mxu0
    %2235 = vmatprep.mubr.bf16.mxu0 0
    %2236 = vmatmul.mubr.bf16.gmra.mrb[0].mxu0 %v2122
    %v2237 = vpop.f32.mrb[0].mxu0
    %v2238 = vadd.f32 %v2145, %v2237
    %v2239 = vpop.f32.mrb[0].mxu0
    %v2240 = vpop.f32.mrb[0].mxu0
    %v2241 = vadd.f32 %v2145, %v2240
    %v2242 = vpop.f32.mrb[0].mxu0
    %2243 = vmatprep.mubr.bf16.mxu0 0
    %2244 = vmatmul.mubr.bf16.gmra.mrb[0].mxu0 %v2123
    %v2245 = vpop.f32.mrb[0].mxu0
    %v2246 = vadd.f32 %v2145, %v2245
    %v2247 = vpop.f32.mrb[0].mxu0
    %v2248 = vpop.f32.mrb[0].mxu0
    %v2249 = vadd.f32 %v2145, %v2248
    %v2250 = vpop.f32.mrb[0].mxu0
    %2251 = vdwg.mxu0
    %v2252 = vadd.f32 %v2230, %v258
    %v2253 = vadd.f32 %v2233, %v259
    %v2254 = vadd.f32 %v2238, %v260
    %v2255 = vadd.f32 %v2241, %v261
    %v2256 = vadd.f32 %v2246, %v262
    %v2257 = vadd.f32 %v2249, %v263
    %v2258 = vld [vmem:[%s11] sm:$0x1]
    %v2259 = vld [vmem:[%s12] sm:$0x1]
    %2260 = vadd.xlane.f32.xlu0 %v2252
    %v2261 = vpop.xlane.xlu0 %2260
    %2262 = vadd.xlane.f32.xlu0 %v2253
    %v2263 = vpop.xlane.xlu0 %2262
    %2264 = vadd.xlane.f32.xlu0 %v2254
    %v2265 = vpop.xlane.xlu0 %2264
    %2266 = vadd.xlane.f32.xlu0 %v2255
    %v2267 = vpop.xlane.xlu0 %2266
    %2268 = vadd.xlane.f32.xlu0 %v2256
    %v2269 = vpop.xlane.xlu0 %2268
    %2270 = vadd.xlane.f32.xlu0 %v2257
    %v2271 = vpop.xlane.xlu0 %2270
    %v2272 = vmul.f32 %v2261, %v282
    %v2273 = vmul.f32 %v2263, %v282
    %v2274 = vmul.f32 %v2265, %v282
    %v2275 = vmul.f32 %v2267, %v282
    %v2276 = vmul.f32 %v2269, %v282
    %v2277 = vmul.f32 %v2271, %v282
    %v2278 = vsub.f32 %v2252, %v2272
    %v2279 = vsub.f32 %v2253, %v2273
    %v2280 = vsub.f32 %v2254, %v2274
    %v2281 = vsub.f32 %v2255, %v2275
    %v2282 = vsub.f32 %v2256, %v2276
    %v2283 = vsub.f32 %v2257, %v2277
    %v2284 = vmul.f32 %v2278, %v2278
    %v2285 = vmul.f32 %v2279, %v2279
    %v2286 = vmul.f32 %v2280, %v2280
    %v2287 = vmul.f32 %v2281, %v2281
    %v2288 = vmul.f32 %v2282, %v2282
    %v2289 = vmul.f32 %v2283, %v2283
    %2290 = vadd.xlane.f32.xlu0 %v2284
    %v2291 = vpop.xlane.xlu0 %2290
    %2292 = vadd.xlane.f32.xlu0 %v2285
    %v2293 = vpop.xlane.xlu0 %2292
    %2294 = vadd.xlane.f32.xlu0 %v2286
    %v2295 = vpop.xlane.xlu0 %2294
    %2296 = vadd.xlane.f32.xlu0 %v2287
    %v2297 = vpop.xlane.xlu0 %2296
    %2298 = vadd.xlane.f32.xlu0 %v2288
    %v2299 = vpop.xlane.xlu0 %2298
    %2300 = vadd.xlane.f32.xlu0 %v2289
    %v2301 = vpop.xlane.xlu0 %2300
    %v2302 = vmul.f32 %v2291, %v282
    %v2303 = vmul.f32 %v2293, %v282
    %v2304 = vmul.f32 %v2295, %v282
    %v2305 = vmul.f32 %v2297, %v282
    %v2306 = vmul.f32 %v2299, %v282
    %v2307 = vmul.f32 %v2301, %v282
    %v2308 = vadd.f32 %v2302, 1e-05
    %v2309 = vadd.f32 %v2303, 1e-05
    %v2310 = vadd.f32 %v2304, 1e-05
    %v2311 = vadd.f32 %v2305, 1e-05
    %v2312 = vadd.f32 %v2306, 1e-05
    %v2313 = vadd.f32 %v2307, 1e-05
    %v2314 = vrsqrt.pop %v2308
    %v2315 = vrsqrt.pop %v2309
    %v2316 = vrsqrt.pop %v2310
    %v2317 = vrsqrt.pop %v2311
    %v2318 = vrsqrt.pop %v2312
    %v2319 = vrsqrt.pop %v2313
    %v2320 = vmul.f32 %v2278, %v2314
    %v2321 = vmul.f32 %v2279, %v2315
    %v2322 = vmul.f32 %v2280, %v2316
    %v2323 = vmul.f32 %v2281, %v2317
    %v2324 = vmul.f32 %v2282, %v2318
    %v2325 = vmul.f32 %v2283, %v2319
    %v2327 = vlaneseq
    %v2328 = vshrl.u32 %v2327, 7
    %v2329 = vsub.s32 0, %v2328
    %v2330 = vrot.slane %v2258, %v2329
    %v2332 = vmul.f32 %v2320, %v2330
    %v2333 = vmul.f32 %v2321, %v2330
    %v2334 = vmul.f32 %v2322, %v2330
    %v2335 = vmul.f32 %v2323, %v2330
    %v2336 = vmul.f32 %v2324, %v2330
    %v2337 = vmul.f32 %v2325, %v2330
    %v2339 = vlaneseq
    %v2340 = vshrl.u32 %v2339, 7
    %v2341 = vsub.s32 0, %v2340
    %v2342 = vrot.slane %v2259, %v2341
    %v2344 = vadd.f32 %v2332, %v2342
    %v2345 = vadd.f32 %v2333, %v2342
    %v2346 = vadd.f32 %v2334, %v2342
    %v2347 = vadd.f32 %v2335, %v2342
    %v2348 = vadd.f32 %v2336, %v2342
    %v2349 = vadd.f32 %v2337, %v2342
    %v2350 = vpack.c.bf16 %v2345, %v2344
    %v2351 = vpack.c.bf16 %v2347, %v2346
    %v2352 = vpack.c.bf16 %v2349, %v2348
    %v2353 = vld [vmem:[%s13] sm:$0xff]
    %v2354 = vld [vmem:[%s13 + $0x8] sm:$0xff]
    %v2355 = vld [vmem:[%s13 + $0x10] sm:$0xff]
    %v2356 = vld [vmem:[%s13 + $0x18] sm:$0xff]
    %v2357 = vld [vmem:[%s13 + $0x20] sm:$0xff]
    %v2358 = vld [vmem:[%s13 + $0x28] sm:$0xff]
    %v2359 = vld [vmem:[%s13 + $0x30] sm:$0xff]
    %v2360 = vld [vmem:[%s13 + $0x38] sm:$0xff]
    %v2361 = vld [vmem:[%s13 + $0x40] sm:$0xff]
    %v2362 = vld [vmem:[%s13 + $0x48] sm:$0xff]
    %v2363 = vld [vmem:[%s13 + $0x50] sm:$0xff]
    %v2364 = vld [vmem:[%s13 + $0x58] sm:$0xff]
    %v2365 = vld [vmem:[%s13 + $0x60] sm:$0xff]
    %v2366 = vld [vmem:[%s13 + $0x68] sm:$0xff]
    %v2367 = vld [vmem:[%s13 + $0x70] sm:$0xff]
    %v2368 = vld [vmem:[%s13 + $0x78] sm:$0xff]
    %v2369 = vld [vmem:[%s14] sm:$0x3]
    %v2371 = vlaneseq
    %v2372 = vshrl.u32 %v2371, 7
    %v2373 = vsub.s32 0, %v2372
    %v2374 = vrot.slane %v2369, %v2373
    %v2375 = vlaneseq
    %v2376 = vshrl.u32 %v2375, 7
    %v2377 = vsub.s32 1, %v2376
    %v2378 = vrot.slane %v2369, %v2377
    %v2397 = vunpack.c.l.b16 %v2353
    %v2398 = vunpack.c.h.b16 %v2353
    %v2399 = vunpack.c.l.b16 %v2354
    %v2400 = vunpack.c.h.b16 %v2354
    %v2401 = vunpack.c.l.b16 %v2355
    %v2402 = vunpack.c.h.b16 %v2355
    %v2403 = vunpack.c.l.b16 %v2356
    %v2404 = vunpack.c.h.b16 %v2356
    %v2405 = vunpack.c.l.b16 %v2357
    %v2406 = vunpack.c.h.b16 %v2357
    %v2407 = vunpack.c.l.b16 %v2358
    %v2408 = vunpack.c.h.b16 %v2358
    %v2409 = vunpack.c.l.b16 %v2359
    %v2410 = vunpack.c.h.b16 %v2359
    %v2411 = vunpack.c.l.b16 %v2360
    %v2412 = vunpack.c.h.b16 %v2360
    %v2413 = vunpack.c.l.b16 %v2361
    %v2414 = vunpack.c.h.b16 %v2361
    %v2415 = vunpack.c.l.b16 %v2362
    %v2416 = vunpack.c.h.b16 %v2362
    %v2417 = vunpack.c.l.b16 %v2363
    %v2418 = vunpack.c.h.b16 %v2363
    %v2419 = vunpack.c.l.b16 %v2364
    %v2420 = vunpack.c.h.b16 %v2364
    %v2421 = vunpack.c.l.b16 %v2365
    %v2422 = vunpack.c.h.b16 %v2365
    %v2423 = vunpack.c.l.b16 %v2366
    %v2424 = vunpack.c.h.b16 %v2366
    %v2425 = vunpack.c.l.b16 %v2367
    %v2426 = vunpack.c.h.b16 %v2367
    %v2427 = vunpack.c.l.b16 %v2368
    %v2428 = vunpack.c.h.b16 %v2368
    %v2429 = vpack.c.b16 %v2399, %v2397
    %v2430 = vpack.c.b16 %v2400, %v2398
    %v2431 = vpack.c.b16 %v2403, %v2401
    %v2432 = vpack.c.b16 %v2404, %v2402
    %v2433 = vpack.c.b16 %v2407, %v2405
    %v2434 = vpack.c.b16 %v2408, %v2406
    %v2435 = vpack.c.b16 %v2411, %v2409
    %v2436 = vpack.c.b16 %v2412, %v2410
    %v2437 = vpack.c.b16 %v2415, %v2413
    %v2438 = vpack.c.b16 %v2416, %v2414
    %v2439 = vpack.c.b16 %v2419, %v2417
    %v2440 = vpack.c.b16 %v2420, %v2418
    %v2441 = vpack.c.b16 %v2423, %v2421
    %v2442 = vpack.c.b16 %v2424, %v2422
    %v2443 = vpack.c.b16 %v2427, %v2425
    %v2444 = vpack.c.b16 %v2428, %v2426
    %2461 = vmatprep.subr.bf16.mxu0 %v2430
    %2462 = vmatpush1.bf16.msra.mxu0 %v2429
    %2463 = vmatprep.subr.bf16.mxu0 %v2432
    %2464 = vmatpush1.bf16.msra.mxu0 %v2431
    %2465 = vmatprep.subr.bf16.mxu0 %v2434
    %2466 = vmatpush1.bf16.msra.mxu0 %v2433
    %2467 = vmatprep.subr.bf16.mxu0 %v2436
    %2468 = vmatpush1.bf16.msra.mxu0 %v2435
    %2469 = vmatprep.subr.bf16.mxu0 %v2438
    %2470 = vmatpush1.bf16.msra.mxu0 %v2437
    %2471 = vmatprep.subr.bf16.mxu0 %v2440
    %2472 = vmatpush1.bf16.msra.mxu0 %v2439
    %2473 = vmatprep.subr.bf16.mxu0 %v2442
    %2474 = vmatpush1.bf16.msra.mxu0 %v2441
    %2475 = vmatprep.subr.bf16.mxu0 %v2444
    %2476 = vmatpush1.bf16.msra.mxu0 %v2443
    %2477 = vmatprep.subr.bf16.mxu0 0
    %2478 = vmatpush1.bf16.msra.mxu0 0
    %2479 = vmatprep.subr.bf16.mxu0 0
    %2480 = vmatpush1.bf16.msra.mxu0 0
    %2481 = vmatprep.subr.bf16.mxu0 0
    %2482 = vmatpush1.bf16.msra.mxu0 0
    %2483 = vmatprep.subr.bf16.mxu0 0
    %2484 = vmatpush1.bf16.msra.mxu0 0
    %2485 = vmatprep.subr.bf16.mxu0 0
    %2486 = vmatpush1.bf16.msra.mxu0 0
    %2487 = vmatprep.subr.bf16.mxu0 0
    %2488 = vmatpush1.bf16.msra.mxu0 0
    %2489 = vmatprep.subr.bf16.mxu0 0
    %2490 = vmatpush1.bf16.msra.mxu0 0
    %2491 = vmatprep.subr.bf16.mxu0 0
    %2492 = vmatpush1.bf16.msra.mxu0 0
    %2493 = vmatprep.mubr.bf16.mxu0 0
    %2494 = vmatmul.mubr.bf16.gmra.mrb[0].mxu0 %v2350
    %v2495 = vpop.f32.mrb[0].mxu0
    %v2496 = vadd.f32 %v2374, %v2495
    %v2497 = vpop.f32.mrb[0].mxu0
    %v2498 = vadd.f32 %v2378, %v2497
    %v2499 = vpop.f32.mrb[0].mxu0
    %v2500 = vadd.f32 %v2374, %v2499
    %v2501 = vpop.f32.mrb[0].mxu0
    %v2502 = vadd.f32 %v2378, %v2501
    %2503 = vmatprep.mubr.bf16.mxu0 0
    %2504 = vmatmul.mubr.bf16.gmra.mrb[0].mxu0 %v2351
    %v2505 = vpop.f32.mrb[0].mxu0
    %v2506 = vadd.f32 %v2374, %v2505
    %v2507 = vpop.f32.mrb[0].mxu0
    %v2508 = vadd.f32 %v2378, %v2507
    %v2509 = vpop.f32.mrb[0].mxu0
    %v2510 = vadd.f32 %v2374, %v2509
    %v2511 = vpop.f32.mrb[0].mxu0
    %v2512 = vadd.f32 %v2378, %v2511
    %2513 = vmatprep.mubr.bf16.mxu0 0
    %2514 = vmatmul.mubr.bf16.gmra.mrb[0].mxu0 %v2352
    %v2515 = vpop.f32.mrb[0].mxu0
    %v2516 = vadd.f32 %v2374, %v2515
    %v2517 = vpop.f32.mrb[0].mxu0
    %v2518 = vadd.f32 %v2378, %v2517
    %v2519 = vpop.f32.mrb[0].mxu0
    %v2520 = vadd.f32 %v2374, %v2519
    %v2521 = vpop.f32.mrb[0].mxu0
    %v2522 = vadd.f32 %v2378, %v2521
    %2523 = vdwg.mxu0
    %v2524 = vmul.f32 %v2496, 0.5
    %v2525 = vmul.f32 %v2498, 0.5
    %v2526 = vmul.f32 %v2500, 0.5
    %v2527 = vmul.f32 %v2502, 0.5
    %v2528 = vmul.f32 %v2506, 0.5
    %v2529 = vmul.f32 %v2508, 0.5
    %v2530 = vmul.f32 %v2510, 0.5
    %v2531 = vmul.f32 %v2512, 0.5
    %v2532 = vmul.f32 %v2516, 0.5
    %v2533 = vmul.f32 %v2518, 0.5
    %v2534 = vmul.f32 %v2520, 0.5
    %v2535 = vmul.f32 %v2522, 0.5
    %v2536 = vmul.f32 %v2496, 0.70710677
    %v2537 = vmul.f32 %v2498, 0.70710677
    %v2538 = vmul.f32 %v2500, 0.70710677
    %v2539 = vmul.f32 %v2502, 0.70710677
    %v2540 = vmul.f32 %v2506, 0.70710677
    %v2541 = vmul.f32 %v2508, 0.70710677
    %v2542 = vmul.f32 %v2510, 0.70710677
    %v2543 = vmul.f32 %v2512, 0.70710677
    %v2544 = vmul.f32 %v2516, 0.70710677
    %v2545 = vmul.f32 %v2518, 0.70710677
    %v2546 = vmul.f32 %v2520, 0.70710677
    %v2547 = vmul.f32 %v2522, 0.70710677
    %v2548 = vand.u32 2147483647, %v2536
    %v2549 = vand.u32 2147483647, %v2537
    %v2550 = vand.u32 2147483647, %v2538
    %v2551 = vand.u32 2147483647, %v2539
    %v2552 = vand.u32 2147483647, %v2540
    %v2553 = vand.u32 2147483647, %v2541
    %v2554 = vand.u32 2147483647, %v2542
    %v2555 = vand.u32 2147483647, %v2543
    %v2556 = vand.u32 2147483647, %v2544
    %v2557 = vand.u32 2147483647, %v2545
    %v2558 = vand.u32 2147483647, %v2546
    %v2559 = vand.u32 2147483647, %v2547
    %v2560 = vmul.f32 %v2548, 0.3275911
    %v2561 = vmul.f32 %v2549, 0.3275911
    %v2562 = vmul.f32 %v2550, 0.3275911
    %v2563 = vmul.f32 %v2551, 0.3275911
    %v2564 = vmul.f32 %v2552, 0.3275911
    %v2565 = vmul.f32 %v2553, 0.3275911
    %v2566 = vmul.f32 %v2554, 0.3275911
    %v2567 = vmul.f32 %v2555, 0.3275911
    %v2568 = vmul.f32 %v2556, 0.3275911
    %v2569 = vmul.f32 %v2557, 0.3275911
    %v2570 = vmul.f32 %v2558, 0.3275911
    %v2571 = vmul.f32 %v2559, 0.3275911
    %v2572 = vadd.f32 %v2560, 1.0
    %v2573 = vadd.f32 %v2561, 1.0
    %v2574 = vadd.f32 %v2562, 1.0
    %v2575 = vadd.f32 %v2563, 1.0
    %v2576 = vadd.f32 %v2564, 1.0
    %v2577 = vadd.f32 %v2565, 1.0
    %v2578 = vadd.f32 %v2566, 1.0
    %v2579 = vadd.f32 %v2567, 1.0
    %v2580 = vadd.f32 %v2568, 1.0
    %v2581 = vadd.f32 %v2569, 1.0
    %v2582 = vadd.f32 %v2570, 1.0
    %v2583 = vadd.f32 %v2571, 1.0
    %v2584 = vrcp.pop %v2572
    %v2585 = vmul.f32 1.0, %v2584
    %v2586 = vrcp.pop %v2573
    %v2587 = vmul.f32 1.0, %v2586
    %v2588 = vrcp.pop %v2574
    %v2589 = vmul.f32 1.0, %v2588
    %v2590 = vrcp.pop %v2575
    %v2591 = vmul.f32 1.0, %v2590
    %v2592 = vrcp.pop %v2576
    %v2593 = vmul.f32 1.0, %v2592
    %v2594 = vrcp.pop %v2577
    %v2595 = vmul.f32 1.0, %v2594
    %v2596 = vrcp.pop %v2578
    %v2597 = vmul.f32 1.0, %v2596
    %v2598 = vrcp.pop %v2579
    %v2599 = vmul.f32 1.0, %v2598
    %v2600 = vrcp.pop %v2580
    %v2601 = vmul.f32 1.0, %v2600
    %v2602 = vrcp.pop %v2581
    %v2603 = vmul.f32 1.0, %v2602
    %v2604 = vrcp.pop %v2582
    %v2605 = vmul.f32 1.0, %v2604
    %v2606 = vrcp.pop %v2583
    %v2607 = vmul.f32 1.0, %v2606
    %v2608 = vmul.f32 %v2585, 1.0614054
    %v2609 = vmul.f32 %v2587, 1.0614054
    %v2610 = vmul.f32 %v2589, 1.0614054
    %v2611 = vmul.f32 %v2591, 1.0614054
    %v2612 = vmul.f32 %v2593, 1.0614054
    %v2613 = vmul.f32 %v2595, 1.0614054
    %v2614 = vmul.f32 %v2597, 1.0614054
    %v2615 = vmul.f32 %v2599, 1.0614054
    %v2616 = vmul.f32 %v2601, 1.0614054
    %v2617 = vmul.f32 %v2603, 1.0614054
    %v2618 = vmul.f32 %v2605, 1.0614054
    %v2619 = vmul.f32 %v2607, 1.0614054
    %v2620 = vadd.f32 %v2608, -1.4531521
    %v2621 = vadd.f32 %v2609, -1.4531521
    %v2622 = vadd.f32 %v2610, -1.4531521
    %v2623 = vadd.f32 %v2611, -1.4531521
    %v2624 = vadd.f32 %v2612, -1.4531521
    %v2625 = vadd.f32 %v2613, -1.4531521
    %v2626 = vadd.f32 %v2614, -1.4531521
    %v2627 = vadd.f32 %v2615, -1.4531521
    %v2628 = vadd.f32 %v2616, -1.4531521
    %v2629 = vadd.f32 %v2617, -1.4531521
    %v2630 = vadd.f32 %v2618, -1.4531521
    %v2631 = vadd.f32 %v2619, -1.4531521
    %v2632 = vmul.f32 %v2620, %v2585
    %v2633 = vmul.f32 %v2621, %v2587
    %v2634 = vmul.f32 %v2622, %v2589
    %v2635 = vmul.f32 %v2623, %v2591
    %v2636 = vmul.f32 %v2624, %v2593
    %v2637 = vmul.f32 %v2625, %v2595
    %v2638 = vmul.f32 %v2626, %v2597
    %v2639 = vmul.f32 %v2627, %v2599
    %v2640 = vmul.f32 %v2628, %v2601
    %v2641 = vmul.f32 %v2629, %v2603
    %v2642 = vmul.f32 %v2630, %v2605
    %v2643 = vmul.f32 %v2631, %v2607
    %v2644 = vadd.f32 %v2632, 1.4214138
    %v2645 = vadd.f32 %v2633, 1.4214138
    %v2646 = vadd.f32 %v2634, 1.4214138
    %v2647 = vadd.f32 %v2635, 1.4214138
    %v2648 = vadd.f32 %v2636, 1.4214138
    %v2649 = vadd.f32 %v2637, 1.4214138
    %v2650 = vadd.f32 %v2638, 1.4214138
    %v2651 = vadd.f32 %v2639, 1.4214138
    %v2652 = vadd.f32 %v2640, 1.4214138
    %v2653 = vadd.f32 %v2641, 1.4214138
    %v2654 = vadd.f32 %v2642, 1.4214138
    %v2655 = vadd.f32 %v2643, 1.4214138
    %v2656 = vmul.f32 %v2644, %v2585
    %v2657 = vmul.f32 %v2645, %v2587
    %v2658 = vmul.f32 %v2646, %v2589
    %v2659 = vmul.f32 %v2647, %v2591
    %v2660 = vmul.f32 %v2648, %v2593
    %v2661 = vmul.f32 %v2649, %v2595
    %v2662 = vmul.f32 %v2650, %v2597
    %v2663 = vmul.f32 %v2651, %v2599
    %v2664 = vmul.f32 %v2652, %v2601
    %v2665 = vmul.f32 %v2653, %v2603
    %v2666 = vmul.f32 %v2654, %v2605
    %v2667 = vmul.f32 %v2655, %v2607
    %v2668 = vadd.f32 %v2656, -0.28449672
    %v2669 = vadd.f32 %v2657, -0.28449672
    %v2670 = vadd.f32 %v2658, -0.28449672
    %v2671 = vadd.f32 %v2659, -0.28449672
    %v2672 = vadd.f32 %v2660, -0.28449672
    %v2673 = vadd.f32 %v2661, -0.28449672
    %v2674 = vadd.f32 %v2662, -0.28449672
    %v2675 = vadd.f32 %v2663, -0.28449672
    %v2676 = vadd.f32 %v2664, -0.28449672
    %v2677 = vadd.f32 %v2665, -0.28449672
    %v2678 = vadd.f32 %v2666, -0.28449672
    %v2679 = vadd.f32 %v2667, -0.28449672
    %v2680 = vmul.f32 %v2668, %v2585
    %v2681 = vmul.f32 %v2669, %v2587
    %v2682 = vmul.f32 %v2670, %v2589
    %v2683 = vmul.f32 %v2671, %v2591
    %v2684 = vmul.f32 %v2672, %v2593
    %v2685 = vmul.f32 %v2673, %v2595
    %v2686 = vmul.f32 %v2674, %v2597
    %v2687 = vmul.f32 %v2675, %v2599
    %v2688 = vmul.f32 %v2676, %v2601
    %v2689 = vmul.f32 %v2677, %v2603
    %v2690 = vmul.f32 %v2678, %v2605
    %v2691 = vmul.f32 %v2679, %v2607
    %v2692 = vadd.f32 %v2680, 0.2548296
    %v2693 = vadd.f32 %v2681, 0.2548296
    %v2694 = vadd.f32 %v2682, 0.2548296
    %v2695 = vadd.f32 %v2683, 0.2548296
    %v2696 = vadd.f32 %v2684, 0.2548296
    %v2697 = vadd.f32 %v2685, 0.2548296
    %v2698 = vadd.f32 %v2686, 0.2548296
    %v2699 = vadd.f32 %v2687, 0.2548296
    %v2700 = vadd.f32 %v2688, 0.2548296
    %v2701 = vadd.f32 %v2689, 0.2548296
    %v2702 = vadd.f32 %v2690, 0.2548296
    %v2703 = vadd.f32 %v2691, 0.2548296
    %v2704 = vmul.f32 %v2692, %v2585
    %v2705 = vmul.f32 %v2693, %v2587
    %v2706 = vmul.f32 %v2694, %v2589
    %v2707 = vmul.f32 %v2695, %v2591
    %v2708 = vmul.f32 %v2696, %v2593
    %v2709 = vmul.f32 %v2697, %v2595
    %v2710 = vmul.f32 %v2698, %v2597
    %v2711 = vmul.f32 %v2699, %v2599
    %v2712 = vmul.f32 %v2700, %v2601
    %v2713 = vmul.f32 %v2701, %v2603
    %v2714 = vmul.f32 %v2702, %v2605
    %v2715 = vmul.f32 %v2703, %v2607
    %v2716 = vsub.f32 0.0, %v2548
    %v2717 = vsub.f32 0.0, %v2549
    %v2718 = vsub.f32 0.0, %v2550
    %v2719 = vsub.f32 0.0, %v2551
    %v2720 = vsub.f32 0.0, %v2552
    %v2721 = vsub.f32 0.0, %v2553
    %v2722 = vsub.f32 0.0, %v2554
    %v2723 = vsub.f32 0.0, %v2555
    %v2724 = vsub.f32 0.0, %v2556
    %v2725 = vsub.f32 0.0, %v2557
    %v2726 = vsub.f32 0.0, %v2558
    %v2727 = vsub.f32 0.0, %v2559
    %v2728 = vmul.f32 %v2716, %v2548
    %v2729 = vmul.f32 %v2717, %v2549
    %v2730 = vmul.f32 %v2718, %v2550
    %v2731 = vmul.f32 %v2719, %v2551
    %v2732 = vmul.f32 %v2720, %v2552
    %v2733 = vmul.f32 %v2721, %v2553
    %v2734 = vmul.f32 %v2722, %v2554
    %v2735 = vmul.f32 %v2723, %v2555
    %v2736 = vmul.f32 %v2724, %v2556
    %v2737 = vmul.f32 %v2725, %v2557
    %v2738 = vmul.f32 %v2726, %v2558
    %v2739 = vmul.f32 %v2727, %v2559
    %v2740 = vmul.f32 %v2728, 1.442695
    %v2741 = vpow.pop %v2740
    %v2742 = vmul.f32 %v2729, 1.442695
    %v2743 = vpow.pop %v2742
    %v2744 = vmul.f32 %v2730, 1.442695
    %v2745 = vpow.pop %v2744
    %v2746 = vmul.f32 %v2731, 1.442695
    %v2747 = vpow.pop %v2746
    %v2748 = vmul.f32 %v2732, 1.442695
    %v2749 = vpow.pop %v2748
    %v2750 = vmul.f32 %v2733, 1.442695
    %v2751 = vpow.pop %v2750
    %v2752 = vmul.f32 %v2734, 1.442695
    %v2753 = vpow.pop %v2752
    %v2754 = vmul.f32 %v2735, 1.442695
    %v2755 = vpow.pop %v2754
    %v2756 = vmul.f32 %v2736, 1.442695
    %v2757 = vpow.pop %v2756
    %v2758 = vmul.f32 %v2737, 1.442695
    %v2759 = vpow.pop %v2758
    %v2760 = vmul.f32 %v2738, 1.442695
    %v2761 = vpow.pop %v2760
    %v2762 = vmul.f32 %v2739, 1.442695
    %v2763 = vpow.pop %v2762
    %v2764 = vmul.f32 %v2704, %v2741
    %v2765 = vmul.f32 %v2705, %v2743
    %v2766 = vmul.f32 %v2706, %v2745
    %v2767 = vmul.f32 %v2707, %v2747
    %v2768 = vmul.f32 %v2708, %v2749
    %v2769 = vmul.f32 %v2709, %v2751
    %v2770 = vmul.f32 %v2710, %v2753
    %v2771 = vmul.f32 %v2711, %v2755
    %v2772 = vmul.f32 %v2712, %v2757
    %v2773 = vmul.f32 %v2713, %v2759
    %v2774 = vmul.f32 %v2714, %v2761
    %v2775 = vmul.f32 %v2715, %v2763
    %v2776 = vsub.f32 1.0, %v2764
    %v2777 = vsub.f32 1.0, %v2765
    %v2778 = vsub.f32 1.0, %v2766
    %v2779 = vsub.f32 1.0, %v2767
    %v2780 = vsub.f32 1.0, %v2768
    %v2781 = vsub.f32 1.0, %v2769
    %v2782 = vsub.f32 1.0, %v2770
    %v2783 = vsub.f32 1.0, %v2771
    %v2784 = vsub.f32 1.0, %v2772
    %v2785 = vsub.f32 1.0, %v2773
    %v2786 = vsub.f32 1.0, %v2774
    %v2787 = vsub.f32 1.0, %v2775
    %vm2788 = vcmp.ge.f32.partialorder %v2536, 0.0
    %vm2789 = vcmp.ge.f32.partialorder %v2537, 0.0
    %vm2790 = vcmp.ge.f32.partialorder %v2538, 0.0
    %vm2791 = vcmp.ge.f32.partialorder %v2539, 0.0
    %vm2792 = vcmp.ge.f32.partialorder %v2540, 0.0
    %vm2793 = vcmp.ge.f32.partialorder %v2541, 0.0
    %vm2794 = vcmp.ge.f32.partialorder %v2542, 0.0
    %vm2795 = vcmp.ge.f32.partialorder %v2543, 0.0
    %vm2796 = vcmp.ge.f32.partialorder %v2544, 0.0
    %vm2797 = vcmp.ge.f32.partialorder %v2545, 0.0
    %vm2798 = vcmp.ge.f32.partialorder %v2546, 0.0
    %vm2799 = vcmp.ge.f32.partialorder %v2547, 0.0
    %v2800 = vsub.f32 0.0, %v2776
    %v2801 = vsub.f32 0.0, %v2777
    %v2802 = vsub.f32 0.0, %v2778
    %v2803 = vsub.f32 0.0, %v2779
    %v2804 = vsub.f32 0.0, %v2780
    %v2805 = vsub.f32 0.0, %v2781
    %v2806 = vsub.f32 0.0, %v2782
    %v2807 = vsub.f32 0.0, %v2783
    %v2808 = vsub.f32 0.0, %v2784
    %v2809 = vsub.f32 0.0, %v2785
    %v2810 = vsub.f32 0.0, %v2786
    %v2811 = vsub.f32 0.0, %v2787
    %v2812 = vsel %vm2788, %v2776, %v2800
    %v2813 = vsel %vm2789, %v2777, %v2801
    %v2814 = vsel %vm2790, %v2778, %v2802
    %v2815 = vsel %vm2791, %v2779, %v2803
    %v2816 = vsel %vm2792, %v2780, %v2804
    %v2817 = vsel %vm2793, %v2781, %v2805
    %v2818 = vsel %vm2794, %v2782, %v2806
    %v2819 = vsel %vm2795, %v2783, %v2807
    %v2820 = vsel %vm2796, %v2784, %v2808
    %v2821 = vsel %vm2797, %v2785, %v2809
    %v2822 = vsel %vm2798, %v2786, %v2810
    %v2823 = vsel %vm2799, %v2787, %v2811
    %v2824 = vadd.f32 %v2812, 1.0
    %v2825 = vadd.f32 %v2813, 1.0
    %v2826 = vadd.f32 %v2814, 1.0
    %v2827 = vadd.f32 %v2815, 1.0
    %v2828 = vadd.f32 %v2816, 1.0
    %v2829 = vadd.f32 %v2817, 1.0
    %v2830 = vadd.f32 %v2818, 1.0
    %v2831 = vadd.f32 %v2819, 1.0
    %v2832 = vadd.f32 %v2820, 1.0
    %v2833 = vadd.f32 %v2821, 1.0
    %v2834 = vadd.f32 %v2822, 1.0
    %v2835 = vadd.f32 %v2823, 1.0
    %v2836 = vmul.f32 %v2524, %v2824
    %v2837 = vmul.f32 %v2525, %v2825
    %v2838 = vmul.f32 %v2526, %v2826
    %v2839 = vmul.f32 %v2527, %v2827
    %v2840 = vmul.f32 %v2528, %v2828
    %v2841 = vmul.f32 %v2529, %v2829
    %v2842 = vmul.f32 %v2530, %v2830
    %v2843 = vmul.f32 %v2531, %v2831
    %v2844 = vmul.f32 %v2532, %v2832
    %v2845 = vmul.f32 %v2533, %v2833
    %v2846 = vmul.f32 %v2534, %v2834
    %v2847 = vmul.f32 %v2535, %v2835
    %v2848 = vpack.c.bf16 %v2838, %v2836
    %v2849 = vpack.c.bf16 %v2839, %v2837
    %v2850 = vpack.c.bf16 %v2842, %v2840
    %v2851 = vpack.c.bf16 %v2843, %v2841
    %v2852 = vpack.c.bf16 %v2846, %v2844
    %v2853 = vpack.c.bf16 %v2847, %v2845
    %v2854 = vld [vmem:[%s15] sm:$0xf]
    %v2855 = vld [vmem:[%s15 + $0x4] sm:$0xf]
    %v2856 = vld [vmem:[%s15 + $0x8] sm:$0xf]
    %v2857 = vld [vmem:[%s15 + $0xc] sm:$0xf]
    %v2858 = vld [vmem:[%s15 + $0x10] sm:$0xf]
    %v2859 = vld [vmem:[%s15 + $0x14] sm:$0xf]
    %v2860 = vld [vmem:[%s15 + $0x18] sm:$0xf]
    %v2861 = vld [vmem:[%s15 + $0x1c] sm:$0xf]
    %v2862 = vld [vmem:[%s15 + $0x20] sm:$0xf]
    %v2863 = vld [vmem:[%s15 + $0x24] sm:$0xf]
    %v2864 = vld [vmem:[%s15 + $0x28] sm:$0xf]
    %v2865 = vld [vmem:[%s15 + $0x2c] sm:$0xf]
    %v2866 = vld [vmem:[%s15 + $0x30] sm:$0xf]
    %v2867 = vld [vmem:[%s15 + $0x34] sm:$0xf]
    %v2868 = vld [vmem:[%s15 + $0x38] sm:$0xf]
    %v2869 = vld [vmem:[%s15 + $0x3c] sm:$0xf]
    %v2870 = vld [vmem:[%s15 + $0x40] sm:$0xf]
    %v2871 = vld [vmem:[%s15 + $0x44] sm:$0xf]
    %v2872 = vld [vmem:[%s15 + $0x48] sm:$0xf]
    %v2873 = vld [vmem:[%s15 + $0x4c] sm:$0xf]
    %v2874 = vld [vmem:[%s15 + $0x50] sm:$0xf]
    %v2875 = vld [vmem:[%s15 + $0x54] sm:$0xf]
    %v2876 = vld [vmem:[%s15 + $0x58] sm:$0xf]
    %v2877 = vld [vmem:[%s15 + $0x5c] sm:$0xf]
    %v2878 = vld [vmem:[%s15 + $0x60] sm:$0xf]
    %v2879 = vld [vmem:[%s15 + $0x64] sm:$0xf]
    %v2880 = vld [vmem:[%s15 + $0x68] sm:$0xf]
    %v2881 = vld [vmem:[%s15 + $0x6c] sm:$0xf]
    %v2882 = vld [vmem:[%s15 + $0x70] sm:$0xf]
    %v2883 = vld [vmem:[%s15 + $0x74] sm:$0xf]
    %v2884 = vld [vmem:[%s15 + $0x78] sm:$0xf]
    %v2885 = vld [vmem:[%s15 + $0x7c] sm:$0xf]
    %v2886 = vld [vmem:[%s16] sm:$0x1]
    %v2888 = vlaneseq
    %v2889 = vshrl.u32 %v2888, 7
    %v2890 = vsub.s32 0, %v2889
    %v2891 = vrot.slane %v2886, %v2890
    %v2925 = vunpack.c.l.b16 %v2854
    %v2926 = vunpack.c.l.b16 %v2855
    %v2927 = vunpack.c.l.b16 %v2856
    %v2928 = vunpack.c.l.b16 %v2857
    %v2929 = vunpack.c.l.b16 %v2858
    %v2930 = vunpack.c.l.b16 %v2859
    %v2931 = vunpack.c.l.b16 %v2860
    %v2932 = vunpack.c.l.b16 %v2861
    %v2933 = vunpack.c.l.b16 %v2862
    %v2934 = vunpack.c.l.b16 %v2863
    %v2935 = vunpack.c.l.b16 %v2864
    %v2936 = vunpack.c.l.b16 %v2865
    %v2937 = vunpack.c.l.b16 %v2866
    %v2938 = vunpack.c.l.b16 %v2867
    %v2939 = vunpack.c.l.b16 %v2868
    %v2940 = vunpack.c.l.b16 %v2869
    %v2941 = vunpack.c.l.b16 %v2870
    %v2942 = vunpack.c.l.b16 %v2871
    %v2943 = vunpack.c.l.b16 %v2872
    %v2944 = vunpack.c.l.b16 %v2873
    %v2945 = vunpack.c.l.b16 %v2874
    %v2946 = vunpack.c.l.b16 %v2875
    %v2947 = vunpack.c.l.b16 %v2876
    %v2948 = vunpack.c.l.b16 %v2877
    %v2949 = vunpack.c.l.b16 %v2878
    %v2950 = vunpack.c.l.b16 %v2879
    %v2951 = vunpack.c.l.b16 %v2880
    %v2952 = vunpack.c.l.b16 %v2881
    %v2953 = vunpack.c.l.b16 %v2882
    %v2954 = vunpack.c.l.b16 %v2883
    %v2955 = vunpack.c.l.b16 %v2884
    %v2956 = vunpack.c.l.b16 %v2885
    %v2957 = vpack.c.b16 %v2926, %v2925
    %v2958 = vpack.c.b16 %v2928, %v2927
    %v2959 = vpack.c.b16 %v2930, %v2929
    %v2960 = vpack.c.b16 %v2932, %v2931
    %v2961 = vpack.c.b16 %v2934, %v2933
    %v2962 = vpack.c.b16 %v2936, %v2935
    %v2963 = vpack.c.b16 %v2938, %v2937
    %v2964 = vpack.c.b16 %v2940, %v2939
    %v2965 = vpack.c.b16 %v2942, %v2941
    %v2966 = vpack.c.b16 %v2944, %v2943
    %v2967 = vpack.c.b16 %v2946, %v2945
    %v2968 = vpack.c.b16 %v2948, %v2947
    %v2969 = vpack.c.b16 %v2950, %v2949
    %v2970 = vpack.c.b16 %v2952, %v2951
    %v2971 = vpack.c.b16 %v2954, %v2953
    %v2972 = vpack.c.b16 %v2956, %v2955
    %2989 = vmatprep.subr.bf16.mxu0 0
    %2990 = vmatpush1.bf16.msra.mxu0 %v2957
    %2991 = vmatprep.subr.bf16.mxu0 0
    %2992 = vmatpush1.bf16.msra.mxu0 %v2958
    %2993 = vmatprep.subr.bf16.mxu0 0
    %2994 = vmatpush1.bf16.msra.mxu0 %v2959
    %2995 = vmatprep.subr.bf16.mxu0 0
    %2996 = vmatpush1.bf16.msra.mxu0 %v2960
    %2997 = vmatprep.subr.bf16.mxu0 0
    %2998 = vmatpush1.bf16.msra.mxu0 %v2961
    %2999 = vmatprep.subr.bf16.mxu0 0
    %3000 = vmatpush1.bf16.msra.mxu0 %v2962
    %3001 = vmatprep.subr.bf16.mxu0 0
    %3002 = vmatpush1.bf16.msra.mxu0 %v2963
    %3003 = vmatprep.subr.bf16.mxu0 0
    %3004 = vmatpush1.bf16.msra.mxu0 %v2964
    %3005 = vmatprep.subr.bf16.mxu0 0
    %3006 = vmatpush1.bf16.msra.mxu0 %v2965
    %3007 = vmatprep.subr.bf16.mxu0 0
    %3008 = vmatpush1.bf16.msra.mxu0 %v2966
    %3009 = vmatprep.subr.bf16.mxu0 0
    %3010 = vmatpush1.bf16.msra.mxu0 %v2967
    %3011 = vmatprep.subr.bf16.mxu0 0
    %3012 = vmatpush1.bf16.msra.mxu0 %v2968
    %3013 = vmatprep.subr.bf16.mxu0 0
    %3014 = vmatpush1.bf16.msra.mxu0 %v2969
    %3015 = vmatprep.subr.bf16.mxu0 0
    %3016 = vmatpush1.bf16.msra.mxu0 %v2970
    %3017 = vmatprep.subr.bf16.mxu0 0
    %3018 = vmatpush1.bf16.msra.mxu0 %v2971
    %3019 = vmatprep.subr.bf16.mxu0 0
    %3020 = vmatpush1.bf16.msra.mxu0 %v2972
    %3021 = vmatprep.mubr.bf16.mxu0 %v2849
    %3022 = vmatmul.mubr.bf16.gmra.mrb[0].mxu0 %v2848
    %v3023 = vpop.f32.mrb[0].mxu0
    %v3024 = vadd.f32 %v2891, %v3023
    %v3025 = vpop.f32.mrb[0].mxu0
    %v3026 = vpop.f32.mrb[0].mxu0
    %v3027 = vadd.f32 %v2891, %v3026
    %v3028 = vpop.f32.mrb[0].mxu0
    %3029 = vmatprep.mubr.bf16.mxu0 %v2851
    %3030 = vmatmul.mubr.bf16.gmra.mrb[0].mxu0 %v2850
    %v3031 = vpop.f32.mrb[0].mxu0
    %v3032 = vadd.f32 %v2891, %v3031
    %v3033 = vpop.f32.mrb[0].mxu0
    %v3034 = vpop.f32.mrb[0].mxu0
    %v3035 = vadd.f32 %v2891, %v3034
    %v3036 = vpop.f32.mrb[0].mxu0
    %3037 = vmatprep.mubr.bf16.mxu0 %v2853
    %3038 = vmatmul.mubr.bf16.gmra.mrb[0].mxu0 %v2852
    %v3039 = vpop.f32.mrb[0].mxu0
    %v3040 = vadd.f32 %v2891, %v3039
    %v3041 = vpop.f32.mrb[0].mxu0
    %v3042 = vpop.f32.mrb[0].mxu0
    %v3043 = vadd.f32 %v2891, %v3042
    %v3044 = vpop.f32.mrb[0].mxu0
    %3045 = vdwg.mxu0
    %v3046 = vadd.f32 %v3024, %v2252
    %v3047 = vadd.f32 %v3027, %v2253
    %v3048 = vadd.f32 %v3032, %v2254
    %v3049 = vadd.f32 %v3035, %v2255
    %v3050 = vadd.f32 %v3040, %v2256
    %v3051 = vadd.f32 %v3043, %v2257
    %s3052 = scalar_lea.vmem %s5, 1
    %v3053 = vld [vmem:[%s3052] sm:$0x1]
    %s3054 = scalar_lea.vmem %s6, 1
    %v3055 = vld [vmem:[%s3054] sm:$0x1]
    %3056 = vadd.xlane.f32.xlu0 %v3046
    %v3057 = vpop.xlane.xlu0 %3056
    %3058 = vadd.xlane.f32.xlu0 %v3047
    %v3059 = vpop.xlane.xlu0 %3058
    %3060 = vadd.xlane.f32.xlu0 %v3048
    %v3061 = vpop.xlane.xlu0 %3060
    %3062 = vadd.xlane.f32.xlu0 %v3049
    %v3063 = vpop.xlane.xlu0 %3062
    %3064 = vadd.xlane.f32.xlu0 %v3050
    %v3065 = vpop.xlane.xlu0 %3064
    %3066 = vadd.xlane.f32.xlu0 %v3051
    %v3067 = vpop.xlane.xlu0 %3066
    %v3068 = vmul.f32 %v3057, %v282
    %v3069 = vmul.f32 %v3059, %v282
    %v3070 = vmul.f32 %v3061, %v282
    %v3071 = vmul.f32 %v3063, %v282
    %v3072 = vmul.f32 %v3065, %v282
    %v3073 = vmul.f32 %v3067, %v282
    %v3074 = vsub.f32 %v3046, %v3068
    %v3075 = vsub.f32 %v3047, %v3069
    %v3076 = vsub.f32 %v3048, %v3070
    %v3077 = vsub.f32 %v3049, %v3071
    %v3078 = vsub.f32 %v3050, %v3072
    %v3079 = vsub.f32 %v3051, %v3073
    %v3080 = vmul.f32 %v3074, %v3074
    %v3081 = vmul.f32 %v3075, %v3075
    %v3082 = vmul.f32 %v3076, %v3076
    %v3083 = vmul.f32 %v3077, %v3077
    %v3084 = vmul.f32 %v3078, %v3078
    %v3085 = vmul.f32 %v3079, %v3079
    %3086 = vadd.xlane.f32.xlu0 %v3080
    %v3087 = vpop.xlane.xlu0 %3086
    %3088 = vadd.xlane.f32.xlu0 %v3081
    %v3089 = vpop.xlane.xlu0 %3088
    %3090 = vadd.xlane.f32.xlu0 %v3082
    %v3091 = vpop.xlane.xlu0 %3090
    %3092 = vadd.xlane.f32.xlu0 %v3083
    %v3093 = vpop.xlane.xlu0 %3092
    %3094 = vadd.xlane.f32.xlu0 %v3084
    %v3095 = vpop.xlane.xlu0 %3094
    %3096 = vadd.xlane.f32.xlu0 %v3085
    %v3097 = vpop.xlane.xlu0 %3096
    %v3098 = vmul.f32 %v3087, %v282
    %v3099 = vmul.f32 %v3089, %v282
    %v3100 = vmul.f32 %v3091, %v282
    %v3101 = vmul.f32 %v3093, %v282
    %v3102 = vmul.f32 %v3095, %v282
    %v3103 = vmul.f32 %v3097, %v282
    %v3104 = vadd.f32 %v3098, 1e-05
    %v3105 = vadd.f32 %v3099, 1e-05
    %v3106 = vadd.f32 %v3100, 1e-05
    %v3107 = vadd.f32 %v3101, 1e-05
    %v3108 = vadd.f32 %v3102, 1e-05
    %v3109 = vadd.f32 %v3103, 1e-05
    %v3110 = vrsqrt.pop %v3104
    %v3111 = vrsqrt.pop %v3105
    %v3112 = vrsqrt.pop %v3106
    %v3113 = vrsqrt.pop %v3107
    %v3114 = vrsqrt.pop %v3108
    %v3115 = vrsqrt.pop %v3109
    %v3116 = vmul.f32 %v3074, %v3110
    %v3117 = vmul.f32 %v3075, %v3111
    %v3118 = vmul.f32 %v3076, %v3112
    %v3119 = vmul.f32 %v3077, %v3113
    %v3120 = vmul.f32 %v3078, %v3114
    %v3121 = vmul.f32 %v3079, %v3115
    %v3123 = vlaneseq
    %v3124 = vshrl.u32 %v3123, 7
    %v3125 = vsub.s32 0, %v3124
    %v3126 = vrot.slane %v3053, %v3125
    %v3128 = vmul.f32 %v3116, %v3126
    %v3129 = vmul.f32 %v3117, %v3126
    %v3130 = vmul.f32 %v3118, %v3126
    %v3131 = vmul.f32 %v3119, %v3126
    %v3132 = vmul.f32 %v3120, %v3126
    %v3133 = vmul.f32 %v3121, %v3126
    %v3135 = vlaneseq
    %v3136 = vshrl.u32 %v3135, 7
    %v3137 = vsub.s32 0, %v3136
    %v3138 = vrot.slane %v3055, %v3137
    %v3140 = vadd.f32 %v3128, %v3138
    %v3141 = vadd.f32 %v3129, %v3138
    %v3142 = vadd.f32 %v3130, %v3138
    %v3143 = vadd.f32 %v3131, %v3138
    %v3144 = vadd.f32 %v3132, %v3138
    %v3145 = vadd.f32 %v3133, %v3138
    %v3146 = vpack.c.bf16 %v3141, %v3140
    %v3147 = vpack.c.bf16 %v3143, %v3142
    %v3148 = vpack.c.bf16 %v3145, %v3144
    %s3149 = scalar_lea.vmem %s7, 192
    %v3150 = vld [vmem:[%s3149] sm:$0xff]
    %v3151 = vld [vmem:[%s3149 + $0x8] sm:$0xf]
    %v3152 = vld [vmem:[%s3149 + $0xc] sm:$0xff]
    %v3153 = vld [vmem:[%s3149 + $0x14] sm:$0xf]
    %v3154 = vld [vmem:[%s3149 + $0x18] sm:$0xff]
    %v3155 = vld [vmem:[%s3149 + $0x20] sm:$0xf]
    %v3156 = vld [vmem:[%s3149 + $0x24] sm:$0xff]
    %v3157 = vld [vmem:[%s3149 + $0x2c] sm:$0xf]
    %v3158 = vld [vmem:[%s3149 + $0x30] sm:$0xff]
    %v3159 = vld [vmem:[%s3149 + $0x38] sm:$0xf]
    %v3160 = vld [vmem:[%s3149 + $0x3c] sm:$0xff]
    %v3161 = vld [vmem:[%s3149 + $0x44] sm:$0xf]
    %v3162 = vld [vmem:[%s3149 + $0x48] sm:$0xff]
    %v3163 = vld [vmem:[%s3149 + $0x50] sm:$0xf]
    %v3164 = vld [vmem:[%s3149 + $0x54] sm:$0xff]
    %v3165 = vld [vmem:[%s3149 + $0x5c] sm:$0xf]
    %v3166 = vld [vmem:[%s3149 + $0x60] sm:$0xff]
    %v3167 = vld [vmem:[%s3149 + $0x68] sm:$0xf]
    %v3168 = vld [vmem:[%s3149 + $0x6c] sm:$0xff]
    %v3169 = vld [vmem:[%s3149 + $0x74] sm:$0xf]
    %v3170 = vld [vmem:[%s3149 + $0x78] sm:$0xff]
    %v3171 = vld [vmem:[%s3149 + $0x80] sm:$0xf]
    %v3172 = vld [vmem:[%s3149 + $0x84] sm:$0xff]
    %v3173 = vld [vmem:[%s3149 + $0x8c] sm:$0xf]
    %v3174 = vld [vmem:[%s3149 + $0x90] sm:$0xff]
    %v3175 = vld [vmem:[%s3149 + $0x98] sm:$0xf]
    %v3176 = vld [vmem:[%s3149 + $0x9c] sm:$0xff]
    %v3177 = vld [vmem:[%s3149 + $0xa4] sm:$0xf]
    %v3178 = vld [vmem:[%s3149 + $0xa8] sm:$0xff]
    %v3179 = vld [vmem:[%s3149 + $0xb0] sm:$0xf]
    %v3180 = vld [vmem:[%s3149 + $0xb4] sm:$0xff]
    %v3181 = vld [vmem:[%s3149 + $0xbc] sm:$0xf]
    %s3182 = scalar_lea.vmem %s8, 3
    %v3183 = vld [vmem:[%s3182] sm:$0x7]
    %v3185 = vlaneseq
    %v3186 = vshrl.u32 %v3185, 7
    %v3187 = vsub.s32 0, %v3186
    %v3188 = vrot.slane %v3183, %v3187
    %v3189 = vlaneseq
    %v3190 = vshrl.u32 %v3189, 7
    %v3191 = vsub.s32 1, %v3190
    %v3192 = vrot.slane %v3183, %v3191
    %v3193 = vlaneseq
    %v3194 = vshrl.u32 %v3193, 7
    %v3195 = vsub.s32 2, %v3194
    %v3196 = vrot.slane %v3183, %v3195
    %v3232 = vunpack.c.l.b16 %v3150
    %v3233 = vunpack.c.h.b16 %v3150
    %v3234 = vunpack.c.l.b16 %v3151
    %v3235 = vunpack.c.l.b16 %v3152
    %v3236 = vunpack.c.h.b16 %v3152
    %v3237 = vunpack.c.l.b16 %v3153
    %v3238 = vunpack.c.l.b16 %v3154
    %v3239 = vunpack.c.h.b16 %v3154
    %v3240 = vunpack.c.l.b16 %v3155
    %v3241 = vunpack.c.l.b16 %v3156
    %v3242 = vunpack.c.h.b16 %v3156
    %v3243 = vunpack.c.l.b16 %v3157
    %v3244 = vunpack.c.l.b16 %v3158
    %v3245 = vunpack.c.h.b16 %v3158
    %v3246 = vunpack.c.l.b16 %v3159
    %v3247 = vunpack.c.l.b16 %v3160
    %v3248 = vunpack.c.h.b16 %v3160
    %v3249 = vunpack.c.l.b16 %v3161
    %v3250 = vunpack.c.l.b16 %v3162
    %v3251 = vunpack.c.h.b16 %v3162
    %v3252 = vunpack.c.l.b16 %v3163
    %v3253 = vunpack.c.l.b16 %v3164
    %v3254 = vunpack.c.h.b16 %v3164
    %v3255 = vunpack.c.l.b16 %v3165
    %v3256 = vunpack.c.l.b16 %v3166
    %v3257 = vunpack.c.h.b16 %v3166
    %v3258 = vunpack.c.l.b16 %v3167
    %v3259 = vunpack.c.l.b16 %v3168
    %v3260 = vunpack.c.h.b16 %v3168
    %v3261 = vunpack.c.l.b16 %v3169
    %v3262 = vunpack.c.l.b16 %v3170
    %v3263 = vunpack.c.h.b16 %v3170
    %v3264 = vunpack.c.l.b16 %v3171
    %v3265 = vunpack.c.l.b16 %v3172
    %v3266 = vunpack.c.h.b16 %v3172
    %v3267 = vunpack.c.l.b16 %v3173
    %v3268 = vunpack.c.l.b16 %v3174
    %v3269 = vunpack.c.h.b16 %v3174
    %v3270 = vunpack.c.l.b16 %v3175
    %v3271 = vunpack.c.l.b16 %v3176
    %v3272 = vunpack.c.h.b16 %v3176
    %v3273 = vunpack.c.l.b16 %v3177
    %v3274 = vunpack.c.l.b16 %v3178
    %v3275 = vunpack.c.h.b16 %v3178
    %v3276 = vunpack.c.l.b16 %v3179
    %v3277 = vunpack.c.l.b16 %v3180
    %v3278 = vunpack.c.h.b16 %v3180
    %v3279 = vunpack.c.l.b16 %v3181
    %v3280 = vpack.c.b16 %v3235, %v3232
    %v3281 = vpack.c.b16 %v3236, %v3233
    %v3282 = vpack.c.b16 %v3237, %v3234
    %v3283 = vpack.c.b16 %v3241, %v3238
    %v3284 = vpack.c.b16 %v3242, %v3239
    %v3285 = vpack.c.b16 %v3243, %v3240
    %v3286 = vpack.c.b16 %v3247, %v3244
    %v3287 = vpack.c.b16 %v3248, %v3245
    %v3288 = vpack.c.b16 %v3249, %v3246
    %v3289 = vpack.c.b16 %v3253, %v3250
    %v3290 = vpack.c.b16 %v3254, %v3251
    %v3291 = vpack.c.b16 %v3255, %v3252
    %v3292 = vpack.c.b16 %v3259, %v3256
    %v3293 = vpack.c.b16 %v3260, %v3257
    %v3294 = vpack.c.b16 %v3261, %v3258
    %v3295 = vpack.c.b16 %v3265, %v3262
    %v3296 = vpack.c.b16 %v3266, %v3263
    %v3297 = vpack.c.b16 %v3267, %v3264
    %v3298 = vpack.c.b16 %v3271, %v3268
    %v3299 = vpack.c.b16 %v3272, %v3269
    %v3300 = vpack.c.b16 %v3273, %v3270
    %v3301 = vpack.c.b16 %v3277, %v3274
    %v3302 = vpack.c.b16 %v3278, %v3275
    %v3303 = vpack.c.b16 %v3279, %v3276
    %3328 = vmatprep.subr.bf16.mxu0 %v3281
    %3329 = vmatpush1.bf16.msra.mxu0 %v3280
    %3330 = vmatprep.subr.bf16.mxu0 %v3284
    %3331 = vmatpush1.bf16.msra.mxu0 %v3283
    %3332 = vmatprep.subr.bf16.mxu0 %v3287
    %3333 = vmatpush1.bf16.msra.mxu0 %v3286
    %3334 = vmatprep.subr.bf16.mxu0 %v3290
    %3335 = vmatpush1.bf16.msra.mxu0 %v3289
    %3336 = vmatprep.subr.bf16.mxu0 %v3293
    %3337 = vmatpush1.bf16.msra.mxu0 %v3292
    %3338 = vmatprep.subr.bf16.mxu0 %v3296
    %3339 = vmatpush1.bf16.msra.mxu0 %v3295
    %3340 = vmatprep.subr.bf16.mxu0 %v3299
    %3341 = vmatpush1.bf16.msra.mxu0 %v3298
    %3342 = vmatprep.subr.bf16.mxu0 %v3302
    %3343 = vmatpush1.bf16.msra.mxu0 %v3301
    %3344 = vmatprep.subr.bf16.mxu0 0
    %3345 = vmatpush1.bf16.msra.mxu0 0
    %3346 = vmatprep.subr.bf16.mxu0 0
    %3347 = vmatpush1.bf16.msra.mxu0 0
    %3348 = vmatprep.subr.bf16.mxu0 0
    %3349 = vmatpush1.bf16.msra.mxu0 0
    %3350 = vmatprep.subr.bf16.mxu0 0
    %3351 = vmatpush1.bf16.msra.mxu0 0
    %3352 = vmatprep.subr.bf16.mxu0 0
    %3353 = vmatpush1.bf16.msra.mxu0 0
    %3354 = vmatprep.subr.bf16.mxu0 0
    %3355 = vmatpush1.bf16.msra.mxu0 0
    %3356 = vmatprep.subr.bf16.mxu0 0
    %3357 = vmatpush1.bf16.msra.mxu0 0
    %3358 = vmatprep.subr.bf16.mxu0 0
    %3359 = vmatpush1.bf16.msra.mxu0 0
    %3360 = vmatprep.mubr.bf16.mxu0 0
    %3361 = vmatmul.mubr.bf16.gmra.mrb[0].mxu0 %v3146
    %v3362 = vpop.f32.mrb[0].mxu0
    %v3363 = vadd.f32 %v3188, %v3362
    %v3364 = vpop.f32.mrb[0].mxu0
    %v3365 = vadd.f32 %v3192, %v3364
    %v3366 = vpop.f32.mrb[0].mxu0
    %v3367 = vadd.f32 %v3188, %v3366
    %v3368 = vpop.f32.mrb[0].mxu0
    %v3369 = vadd.f32 %v3192, %v3368
    %3370 = vmatprep.mubr.bf16.mxu0 0
    %3371 = vmatmul.mubr.bf16.gmra.mrb[0].mxu0 %v3147
    %v3372 = vpop.f32.mrb[0].mxu0
    %v3373 = vadd.f32 %v3188, %v3372
    %v3374 = vpop.f32.mrb[0].mxu0
    %v3375 = vadd.f32 %v3192, %v3374
    %v3376 = vpop.f32.mrb[0].mxu0
    %v3377 = vadd.f32 %v3188, %v3376
    %v3378 = vpop.f32.mrb[0].mxu0
    %v3379 = vadd.f32 %v3192, %v3378
    %3380 = vmatprep.mubr.bf16.mxu0 0
    %3381 = vmatmul.mubr.bf16.gmra.mrb[0].mxu0 %v3148
    %v3382 = vpop.f32.mrb[0].mxu0
    %v3383 = vadd.f32 %v3188, %v3382
    %v3384 = vpop.f32.mrb[0].mxu0
    %v3385 = vadd.f32 %v3192, %v3384
    %v3386 = vpop.f32.mrb[0].mxu0
    %v3387 = vadd.f32 %v3188, %v3386
    %v3388 = vpop.f32.mrb[0].mxu0
    %v3389 = vadd.f32 %v3192, %v3388
    %3390 = vdwg.mxu0
    %3391 = vmatprep.subr.bf16.mxu0 0
    %3392 = vmatpush1.bf16.msra.mxu0 %v3282
    %3393 = vmatprep.subr.bf16.mxu0 0
    %3394 = vmatpush1.bf16.msra.mxu0 %v3285
    %3395 = vmatprep.subr.bf16.mxu0 0
    %3396 = vmatpush1.bf16.msra.mxu0 %v3288
    %3397 = vmatprep.subr.bf16.mxu0 0
    %3398 = vmatpush1.bf16.msra.mxu0 %v3291
    %3399 = vmatprep.subr.bf16.mxu0 0
    %3400 = vmatpush1.bf16.msra.mxu0 %v3294
    %3401 = vmatprep.subr.bf16.mxu0 0
    %3402 = vmatpush1.bf16.msra.mxu0 %v3297
    %3403 = vmatprep.subr.bf16.mxu0 0
    %3404 = vmatpush1.bf16.msra.mxu0 %v3300
    %3405 = vmatprep.subr.bf16.mxu0 0
    %3406 = vmatpush1.bf16.msra.mxu0 %v3303
    %3407 = vmatprep.subr.bf16.mxu0 0
    %3408 = vmatpush1.bf16.msra.mxu0 0
    %3409 = vmatprep.subr.bf16.mxu0 0
    %3410 = vmatpush1.bf16.msra.mxu0 0
    %3411 = vmatprep.subr.bf16.mxu0 0
    %3412 = vmatpush1.bf16.msra.mxu0 0
    %3413 = vmatprep.subr.bf16.mxu0 0
    %3414 = vmatpush1.bf16.msra.mxu0 0
    %3415 = vmatprep.subr.bf16.mxu0 0
    %3416 = vmatpush1.bf16.msra.mxu0 0
    %3417 = vmatprep.subr.bf16.mxu0 0
    %3418 = vmatpush1.bf16.msra.mxu0 0
    %3419 = vmatprep.subr.bf16.mxu0 0
    %3420 = vmatpush1.bf16.msra.mxu0 0
    %3421 = vmatprep.subr.bf16.mxu0 0
    %3422 = vmatpush1.bf16.msra.mxu0 0
    %3423 = vmatprep.mubr.bf16.mxu0 0
    %3424 = vmatmul.mubr.bf16.gmra.mrb[0].mxu0 %v3146
    %v3425 = vpop.f32.mrb[0].mxu0
    %v3426 = vadd.f32 %v3196, %v3425
    %v3427 = vpop.f32.mrb[0].mxu0
    %v3428 = vpop.f32.mrb[0].mxu0
    %v3429 = vadd.f32 %v3196, %v3428
    %v3430 = vpop.f32.mrb[0].mxu0
    %3431 = vmatprep.mubr.bf16.mxu0 0
    %3432 = vmatmul.mubr.bf16.gmra.mrb[0].mxu0 %v3147
    %v3433 = vpop.f32.mrb[0].mxu0
    %v3434 = vadd.f32 %v3196, %v3433
    %v3435 = vpop.f32.mrb[0].mxu0
    %v3436 = vpop.f32.mrb[0].mxu0
    %v3437 = vadd.f32 %v3196, %v3436
    %v3438 = vpop.f32.mrb[0].mxu0
    %3439 = vmatprep.mubr.bf16.mxu0 0
    %3440 = vmatmul.mubr.bf16.gmra.mrb[0].mxu0 %v3148
    %v3441 = vpop.f32.mrb[0].mxu0
    %v3442 = vadd.f32 %v3196, %v3441
    %v3443 = vpop.f32.mrb[0].mxu0
    %v3444 = vpop.f32.mrb[0].mxu0
    %v3445 = vadd.f32 %v3196, %v3444
    %v3446 = vpop.f32.mrb[0].mxu0
    %3447 = vdwg.mxu0
    %v3448 = vpack.c.bf16 %v3367, %v3363
    %v3449 = vpack.c.bf16 %v3373, %v3373
    %v3450 = vpack.c.bf16 %v3383, %v3377
    %v3451 = vpack.c.bf16 %v3387, %v3387
    %v3452 = vpack.c.bf16 %v3369, %v3365
    %v3453 = vpack.c.bf16 %v3375, %v3375
    %v3454 = vpack.c.bf16 %v3385, %v3379
    %v3455 = vpack.c.bf16 %v3389, %v3389
    %v3456 = vpack.c.bf16 %v3429, %v3426
    %v3457 = vpack.c.bf16 %v3434, %v3434
    %v3458 = vpack.c.bf16 %v3442, %v3437
    %v3459 = vpack.c.bf16 %v3445, %v3445
    %v3461 = vsel %vm673, %v3448, 0
    %v3464 = vsel %vm673, %v3449, 0
    %v3467 = vsel %vm673, %v3452, 0
    %v3470 = vsel %vm673, %v3453, 0
    %3472 = vmatprep.subr.bf16.mxu0 0
    %3473 = vmatpush1.bf16.xpose.msra.mxu0 %v3467
    %3474 = vmatprep.subr.bf16.mxu0 0
    %3475 = vmatpush1.bf16.xpose.msra.mxu0 %v3470
    %3476 = vmatprep.subr.bf16.mxu0 0
    %3477 = vmatpush1.bf16.xpose.msra.mxu0 0
    %3478 = vmatprep.subr.bf16.mxu0 0
    %3479 = vmatpush1.bf16.xpose.msra.mxu0 0
    %3480 = vmatprep.subr.bf16.mxu0 0
    %3481 = vmatpush1.bf16.xpose.msra.mxu0 0
    %3482 = vmatprep.subr.bf16.mxu0 0
    %3483 = vmatpush1.bf16.xpose.msra.mxu0 0
    %3484 = vmatprep.subr.bf16.mxu0 0
    %3485 = vmatpush1.bf16.xpose.msra.mxu0 0
    %3486 = vmatprep.subr.bf16.mxu0 0
    %3487 = vmatpush1.bf16.xpose.msra.mxu0 0
    %3488 = vmatprep.subr.bf16.mxu0 0
    %3489 = vmatpush1.bf16.xpose.msra.mxu0 0
    %3490 = vmatprep.subr.bf16.mxu0 0
    %3491 = vmatpush1.bf16.xpose.msra.mxu0 0
    %3492 = vmatprep.subr.bf16.mxu0 0
    %3493 = vmatpush1.bf16.xpose.msra.mxu0 0
    %3494 = vmatprep.subr.bf16.mxu0 0
    %3495 = vmatpush1.bf16.xpose.msra.mxu0 0
    %3496 = vmatprep.subr.bf16.mxu0 0
    %3497 = vmatpush1.bf16.xpose.msra.mxu0 0
    %3498 = vmatprep.subr.bf16.mxu0 0
    %3499 = vmatpush1.bf16.xpose.msra.mxu0 0
    %3500 = vmatprep.subr.bf16.mxu0 0
    %3501 = vmatpush1.bf16.xpose.msra.mxu0 0
    %3502 = vmatprep.subr.bf16.mxu0 0
    %3503 = vmatpush1.bf16.xpose.msra.mxu0 0
    %3504 = vmatprep.mubr.bf16.mxu0 0
    %3505 = vmatmul.mubr.bf16.gmra.mrb[0].mxu0 %v3461
    %v3506 = vpop.f32.mrb[0].mxu0
    %v3507 = vadd.f32 0.0, %v3506
    %v3508 = vpop.f32.mrb[0].mxu0
    %v3509 = vpop.f32.mrb[0].mxu0
    %v3510 = vadd.f32 0.0, %v3509
    %v3511 = vpop.f32.mrb[0].mxu0
    %3512 = vmatprep.mubr.bf16.mxu0 0
    %3513 = vmatmul.mubr.bf16.gmra.mrb[0].mxu0 %v3464
    %v3514 = vpop.f32.mrb[0].mxu0
    %v3515 = vadd.f32 0.0, %v3514
    %v3516 = vpop.f32.mrb[0].mxu0
    %v3517 = vpop.f32.mrb[0].mxu0
    %v3518 = vpop.f32.mrb[0].mxu0
    %3519 = vdwg.mxu0
    %v3521 = vsel %vm673, %v3450, 0
    %v3524 = vsel %vm673, %v3451, 0
    %v3527 = vsel %vm673, %v3454, 0
    %v3530 = vsel %vm673, %v3455, 0
    %3532 = vmatprep.subr.bf16.mxu0 0
    %3533 = vmatpush1.bf16.xpose.msra.mxu0 %v3527
    %3534 = vmatprep.subr.bf16.mxu0 0
    %3535 = vmatpush1.bf16.xpose.msra.mxu0 %v3530
    %3536 = vmatprep.subr.bf16.mxu0 0
    %3537 = vmatpush1.bf16.xpose.msra.mxu0 0
    %3538 = vmatprep.subr.bf16.mxu0 0
    %3539 = vmatpush1.bf16.xpose.msra.mxu0 0
    %3540 = vmatprep.subr.bf16.mxu0 0
    %3541 = vmatpush1.bf16.xpose.msra.mxu0 0
    %3542 = vmatprep.subr.bf16.mxu0 0
    %3543 = vmatpush1.bf16.xpose.msra.mxu0 0
    %3544 = vmatprep.subr.bf16.mxu0 0
    %3545 = vmatpush1.bf16.xpose.msra.mxu0 0
    %3546 = vmatprep.subr.bf16.mxu0 0
    %3547 = vmatpush1.bf16.xpose.msra.mxu0 0
    %3548 = vmatprep.subr.bf16.mxu0 0
    %3549 = vmatpush1.bf16.xpose.msra.mxu0 0
    %3550 = vmatprep.subr.bf16.mxu0 0
    %3551 = vmatpush1.bf16.xpose.msra.mxu0 0
    %3552 = vmatprep.subr.bf16.mxu0 0
    %3553 = vmatpush1.bf16.xpose.msra.mxu0 0
    %3554 = vmatprep.subr.bf16.mxu0 0
    %3555 = vmatpush1.bf16.xpose.msra.mxu0 0
    %3556 = vmatprep.subr.bf16.mxu0 0
    %3557 = vmatpush1.bf16.xpose.msra.mxu0 0
    %3558 = vmatprep.subr.bf16.mxu0 0
    %3559 = vmatpush1.bf16.xpose.msra.mxu0 0
    %3560 = vmatprep.subr.bf16.mxu0 0
    %3561 = vmatpush1.bf16.xpose.msra.mxu0 0
    %3562 = vmatprep.subr.bf16.mxu0 0
    %3563 = vmatpush1.bf16.xpose.msra.mxu0 0
    %3564 = vmatprep.mubr.bf16.mxu0 0
    %3565 = vmatmul.mubr.bf16.gmra.mrb[0].mxu0 %v3521
    %v3566 = vpop.f32.mrb[0].mxu0
    %v3567 = vadd.f32 0.0, %v3566
    %v3568 = vpop.f32.mrb[0].mxu0
    %v3569 = vpop.f32.mrb[0].mxu0
    %v3570 = vadd.f32 0.0, %v3569
    %v3571 = vpop.f32.mrb[0].mxu0
    %3572 = vmatprep.mubr.bf16.mxu0 0
    %3573 = vmatmul.mubr.bf16.gmra.mrb[0].mxu0 %v3524
    %v3574 = vpop.f32.mrb[0].mxu0
    %v3575 = vadd.f32 0.0, %v3574
    %v3576 = vpop.f32.mrb[0].mxu0
    %v3577 = vpop.f32.mrb[0].mxu0
    %v3578 = vpop.f32.mrb[0].mxu0
    %3579 = vdwg.mxu0
    %v3580 = vmul.f32 %v3507, 0.17677669
    %v3581 = vmul.f32 %v3510, 0.17677669
    %v3582 = vmul.f32 %v3515, 0.17677669
    %v3583 = vmul.f32 %v3567, 0.17677669
    %v3584 = vmul.f32 %v3570, 0.17677669
    %v3585 = vmul.f32 %v3575, 0.17677669
    %v3586 = vadd.f32 %v3580, %v267
    %v3587 = vadd.f32 %v3581, %v267
    %v3588 = vadd.f32 %v3582, %v267
    %v3589 = vadd.f32 %v3583, %v267
    %v3590 = vadd.f32 %v3584, %v267
    %v3591 = vadd.f32 %v3585, %v267
    %v3592 = vsel %vm806, %v3586, -inf
    %3593 = vmax.xlane.f32.xlu0 %v3592
    %v3594 = vpop.xlane.xlu0 %3593
    %v3595 = vsel %vm806, %v3587, -inf
    %3596 = vmax.xlane.f32.xlu0 %v3595
    %v3597 = vpop.xlane.xlu0 %3596
    %v3598 = vsel %vm806, %v3588, -inf
    %3599 = vmax.xlane.f32.xlu0 %v3598
    %v3600 = vpop.xlane.xlu0 %3599
    %v3601 = vsel %vm806, %v3589, -inf
    %3602 = vmax.xlane.f32.xlu0 %v3601
    %v3603 = vpop.xlane.xlu0 %3602
    %v3604 = vsel %vm806, %v3590, -inf
    %3605 = vmax.xlane.f32.xlu0 %v3604
    %v3606 = vpop.xlane.xlu0 %3605
    %v3607 = vsel %vm806, %v3591, -inf
    %3608 = vmax.xlane.f32.xlu0 %v3607
    %v3609 = vpop.xlane.xlu0 %3608
    %v3610 = vsub.f32 %v3586, %v3594
    %v3611 = vsub.f32 %v3587, %v3597
    %v3612 = vsub.f32 %v3588, %v3600
    %v3613 = vsub.f32 %v3589, %v3603
    %v3614 = vsub.f32 %v3590, %v3606
    %v3615 = vsub.f32 %v3591, %v3609
    %v3616 = vmul.f32 %v3610, 1.442695
    %v3617 = vpow.pop %v3616
    %v3618 = vmul.f32 %v3611, 1.442695
    %v3619 = vpow.pop %v3618
    %v3620 = vmul.f32 %v3612, 1.442695
    %v3621 = vpow.pop %v3620
    %v3622 = vmul.f32 %v3613, 1.442695
    %v3623 = vpow.pop %v3622
    %v3624 = vmul.f32 %v3614, 1.442695
    %v3625 = vpow.pop %v3624
    %v3626 = vmul.f32 %v3615, 1.442695
    %v3627 = vpow.pop %v3626
    %v3628 = vsel %vm806, %v3617, 0.0
    %3629 = vadd.xlane.f32.xlu0 %v3628
    %v3630 = vpop.xlane.xlu0 %3629
    %v3631 = vsel %vm806, %v3619, 0.0
    %3632 = vadd.xlane.f32.xlu0 %v3631
    %v3633 = vpop.xlane.xlu0 %3632
    %v3634 = vsel %vm806, %v3621, 0.0
    %3635 = vadd.xlane.f32.xlu0 %v3634
    %v3636 = vpop.xlane.xlu0 %3635
    %v3637 = vsel %vm806, %v3623, 0.0
    %3638 = vadd.xlane.f32.xlu0 %v3637
    %v3639 = vpop.xlane.xlu0 %3638
    %v3640 = vsel %vm806, %v3625, 0.0
    %3641 = vadd.xlane.f32.xlu0 %v3640
    %v3642 = vpop.xlane.xlu0 %3641
    %v3643 = vsel %vm806, %v3627, 0.0
    %3644 = vadd.xlane.f32.xlu0 %v3643
    %v3645 = vpop.xlane.xlu0 %3644
    %v3646 = vrcp.pop %v3630
    %v3647 = vrcp.pop %v3633
    %v3648 = vrcp.pop %v3636
    %v3649 = vrcp.pop %v3639
    %v3650 = vrcp.pop %v3642
    %v3651 = vrcp.pop %v3645
    %v3652 = vmul.f32 %v3617, %v3646
    %v3653 = vmul.f32 %v3619, %v3647
    %v3654 = vmul.f32 %v3621, %v3648
    %v3655 = vmul.f32 %v3623, %v3649
    %v3656 = vmul.f32 %v3625, %v3650
    %v3657 = vmul.f32 %v3627, %v3651
    %v3658 = vpack.c.bf16 %v3653, %v3652
    %v3659 = vpack.c.bf16 %v3654, %v3654
    %v3660 = vpack.c.bf16 %v3656, %v3655
    %v3661 = vpack.c.bf16 %v3657, %v3657
    %v3663 = vsel %vm806, %v3658, 0
    %v3666 = vsel %vm806, %v3659, 0
    %v3669 = vsel %vm883, %v3457, 0
    %3671 = vmatprep.subr.bf16.mxu0 0
    %3672 = vmatpush1.bf16.msra.mxu0 %v3456
    %3673 = vmatprep.subr.bf16.mxu0 0
    %3674 = vmatpush1.bf16.msra.mxu0 %v3669
    %3675 = vmatprep.subr.bf16.mxu0 0
    %3676 = vmatpush1.bf16.msra.mxu0 0
    %3677 = vmatprep.subr.bf16.mxu0 0
    %3678 = vmatpush1.bf16.msra.mxu0 0
    %3679 = vmatprep.subr.bf16.mxu0 0
    %3680 = vmatpush1.bf16.msra.mxu0 0
    %3681 = vmatprep.subr.bf16.mxu0 0
    %3682 = vmatpush1.bf16.msra.mxu0 0
    %3683 = vmatprep.subr.bf16.mxu0 0
    %3684 = vmatpush1.bf16.msra.mxu0 0
    %3685 = vmatprep.subr.bf16.mxu0 0
    %3686 = vmatpush1.bf16.msra.mxu0 0
    %3687 = vmatprep.subr.bf16.mxu0 0
    %3688 = vmatpush1.bf16.msra.mxu0 0
    %3689 = vmatprep.subr.bf16.mxu0 0
    %3690 = vmatpush1.bf16.msra.mxu0 0
    %3691 = vmatprep.subr.bf16.mxu0 0
    %3692 = vmatpush1.bf16.msra.mxu0 0
    %3693 = vmatprep.subr.bf16.mxu0 0
    %3694 = vmatpush1.bf16.msra.mxu0 0
    %3695 = vmatprep.subr.bf16.mxu0 0
    %3696 = vmatpush1.bf16.msra.mxu0 0
    %3697 = vmatprep.subr.bf16.mxu0 0
    %3698 = vmatpush1.bf16.msra.mxu0 0
    %3699 = vmatprep.subr.bf16.mxu0 0
    %3700 = vmatpush1.bf16.msra.mxu0 0
    %3701 = vmatprep.subr.bf16.mxu0 0
    %3702 = vmatpush1.bf16.msra.mxu0 0
    %3703 = vmatprep.mubr.bf16.mxu0 0
    %3704 = vmatmul.mubr.bf16.gmra.mrb[0].mxu0 %v3663
    %v3705 = vpop.f32.mrb[0].mxu0
    %v3706 = vadd.f32 0.0, %v3705
    %v3707 = vpop.f32.mrb[0].mxu0
    %v3708 = vpop.f32.mrb[0].mxu0
    %v3709 = vadd.f32 0.0, %v3708
    %v3710 = vpop.f32.mrb[0].mxu0
    %3711 = vmatprep.mubr.bf16.mxu0 0
    %3712 = vmatmul.mubr.bf16.gmra.mrb[0].mxu0 %v3666
    %v3713 = vpop.f32.mrb[0].mxu0
    %v3714 = vadd.f32 0.0, %v3713
    %v3715 = vpop.f32.mrb[0].mxu0
    %v3716 = vpop.f32.mrb[0].mxu0
    %v3717 = vpop.f32.mrb[0].mxu0
    %3718 = vdwg.mxu0
    %v3720 = vsel %vm806, %v3660, 0
    %v3723 = vsel %vm806, %v3661, 0
    %v3726 = vsel %vm883, %v3459, 0
    %3728 = vmatprep.subr.bf16.mxu0 0
    %3729 = vmatpush1.bf16.msra.mxu0 %v3458
    %3730 = vmatprep.subr.bf16.mxu0 0
    %3731 = vmatpush1.bf16.msra.mxu0 %v3726
    %3732 = vmatprep.subr.bf16.mxu0 0
    %3733 = vmatpush1.bf16.msra.mxu0 0
    %3734 = vmatprep.subr.bf16.mxu0 0
    %3735 = vmatpush1.bf16.msra.mxu0 0
    %3736 = vmatprep.subr.bf16.mxu0 0
    %3737 = vmatpush1.bf16.msra.mxu0 0
    %3738 = vmatprep.subr.bf16.mxu0 0
    %3739 = vmatpush1.bf16.msra.mxu0 0
    %3740 = vmatprep.subr.bf16.mxu0 0
    %3741 = vmatpush1.bf16.msra.mxu0 0
    %3742 = vmatprep.subr.bf16.mxu0 0
    %3743 = vmatpush1.bf16.msra.mxu0 0
    %3744 = vmatprep.subr.bf16.mxu0 0
    %3745 = vmatpush1.bf16.msra.mxu0 0
    %3746 = vmatprep.subr.bf16.mxu0 0
    %3747 = vmatpush1.bf16.msra.mxu0 0
    %3748 = vmatprep.subr.bf16.mxu0 0
    %3749 = vmatpush1.bf16.msra.mxu0 0
    %3750 = vmatprep.subr.bf16.mxu0 0
    %3751 = vmatpush1.bf16.msra.mxu0 0
    %3752 = vmatprep.subr.bf16.mxu0 0
    %3753 = vmatpush1.bf16.msra.mxu0 0
    %3754 = vmatprep.subr.bf16.mxu0 0
    %3755 = vmatpush1.bf16.msra.mxu0 0
    %3756 = vmatprep.subr.bf16.mxu0 0
    %3757 = vmatpush1.bf16.msra.mxu0 0
    %3758 = vmatprep.subr.bf16.mxu0 0
    %3759 = vmatpush1.bf16.msra.mxu0 0
    %3760 = vmatprep.mubr.bf16.mxu0 0
    %3761 = vmatmul.mubr.bf16.gmra.mrb[0].mxu0 %v3720
    %v3762 = vpop.f32.mrb[0].mxu0
    %v3763 = vadd.f32 0.0, %v3762
    %v3764 = vpop.f32.mrb[0].mxu0
    %v3765 = vpop.f32.mrb[0].mxu0
    %v3766 = vadd.f32 0.0, %v3765
    %v3767 = vpop.f32.mrb[0].mxu0
    %3768 = vmatprep.mubr.bf16.mxu0 0
    %3769 = vmatmul.mubr.bf16.gmra.mrb[0].mxu0 %v3723
    %v3770 = vpop.f32.mrb[0].mxu0
    %v3771 = vadd.f32 0.0, %v3770
    %v3772 = vpop.f32.mrb[0].mxu0
    %v3773 = vpop.f32.mrb[0].mxu0
    %v3774 = vpop.f32.mrb[0].mxu0
    %3775 = vdwg.mxu0
    %3778 = vrot.lane.b32.xlu0 %v3448, 96
    %v3779 = vpop.permute.xlu0 %3778
    %3780 = vrot.lane.b32.xlu0 %v3449, 96
    %v3781 = vpop.permute.xlu0 %3780
    %3784 = vrot.lane.b32.xlu0 %v3452, 96
    %v3785 = vpop.permute.xlu0 %3784
    %3786 = vrot.lane.b32.xlu0 %v3453, 96
    %v3787 = vpop.permute.xlu0 %3786
    %v3789 = vsel %vm673, %v3779, 0
    %v3792 = vsel %vm673, %v3781, 0
    %v3795 = vsel %vm673, %v3785, 0
    %v3798 = vsel %vm673, %v3787, 0
    %3800 = vmatprep.subr.bf16.mxu0 0
    %3801 = vmatpush1.bf16.xpose.msra.mxu0 %v3795
    %3802 = vmatprep.subr.bf16.mxu0 0
    %3803 = vmatpush1.bf16.xpose.msra.mxu0 %v3798
    %3804 = vmatprep.subr.bf16.mxu0 0
    %3805 = vmatpush1.bf16.xpose.msra.mxu0 0
    %3806 = vmatprep.subr.bf16.mxu0 0
    %3807 = vmatpush1.bf16.xpose.msra.mxu0 0
    %3808 = vmatprep.subr.bf16.mxu0 0
    %3809 = vmatpush1.bf16.xpose.msra.mxu0 0
    %3810 = vmatprep.subr.bf16.mxu0 0
    %3811 = vmatpush1.bf16.xpose.msra.mxu0 0
    %3812 = vmatprep.subr.bf16.mxu0 0
    %3813 = vmatpush1.bf16.xpose.msra.mxu0 0
    %3814 = vmatprep.subr.bf16.mxu0 0
    %3815 = vmatpush1.bf16.xpose.msra.mxu0 0
    %3816 = vmatprep.subr.bf16.mxu0 0
    %3817 = vmatpush1.bf16.xpose.msra.mxu0 0
    %3818 = vmatprep.subr.bf16.mxu0 0
    %3819 = vmatpush1.bf16.xpose.msra.mxu0 0
    %3820 = vmatprep.subr.bf16.mxu0 0
    %3821 = vmatpush1.bf16.xpose.msra.mxu0 0
    %3822 = vmatprep.subr.bf16.mxu0 0
    %3823 = vmatpush1.bf16.xpose.msra.mxu0 0
    %3824 = vmatprep.subr.bf16.mxu0 0
    %3825 = vmatpush1.bf16.xpose.msra.mxu0 0
    %3826 = vmatprep.subr.bf16.mxu0 0
    %3827 = vmatpush1.bf16.xpose.msra.mxu0 0
    %3828 = vmatprep.subr.bf16.mxu0 0
    %3829 = vmatpush1.bf16.xpose.msra.mxu0 0
    %3830 = vmatprep.subr.bf16.mxu0 0
    %3831 = vmatpush1.bf16.xpose.msra.mxu0 0
    %3832 = vmatprep.mubr.bf16.mxu0 0
    %3833 = vmatmul.mubr.bf16.gmra.mrb[0].mxu0 %v3789
    %v3834 = vpop.f32.mrb[0].mxu0
    %v3835 = vadd.f32 0.0, %v3834
    %v3836 = vpop.f32.mrb[0].mxu0
    %v3837 = vpop.f32.mrb[0].mxu0
    %v3838 = vadd.f32 0.0, %v3837
    %v3839 = vpop.f32.mrb[0].mxu0
    %3840 = vmatprep.mubr.bf16.mxu0 0
    %3841 = vmatmul.mubr.bf16.gmra.mrb[0].mxu0 %v3792
    %v3842 = vpop.f32.mrb[0].mxu0
    %v3843 = vadd.f32 0.0, %v3842
    %v3844 = vpop.f32.mrb[0].mxu0
    %v3845 = vpop.f32.mrb[0].mxu0
    %v3846 = vpop.f32.mrb[0].mxu0
    %3847 = vdwg.mxu0
    %3850 = vrot.lane.b32.xlu0 %v3450, 96
    %v3851 = vpop.permute.xlu0 %3850
    %3852 = vrot.lane.b32.xlu0 %v3451, 96
    %v3853 = vpop.permute.xlu0 %3852
    %3856 = vrot.lane.b32.xlu0 %v3454, 96
    %v3857 = vpop.permute.xlu0 %3856
    %3858 = vrot.lane.b32.xlu0 %v3455, 96
    %v3859 = vpop.permute.xlu0 %3858
    %v3861 = vsel %vm673, %v3851, 0
    %v3864 = vsel %vm673, %v3853, 0
    %v3867 = vsel %vm673, %v3857, 0
    %v3870 = vsel %vm673, %v3859, 0
    %3872 = vmatprep.subr.bf16.mxu0 0
    %3873 = vmatpush1.bf16.xpose.msra.mxu0 %v3867
    %3874 = vmatprep.subr.bf16.mxu0 0
    %3875 = vmatpush1.bf16.xpose.msra.mxu0 %v3870
    %3876 = vmatprep.subr.bf16.mxu0 0
    %3877 = vmatpush1.bf16.xpose.msra.mxu0 0
    %3878 = vmatprep.subr.bf16.mxu0 0
    %3879 = vmatpush1.bf16.xpose.msra.mxu0 0
    %3880 = vmatprep.subr.bf16.mxu0 0
    %3881 = vmatpush1.bf16.xpose.msra.mxu0 0
    %3882 = vmatprep.subr.bf16.mxu0 0
    %3883 = vmatpush1.bf16.xpose.msra.mxu0 0
    %3884 = vmatprep.subr.bf16.mxu0 0
    %3885 = vmatpush1.bf16.xpose.msra.mxu0 0
    %3886 = vmatprep.subr.bf16.mxu0 0
    %3887 = vmatpush1.bf16.xpose.msra.mxu0 0
    %3888 = vmatprep.subr.bf16.mxu0 0
    %3889 = vmatpush1.bf16.xpose.msra.mxu0 0
    %3890 = vmatprep.subr.bf16.mxu0 0
    %3891 = vmatpush1.bf16.xpose.msra.mxu0 0
    %3892 = vmatprep.subr.bf16.mxu0 0
    %3893 = vmatpush1.bf16.xpose.msra.mxu0 0
    %3894 = vmatprep.subr.bf16.mxu0 0
    %3895 = vmatpush1.bf16.xpose.msra.mxu0 0
    %3896 = vmatprep.subr.bf16.mxu0 0
    %3897 = vmatpush1.bf16.xpose.msra.mxu0 0
    %3898 = vmatprep.subr.bf16.mxu0 0
    %3899 = vmatpush1.bf16.xpose.msra.mxu0 0
    %3900 = vmatprep.subr.bf16.mxu0 0
    %3901 = vmatpush1.bf16.xpose.msra.mxu0 0
    %3902 = vmatprep.subr.bf16.mxu0 0
    %3903 = vmatpush1.bf16.xpose.msra.mxu0 0
    %3904 = vmatprep.mubr.bf16.mxu0 0
    %3905 = vmatmul.mubr.bf16.gmra.mrb[0].mxu0 %v3861
    %v3906 = vpop.f32.mrb[0].mxu0
    %v3907 = vadd.f32 0.0, %v3906
    %v3908 = vpop.f32.mrb[0].mxu0
    %v3909 = vpop.f32.mrb[0].mxu0
    %v3910 = vadd.f32 0.0, %v3909
    %v3911 = vpop.f32.mrb[0].mxu0
    %3912 = vmatprep.mubr.bf16.mxu0 0
    %3913 = vmatmul.mubr.bf16.gmra.mrb[0].mxu0 %v3864
    %v3914 = vpop.f32.mrb[0].mxu0
    %v3915 = vadd.f32 0.0, %v3914
    %v3916 = vpop.f32.mrb[0].mxu0
    %v3917 = vpop.f32.mrb[0].mxu0
    %v3918 = vpop.f32.mrb[0].mxu0
    %3919 = vdwg.mxu0
    %v3920 = vmul.f32 %v3835, 0.17677669
    %v3921 = vmul.f32 %v3838, 0.17677669
    %v3922 = vmul.f32 %v3843, 0.17677669
    %v3923 = vmul.f32 %v3907, 0.17677669
    %v3924 = vmul.f32 %v3910, 0.17677669
    %v3925 = vmul.f32 %v3915, 0.17677669
    %v3926 = vadd.f32 %v3920, %v267
    %v3927 = vadd.f32 %v3921, %v267
    %v3928 = vadd.f32 %v3922, %v267
    %v3929 = vadd.f32 %v3923, %v267
    %v3930 = vadd.f32 %v3924, %v267
    %v3931 = vadd.f32 %v3925, %v267
    %v3932 = vsel %vm806, %v3926, -inf
    %3933 = vmax.xlane.f32.xlu0 %v3932
    %v3934 = vpop.xlane.xlu0 %3933
    %v3935 = vsel %vm806, %v3927, -inf
    %3936 = vmax.xlane.f32.xlu0 %v3935
    %v3937 = vpop.xlane.xlu0 %3936
    %v3938 = vsel %vm806, %v3928, -inf
    %3939 = vmax.xlane.f32.xlu0 %v3938
    %v3940 = vpop.xlane.xlu0 %3939
    %v3941 = vsel %vm806, %v3929, -inf
    %3942 = vmax.xlane.f32.xlu0 %v3941
    %v3943 = vpop.xlane.xlu0 %3942
    %v3944 = vsel %vm806, %v3930, -inf
    %3945 = vmax.xlane.f32.xlu0 %v3944
    %v3946 = vpop.xlane.xlu0 %3945
    %v3947 = vsel %vm806, %v3931, -inf
    %3948 = vmax.xlane.f32.xlu0 %v3947
    %v3949 = vpop.xlane.xlu0 %3948
    %v3950 = vsub.f32 %v3926, %v3934
    %v3951 = vsub.f32 %v3927, %v3937
    %v3952 = vsub.f32 %v3928, %v3940
    %v3953 = vsub.f32 %v3929, %v3943
    %v3954 = vsub.f32 %v3930, %v3946
    %v3955 = vsub.f32 %v3931, %v3949
    %v3956 = vmul.f32 %v3950, 1.442695
    %v3957 = vpow.pop %v3956
    %v3958 = vmul.f32 %v3951, 1.442695
    %v3959 = vpow.pop %v3958
    %v3960 = vmul.f32 %v3952, 1.442695
    %v3961 = vpow.pop %v3960
    %v3962 = vmul.f32 %v3953, 1.442695
    %v3963 = vpow.pop %v3962
    %v3964 = vmul.f32 %v3954, 1.442695
    %v3965 = vpow.pop %v3964
    %v3966 = vmul.f32 %v3955, 1.442695
    %v3967 = vpow.pop %v3966
    %v3968 = vsel %vm806, %v3957, 0.0
    %3969 = vadd.xlane.f32.xlu0 %v3968
    %v3970 = vpop.xlane.xlu0 %3969
    %v3971 = vsel %vm806, %v3959, 0.0
    %3972 = vadd.xlane.f32.xlu0 %v3971
    %v3973 = vpop.xlane.xlu0 %3972
    %v3974 = vsel %vm806, %v3961, 0.0
    %3975 = vadd.xlane.f32.xlu0 %v3974
    %v3976 = vpop.xlane.xlu0 %3975
    %v3977 = vsel %vm806, %v3963, 0.0
    %3978 = vadd.xlane.f32.xlu0 %v3977
    %v3979 = vpop.xlane.xlu0 %3978
    %v3980 = vsel %vm806, %v3965, 0.0
    %3981 = vadd.xlane.f32.xlu0 %v3980
    %v3982 = vpop.xlane.xlu0 %3981
    %v3983 = vsel %vm806, %v3967, 0.0
    %3984 = vadd.xlane.f32.xlu0 %v3983
    %v3985 = vpop.xlane.xlu0 %3984
    %v3986 = vrcp.pop %v3970
    %v3987 = vrcp.pop %v3973
    %v3988 = vrcp.pop %v3976
    %v3989 = vrcp.pop %v3979
    %v3990 = vrcp.pop %v3982
    %v3991 = vrcp.pop %v3985
    %v3992 = vmul.f32 %v3957, %v3986
    %v3993 = vmul.f32 %v3959, %v3987
    %v3994 = vmul.f32 %v3961, %v3988
    %v3995 = vmul.f32 %v3963, %v3989
    %v3996 = vmul.f32 %v3965, %v3990
    %v3997 = vmul.f32 %v3967, %v3991
    %v3998 = vpack.c.bf16 %v3993, %v3992
    %v3999 = vpack.c.bf16 %v3994, %v3994
    %v4000 = vpack.c.bf16 %v3996, %v3995
    %v4001 = vpack.c.bf16 %v3997, %v3997
    %4004 = vrot.lane.b32.xlu0 %v3456, 96
    %v4005 = vpop.permute.xlu0 %4004
    %4006 = vrot.lane.b32.xlu0 %v3457, 96
    %v4007 = vpop.permute.xlu0 %4006
    %v4010 = vsel %vm806, %v3998, 0
    %v4013 = vsel %vm806, %v3999, 0
    %v4016 = vsel %vm883, %v4007, 0
    %4018 = vmatprep.subr.bf16.mxu0 0
    %4019 = vmatpush1.bf16.msra.mxu0 %v4005
    %4020 = vmatprep.subr.bf16.mxu0 0
    %4021 = vmatpush1.bf16.msra.mxu0 %v4016
    %4022 = vmatprep.subr.bf16.mxu0 0
    %4023 = vmatpush1.bf16.msra.mxu0 0
    %4024 = vmatprep.subr.bf16.mxu0 0
    %4025 = vmatpush1.bf16.msra.mxu0 0
    %4026 = vmatprep.subr.bf16.mxu0 0
    %4027 = vmatpush1.bf16.msra.mxu0 0
    %4028 = vmatprep.subr.bf16.mxu0 0
    %4029 = vmatpush1.bf16.msra.mxu0 0
    %4030 = vmatprep.subr.bf16.mxu0 0
    %4031 = vmatpush1.bf16.msra.mxu0 0
    %4032 = vmatprep.subr.bf16.mxu0 0
    %4033 = vmatpush1.bf16.msra.mxu0 0
    %4034 = vmatprep.subr.bf16.mxu0 0
    %4035 = vmatpush1.bf16.msra.mxu0 0
    %4036 = vmatprep.subr.bf16.mxu0 0
    %4037 = vmatpush1.bf16.msra.mxu0 0
    %4038 = vmatprep.subr.bf16.mxu0 0
    %4039 = vmatpush1.bf16.msra.mxu0 0
    %4040 = vmatprep.subr.bf16.mxu0 0
    %4041 = vmatpush1.bf16.msra.mxu0 0
    %4042 = vmatprep.subr.bf16.mxu0 0
    %4043 = vmatpush1.bf16.msra.mxu0 0
    %4044 = vmatprep.subr.bf16.mxu0 0
    %4045 = vmatpush1.bf16.msra.mxu0 0
    %4046 = vmatprep.subr.bf16.mxu0 0
    %4047 = vmatpush1.bf16.msra.mxu0 0
    %4048 = vmatprep.subr.bf16.mxu0 0
    %4049 = vmatpush1.bf16.msra.mxu0 0
    %4050 = vmatprep.mubr.bf16.mxu0 0
    %4051 = vmatmul.mubr.bf16.gmra.mrb[0].mxu0 %v4010
    %v4052 = vpop.f32.mrb[0].mxu0
    %v4053 = vadd.f32 0.0, %v4052
    %v4054 = vpop.f32.mrb[0].mxu0
    %v4055 = vpop.f32.mrb[0].mxu0
    %v4056 = vadd.f32 0.0, %v4055
    %v4057 = vpop.f32.mrb[0].mxu0
    %4058 = vmatprep.mubr.bf16.mxu0 0
    %4059 = vmatmul.mubr.bf16.gmra.mrb[0].mxu0 %v4013
    %v4060 = vpop.f32.mrb[0].mxu0
    %v4061 = vadd.f32 0.0, %v4060
    %v4062 = vpop.f32.mrb[0].mxu0
    %v4063 = vpop.f32.mrb[0].mxu0
    %v4064 = vpop.f32.mrb[0].mxu0
    %4065 = vdwg.mxu0
    %4068 = vrot.lane.b32.xlu0 %v3458, 96
    %v4069 = vpop.permute.xlu0 %4068
    %4070 = vrot.lane.b32.xlu0 %v3459, 96
    %v4071 = vpop.permute.xlu0 %4070
    %v4074 = vsel %vm806, %v4000, 0
    %v4077 = vsel %vm806, %v4001, 0
    %v4080 = vsel %vm883, %v4071, 0
    %4082 = vmatprep.subr.bf16.mxu0 0
    %4083 = vmatpush1.bf16.msra.mxu0 %v4069
    %4084 = vmatprep.subr.bf16.mxu0 0
    %4085 = vmatpush1.bf16.msra.mxu0 %v4080
    %4086 = vmatprep.subr.bf16.mxu0 0
    %4087 = vmatpush1.bf16.msra.mxu0 0
    %4088 = vmatprep.subr.bf16.mxu0 0
    %4089 = vmatpush1.bf16.msra.mxu0 0
    %4090 = vmatprep.subr.bf16.mxu0 0
    %4091 = vmatpush1.bf16.msra.mxu0 0
    %4092 = vmatprep.subr.bf16.mxu0 0
    %4093 = vmatpush1.bf16.msra.mxu0 0
    %4094 = vmatprep.subr.bf16.mxu0 0
    %4095 = vmatpush1.bf16.msra.mxu0 0
    %4096 = vmatprep.subr.bf16.mxu0 0
    %4097 = vmatpush1.bf16.msra.mxu0 0
    %4098 = vmatprep.subr.bf16.mxu0 0
    %4099 = vmatpush1.bf16.msra.mxu0 0
    %4100 = vmatprep.subr.bf16.mxu0 0
    %4101 = vmatpush1.bf16.msra.mxu0 0
    %4102 = vmatprep.subr.bf16.mxu0 0
    %4103 = vmatpush1.bf16.msra.mxu0 0
    %4104 = vmatprep.subr.bf16.mxu0 0
    %4105 = vmatpush1.bf16.msra.mxu0 0
    %4106 = vmatprep.subr.bf16.mxu0 0
    %4107 = vmatpush1.bf16.msra.mxu0 0
    %4108 = vmatprep.subr.bf16.mxu0 0
    %4109 = vmatpush1.bf16.msra.mxu0 0
    %4110 = vmatprep.subr.bf16.mxu0 0
    %4111 = vmatpush1.bf16.msra.mxu0 0
    %4112 = vmatprep.subr.bf16.mxu0 0
    %4113 = vmatpush1.bf16.msra.mxu0 0
    %4114 = vmatprep.mubr.bf16.mxu0 0
    %4115 = vmatmul.mubr.bf16.gmra.mrb[0].mxu0 %v4074
    %v4116 = vpop.f32.mrb[0].mxu0
    %v4117 = vadd.f32 0.0, %v4116
    %v4118 = vpop.f32.mrb[0].mxu0
    %v4119 = vpop.f32.mrb[0].mxu0
    %v4120 = vadd.f32 0.0, %v4119
    %v4121 = vpop.f32.mrb[0].mxu0
    %4122 = vmatprep.mubr.bf16.mxu0 0
    %4123 = vmatmul.mubr.bf16.gmra.mrb[0].mxu0 %v4077
    %v4124 = vpop.f32.mrb[0].mxu0
    %v4125 = vadd.f32 0.0, %v4124
    %v4126 = vpop.f32.mrb[0].mxu0
    %v4127 = vpop.f32.mrb[0].mxu0
    %v4128 = vpop.f32.mrb[0].mxu0
    %4129 = vdwg.mxu0
    %4130 = vrot.lane.b32.xlu0 %v3448, 64
    %v4131 = vpop.permute.xlu0 %4130
    %4132 = vrot.lane.b32.xlu0 %v3449, 64
    %v4133 = vpop.permute.xlu0 %4132
    %4134 = vrot.lane.b32.xlu0 %v3452, 64
    %v4135 = vpop.permute.xlu0 %4134
    %4136 = vrot.lane.b32.xlu0 %v3453, 64
    %v4137 = vpop.permute.xlu0 %4136
    %v4139 = vsel %vm673, %v4131, 0
    %v4142 = vsel %vm673, %v4133, 0
    %v4145 = vsel %vm673, %v4135, 0
    %v4148 = vsel %vm673, %v4137, 0
    %4150 = vmatprep.subr.bf16.mxu0 0
    %4151 = vmatpush1.bf16.xpose.msra.mxu0 %v4145
    %4152 = vmatprep.subr.bf16.mxu0 0
    %4153 = vmatpush1.bf16.xpose.msra.mxu0 %v4148
    %4154 = vmatprep.subr.bf16.mxu0 0
    %4155 = vmatpush1.bf16.xpose.msra.mxu0 0
    %4156 = vmatprep.subr.bf16.mxu0 0
    %4157 = vmatpush1.bf16.xpose.msra.mxu0 0
    %4158 = vmatprep.subr.bf16.mxu0 0
    %4159 = vmatpush1.bf16.xpose.msra.mxu0 0
    %4160 = vmatprep.subr.bf16.mxu0 0
    %4161 = vmatpush1.bf16.xpose.msra.mxu0 0
    %4162 = vmatprep.subr.bf16.mxu0 0
    %4163 = vmatpush1.bf16.xpose.msra.mxu0 0
    %4164 = vmatprep.subr.bf16.mxu0 0
    %4165 = vmatpush1.bf16.xpose.msra.mxu0 0
    %4166 = vmatprep.subr.bf16.mxu0 0
    %4167 = vmatpush1.bf16.xpose.msra.mxu0 0
    %4168 = vmatprep.subr.bf16.mxu0 0
    %4169 = vmatpush1.bf16.xpose.msra.mxu0 0
    %4170 = vmatprep.subr.bf16.mxu0 0
    %4171 = vmatpush1.bf16.xpose.msra.mxu0 0
    %4172 = vmatprep.subr.bf16.mxu0 0
    %4173 = vmatpush1.bf16.xpose.msra.mxu0 0
    %4174 = vmatprep.subr.bf16.mxu0 0
    %4175 = vmatpush1.bf16.xpose.msra.mxu0 0
    %4176 = vmatprep.subr.bf16.mxu0 0
    %4177 = vmatpush1.bf16.xpose.msra.mxu0 0
    %4178 = vmatprep.subr.bf16.mxu0 0
    %4179 = vmatpush1.bf16.xpose.msra.mxu0 0
    %4180 = vmatprep.subr.bf16.mxu0 0
    %4181 = vmatpush1.bf16.xpose.msra.mxu0 0
    %4182 = vmatprep.mubr.bf16.mxu0 0
    %4183 = vmatmul.mubr.bf16.gmra.mrb[0].mxu0 %v4139
    %v4184 = vpop.f32.mrb[0].mxu0
    %v4185 = vadd.f32 0.0, %v4184
    %v4186 = vpop.f32.mrb[0].mxu0
    %v4187 = vpop.f32.mrb[0].mxu0
    %v4188 = vadd.f32 0.0, %v4187
    %v4189 = vpop.f32.mrb[0].mxu0
    %4190 = vmatprep.mubr.bf16.mxu0 0
    %4191 = vmatmul.mubr.bf16.gmra.mrb[0].mxu0 %v4142
    %v4192 = vpop.f32.mrb[0].mxu0
    %v4193 = vadd.f32 0.0, %v4192
    %v4194 = vpop.f32.mrb[0].mxu0
    %v4195 = vpop.f32.mrb[0].mxu0
    %v4196 = vpop.f32.mrb[0].mxu0
    %4197 = vdwg.mxu0
    %4198 = vrot.lane.b32.xlu0 %v3450, 64
    %v4199 = vpop.permute.xlu0 %4198
    %4200 = vrot.lane.b32.xlu0 %v3451, 64
    %v4201 = vpop.permute.xlu0 %4200
    %4202 = vrot.lane.b32.xlu0 %v3454, 64
    %v4203 = vpop.permute.xlu0 %4202
    %4204 = vrot.lane.b32.xlu0 %v3455, 64
    %v4205 = vpop.permute.xlu0 %4204
    %v4207 = vsel %vm673, %v4199, 0
    %v4210 = vsel %vm673, %v4201, 0
    %v4213 = vsel %vm673, %v4203, 0
    %v4216 = vsel %vm673, %v4205, 0
    %4218 = vmatprep.subr.bf16.mxu0 0
    %4219 = vmatpush1.bf16.xpose.msra.mxu0 %v4213
    %4220 = vmatprep.subr.bf16.mxu0 0
    %4221 = vmatpush1.bf16.xpose.msra.mxu0 %v4216
    %4222 = vmatprep.subr.bf16.mxu0 0
    %4223 = vmatpush1.bf16.xpose.msra.mxu0 0
    %4224 = vmatprep.subr.bf16.mxu0 0
    %4225 = vmatpush1.bf16.xpose.msra.mxu0 0
    %4226 = vmatprep.subr.bf16.mxu0 0
    %4227 = vmatpush1.bf16.xpose.msra.mxu0 0
    %4228 = vmatprep.subr.bf16.mxu0 0
    %4229 = vmatpush1.bf16.xpose.msra.mxu0 0
    %4230 = vmatprep.subr.bf16.mxu0 0
    %4231 = vmatpush1.bf16.xpose.msra.mxu0 0
    %4232 = vmatprep.subr.bf16.mxu0 0
    %4233 = vmatpush1.bf16.xpose.msra.mxu0 0
    %4234 = vmatprep.subr.bf16.mxu0 0
    %4235 = vmatpush1.bf16.xpose.msra.mxu0 0
    %4236 = vmatprep.subr.bf16.mxu0 0
    %4237 = vmatpush1.bf16.xpose.msra.mxu0 0
    %4238 = vmatprep.subr.bf16.mxu0 0
    %4239 = vmatpush1.bf16.xpose.msra.mxu0 0
    %4240 = vmatprep.subr.bf16.mxu0 0
    %4241 = vmatpush1.bf16.xpose.msra.mxu0 0
    %4242 = vmatprep.subr.bf16.mxu0 0
    %4243 = vmatpush1.bf16.xpose.msra.mxu0 0
    %4244 = vmatprep.subr.bf16.mxu0 0
    %4245 = vmatpush1.bf16.xpose.msra.mxu0 0
    %4246 = vmatprep.subr.bf16.mxu0 0
    %4247 = vmatpush1.bf16.xpose.msra.mxu0 0
    %4248 = vmatprep.subr.bf16.mxu0 0
    %4249 = vmatpush1.bf16.xpose.msra.mxu0 0
    %4250 = vmatprep.mubr.bf16.mxu0 0
    %4251 = vmatmul.mubr.bf16.gmra.mrb[0].mxu0 %v4207
    %v4252 = vpop.f32.mrb[0].mxu0
    %v4253 = vadd.f32 0.0, %v4252
    %v4254 = vpop.f32.mrb[0].mxu0
    %v4255 = vpop.f32.mrb[0].mxu0
    %v4256 = vadd.f32 0.0, %v4255
    %v4257 = vpop.f32.mrb[0].mxu0
    %4258 = vmatprep.mubr.bf16.mxu0 0
    %4259 = vmatmul.mubr.bf16.gmra.mrb[0].mxu0 %v4210
    %v4260 = vpop.f32.mrb[0].mxu0
    %v4261 = vadd.f32 0.0, %v4260
    %v4262 = vpop.f32.mrb[0].mxu0
    %v4263 = vpop.f32.mrb[0].mxu0
    %v4264 = vpop.f32.mrb[0].mxu0
    %4265 = vdwg.mxu0
    %v4266 = vmul.f32 %v4185, 0.17677669
    %v4267 = vmul.f32 %v4188, 0.17677669
    %v4268 = vmul.f32 %v4193, 0.17677669
    %v4269 = vmul.f32 %v4253, 0.17677669
    %v4270 = vmul.f32 %v4256, 0.17677669
    %v4271 = vmul.f32 %v4261, 0.17677669
    %v4272 = vadd.f32 %v4266, %v267
    %v4273 = vadd.f32 %v4267, %v267
    %v4274 = vadd.f32 %v4268, %v267
    %v4275 = vadd.f32 %v4269, %v267
    %v4276 = vadd.f32 %v4270, %v267
    %v4277 = vadd.f32 %v4271, %v267
    %v4278 = vsel %vm806, %v4272, -inf
    %4279 = vmax.xlane.f32.xlu0 %v4278
    %v4280 = vpop.xlane.xlu0 %4279
    %v4281 = vsel %vm806, %v4273, -inf
    %4282 = vmax.xlane.f32.xlu0 %v4281
    %v4283 = vpop.xlane.xlu0 %4282
    %v4284 = vsel %vm806, %v4274, -inf
    %4285 = vmax.xlane.f32.xlu0 %v4284
    %v4286 = vpop.xlane.xlu0 %4285
    %v4287 = vsel %vm806, %v4275, -inf
    %4288 = vmax.xlane.f32.xlu0 %v4287
    %v4289 = vpop.xlane.xlu0 %4288
    %v4290 = vsel %vm806, %v4276, -inf
    %4291 = vmax.xlane.f32.xlu0 %v4290
    %v4292 = vpop.xlane.xlu0 %4291
    %v4293 = vsel %vm806, %v4277, -inf
    %4294 = vmax.xlane.f32.xlu0 %v4293
    %v4295 = vpop.xlane.xlu0 %4294
    %v4296 = vsub.f32 %v4272, %v4280
    %v4297 = vsub.f32 %v4273, %v4283
    %v4298 = vsub.f32 %v4274, %v4286
    %v4299 = vsub.f32 %v4275, %v4289
    %v4300 = vsub.f32 %v4276, %v4292
    %v4301 = vsub.f32 %v4277, %v4295
    %v4302 = vmul.f32 %v4296, 1.442695
    %v4303 = vpow.pop %v4302
    %v4304 = vmul.f32 %v4297, 1.442695
    %v4305 = vpow.pop %v4304
    %v4306 = vmul.f32 %v4298, 1.442695
    %v4307 = vpow.pop %v4306
    %v4308 = vmul.f32 %v4299, 1.442695
    %v4309 = vpow.pop %v4308
    %v4310 = vmul.f32 %v4300, 1.442695
    %v4311 = vpow.pop %v4310
    %v4312 = vmul.f32 %v4301, 1.442695
    %v4313 = vpow.pop %v4312
    %v4314 = vsel %vm806, %v4303, 0.0
    %4315 = vadd.xlane.f32.xlu0 %v4314
    %v4316 = vpop.xlane.xlu0 %4315
    %v4317 = vsel %vm806, %v4305, 0.0
    %4318 = vadd.xlane.f32.xlu0 %v4317
    %v4319 = vpop.xlane.xlu0 %4318
    %v4320 = vsel %vm806, %v4307, 0.0
    %4321 = vadd.xlane.f32.xlu0 %v4320
    %v4322 = vpop.xlane.xlu0 %4321
    %v4323 = vsel %vm806, %v4309, 0.0
    %4324 = vadd.xlane.f32.xlu0 %v4323
    %v4325 = vpop.xlane.xlu0 %4324
    %v4326 = vsel %vm806, %v4311, 0.0
    %4327 = vadd.xlane.f32.xlu0 %v4326
    %v4328 = vpop.xlane.xlu0 %4327
    %v4329 = vsel %vm806, %v4313, 0.0
    %4330 = vadd.xlane.f32.xlu0 %v4329
    %v4331 = vpop.xlane.xlu0 %4330
    %v4332 = vrcp.pop %v4316
    %v4333 = vrcp.pop %v4319
    %v4334 = vrcp.pop %v4322
    %v4335 = vrcp.pop %v4325
    %v4336 = vrcp.pop %v4328
    %v4337 = vrcp.pop %v4331
    %v4338 = vmul.f32 %v4303, %v4332
    %v4339 = vmul.f32 %v4305, %v4333
    %v4340 = vmul.f32 %v4307, %v4334
    %v4341 = vmul.f32 %v4309, %v4335
    %v4342 = vmul.f32 %v4311, %v4336
    %v4343 = vmul.f32 %v4313, %v4337
    %v4344 = vpack.c.bf16 %v4339, %v4338
    %v4345 = vpack.c.bf16 %v4340, %v4340
    %v4346 = vpack.c.bf16 %v4342, %v4341
    %v4347 = vpack.c.bf16 %v4343, %v4343
    %4348 = vrot.lane.b32.xlu0 %v3456, 64
    %v4349 = vpop.permute.xlu0 %4348
    %4350 = vrot.lane.b32.xlu0 %v3457, 64
    %v4351 = vpop.permute.xlu0 %4350
    %v4354 = vsel %vm806, %v4344, 0
    %v4357 = vsel %vm806, %v4345, 0
    %v4360 = vsel %vm883, %v4351, 0
    %4362 = vmatprep.subr.bf16.mxu0 0
    %4363 = vmatpush1.bf16.msra.mxu0 %v4349
    %4364 = vmatprep.subr.bf16.mxu0 0
    %4365 = vmatpush1.bf16.msra.mxu0 %v4360
    %4366 = vmatprep.subr.bf16.mxu0 0
    %4367 = vmatpush1.bf16.msra.mxu0 0
    %4368 = vmatprep.subr.bf16.mxu0 0
    %4369 = vmatpush1.bf16.msra.mxu0 0
    %4370 = vmatprep.subr.bf16.mxu0 0
    %4371 = vmatpush1.bf16.msra.mxu0 0
    %4372 = vmatprep.subr.bf16.mxu0 0
    %4373 = vmatpush1.bf16.msra.mxu0 0
    %4374 = vmatprep.subr.bf16.mxu0 0
    %4375 = vmatpush1.bf16.msra.mxu0 0
    %4376 = vmatprep.subr.bf16.mxu0 0
    %4377 = vmatpush1.bf16.msra.mxu0 0
    %4378 = vmatprep.subr.bf16.mxu0 0
    %4379 = vmatpush1.bf16.msra.mxu0 0
    %4380 = vmatprep.subr.bf16.mxu0 0
    %4381 = vmatpush1.bf16.msra.mxu0 0
    %4382 = vmatprep.subr.bf16.mxu0 0
    %4383 = vmatpush1.bf16.msra.mxu0 0
    %4384 = vmatprep.subr.bf16.mxu0 0
    %4385 = vmatpush1.bf16.msra.mxu0 0
    %4386 = vmatprep.subr.bf16.mxu0 0
    %4387 = vmatpush1.bf16.msra.mxu0 0
    %4388 = vmatprep.subr.bf16.mxu0 0
    %4389 = vmatpush1.bf16.msra.mxu0 0
    %4390 = vmatprep.subr.bf16.mxu0 0
    %4391 = vmatpush1.bf16.msra.mxu0 0
    %4392 = vmatprep.subr.bf16.mxu0 0
    %4393 = vmatpush1.bf16.msra.mxu0 0
    %4394 = vmatprep.mubr.bf16.mxu0 0
    %4395 = vmatmul.mubr.bf16.gmra.mrb[0].mxu0 %v4354
    %v4396 = vpop.f32.mrb[0].mxu0
    %v4397 = vadd.f32 0.0, %v4396
    %v4398 = vpop.f32.mrb[0].mxu0
    %v4399 = vpop.f32.mrb[0].mxu0
    %v4400 = vadd.f32 0.0, %v4399
    %v4401 = vpop.f32.mrb[0].mxu0
    %4402 = vmatprep.mubr.bf16.mxu0 0
    %4403 = vmatmul.mubr.bf16.gmra.mrb[0].mxu0 %v4357
    %v4404 = vpop.f32.mrb[0].mxu0
    %v4405 = vadd.f32 0.0, %v4404
    %v4406 = vpop.f32.mrb[0].mxu0
    %v4407 = vpop.f32.mrb[0].mxu0
    %v4408 = vpop.f32.mrb[0].mxu0
    %4409 = vdwg.mxu0
    %4410 = vrot.lane.b32.xlu0 %v3458, 64
    %v4411 = vpop.permute.xlu0 %4410
    %4412 = vrot.lane.b32.xlu0 %v3459, 64
    %v4413 = vpop.permute.xlu0 %4412
    %v4416 = vsel %vm806, %v4346, 0
    %v4419 = vsel %vm806, %v4347, 0
    %v4422 = vsel %vm883, %v4413, 0
    %4424 = vmatprep.subr.bf16.mxu0 0
    %4425 = vmatpush1.bf16.msra.mxu0 %v4411
    %4426 = vmatprep.subr.bf16.mxu0 0
    %4427 = vmatpush1.bf16.msra.mxu0 %v4422
    %4428 = vmatprep.subr.bf16.mxu0 0
    %4429 = vmatpush1.bf16.msra.mxu0 0
    %4430 = vmatprep.subr.bf16.mxu0 0
    %4431 = vmatpush1.bf16.msra.mxu0 0
    %4432 = vmatprep.subr.bf16.mxu0 0
    %4433 = vmatpush1.bf16.msra.mxu0 0
    %4434 = vmatprep.subr.bf16.mxu0 0
    %4435 = vmatpush1.bf16.msra.mxu0 0
    %4436 = vmatprep.subr.bf16.mxu0 0
    %4437 = vmatpush1.bf16.msra.mxu0 0
    %4438 = vmatprep.subr.bf16.mxu0 0
    %4439 = vmatpush1.bf16.msra.mxu0 0
    %4440 = vmatprep.subr.bf16.mxu0 0
    %4441 = vmatpush1.bf16.msra.mxu0 0
    %4442 = vmatprep.subr.bf16.mxu0 0
    %4443 = vmatpush1.bf16.msra.mxu0 0
    %4444 = vmatprep.subr.bf16.mxu0 0
    %4445 = vmatpush1.bf16.msra.mxu0 0
    %4446 = vmatprep.subr.bf16.mxu0 0
    %4447 = vmatpush1.bf16.msra.mxu0 0
    %4448 = vmatprep.subr.bf16.mxu0 0
    %4449 = vmatpush1.bf16.msra.mxu0 0
    %4450 = vmatprep.subr.bf16.mxu0 0
    %4451 = vmatpush1.bf16.msra.mxu0 0
    %4452 = vmatprep.subr.bf16.mxu0 0
    %4453 = vmatpush1.bf16.msra.mxu0 0
    %4454 = vmatprep.subr.bf16.mxu0 0
    %4455 = vmatpush1.bf16.msra.mxu0 0
    %4456 = vmatprep.mubr.bf16.mxu0 0
    %4457 = vmatmul.mubr.bf16.gmra.mrb[0].mxu0 %v4416
    %v4458 = vpop.f32.mrb[0].mxu0
    %v4459 = vadd.f32 0.0, %v4458
    %v4460 = vpop.f32.mrb[0].mxu0
    %v4461 = vpop.f32.mrb[0].mxu0
    %v4462 = vadd.f32 0.0, %v4461
    %v4463 = vpop.f32.mrb[0].mxu0
    %4464 = vmatprep.mubr.bf16.mxu0 0
    %4465 = vmatmul.mubr.bf16.gmra.mrb[0].mxu0 %v4419
    %v4466 = vpop.f32.mrb[0].mxu0
    %v4467 = vadd.f32 0.0, %v4466
    %v4468 = vpop.f32.mrb[0].mxu0
    %v4469 = vpop.f32.mrb[0].mxu0
    %v4470 = vpop.f32.mrb[0].mxu0
    %4471 = vdwg.mxu0
    %4472 = vrot.lane.b32.xlu0 %v3448, 32
    %v4473 = vpop.permute.xlu0 %4472
    %4474 = vrot.lane.b32.xlu0 %v3449, 32
    %v4475 = vpop.permute.xlu0 %4474
    %4476 = vrot.lane.b32.xlu0 %v3452, 32
    %v4477 = vpop.permute.xlu0 %4476
    %4478 = vrot.lane.b32.xlu0 %v3453, 32
    %v4479 = vpop.permute.xlu0 %4478
    %v4481 = vsel %vm673, %v4473, 0
    %v4484 = vsel %vm673, %v4475, 0
    %v4487 = vsel %vm673, %v4477, 0
    %v4490 = vsel %vm673, %v4479, 0
    %4492 = vmatprep.subr.bf16.mxu0 0
    %4493 = vmatpush1.bf16.xpose.msra.mxu0 %v4487
    %4494 = vmatprep.subr.bf16.mxu0 0
    %4495 = vmatpush1.bf16.xpose.msra.mxu0 %v4490
    %4496 = vmatprep.subr.bf16.mxu0 0
    %4497 = vmatpush1.bf16.xpose.msra.mxu0 0
    %4498 = vmatprep.subr.bf16.mxu0 0
    %4499 = vmatpush1.bf16.xpose.msra.mxu0 0
    %4500 = vmatprep.subr.bf16.mxu0 0
    %4501 = vmatpush1.bf16.xpose.msra.mxu0 0
    %4502 = vmatprep.subr.bf16.mxu0 0
    %4503 = vmatpush1.bf16.xpose.msra.mxu0 0
    %4504 = vmatprep.subr.bf16.mxu0 0
    %4505 = vmatpush1.bf16.xpose.msra.mxu0 0
    %4506 = vmatprep.subr.bf16.mxu0 0
    %4507 = vmatpush1.bf16.xpose.msra.mxu0 0
    %4508 = vmatprep.subr.bf16.mxu0 0
    %4509 = vmatpush1.bf16.xpose.msra.mxu0 0
    %4510 = vmatprep.subr.bf16.mxu0 0
    %4511 = vmatpush1.bf16.xpose.msra.mxu0 0
    %4512 = vmatprep.subr.bf16.mxu0 0
    %4513 = vmatpush1.bf16.xpose.msra.mxu0 0
    %4514 = vmatprep.subr.bf16.mxu0 0
    %4515 = vmatpush1.bf16.xpose.msra.mxu0 0
    %4516 = vmatprep.subr.bf16.mxu0 0
    %4517 = vmatpush1.bf16.xpose.msra.mxu0 0
    %4518 = vmatprep.subr.bf16.mxu0 0
    %4519 = vmatpush1.bf16.xpose.msra.mxu0 0
    %4520 = vmatprep.subr.bf16.mxu0 0
    %4521 = vmatpush1.bf16.xpose.msra.mxu0 0
    %4522 = vmatprep.subr.bf16.mxu0 0
    %4523 = vmatpush1.bf16.xpose.msra.mxu0 0
    %4524 = vmatprep.mubr.bf16.mxu0 0
    %4525 = vmatmul.mubr.bf16.gmra.mrb[0].mxu0 %v4481
    %v4526 = vpop.f32.mrb[0].mxu0
    %v4527 = vadd.f32 0.0, %v4526
    %v4528 = vpop.f32.mrb[0].mxu0
    %v4529 = vpop.f32.mrb[0].mxu0
    %v4530 = vadd.f32 0.0, %v4529
    %v4531 = vpop.f32.mrb[0].mxu0
    %4532 = vmatprep.mubr.bf16.mxu0 0
    %4533 = vmatmul.mubr.bf16.gmra.mrb[0].mxu0 %v4484
    %v4534 = vpop.f32.mrb[0].mxu0
    %v4535 = vadd.f32 0.0, %v4534
    %v4536 = vpop.f32.mrb[0].mxu0
    %v4537 = vpop.f32.mrb[0].mxu0
    %v4538 = vpop.f32.mrb[0].mxu0
    %4539 = vdwg.mxu0
    %4540 = vrot.lane.b32.xlu0 %v3450, 32
    %v4541 = vpop.permute.xlu0 %4540
    %4542 = vrot.lane.b32.xlu0 %v3451, 32
    %v4543 = vpop.permute.xlu0 %4542
    %4544 = vrot.lane.b32.xlu0 %v3454, 32
    %v4545 = vpop.permute.xlu0 %4544
    %4546 = vrot.lane.b32.xlu0 %v3455, 32
    %v4547 = vpop.permute.xlu0 %4546
    %v4549 = vsel %vm673, %v4541, 0
    %v4552 = vsel %vm673, %v4543, 0
    %v4555 = vsel %vm673, %v4545, 0
    %v4558 = vsel %vm673, %v4547, 0
    %4560 = vmatprep.subr.bf16.mxu0 0
    %4561 = vmatpush1.bf16.xpose.msra.mxu0 %v4555
    %4562 = vmatprep.subr.bf16.mxu0 0
    %4563 = vmatpush1.bf16.xpose.msra.mxu0 %v4558
    %4564 = vmatprep.subr.bf16.mxu0 0
    %4565 = vmatpush1.bf16.xpose.msra.mxu0 0
    %4566 = vmatprep.subr.bf16.mxu0 0
    %4567 = vmatpush1.bf16.xpose.msra.mxu0 0
    %4568 = vmatprep.subr.bf16.mxu0 0
    %4569 = vmatpush1.bf16.xpose.msra.mxu0 0
    %4570 = vmatprep.subr.bf16.mxu0 0
    %4571 = vmatpush1.bf16.xpose.msra.mxu0 0
    %4572 = vmatprep.subr.bf16.mxu0 0
    %4573 = vmatpush1.bf16.xpose.msra.mxu0 0
    %4574 = vmatprep.subr.bf16.mxu0 0
    %4575 = vmatpush1.bf16.xpose.msra.mxu0 0
    %4576 = vmatprep.subr.bf16.mxu0 0
    %4577 = vmatpush1.bf16.xpose.msra.mxu0 0
    %4578 = vmatprep.subr.bf16.mxu0 0
    %4579 = vmatpush1.bf16.xpose.msra.mxu0 0
    %4580 = vmatprep.subr.bf16.mxu0 0
    %4581 = vmatpush1.bf16.xpose.msra.mxu0 0
    %4582 = vmatprep.subr.bf16.mxu0 0
    %4583 = vmatpush1.bf16.xpose.msra.mxu0 0
    %4584 = vmatprep.subr.bf16.mxu0 0
    %4585 = vmatpush1.bf16.xpose.msra.mxu0 0
    %4586 = vmatprep.subr.bf16.mxu0 0
    %4587 = vmatpush1.bf16.xpose.msra.mxu0 0
    %4588 = vmatprep.subr.bf16.mxu0 0
    %4589 = vmatpush1.bf16.xpose.msra.mxu0 0
    %4590 = vmatprep.subr.bf16.mxu0 0
    %4591 = vmatpush1.bf16.xpose.msra.mxu0 0
    %4592 = vmatprep.mubr.bf16.mxu0 0
    %4593 = vmatmul.mubr.bf16.gmra.mrb[0].mxu0 %v4549
    %v4594 = vpop.f32.mrb[0].mxu0
    %v4595 = vadd.f32 0.0, %v4594
    %v4596 = vpop.f32.mrb[0].mxu0
    %v4597 = vpop.f32.mrb[0].mxu0
    %v4598 = vadd.f32 0.0, %v4597
    %v4599 = vpop.f32.mrb[0].mxu0
    %4600 = vmatprep.mubr.bf16.mxu0 0
    %4601 = vmatmul.mubr.bf16.gmra.mrb[0].mxu0 %v4552
    %v4602 = vpop.f32.mrb[0].mxu0
    %v4603 = vadd.f32 0.0, %v4602
    %v4604 = vpop.f32.mrb[0].mxu0
    %v4605 = vpop.f32.mrb[0].mxu0
    %v4606 = vpop.f32.mrb[0].mxu0
    %4607 = vdwg.mxu0
    %v4608 = vmul.f32 %v4527, 0.17677669
    %v4609 = vmul.f32 %v4530, 0.17677669
    %v4610 = vmul.f32 %v4535, 0.17677669
    %v4611 = vmul.f32 %v4595, 0.17677669
    %v4612 = vmul.f32 %v4598, 0.17677669
    %v4613 = vmul.f32 %v4603, 0.17677669
    %v4614 = vadd.f32 %v4608, %v267
    %v4615 = vadd.f32 %v4609, %v267
    %v4616 = vadd.f32 %v4610, %v267
    %v4617 = vadd.f32 %v4611, %v267
    %v4618 = vadd.f32 %v4612, %v267
    %v4619 = vadd.f32 %v4613, %v267
    %v4620 = vsel %vm806, %v4614, -inf
    %4621 = vmax.xlane.f32.xlu0 %v4620
    %v4622 = vpop.xlane.xlu0 %4621
    %v4623 = vsel %vm806, %v4615, -inf
    %4624 = vmax.xlane.f32.xlu0 %v4623
    %v4625 = vpop.xlane.xlu0 %4624
    %v4626 = vsel %vm806, %v4616, -inf
    %4627 = vmax.xlane.f32.xlu0 %v4626
    %v4628 = vpop.xlane.xlu0 %4627
    %v4629 = vsel %vm806, %v4617, -inf
    %4630 = vmax.xlane.f32.xlu0 %v4629
    %v4631 = vpop.xlane.xlu0 %4630
    %v4632 = vsel %vm806, %v4618, -inf
    %4633 = vmax.xlane.f32.xlu0 %v4632
    %v4634 = vpop.xlane.xlu0 %4633
    %v4635 = vsel %vm806, %v4619, -inf
    %4636 = vmax.xlane.f32.xlu0 %v4635
    %v4637 = vpop.xlane.xlu0 %4636
    %v4638 = vsub.f32 %v4614, %v4622
    %v4639 = vsub.f32 %v4615, %v4625
    %v4640 = vsub.f32 %v4616, %v4628
    %v4641 = vsub.f32 %v4617, %v4631
    %v4642 = vsub.f32 %v4618, %v4634
    %v4643 = vsub.f32 %v4619, %v4637
    %v4644 = vmul.f32 %v4638, 1.442695
    %v4645 = vpow.pop %v4644
    %v4646 = vmul.f32 %v4639, 1.442695
    %v4647 = vpow.pop %v4646
    %v4648 = vmul.f32 %v4640, 1.442695
    %v4649 = vpow.pop %v4648
    %v4650 = vmul.f32 %v4641, 1.442695
    %v4651 = vpow.pop %v4650
    %v4652 = vmul.f32 %v4642, 1.442695
    %v4653 = vpow.pop %v4652
    %v4654 = vmul.f32 %v4643, 1.442695
    %v4655 = vpow.pop %v4654
    %v4656 = vsel %vm806, %v4645, 0.0
    %4657 = vadd.xlane.f32.xlu0 %v4656
    %v4658 = vpop.xlane.xlu0 %4657
    %v4659 = vsel %vm806, %v4647, 0.0
    %4660 = vadd.xlane.f32.xlu0 %v4659
    %v4661 = vpop.xlane.xlu0 %4660
    %v4662 = vsel %vm806, %v4649, 0.0
    %4663 = vadd.xlane.f32.xlu0 %v4662
    %v4664 = vpop.xlane.xlu0 %4663
    %v4665 = vsel %vm806, %v4651, 0.0
    %4666 = vadd.xlane.f32.xlu0 %v4665
    %v4667 = vpop.xlane.xlu0 %4666
    %v4668 = vsel %vm806, %v4653, 0.0
    %4669 = vadd.xlane.f32.xlu0 %v4668
    %v4670 = vpop.xlane.xlu0 %4669
    %v4671 = vsel %vm806, %v4655, 0.0
    %4672 = vadd.xlane.f32.xlu0 %v4671
    %v4673 = vpop.xlane.xlu0 %4672
    %v4674 = vrcp.pop %v4658
    %v4675 = vrcp.pop %v4661
    %v4676 = vrcp.pop %v4664
    %v4677 = vrcp.pop %v4667
    %v4678 = vrcp.pop %v4670
    %v4679 = vrcp.pop %v4673
    %v4680 = vmul.f32 %v4645, %v4674
    %v4681 = vmul.f32 %v4647, %v4675
    %v4682 = vmul.f32 %v4649, %v4676
    %v4683 = vmul.f32 %v4651, %v4677
    %v4684 = vmul.f32 %v4653, %v4678
    %v4685 = vmul.f32 %v4655, %v4679
    %v4686 = vpack.c.bf16 %v4681, %v4680
    %v4687 = vpack.c.bf16 %v4682, %v4682
    %v4688 = vpack.c.bf16 %v4684, %v4683
    %v4689 = vpack.c.bf16 %v4685, %v4685
    %4690 = vrot.lane.b32.xlu0 %v3456, 32
    %v4691 = vpop.permute.xlu0 %4690
    %4692 = vrot.lane.b32.xlu0 %v3457, 32
    %v4693 = vpop.permute.xlu0 %4692
    %v4696 = vsel %vm806, %v4686, 0
    %v4699 = vsel %vm806, %v4687, 0
    %v4702 = vsel %vm883, %v4693, 0
    %4704 = vmatprep.subr.bf16.mxu0 0
    %4705 = vmatpush1.bf16.msra.mxu0 %v4691
    %4706 = vmatprep.subr.bf16.mxu0 0
    %4707 = vmatpush1.bf16.msra.mxu0 %v4702
    %4708 = vmatprep.subr.bf16.mxu0 0
    %4709 = vmatpush1.bf16.msra.mxu0 0
    %4710 = vmatprep.subr.bf16.mxu0 0
    %4711 = vmatpush1.bf16.msra.mxu0 0
    %4712 = vmatprep.subr.bf16.mxu0 0
    %4713 = vmatpush1.bf16.msra.mxu0 0
    %4714 = vmatprep.subr.bf16.mxu0 0
    %4715 = vmatpush1.bf16.msra.mxu0 0
    %4716 = vmatprep.subr.bf16.mxu0 0
    %4717 = vmatpush1.bf16.msra.mxu0 0
    %4718 = vmatprep.subr.bf16.mxu0 0
    %4719 = vmatpush1.bf16.msra.mxu0 0
    %4720 = vmatprep.subr.bf16.mxu0 0
    %4721 = vmatpush1.bf16.msra.mxu0 0
    %4722 = vmatprep.subr.bf16.mxu0 0
    %4723 = vmatpush1.bf16.msra.mxu0 0
    %4724 = vmatprep.subr.bf16.mxu0 0
    %4725 = vmatpush1.bf16.msra.mxu0 0
    %4726 = vmatprep.subr.bf16.mxu0 0
    %4727 = vmatpush1.bf16.msra.mxu0 0
    %4728 = vmatprep.subr.bf16.mxu0 0
    %4729 = vmatpush1.bf16.msra.mxu0 0
    %4730 = vmatprep.subr.bf16.mxu0 0
    %4731 = vmatpush1.bf16.msra.mxu0 0
    %4732 = vmatprep.subr.bf16.mxu0 0
    %4733 = vmatpush1.bf16.msra.mxu0 0
    %4734 = vmatprep.subr.bf16.mxu0 0
    %4735 = vmatpush1.bf16.msra.mxu0 0
    %4736 = vmatprep.mubr.bf16.mxu0 0
    %4737 = vmatmul.mubr.bf16.gmra.mrb[0].mxu0 %v4696
    %v4738 = vpop.f32.mrb[0].mxu0
    %v4739 = vadd.f32 0.0, %v4738
    %v4740 = vpop.f32.mrb[0].mxu0
    %v4741 = vpop.f32.mrb[0].mxu0
    %v4742 = vadd.f32 0.0, %v4741
    %v4743 = vpop.f32.mrb[0].mxu0
    %4744 = vmatprep.mubr.bf16.mxu0 0
    %4745 = vmatmul.mubr.bf16.gmra.mrb[0].mxu0 %v4699
    %v4746 = vpop.f32.mrb[0].mxu0
    %v4747 = vadd.f32 0.0, %v4746
    %v4748 = vpop.f32.mrb[0].mxu0
    %v4749 = vpop.f32.mrb[0].mxu0
    %v4750 = vpop.f32.mrb[0].mxu0
    %4751 = vdwg.mxu0
    %4752 = vrot.lane.b32.xlu0 %v3458, 32
    %v4753 = vpop.permute.xlu0 %4752
    %4754 = vrot.lane.b32.xlu0 %v3459, 32
    %v4755 = vpop.permute.xlu0 %4754
    %v4758 = vsel %vm806, %v4688, 0
    %v4761 = vsel %vm806, %v4689, 0
    %v4764 = vsel %vm883, %v4755, 0
    %4766 = vmatprep.subr.bf16.mxu0 0
    %4767 = vmatpush1.bf16.msra.mxu0 %v4753
    %4768 = vmatprep.subr.bf16.mxu0 0
    %4769 = vmatpush1.bf16.msra.mxu0 %v4764
    %4770 = vmatprep.subr.bf16.mxu0 0
    %4771 = vmatpush1.bf16.msra.mxu0 0
    %4772 = vmatprep.subr.bf16.mxu0 0
    %4773 = vmatpush1.bf16.msra.mxu0 0
    %4774 = vmatprep.subr.bf16.mxu0 0
    %4775 = vmatpush1.bf16.msra.mxu0 0
    %4776 = vmatprep.subr.bf16.mxu0 0
    %4777 = vmatpush1.bf16.msra.mxu0 0
    %4778 = vmatprep.subr.bf16.mxu0 0
    %4779 = vmatpush1.bf16.msra.mxu0 0
    %4780 = vmatprep.subr.bf16.mxu0 0
    %4781 = vmatpush1.bf16.msra.mxu0 0
    %4782 = vmatprep.subr.bf16.mxu0 0
    %4783 = vmatpush1.bf16.msra.mxu0 0
    %4784 = vmatprep.subr.bf16.mxu0 0
    %4785 = vmatpush1.bf16.msra.mxu0 0
    %4786 = vmatprep.subr.bf16.mxu0 0
    %4787 = vmatpush1.bf16.msra.mxu0 0
    %4788 = vmatprep.subr.bf16.mxu0 0
    %4789 = vmatpush1.bf16.msra.mxu0 0
    %4790 = vmatprep.subr.bf16.mxu0 0
    %4791 = vmatpush1.bf16.msra.mxu0 0
    %4792 = vmatprep.subr.bf16.mxu0 0
    %4793 = vmatpush1.bf16.msra.mxu0 0
    %4794 = vmatprep.subr.bf16.mxu0 0
    %4795 = vmatpush1.bf16.msra.mxu0 0
    %4796 = vmatprep.subr.bf16.mxu0 0
    %4797 = vmatpush1.bf16.msra.mxu0 0
    %4798 = vmatprep.mubr.bf16.mxu0 0
    %4799 = vmatmul.mubr.bf16.gmra.mrb[0].mxu0 %v4758
    %v4800 = vpop.f32.mrb[0].mxu0
    %v4801 = vadd.f32 0.0, %v4800
    %v4802 = vpop.f32.mrb[0].mxu0
    %v4803 = vpop.f32.mrb[0].mxu0
    %v4804 = vadd.f32 0.0, %v4803
    %v4805 = vpop.f32.mrb[0].mxu0
    %4806 = vmatprep.mubr.bf16.mxu0 0
    %4807 = vmatmul.mubr.bf16.gmra.mrb[0].mxu0 %v4761
    %v4808 = vpop.f32.mrb[0].mxu0
    %v4809 = vadd.f32 0.0, %v4808
    %v4810 = vpop.f32.mrb[0].mxu0
    %v4811 = vpop.f32.mrb[0].mxu0
    %v4812 = vpop.f32.mrb[0].mxu0
    %4813 = vdwg.mxu0
    %4820 = vrot.lane.b32.xlu0 %v4053, 32
    %v4821 = vpop.permute.xlu0 %4820
    %4822 = vrot.lane.b32.xlu0 %v4056, 32
    %v4823 = vpop.permute.xlu0 %4822
    %4824 = vrot.lane.b32.xlu0 %v4061, 32
    %v4825 = vpop.permute.xlu0 %4824
    %4826 = vrot.lane.b32.xlu0 %v4117, 32
    %v4827 = vpop.permute.xlu0 %4826
    %4828 = vrot.lane.b32.xlu0 %v4120, 32
    %v4829 = vpop.permute.xlu0 %4828
    %4830 = vrot.lane.b32.xlu0 %v4125, 32
    %v4831 = vpop.permute.xlu0 %4830
    %4844 = vrot.lane.b32.xlu0 %v4397, 64
    %v4845 = vpop.permute.xlu0 %4844
    %4846 = vrot.lane.b32.xlu0 %v4400, 64
    %v4847 = vpop.permute.xlu0 %4846
    %4848 = vrot.lane.b32.xlu0 %v4405, 64
    %v4849 = vpop.permute.xlu0 %4848
    %4850 = vrot.lane.b32.xlu0 %v4459, 64
    %v4851 = vpop.permute.xlu0 %4850
    %4852 = vrot.lane.b32.xlu0 %v4462, 64
    %v4853 = vpop.permute.xlu0 %4852
    %4854 = vrot.lane.b32.xlu0 %v4467, 64
    %v4855 = vpop.permute.xlu0 %4854
    %4868 = vrot.lane.b32.xlu0 %v4739, 96
    %v4869 = vpop.permute.xlu0 %4868
    %4870 = vrot.lane.b32.xlu0 %v4742, 96
    %v4871 = vpop.permute.xlu0 %4870
    %4872 = vrot.lane.b32.xlu0 %v4747, 96
    %v4873 = vpop.permute.xlu0 %4872
    %4874 = vrot.lane.b32.xlu0 %v4801, 96
    %v4875 = vpop.permute.xlu0 %4874
    %4876 = vrot.lane.b32.xlu0 %v4804, 96
    %v4877 = vpop.permute.xlu0 %4876
    %4878 = vrot.lane.b32.xlu0 %v4809, 96
    %v4879 = vpop.permute.xlu0 %4878
    %v4886 = vsel %vm673, %v3706, %v4821
    %v4887 = vsel %vm673, %v3709, %v4823
    %v4888 = vsel %vm673, %v3714, %v4825
    %v4889 = vsel %vm673, %v3763, %v4827
    %v4890 = vsel %vm673, %v3766, %v4829
    %v4891 = vsel %vm673, %v3771, %v4831
    %v4892 = vsel %vm185, %v4886, %v4845
    %v4893 = vsel %vm185, %v4887, %v4847
    %v4894 = vsel %vm185, %v4888, %v4849
    %v4895 = vsel %vm185, %v4889, %v4851
    %v4896 = vsel %vm185, %v4890, %v4853
    %v4897 = vsel %vm185, %v4891, %v4855
    %v4898 = vsel %vm2114, %v4892, %v4869
    %v4899 = vsel %vm2114, %v4893, %v4871
    %v4900 = vsel %vm2114, %v4894, %v4873
    %v4901 = vsel %vm2114, %v4895, %v4875
    %v4902 = vsel %vm2114, %v4896, %v4877
    %v4903 = vsel %vm2114, %v4897, %v4879
    %v4904 = vpack.c.bf16 %v4899, %v4898
    %v4905 = vpack.c.bf16 %v4901, %v4900
    %v4906 = vpack.c.bf16 %v4903, %v4902
    %s4907 = scalar_lea.vmem %s9, 64
    %v4908 = vld [vmem:[%s4907] sm:$0xf]
    %v4909 = vld [vmem:[%s4907 + $0x4] sm:$0xf]
    %v4910 = vld [vmem:[%s4907 + $0x8] sm:$0xf]
    %v4911 = vld [vmem:[%s4907 + $0xc] sm:$0xf]
    %v4912 = vld [vmem:[%s4907 + $0x10] sm:$0xf]
    %v4913 = vld [vmem:[%s4907 + $0x14] sm:$0xf]
    %v4914 = vld [vmem:[%s4907 + $0x18] sm:$0xf]
    %v4915 = vld [vmem:[%s4907 + $0x1c] sm:$0xf]
    %v4916 = vld [vmem:[%s4907 + $0x20] sm:$0xf]
    %v4917 = vld [vmem:[%s4907 + $0x24] sm:$0xf]
    %v4918 = vld [vmem:[%s4907 + $0x28] sm:$0xf]
    %v4919 = vld [vmem:[%s4907 + $0x2c] sm:$0xf]
    %v4920 = vld [vmem:[%s4907 + $0x30] sm:$0xf]
    %v4921 = vld [vmem:[%s4907 + $0x34] sm:$0xf]
    %v4922 = vld [vmem:[%s4907 + $0x38] sm:$0xf]
    %v4923 = vld [vmem:[%s4907 + $0x3c] sm:$0xf]
    %s4924 = scalar_lea.vmem %s10, 1
    %v4925 = vld [vmem:[%s4924] sm:$0x1]
    %v4927 = vlaneseq
    %v4928 = vshrl.u32 %v4927, 7
    %v4929 = vsub.s32 0, %v4928
    %v4930 = vrot.slane %v4925, %v4929
    %v4948 = vunpack.c.l.b16 %v4908
    %v4949 = vunpack.c.l.b16 %v4909
    %v4950 = vunpack.c.l.b16 %v4910
    %v4951 = vunpack.c.l.b16 %v4911
    %v4952 = vunpack.c.l.b16 %v4912
    %v4953 = vunpack.c.l.b16 %v4913
    %v4954 = vunpack.c.l.b16 %v4914
    %v4955 = vunpack.c.l.b16 %v4915
    %v4956 = vunpack.c.l.b16 %v4916
    %v4957 = vunpack.c.l.b16 %v4917
    %v4958 = vunpack.c.l.b16 %v4918
    %v4959 = vunpack.c.l.b16 %v4919
    %v4960 = vunpack.c.l.b16 %v4920
    %v4961 = vunpack.c.l.b16 %v4921
    %v4962 = vunpack.c.l.b16 %v4922
    %v4963 = vunpack.c.l.b16 %v4923
    %v4964 = vpack.c.b16 %v4949, %v4948
    %v4965 = vpack.c.b16 %v4951, %v4950
    %v4966 = vpack.c.b16 %v4953, %v4952
    %v4967 = vpack.c.b16 %v4955, %v4954
    %v4968 = vpack.c.b16 %v4957, %v4956
    %v4969 = vpack.c.b16 %v4959, %v4958
    %v4970 = vpack.c.b16 %v4961, %v4960
    %v4971 = vpack.c.b16 %v4963, %v4962
    %4980 = vmatprep.subr.bf16.mxu0 0
    %4981 = vmatpush1.bf16.msra.mxu0 %v4964
    %4982 = vmatprep.subr.bf16.mxu0 0
    %4983 = vmatpush1.bf16.msra.mxu0 %v4965
    %4984 = vmatprep.subr.bf16.mxu0 0
    %4985 = vmatpush1.bf16.msra.mxu0 %v4966
    %4986 = vmatprep.subr.bf16.mxu0 0
    %4987 = vmatpush1.bf16.msra.mxu0 %v4967
    %4988 = vmatprep.subr.bf16.mxu0 0
    %4989 = vmatpush1.bf16.msra.mxu0 %v4968
    %4990 = vmatprep.subr.bf16.mxu0 0
    %4991 = vmatpush1.bf16.msra.mxu0 %v4969
    %4992 = vmatprep.subr.bf16.mxu0 0
    %4993 = vmatpush1.bf16.msra.mxu0 %v4970
    %4994 = vmatprep.subr.bf16.mxu0 0
    %4995 = vmatpush1.bf16.msra.mxu0 %v4971
    %4996 = vmatprep.subr.bf16.mxu0 0
    %4997 = vmatpush1.bf16.msra.mxu0 0
    %4998 = vmatprep.subr.bf16.mxu0 0
    %4999 = vmatpush1.bf16.msra.mxu0 0
    %5000 = vmatprep.subr.bf16.mxu0 0
    %5001 = vmatpush1.bf16.msra.mxu0 0
    %5002 = vmatprep.subr.bf16.mxu0 0
    %5003 = vmatpush1.bf16.msra.mxu0 0
    %5004 = vmatprep.subr.bf16.mxu0 0
    %5005 = vmatpush1.bf16.msra.mxu0 0
    %5006 = vmatprep.subr.bf16.mxu0 0
    %5007 = vmatpush1.bf16.msra.mxu0 0
    %5008 = vmatprep.subr.bf16.mxu0 0
    %5009 = vmatpush1.bf16.msra.mxu0 0
    %5010 = vmatprep.subr.bf16.mxu0 0
    %5011 = vmatpush1.bf16.msra.mxu0 0
    %5012 = vmatprep.mubr.bf16.mxu0 0
    %5013 = vmatmul.mubr.bf16.gmra.mrb[0].mxu0 %v4904
    %v5014 = vpop.f32.mrb[0].mxu0
    %v5015 = vadd.f32 %v4930, %v5014
    %v5016 = vpop.f32.mrb[0].mxu0
    %v5017 = vpop.f32.mrb[0].mxu0
    %v5018 = vadd.f32 %v4930, %v5017
    %v5019 = vpop.f32.mrb[0].mxu0
    %5020 = vmatprep.mubr.bf16.mxu0 0
    %5021 = vmatmul.mubr.bf16.gmra.mrb[0].mxu0 %v4905
    %v5022 = vpop.f32.mrb[0].mxu0
    %v5023 = vadd.f32 %v4930, %v5022
    %v5024 = vpop.f32.mrb[0].mxu0
    %v5025 = vpop.f32.mrb[0].mxu0
    %v5026 = vadd.f32 %v4930, %v5025
    %v5027 = vpop.f32.mrb[0].mxu0
    %5028 = vmatprep.mubr.bf16.mxu0 0
    %5029 = vmatmul.mubr.bf16.gmra.mrb[0].mxu0 %v4906
    %v5030 = vpop.f32.mrb[0].mxu0
    %v5031 = vadd.f32 %v4930, %v5030
    %v5032 = vpop.f32.mrb[0].mxu0
    %v5033 = vpop.f32.mrb[0].mxu0
    %v5034 = vadd.f32 %v4930, %v5033
    %v5035 = vpop.f32.mrb[0].mxu0
    %5036 = vdwg.mxu0
    %v5037 = vadd.f32 %v5015, %v3046
    %v5038 = vadd.f32 %v5018, %v3047
    %v5039 = vadd.f32 %v5023, %v3048
    %v5040 = vadd.f32 %v5026, %v3049
    %v5041 = vadd.f32 %v5031, %v3050
    %v5042 = vadd.f32 %v5034, %v3051
    %s5043 = scalar_lea.vmem %s11, 1
    %v5044 = vld [vmem:[%s5043] sm:$0x1]
    %s5045 = scalar_lea.vmem %s12, 1
    %v5046 = vld [vmem:[%s5045] sm:$0x1]
    %5047 = vadd.xlane.f32.xlu0 %v5037
    %v5048 = vpop.xlane.xlu0 %5047
    %5049 = vadd.xlane.f32.xlu0 %v5038
    %v5050 = vpop.xlane.xlu0 %5049
    %5051 = vadd.xlane.f32.xlu0 %v5039
    %v5052 = vpop.xlane.xlu0 %5051
    %5053 = vadd.xlane.f32.xlu0 %v5040
    %v5054 = vpop.xlane.xlu0 %5053
    %5055 = vadd.xlane.f32.xlu0 %v5041
    %v5056 = vpop.xlane.xlu0 %5055
    %5057 = vadd.xlane.f32.xlu0 %v5042
    %v5058 = vpop.xlane.xlu0 %5057
    %v5059 = vmul.f32 %v5048, %v282
    %v5060 = vmul.f32 %v5050, %v282
    %v5061 = vmul.f32 %v5052, %v282
    %v5062 = vmul.f32 %v5054, %v282
    %v5063 = vmul.f32 %v5056, %v282
    %v5064 = vmul.f32 %v5058, %v282
    %v5065 = vsub.f32 %v5037, %v5059
    %v5066 = vsub.f32 %v5038, %v5060
    %v5067 = vsub.f32 %v5039, %v5061
    %v5068 = vsub.f32 %v5040, %v5062
    %v5069 = vsub.f32 %v5041, %v5063
    %v5070 = vsub.f32 %v5042, %v5064
    %v5071 = vmul.f32 %v5065, %v5065
    %v5072 = vmul.f32 %v5066, %v5066
    %v5073 = vmul.f32 %v5067, %v5067
    %v5074 = vmul.f32 %v5068, %v5068
    %v5075 = vmul.f32 %v5069, %v5069
    %v5076 = vmul.f32 %v5070, %v5070
    %5077 = vadd.xlane.f32.xlu0 %v5071
    %v5078 = vpop.xlane.xlu0 %5077
    %5079 = vadd.xlane.f32.xlu0 %v5072
    %v5080 = vpop.xlane.xlu0 %5079
    %5081 = vadd.xlane.f32.xlu0 %v5073
    %v5082 = vpop.xlane.xlu0 %5081
    %5083 = vadd.xlane.f32.xlu0 %v5074
    %v5084 = vpop.xlane.xlu0 %5083
    %5085 = vadd.xlane.f32.xlu0 %v5075
    %v5086 = vpop.xlane.xlu0 %5085
    %5087 = vadd.xlane.f32.xlu0 %v5076
    %v5088 = vpop.xlane.xlu0 %5087
    %v5089 = vmul.f32 %v5078, %v282
    %v5090 = vmul.f32 %v5080, %v282
    %v5091 = vmul.f32 %v5082, %v282
    %v5092 = vmul.f32 %v5084, %v282
    %v5093 = vmul.f32 %v5086, %v282
    %v5094 = vmul.f32 %v5088, %v282
    %v5095 = vadd.f32 %v5089, 1e-05
    %v5096 = vadd.f32 %v5090, 1e-05
    %v5097 = vadd.f32 %v5091, 1e-05
    %v5098 = vadd.f32 %v5092, 1e-05
    %v5099 = vadd.f32 %v5093, 1e-05
    %v5100 = vadd.f32 %v5094, 1e-05
    %v5101 = vrsqrt.pop %v5095
    %v5102 = vrsqrt.pop %v5096
    %v5103 = vrsqrt.pop %v5097
    %v5104 = vrsqrt.pop %v5098
    %v5105 = vrsqrt.pop %v5099
    %v5106 = vrsqrt.pop %v5100
    %v5107 = vmul.f32 %v5065, %v5101
    %v5108 = vmul.f32 %v5066, %v5102
    %v5109 = vmul.f32 %v5067, %v5103
    %v5110 = vmul.f32 %v5068, %v5104
    %v5111 = vmul.f32 %v5069, %v5105
    %v5112 = vmul.f32 %v5070, %v5106
    %v5114 = vlaneseq
    %v5115 = vshrl.u32 %v5114, 7
    %v5116 = vsub.s32 0, %v5115
    %v5117 = vrot.slane %v5044, %v5116
    %v5119 = vmul.f32 %v5107, %v5117
    %v5120 = vmul.f32 %v5108, %v5117
    %v5121 = vmul.f32 %v5109, %v5117
    %v5122 = vmul.f32 %v5110, %v5117
    %v5123 = vmul.f32 %v5111, %v5117
    %v5124 = vmul.f32 %v5112, %v5117
    %v5126 = vlaneseq
    %v5127 = vshrl.u32 %v5126, 7
    %v5128 = vsub.s32 0, %v5127
    %v5129 = vrot.slane %v5046, %v5128
    %v5131 = vadd.f32 %v5119, %v5129
    %v5132 = vadd.f32 %v5120, %v5129
    %v5133 = vadd.f32 %v5121, %v5129
    %v5134 = vadd.f32 %v5122, %v5129
    %v5135 = vadd.f32 %v5123, %v5129
    %v5136 = vadd.f32 %v5124, %v5129
    %v5137 = vpack.c.bf16 %v5132, %v5131
    %v5138 = vpack.c.bf16 %v5134, %v5133
    %v5139 = vpack.c.bf16 %v5136, %v5135
    %s5140 = scalar_lea.vmem %s13, 128
    %v5141 = vld [vmem:[%s5140] sm:$0xff]
    %v5142 = vld [vmem:[%s5140 + $0x8] sm:$0xff]
    %v5143 = vld [vmem:[%s5140 + $0x10] sm:$0xff]
    %v5144 = vld [vmem:[%s5140 + $0x18] sm:$0xff]
    %v5145 = vld [vmem:[%s5140 + $0x20] sm:$0xff]
    %v5146 = vld [vmem:[%s5140 + $0x28] sm:$0xff]
    %v5147 = vld [vmem:[%s5140 + $0x30] sm:$0xff]
    %v5148 = vld [vmem:[%s5140 + $0x38] sm:$0xff]
    %v5149 = vld [vmem:[%s5140 + $0x40] sm:$0xff]
    %v5150 = vld [vmem:[%s5140 + $0x48] sm:$0xff]
    %v5151 = vld [vmem:[%s5140 + $0x50] sm:$0xff]
    %v5152 = vld [vmem:[%s5140 + $0x58] sm:$0xff]
    %v5153 = vld [vmem:[%s5140 + $0x60] sm:$0xff]
    %v5154 = vld [vmem:[%s5140 + $0x68] sm:$0xff]
    %v5155 = vld [vmem:[%s5140 + $0x70] sm:$0xff]
    %v5156 = vld [vmem:[%s5140 + $0x78] sm:$0xff]
    %s5157 = scalar_lea.vmem %s14, 2
    %v5158 = vld [vmem:[%s5157] sm:$0x3]
    %v5160 = vlaneseq
    %v5161 = vshrl.u32 %v5160, 7
    %v5162 = vsub.s32 0, %v5161
    %v5163 = vrot.slane %v5158, %v5162
    %v5164 = vlaneseq
    %v5165 = vshrl.u32 %v5164, 7
    %v5166 = vsub.s32 1, %v5165
    %v5167 = vrot.slane %v5158, %v5166
    %v5186 = vunpack.c.l.b16 %v5141
    %v5187 = vunpack.c.h.b16 %v5141
    %v5188 = vunpack.c.l.b16 %v5142
    %v5189 = vunpack.c.h.b16 %v5142
    %v5190 = vunpack.c.l.b16 %v5143
    %v5191 = vunpack.c.h.b16 %v5143
    %v5192 = vunpack.c.l.b16 %v5144
    %v5193 = vunpack.c.h.b16 %v5144
    %v5194 = vunpack.c.l.b16 %v5145
    %v5195 = vunpack.c.h.b16 %v5145
    %v5196 = vunpack.c.l.b16 %v5146
    %v5197 = vunpack.c.h.b16 %v5146
    %v5198 = vunpack.c.l.b16 %v5147
    %v5199 = vunpack.c.h.b16 %v5147
    %v5200 = vunpack.c.l.b16 %v5148
    %v5201 = vunpack.c.h.b16 %v5148
    %v5202 = vunpack.c.l.b16 %v5149
    %v5203 = vunpack.c.h.b16 %v5149
    %v5204 = vunpack.c.l.b16 %v5150
    %v5205 = vunpack.c.h.b16 %v5150
    %v5206 = vunpack.c.l.b16 %v5151
    %v5207 = vunpack.c.h.b16 %v5151
    %v5208 = vunpack.c.l.b16 %v5152
    %v5209 = vunpack.c.h.b16 %v5152
    %v5210 = vunpack.c.l.b16 %v5153
    %v5211 = vunpack.c.h.b16 %v5153
    %v5212 = vunpack.c.l.b16 %v5154
    %v5213 = vunpack.c.h.b16 %v5154
    %v5214 = vunpack.c.l.b16 %v5155
    %v5215 = vunpack.c.h.b16 %v5155
    %v5216 = vunpack.c.l.b16 %v5156
    %v5217 = vunpack.c.h.b16 %v5156
    %v5218 = vpack.c.b16 %v5188, %v5186
    %v5219 = vpack.c.b16 %v5189, %v5187
    %v5220 = vpack.c.b16 %v5192, %v5190
    %v5221 = vpack.c.b16 %v5193, %v5191
    %v5222 = vpack.c.b16 %v5196, %v5194
    %v5223 = vpack.c.b16 %v5197, %v5195
    %v5224 = vpack.c.b16 %v5200, %v5198
    %v5225 = vpack.c.b16 %v5201, %v5199
    %v5226 = vpack.c.b16 %v5204, %v5202
    %v5227 = vpack.c.b16 %v5205, %v5203
    %v5228 = vpack.c.b16 %v5208, %v5206
    %v5229 = vpack.c.b16 %v5209, %v5207
    %v5230 = vpack.c.b16 %v5212, %v5210
    %v5231 = vpack.c.b16 %v5213, %v5211
    %v5232 = vpack.c.b16 %v5216, %v5214
    %v5233 = vpack.c.b16 %v5217, %v5215
    %5250 = vmatprep.subr.bf16.mxu0 %v5219
    %5251 = vmatpush1.bf16.msra.mxu0 %v5218
    %5252 = vmatprep.subr.bf16.mxu0 %v5221
    %5253 = vmatpush1.bf16.msra.mxu0 %v5220
    %5254 = vmatprep.subr.bf16.mxu0 %v5223
    %5255 = vmatpush1.bf16.msra.mxu0 %v5222
    %5256 = vmatprep.subr.bf16.mxu0 %v5225
    %5257 = vmatpush1.bf16.msra.mxu0 %v5224
    %5258 = vmatprep.subr.bf16.mxu0 %v5227
    %5259 = vmatpush1.bf16.msra.mxu0 %v5226
    %5260 = vmatprep.subr.bf16.mxu0 %v5229
    %5261 = vmatpush1.bf16.msra.mxu0 %v5228
    %5262 = vmatprep.subr.bf16.mxu0 %v5231
    %5263 = vmatpush1.bf16.msra.mxu0 %v5230
    %5264 = vmatprep.subr.bf16.mxu0 %v5233
    %5265 = vmatpush1.bf16.msra.mxu0 %v5232
    %5266 = vmatprep.subr.bf16.mxu0 0
    %5267 = vmatpush1.bf16.msra.mxu0 0
    %5268 = vmatprep.subr.bf16.mxu0 0
    %5269 = vmatpush1.bf16.msra.mxu0 0
    %5270 = vmatprep.subr.bf16.mxu0 0
    %5271 = vmatpush1.bf16.msra.mxu0 0
    %5272 = vmatprep.subr.bf16.mxu0 0
    %5273 = vmatpush1.bf16.msra.mxu0 0
    %5274 = vmatprep.subr.bf16.mxu0 0
    %5275 = vmatpush1.bf16.msra.mxu0 0
    %5276 = vmatprep.subr.bf16.mxu0 0
    %5277 = vmatpush1.bf16.msra.mxu0 0
    %5278 = vmatprep.subr.bf16.mxu0 0
    %5279 = vmatpush1.bf16.msra.mxu0 0
    %5280 = vmatprep.subr.bf16.mxu0 0
    %5281 = vmatpush1.bf16.msra.mxu0 0
    %5282 = vmatprep.mubr.bf16.mxu0 0
    %5283 = vmatmul.mubr.bf16.gmra.mrb[0].mxu0 %v5137
    %v5284 = vpop.f32.mrb[0].mxu0
    %v5285 = vadd.f32 %v5163, %v5284
    %v5286 = vpop.f32.mrb[0].mxu0
    %v5287 = vadd.f32 %v5167, %v5286
    %v5288 = vpop.f32.mrb[0].mxu0
    %v5289 = vadd.f32 %v5163, %v5288
    %v5290 = vpop.f32.mrb[0].mxu0
    %v5291 = vadd.f32 %v5167, %v5290
    %5292 = vmatprep.mubr.bf16.mxu0 0
    %5293 = vmatmul.mubr.bf16.gmra.mrb[0].mxu0 %v5138
    %v5294 = vpop.f32.mrb[0].mxu0
    %v5295 = vadd.f32 %v5163, %v5294
    %v5296 = vpop.f32.mrb[0].mxu0
    %v5297 = vadd.f32 %v5167, %v5296
    %v5298 = vpop.f32.mrb[0].mxu0
    %v5299 = vadd.f32 %v5163, %v5298
    %v5300 = vpop.f32.mrb[0].mxu0
    %v5301 = vadd.f32 %v5167, %v5300
    %5302 = vmatprep.mubr.bf16.mxu0 0
    %5303 = vmatmul.mubr.bf16.gmra.mrb[0].mxu0 %v5139
    %v5304 = vpop.f32.mrb[0].mxu0
    %v5305 = vadd.f32 %v5163, %v5304
    %v5306 = vpop.f32.mrb[0].mxu0
    %v5307 = vadd.f32 %v5167, %v5306
    %v5308 = vpop.f32.mrb[0].mxu0
    %v5309 = vadd.f32 %v5163, %v5308
    %v5310 = vpop.f32.mrb[0].mxu0
    %v5311 = vadd.f32 %v5167, %v5310
    %5312 = vdwg.mxu0
    %v5313 = vmul.f32 %v5285, 0.5
    %v5314 = vmul.f32 %v5287, 0.5
    %v5315 = vmul.f32 %v5289, 0.5
    %v5316 = vmul.f32 %v5291, 0.5
    %v5317 = vmul.f32 %v5295, 0.5
    %v5318 = vmul.f32 %v5297, 0.5
    %v5319 = vmul.f32 %v5299, 0.5
    %v5320 = vmul.f32 %v5301, 0.5
    %v5321 = vmul.f32 %v5305, 0.5
    %v5322 = vmul.f32 %v5307, 0.5
    %v5323 = vmul.f32 %v5309, 0.5
    %v5324 = vmul.f32 %v5311, 0.5
    %v5325 = vmul.f32 %v5285, 0.70710677
    %v5326 = vmul.f32 %v5287, 0.70710677
    %v5327 = vmul.f32 %v5289, 0.70710677
    %v5328 = vmul.f32 %v5291, 0.70710677
    %v5329 = vmul.f32 %v5295, 0.70710677
    %v5330 = vmul.f32 %v5297, 0.70710677
    %v5331 = vmul.f32 %v5299, 0.70710677
    %v5332 = vmul.f32 %v5301, 0.70710677
    %v5333 = vmul.f32 %v5305, 0.70710677
    %v5334 = vmul.f32 %v5307, 0.70710677
    %v5335 = vmul.f32 %v5309, 0.70710677
    %v5336 = vmul.f32 %v5311, 0.70710677
    %v5337 = vand.u32 2147483647, %v5325
    %v5338 = vand.u32 2147483647, %v5326
    %v5339 = vand.u32 2147483647, %v5327
    %v5340 = vand.u32 2147483647, %v5328
    %v5341 = vand.u32 2147483647, %v5329
    %v5342 = vand.u32 2147483647, %v5330
    %v5343 = vand.u32 2147483647, %v5331
    %v5344 = vand.u32 2147483647, %v5332
    %v5345 = vand.u32 2147483647, %v5333
    %v5346 = vand.u32 2147483647, %v5334
    %v5347 = vand.u32 2147483647, %v5335
    %v5348 = vand.u32 2147483647, %v5336
    %v5349 = vmul.f32 %v5337, 0.3275911
    %v5350 = vmul.f32 %v5338, 0.3275911
    %v5351 = vmul.f32 %v5339, 0.3275911
    %v5352 = vmul.f32 %v5340, 0.3275911
    %v5353 = vmul.f32 %v5341, 0.3275911
    %v5354 = vmul.f32 %v5342, 0.3275911
    %v5355 = vmul.f32 %v5343, 0.3275911
    %v5356 = vmul.f32 %v5344, 0.3275911
    %v5357 = vmul.f32 %v5345, 0.3275911
    %v5358 = vmul.f32 %v5346, 0.3275911
    %v5359 = vmul.f32 %v5347, 0.3275911
    %v5360 = vmul.f32 %v5348, 0.3275911
    %v5361 = vadd.f32 %v5349, 1.0
    %v5362 = vadd.f32 %v5350, 1.0
    %v5363 = vadd.f32 %v5351, 1.0
    %v5364 = vadd.f32 %v5352, 1.0
    %v5365 = vadd.f32 %v5353, 1.0
    %v5366 = vadd.f32 %v5354, 1.0
    %v5367 = vadd.f32 %v5355, 1.0
    %v5368 = vadd.f32 %v5356, 1.0
    %v5369 = vadd.f32 %v5357, 1.0
    %v5370 = vadd.f32 %v5358, 1.0
    %v5371 = vadd.f32 %v5359, 1.0
    %v5372 = vadd.f32 %v5360, 1.0
    %v5373 = vrcp.pop %v5361
    %v5374 = vmul.f32 1.0, %v5373
    %v5375 = vrcp.pop %v5362
    %v5376 = vmul.f32 1.0, %v5375
    %v5377 = vrcp.pop %v5363
    %v5378 = vmul.f32 1.0, %v5377
    %v5379 = vrcp.pop %v5364
    %v5380 = vmul.f32 1.0, %v5379
    %v5381 = vrcp.pop %v5365
    %v5382 = vmul.f32 1.0, %v5381
    %v5383 = vrcp.pop %v5366
    %v5384 = vmul.f32 1.0, %v5383
    %v5385 = vrcp.pop %v5367
    %v5386 = vmul.f32 1.0, %v5385
    %v5387 = vrcp.pop %v5368
    %v5388 = vmul.f32 1.0, %v5387
    %v5389 = vrcp.pop %v5369
    %v5390 = vmul.f32 1.0, %v5389
    %v5391 = vrcp.pop %v5370
    %v5392 = vmul.f32 1.0, %v5391
    %v5393 = vrcp.pop %v5371
    %v5394 = vmul.f32 1.0, %v5393
    %v5395 = vrcp.pop %v5372
    %v5396 = vmul.f32 1.0, %v5395
    %v5397 = vmul.f32 %v5374, 1.0614054
    %v5398 = vmul.f32 %v5376, 1.0614054
    %v5399 = vmul.f32 %v5378, 1.0614054
    %v5400 = vmul.f32 %v5380, 1.0614054
    %v5401 = vmul.f32 %v5382, 1.0614054
    %v5402 = vmul.f32 %v5384, 1.0614054
    %v5403 = vmul.f32 %v5386, 1.0614054
    %v5404 = vmul.f32 %v5388, 1.0614054
    %v5405 = vmul.f32 %v5390, 1.0614054
    %v5406 = vmul.f32 %v5392, 1.0614054
    %v5407 = vmul.f32 %v5394, 1.0614054
    %v5408 = vmul.f32 %v5396, 1.0614054
    %v5409 = vadd.f32 %v5397, -1.4531521
    %v5410 = vadd.f32 %v5398, -1.4531521
    %v5411 = vadd.f32 %v5399, -1.4531521
    %v5412 = vadd.f32 %v5400, -1.4531521
    %v5413 = vadd.f32 %v5401, -1.4531521
    %v5414 = vadd.f32 %v5402, -1.4531521
    %v5415 = vadd.f32 %v5403, -1.4531521
    %v5416 = vadd.f32 %v5404, -1.4531521
    %v5417 = vadd.f32 %v5405, -1.4531521
    %v5418 = vadd.f32 %v5406, -1.4531521
    %v5419 = vadd.f32 %v5407, -1.4531521
    %v5420 = vadd.f32 %v5408, -1.4531521
    %v5421 = vmul.f32 %v5409, %v5374
    %v5422 = vmul.f32 %v5410, %v5376
    %v5423 = vmul.f32 %v5411, %v5378
    %v5424 = vmul.f32 %v5412, %v5380
    %v5425 = vmul.f32 %v5413, %v5382
    %v5426 = vmul.f32 %v5414, %v5384
    %v5427 = vmul.f32 %v5415, %v5386
    %v5428 = vmul.f32 %v5416, %v5388
    %v5429 = vmul.f32 %v5417, %v5390
    %v5430 = vmul.f32 %v5418, %v5392
    %v5431 = vmul.f32 %v5419, %v5394
    %v5432 = vmul.f32 %v5420, %v5396
    %v5433 = vadd.f32 %v5421, 1.4214138
    %v5434 = vadd.f32 %v5422, 1.4214138
    %v5435 = vadd.f32 %v5423, 1.4214138
    %v5436 = vadd.f32 %v5424, 1.4214138
    %v5437 = vadd.f32 %v5425, 1.4214138
    %v5438 = vadd.f32 %v5426, 1.4214138
    %v5439 = vadd.f32 %v5427, 1.4214138
    %v5440 = vadd.f32 %v5428, 1.4214138
    %v5441 = vadd.f32 %v5429, 1.4214138
    %v5442 = vadd.f32 %v5430, 1.4214138
    %v5443 = vadd.f32 %v5431, 1.4214138
    %v5444 = vadd.f32 %v5432, 1.4214138
    %v5445 = vmul.f32 %v5433, %v5374
    %v5446 = vmul.f32 %v5434, %v5376
    %v5447 = vmul.f32 %v5435, %v5378
    %v5448 = vmul.f32 %v5436, %v5380
    %v5449 = vmul.f32 %v5437, %v5382
    %v5450 = vmul.f32 %v5438, %v5384
    %v5451 = vmul.f32 %v5439, %v5386
    %v5452 = vmul.f32 %v5440, %v5388
    %v5453 = vmul.f32 %v5441, %v5390
    %v5454 = vmul.f32 %v5442, %v5392
    %v5455 = vmul.f32 %v5443, %v5394
    %v5456 = vmul.f32 %v5444, %v5396
    %v5457 = vadd.f32 %v5445, -0.28449672
    %v5458 = vadd.f32 %v5446, -0.28449672
    %v5459 = vadd.f32 %v5447, -0.28449672
    %v5460 = vadd.f32 %v5448, -0.28449672
    %v5461 = vadd.f32 %v5449, -0.28449672
    %v5462 = vadd.f32 %v5450, -0.28449672
    %v5463 = vadd.f32 %v5451, -0.28449672
    %v5464 = vadd.f32 %v5452, -0.28449672
    %v5465 = vadd.f32 %v5453, -0.28449672
    %v5466 = vadd.f32 %v5454, -0.28449672
    %v5467 = vadd.f32 %v5455, -0.28449672
    %v5468 = vadd.f32 %v5456, -0.28449672
    %v5469 = vmul.f32 %v5457, %v5374
    %v5470 = vmul.f32 %v5458, %v5376
    %v5471 = vmul.f32 %v5459, %v5378
    %v5472 = vmul.f32 %v5460, %v5380
    %v5473 = vmul.f32 %v5461, %v5382
    %v5474 = vmul.f32 %v5462, %v5384
    %v5475 = vmul.f32 %v5463, %v5386
    %v5476 = vmul.f32 %v5464, %v5388
    %v5477 = vmul.f32 %v5465, %v5390
    %v5478 = vmul.f32 %v5466, %v5392
    %v5479 = vmul.f32 %v5467, %v5394
    %v5480 = vmul.f32 %v5468, %v5396
    %v5481 = vadd.f32 %v5469, 0.2548296
    %v5482 = vadd.f32 %v5470, 0.2548296
    %v5483 = vadd.f32 %v5471, 0.2548296
    %v5484 = vadd.f32 %v5472, 0.2548296
    %v5485 = vadd.f32 %v5473, 0.2548296
    %v5486 = vadd.f32 %v5474, 0.2548296
    %v5487 = vadd.f32 %v5475, 0.2548296
    %v5488 = vadd.f32 %v5476, 0.2548296
    %v5489 = vadd.f32 %v5477, 0.2548296
    %v5490 = vadd.f32 %v5478, 0.2548296
    %v5491 = vadd.f32 %v5479, 0.2548296
    %v5492 = vadd.f32 %v5480, 0.2548296
    %v5493 = vmul.f32 %v5481, %v5374
    %v5494 = vmul.f32 %v5482, %v5376
    %v5495 = vmul.f32 %v5483, %v5378
    %v5496 = vmul.f32 %v5484, %v5380
    %v5497 = vmul.f32 %v5485, %v5382
    %v5498 = vmul.f32 %v5486, %v5384
    %v5499 = vmul.f32 %v5487, %v5386
    %v5500 = vmul.f32 %v5488, %v5388
    %v5501 = vmul.f32 %v5489, %v5390
    %v5502 = vmul.f32 %v5490, %v5392
    %v5503 = vmul.f32 %v5491, %v5394
    %v5504 = vmul.f32 %v5492, %v5396
    %v5505 = vsub.f32 0.0, %v5337
    %v5506 = vsub.f32 0.0, %v5338
    %v5507 = vsub.f32 0.0, %v5339
    %v5508 = vsub.f32 0.0, %v5340
    %v5509 = vsub.f32 0.0, %v5341
    %v5510 = vsub.f32 0.0, %v5342
    %v5511 = vsub.f32 0.0, %v5343
    %v5512 = vsub.f32 0.0, %v5344
    %v5513 = vsub.f32 0.0, %v5345
    %v5514 = vsub.f32 0.0, %v5346
    %v5515 = vsub.f32 0.0, %v5347
    %v5516 = vsub.f32 0.0, %v5348
    %v5517 = vmul.f32 %v5505, %v5337
    %v5518 = vmul.f32 %v5506, %v5338
    %v5519 = vmul.f32 %v5507, %v5339
    %v5520 = vmul.f32 %v5508, %v5340
    %v5521 = vmul.f32 %v5509, %v5341
    %v5522 = vmul.f32 %v5510, %v5342
    %v5523 = vmul.f32 %v5511, %v5343
    %v5524 = vmul.f32 %v5512, %v5344
    %v5525 = vmul.f32 %v5513, %v5345
    %v5526 = vmul.f32 %v5514, %v5346
    %v5527 = vmul.f32 %v5515, %v5347
    %v5528 = vmul.f32 %v5516, %v5348
    %v5529 = vmul.f32 %v5517, 1.442695
    %v5530 = vpow.pop %v5529
    %v5531 = vmul.f32 %v5518, 1.442695
    %v5532 = vpow.pop %v5531
    %v5533 = vmul.f32 %v5519, 1.442695
    %v5534 = vpow.pop %v5533
    %v5535 = vmul.f32 %v5520, 1.442695
    %v5536 = vpow.pop %v5535
    %v5537 = vmul.f32 %v5521, 1.442695
    %v5538 = vpow.pop %v5537
    %v5539 = vmul.f32 %v5522, 1.442695
    %v5540 = vpow.pop %v5539
    %v5541 = vmul.f32 %v5523, 1.442695
    %v5542 = vpow.pop %v5541
    %v5543 = vmul.f32 %v5524, 1.442695
    %v5544 = vpow.pop %v5543
    %v5545 = vmul.f32 %v5525, 1.442695
    %v5546 = vpow.pop %v5545
    %v5547 = vmul.f32 %v5526, 1.442695
    %v5548 = vpow.pop %v5547
    %v5549 = vmul.f32 %v5527, 1.442695
    %v5550 = vpow.pop %v5549
    %v5551 = vmul.f32 %v5528, 1.442695
    %v5552 = vpow.pop %v5551
    %v5553 = vmul.f32 %v5493, %v5530
    %v5554 = vmul.f32 %v5494, %v5532
    %v5555 = vmul.f32 %v5495, %v5534
    %v5556 = vmul.f32 %v5496, %v5536
    %v5557 = vmul.f32 %v5497, %v5538
    %v5558 = vmul.f32 %v5498, %v5540
    %v5559 = vmul.f32 %v5499, %v5542
    %v5560 = vmul.f32 %v5500, %v5544
    %v5561 = vmul.f32 %v5501, %v5546
    %v5562 = vmul.f32 %v5502, %v5548
    %v5563 = vmul.f32 %v5503, %v5550
    %v5564 = vmul.f32 %v5504, %v5552
    %v5565 = vsub.f32 1.0, %v5553
    %v5566 = vsub.f32 1.0, %v5554
    %v5567 = vsub.f32 1.0, %v5555
    %v5568 = vsub.f32 1.0, %v5556
    %v5569 = vsub.f32 1.0, %v5557
    %v5570 = vsub.f32 1.0, %v5558
    %v5571 = vsub.f32 1.0, %v5559
    %v5572 = vsub.f32 1.0, %v5560
    %v5573 = vsub.f32 1.0, %v5561
    %v5574 = vsub.f32 1.0, %v5562
    %v5575 = vsub.f32 1.0, %v5563
    %v5576 = vsub.f32 1.0, %v5564
    %vm5577 = vcmp.ge.f32.partialorder %v5325, 0.0
    %vm5578 = vcmp.ge.f32.partialorder %v5326, 0.0
    %vm5579 = vcmp.ge.f32.partialorder %v5327, 0.0
    %vm5580 = vcmp.ge.f32.partialorder %v5328, 0.0
    %vm5581 = vcmp.ge.f32.partialorder %v5329, 0.0
    %vm5582 = vcmp.ge.f32.partialorder %v5330, 0.0
    %vm5583 = vcmp.ge.f32.partialorder %v5331, 0.0
    %vm5584 = vcmp.ge.f32.partialorder %v5332, 0.0
    %vm5585 = vcmp.ge.f32.partialorder %v5333, 0.0
    %vm5586 = vcmp.ge.f32.partialorder %v5334, 0.0
    %vm5587 = vcmp.ge.f32.partialorder %v5335, 0.0
    %vm5588 = vcmp.ge.f32.partialorder %v5336, 0.0
    %v5589 = vsub.f32 0.0, %v5565
    %v5590 = vsub.f32 0.0, %v5566
    %v5591 = vsub.f32 0.0, %v5567
    %v5592 = vsub.f32 0.0, %v5568
    %v5593 = vsub.f32 0.0, %v5569
    %v5594 = vsub.f32 0.0, %v5570
    %v5595 = vsub.f32 0.0, %v5571
    %v5596 = vsub.f32 0.0, %v5572
    %v5597 = vsub.f32 0.0, %v5573
    %v5598 = vsub.f32 0.0, %v5574
    %v5599 = vsub.f32 0.0, %v5575
    %v5600 = vsub.f32 0.0, %v5576
    %v5601 = vsel %vm5577, %v5565, %v5589
    %v5602 = vsel %vm5578, %v5566, %v5590
    %v5603 = vsel %vm5579, %v5567, %v5591
    %v5604 = vsel %vm5580, %v5568, %v5592
    %v5605 = vsel %vm5581, %v5569, %v5593
    %v5606 = vsel %vm5582, %v5570, %v5594
    %v5607 = vsel %vm5583, %v5571, %v5595
    %v5608 = vsel %vm5584, %v5572, %v5596
    %v5609 = vsel %vm5585, %v5573, %v5597
    %v5610 = vsel %vm5586, %v5574, %v5598
    %v5611 = vsel %vm5587, %v5575, %v5599
    %v5612 = vsel %vm5588, %v5576, %v5600
    %v5613 = vadd.f32 %v5601, 1.0
    %v5614 = vadd.f32 %v5602, 1.0
    %v5615 = vadd.f32 %v5603, 1.0
    %v5616 = vadd.f32 %v5604, 1.0
    %v5617 = vadd.f32 %v5605, 1.0
    %v5618 = vadd.f32 %v5606, 1.0
    %v5619 = vadd.f32 %v5607, 1.0
    %v5620 = vadd.f32 %v5608, 1.0
    %v5621 = vadd.f32 %v5609, 1.0
    %v5622 = vadd.f32 %v5610, 1.0
    %v5623 = vadd.f32 %v5611, 1.0
    %v5624 = vadd.f32 %v5612, 1.0
    %v5625 = vmul.f32 %v5313, %v5613
    %v5626 = vmul.f32 %v5314, %v5614
    %v5627 = vmul.f32 %v5315, %v5615
    %v5628 = vmul.f32 %v5316, %v5616
    %v5629 = vmul.f32 %v5317, %v5617
    %v5630 = vmul.f32 %v5318, %v5618
    %v5631 = vmul.f32 %v5319, %v5619
    %v5632 = vmul.f32 %v5320, %v5620
    %v5633 = vmul.f32 %v5321, %v5621
    %v5634 = vmul.f32 %v5322, %v5622
    %v5635 = vmul.f32 %v5323, %v5623
    %v5636 = vmul.f32 %v5324, %v5624
    %v5637 = vpack.c.bf16 %v5627, %v5625
    %v5638 = vpack.c.bf16 %v5628, %v5626
    %v5639 = vpack.c.bf16 %v5631, %v5629
    %v5640 = vpack.c.bf16 %v5632, %v5630
    %v5641 = vpack.c.bf16 %v5635, %v5633
    %v5642 = vpack.c.bf16 %v5636, %v5634
    %s5643 = scalar_lea.vmem %s15, 128
    %v5644 = vld [vmem:[%s5643] sm:$0xf]
    %v5645 = vld [vmem:[%s5643 + $0x4] sm:$0xf]
    %v5646 = vld [vmem:[%s5643 + $0x8] sm:$0xf]
    %v5647 = vld [vmem:[%s5643 + $0xc] sm:$0xf]
    %v5648 = vld [vmem:[%s5643 + $0x10] sm:$0xf]
    %v5649 = vld [vmem:[%s5643 + $0x14] sm:$0xf]
    %v5650 = vld [vmem:[%s5643 + $0x18] sm:$0xf]
    %v5651 = vld [vmem:[%s5643 + $0x1c] sm:$0xf]
    %v5652 = vld [vmem:[%s5643 + $0x20] sm:$0xf]
    %v5653 = vld [vmem:[%s5643 + $0x24] sm:$0xf]
    %v5654 = vld [vmem:[%s5643 + $0x28] sm:$0xf]
    %v5655 = vld [vmem:[%s5643 + $0x2c] sm:$0xf]
    %v5656 = vld [vmem:[%s5643 + $0x30] sm:$0xf]
    %v5657 = vld [vmem:[%s5643 + $0x34] sm:$0xf]
    %v5658 = vld [vmem:[%s5643 + $0x38] sm:$0xf]
    %v5659 = vld [vmem:[%s5643 + $0x3c] sm:$0xf]
    %v5660 = vld [vmem:[%s5643 + $0x40] sm:$0xf]
    %v5661 = vld [vmem:[%s5643 + $0x44] sm:$0xf]
    %v5662 = vld [vmem:[%s5643 + $0x48] sm:$0xf]
    %v5663 = vld [vmem:[%s5643 + $0x4c] sm:$0xf]
    %v5664 = vld [vmem:[%s5643 + $0x50] sm:$0xf]
    %v5665 = vld [vmem:[%s5643 + $0x54] sm:$0xf]
    %v5666 = vld [vmem:[%s5643 + $0x58] sm:$0xf]
    %v5667 = vld [vmem:[%s5643 + $0x5c] sm:$0xf]
    %v5668 = vld [vmem:[%s5643 + $0x60] sm:$0xf]
    %v5669 = vld [vmem:[%s5643 + $0x64] sm:$0xf]
    %v5670 = vld [vmem:[%s5643 + $0x68] sm:$0xf]
    %v5671 = vld [vmem:[%s5643 + $0x6c] sm:$0xf]
    %v5672 = vld [vmem:[%s5643 + $0x70] sm:$0xf]
    %v5673 = vld [vmem:[%s5643 + $0x74] sm:$0xf]
    %v5674 = vld [vmem:[%s5643 + $0x78] sm:$0xf]
    %v5675 = vld [vmem:[%s5643 + $0x7c] sm:$0xf]
    %s5676 = scalar_lea.vmem %s16, 1
    %v5677 = vld [vmem:[%s5676] sm:$0x1]
    %v5679 = vlaneseq
    %v5680 = vshrl.u32 %v5679, 7
    %v5681 = vsub.s32 0, %v5680
    %v5682 = vrot.slane %v5677, %v5681
    %v5716 = vunpack.c.l.b16 %v5644
    %v5717 = vunpack.c.l.b16 %v5645
    %v5718 = vunpack.c.l.b16 %v5646
    %v5719 = vunpack.c.l.b16 %v5647
    %v5720 = vunpack.c.l.b16 %v5648
    %v5721 = vunpack.c.l.b16 %v5649
    %v5722 = vunpack.c.l.b16 %v5650
    %v5723 = vunpack.c.l.b16 %v5651
    %v5724 = vunpack.c.l.b16 %v5652
    %v5725 = vunpack.c.l.b16 %v5653
    %v5726 = vunpack.c.l.b16 %v5654
    %v5727 = vunpack.c.l.b16 %v5655
    %v5728 = vunpack.c.l.b16 %v5656
    %v5729 = vunpack.c.l.b16 %v5657
    %v5730 = vunpack.c.l.b16 %v5658
    %v5731 = vunpack.c.l.b16 %v5659
    %v5732 = vunpack.c.l.b16 %v5660
    %v5733 = vunpack.c.l.b16 %v5661
    %v5734 = vunpack.c.l.b16 %v5662
    %v5735 = vunpack.c.l.b16 %v5663
    %v5736 = vunpack.c.l.b16 %v5664
    %v5737 = vunpack.c.l.b16 %v5665
    %v5738 = vunpack.c.l.b16 %v5666
    %v5739 = vunpack.c.l.b16 %v5667
    %v5740 = vunpack.c.l.b16 %v5668
    %v5741 = vunpack.c.l.b16 %v5669
    %v5742 = vunpack.c.l.b16 %v5670
    %v5743 = vunpack.c.l.b16 %v5671
    %v5744 = vunpack.c.l.b16 %v5672
    %v5745 = vunpack.c.l.b16 %v5673
    %v5746 = vunpack.c.l.b16 %v5674
    %v5747 = vunpack.c.l.b16 %v5675
    %v5748 = vpack.c.b16 %v5717, %v5716
    %v5749 = vpack.c.b16 %v5719, %v5718
    %v5750 = vpack.c.b16 %v5721, %v5720
    %v5751 = vpack.c.b16 %v5723, %v5722
    %v5752 = vpack.c.b16 %v5725, %v5724
    %v5753 = vpack.c.b16 %v5727, %v5726
    %v5754 = vpack.c.b16 %v5729, %v5728
    %v5755 = vpack.c.b16 %v5731, %v5730
    %v5756 = vpack.c.b16 %v5733, %v5732
    %v5757 = vpack.c.b16 %v5735, %v5734
    %v5758 = vpack.c.b16 %v5737, %v5736
    %v5759 = vpack.c.b16 %v5739, %v5738
    %v5760 = vpack.c.b16 %v5741, %v5740
    %v5761 = vpack.c.b16 %v5743, %v5742
    %v5762 = vpack.c.b16 %v5745, %v5744
    %v5763 = vpack.c.b16 %v5747, %v5746
    %5780 = vmatprep.subr.bf16.mxu0 0
    %5781 = vmatpush1.bf16.msra.mxu0 %v5748
    %5782 = vmatprep.subr.bf16.mxu0 0
    %5783 = vmatpush1.bf16.msra.mxu0 %v5749
    %5784 = vmatprep.subr.bf16.mxu0 0
    %5785 = vmatpush1.bf16.msra.mxu0 %v5750
    %5786 = vmatprep.subr.bf16.mxu0 0
    %5787 = vmatpush1.bf16.msra.mxu0 %v5751
    %5788 = vmatprep.subr.bf16.mxu0 0
    %5789 = vmatpush1.bf16.msra.mxu0 %v5752
    %5790 = vmatprep.subr.bf16.mxu0 0
    %5791 = vmatpush1.bf16.msra.mxu0 %v5753
    %5792 = vmatprep.subr.bf16.mxu0 0
    %5793 = vmatpush1.bf16.msra.mxu0 %v5754
    %5794 = vmatprep.subr.bf16.mxu0 0
    %5795 = vmatpush1.bf16.msra.mxu0 %v5755
    %5796 = vmatprep.subr.bf16.mxu0 0
    %5797 = vmatpush1.bf16.msra.mxu0 %v5756
    %5798 = vmatprep.subr.bf16.mxu0 0
    %5799 = vmatpush1.bf16.msra.mxu0 %v5757
    %5800 = vmatprep.subr.bf16.mxu0 0
    %5801 = vmatpush1.bf16.msra.mxu0 %v5758
    %5802 = vmatprep.subr.bf16.mxu0 0
    %5803 = vmatpush1.bf16.msra.mxu0 %v5759
    %5804 = vmatprep.subr.bf16.mxu0 0
    %5805 = vmatpush1.bf16.msra.mxu0 %v5760
    %5806 = vmatprep.subr.bf16.mxu0 0
    %5807 = vmatpush1.bf16.msra.mxu0 %v5761
    %5808 = vmatprep.subr.bf16.mxu0 0
    %5809 = vmatpush1.bf16.msra.mxu0 %v5762
    %5810 = vmatprep.subr.bf16.mxu0 0
    %5811 = vmatpush1.bf16.msra.mxu0 %v5763
    %5812 = vmatprep.mubr.bf16.mxu0 %v5638
    %5813 = vmatmul.mubr.bf16.gmra.mrb[0].mxu0 %v5637
    %v5814 = vpop.f32.mrb[0].mxu0
    %v5815 = vadd.f32 %v5682, %v5814
    %v5816 = vpop.f32.mrb[0].mxu0
    %v5817 = vpop.f32.mrb[0].mxu0
    %v5818 = vpop.f32.mrb[0].mxu0
    %5819 = vmatprep.mubr.bf16.mxu0 %v5640
    %5820 = vmatmul.mubr.bf16.gmra.mrb[0].mxu0 %v5639
    %v5821 = vpop.f32.mrb[0].mxu0
    %v5822 = vpop.f32.mrb[0].mxu0
    %v5823 = vpop.f32.mrb[0].mxu0
    %v5824 = vadd.f32 %v5682, %v5823
    %v5825 = vpop.f32.mrb[0].mxu0
    %5826 = vmatprep.mubr.bf16.mxu0 %v5642
    %5827 = vmatmul.mubr.bf16.gmra.mrb[0].mxu0 %v5641
    %v5828 = vpop.f32.mrb[0].mxu0
    %v5829 = vpop.f32.mrb[0].mxu0
    %v5830 = vpop.f32.mrb[0].mxu0
    %v5831 = vpop.f32.mrb[0].mxu0
    %5832 = vdwg.mxu0
    %v5833 = vadd.f32 %v5815, %v5037
    %v5834 = vadd.f32 %v5824, %v5040
    %v5835 = vld [vmem:[%s17] sm:$0x1]
    %v5836 = vld [vmem:[%s18] sm:$0x1]
    %v5839 = vrot.slane %v5834, 7
    %vm5840 = vcmask 1041409
    %v5841 = vsel %vm5840, %v5839, %v5833
    %vm5843 = vcmask 1041408
    %v5844 = vsel %vm5843, %v5841, 0.0
    %5845 = vadd.xlane.f32.xlu0 %v5844
    %v5846 = vpop.xlane.xlu0 %5845
    %v5847 = vmul.f32 %v5846, %v282
    %v5849 = vrot.slane %v5847, 1
    %v5852 = vsub.f32 %v5833, %v5847
    %v5853 = vsub.f32 %v5834, %v5849
    %v5854 = vmul.f32 %v5852, %v5852
    %v5855 = vmul.f32 %v5853, %v5853
    %v5858 = vrot.slane %v5855, 7
    %v5859 = vsel %vm5840, %v5858, %v5854
    %v5861 = vsel %vm5843, %v5859, 0.0
    %5862 = vadd.xlane.f32.xlu0 %v5861
    %v5863 = vpop.xlane.xlu0 %5862
    %v5864 = vmul.f32 %v5863, %v282
    %v5865 = vadd.f32 %v5864, 1e-05
    %v5866 = vrsqrt.pop %v5865
    %v5868 = vrot.slane %v5866, 1
    %v5871 = vmul.f32 %v5852, %v5866
    %v5872 = vmul.f32 %v5853, %v5868
    %v5874 = vlaneseq
    %v5875 = vshrl.u32 %v5874, 7
    %v5876 = vsub.s32 0, %v5875
    %v5877 = vrot.slane %v5835, %v5876
    %v5879 = vmul.f32 %v5871, %v5877
    %v5880 = vmul.f32 %v5872, %v5877
    %v5882 = vlaneseq
    %v5883 = vshrl.u32 %v5882, 7
    %v5884 = vsub.s32 0, %v5883
    %v5885 = vrot.slane %v5836, %v5884
    %v5887 = vadd.f32 %v5879, %v5885
    %v5888 = vadd.f32 %v5880, %v5885
    %v5889 = vpack.c.bf16 %v5887, %v5887
    %v5890 = vpack.c.bf16 %v5888, %v5888
    %v5891 = vld [vmem:[%s19] sm:$0xf]
    %v5892 = vld [vmem:[%s19 + $0x4] sm:$0xf]
    %v5893 = vld [vmem:[%s19 + $0x8] sm:$0xf]
    %v5894 = vld [vmem:[%s19 + $0xc] sm:$0xf]
    %v5895 = vld [vmem:[%s19 + $0x10] sm:$0xf]
    %v5896 = vld [vmem:[%s19 + $0x14] sm:$0xf]
    %v5897 = vld [vmem:[%s19 + $0x18] sm:$0xf]
    %v5898 = vld [vmem:[%s19 + $0x1c] sm:$0xf]
    %v5899 = vld [vmem:[%s19 + $0x20] sm:$0xf]
    %v5900 = vld [vmem:[%s19 + $0x24] sm:$0xf]
    %v5901 = vld [vmem:[%s19 + $0x28] sm:$0xf]
    %v5902 = vld [vmem:[%s19 + $0x2c] sm:$0xf]
    %v5903 = vld [vmem:[%s19 + $0x30] sm:$0xf]
    %v5904 = vld [vmem:[%s19 + $0x34] sm:$0xf]
    %v5905 = vld [vmem:[%s19 + $0x38] sm:$0xf]
    %v5906 = vld [vmem:[%s19 + $0x3c] sm:$0xf]
    %v5907 = vld [vmem:[%s20] sm:$0x1]
    %v5909 = vlaneseq
    %v5910 = vshrl.u32 %v5909, 7
    %v5911 = vsub.s32 0, %v5910
    %v5912 = vrot.slane %v5907, %v5911
    %v5916 = vunpack.c.l.b16 %v5889
    %v5917 = vunpack.c.l.b16 %v5890
    %v5918 = vrot.slane %v5917, 7
    %v5919 = vsel %vm5840, %v5918, %v5916
    %v5920 = vpack.c.b16 %v5919, %v5919
    %v5938 = vunpack.c.l.b16 %v5891
    %v5939 = vunpack.c.l.b16 %v5892
    %v5940 = vunpack.c.l.b16 %v5893
    %v5941 = vunpack.c.l.b16 %v5894
    %v5942 = vunpack.c.l.b16 %v5895
    %v5943 = vunpack.c.l.b16 %v5896
    %v5944 = vunpack.c.l.b16 %v5897
    %v5945 = vunpack.c.l.b16 %v5898
    %v5946 = vunpack.c.l.b16 %v5899
    %v5947 = vunpack.c.l.b16 %v5900
    %v5948 = vunpack.c.l.b16 %v5901
    %v5949 = vunpack.c.l.b16 %v5902
    %v5950 = vunpack.c.l.b16 %v5903
    %v5951 = vunpack.c.l.b16 %v5904
    %v5952 = vunpack.c.l.b16 %v5905
    %v5953 = vunpack.c.l.b16 %v5906
    %v5954 = vpack.c.b16 %v5939, %v5938
    %v5955 = vpack.c.b16 %v5941, %v5940
    %v5956 = vpack.c.b16 %v5943, %v5942
    %v5957 = vpack.c.b16 %v5945, %v5944
    %v5958 = vpack.c.b16 %v5947, %v5946
    %v5959 = vpack.c.b16 %v5949, %v5948
    %v5960 = vpack.c.b16 %v5951, %v5950
    %v5961 = vpack.c.b16 %v5953, %v5952
    %5970 = vmatprep.subr.bf16.mxu0 0
    %5971 = vmatpush1.bf16.msra.mxu0 %v5954
    %5972 = vmatprep.subr.bf16.mxu0 0
    %5973 = vmatpush1.bf16.msra.mxu0 %v5955
    %5974 = vmatprep.subr.bf16.mxu0 0
    %5975 = vmatpush1.bf16.msra.mxu0 %v5956
    %5976 = vmatprep.subr.bf16.mxu0 0
    %5977 = vmatpush1.bf16.msra.mxu0 %v5957
    %5978 = vmatprep.subr.bf16.mxu0 0
    %5979 = vmatpush1.bf16.msra.mxu0 %v5958
    %5980 = vmatprep.subr.bf16.mxu0 0
    %5981 = vmatpush1.bf16.msra.mxu0 %v5959
    %5982 = vmatprep.subr.bf16.mxu0 0
    %5983 = vmatpush1.bf16.msra.mxu0 %v5960
    %5984 = vmatprep.subr.bf16.mxu0 0
    %5985 = vmatpush1.bf16.msra.mxu0 %v5961
    %5986 = vmatprep.subr.bf16.mxu0 0
    %5987 = vmatpush1.bf16.msra.mxu0 0
    %5988 = vmatprep.subr.bf16.mxu0 0
    %5989 = vmatpush1.bf16.msra.mxu0 0
    %5990 = vmatprep.subr.bf16.mxu0 0
    %5991 = vmatpush1.bf16.msra.mxu0 0
    %5992 = vmatprep.subr.bf16.mxu0 0
    %5993 = vmatpush1.bf16.msra.mxu0 0
    %5994 = vmatprep.subr.bf16.mxu0 0
    %5995 = vmatpush1.bf16.msra.mxu0 0
    %5996 = vmatprep.subr.bf16.mxu0 0
    %5997 = vmatpush1.bf16.msra.mxu0 0
    %5998 = vmatprep.subr.bf16.mxu0 0
    %5999 = vmatpush1.bf16.msra.mxu0 0
    %6000 = vmatprep.subr.bf16.mxu0 0
    %6001 = vmatpush1.bf16.msra.mxu0 0
    %6002 = vmatprep.mubr.bf16.mxu0 0
    %6003 = vmatmul.mubr.bf16.gmra.mrb[0].mxu0 %v5920
    %v6004 = vpop.f32.mrb[0].mxu0
    %v6005 = vadd.f32 %v5912, %v6004
    %v6006 = vpop.f32.mrb[0].mxu0
    %v6007 = vpop.f32.mrb[0].mxu0
    %v6008 = vpop.f32.mrb[0].mxu0
    %6009 = vdwg.mxu0
    %6010 = vst [vmem:[#allocation3] sm:$0x3] %v6005
    // Predicated region
    $region86: #{vit_forward.1} parent=1 // pred_check
      _
    $region87: #{vit_forward.1} parent=1 // pred_check_branch
      %6012 = sbr.rel (0) target = $region89
    $region88: #{vit_forward.1} parent=1 // pred_region
      %s6014 = ssub.s32 32, 32
      %6015 = vsyncadd [#allocation4], %s6014
      %s6017 = sshll.u32 [#allocation3], 4
      %s6018 = int_to_ptr.vmem [resolvable:$true] %s6017
      %6020 = dma.vmem_to_hbm [thread:$0]  %s6018, 32, %s21, [#allocation4]
    $region89: #{vit_forward.1} parent=1 // pred_fallthru
      _
    // Predicated region
    $region90: #{vit_forward.1} parent=1 // pred_check
      _
    $region91: #{vit_forward.1} parent=1 // pred_check_branch
      %6022 = sbr.rel (0) target = $region93
    $region92: #{vit_forward.1} parent=1 // pred_region
      %6023 = dma.done [#allocation4], 32
    $region93: #{vit_forward.1} parent=1 // pred_fallthru
      _
    %6024 = vsyncpa [#allocation4], 1

</llo_original>
